<compile_context>
chip_gen: v5e
topology: v5e:2x2
jax: 0.10.0
libtpu: 0.0.40
codegen_flags: <defaults>
</compile_context>

<pallas_src>
import functools

import jax
import jax.numpy as jnp
from jax.experimental import pallas as pl
from jax.experimental.pallas import tpu as pltpu


def _log_sigmoid(x):
    # stable log(sigmoid(x)) = -(max(-x, 0) + log1p(exp(-|x|)))  -- one exp, one log1p
    return -(jnp.maximum(-x, 0.0) + jnp.log1p(jnp.exp(-jnp.abs(x))))


def _skip_gram_kernel(v_ref, u_ref, ns_ref, out_ref, acc_ref, *, tb, total_b):
    c = pl.program_id(0)                 # core-split axis ("parallel")
    i = pl.program_id(1)                 # batch-tile axis ("arbitrary" reduction)
    tiles_per_core = pl.num_programs(1)

    @pl.when(i == 0)
    def _():
        acc_ref[...] = jnp.zeros_like(acc_ref)

    v = v_ref[...].astype(jnp.float32)      # (tb, D)
    u = u_ref[...].astype(jnp.float32)      # (tb, D)
    ns = ns_ref[...].astype(jnp.float32)    # (tb, D) == sum_k u_emb[neg_pos[:, k]]

    pos_score = jnp.sum(v * u, axis=1, keepdims=True)     # (tb, 1)
    neg_score = jnp.sum(v * ns, axis=1, keepdims=True)    # (tb, 1)
    loss = _log_sigmoid(pos_score) + _log_sigmoid(-neg_score)

    # Mask padded batch rows (batch was padded up to a multiple of cores*tb).
    row0 = (c * tiles_per_core + i) * tb
    rows = row0 + jax.lax.broadcasted_iota(jnp.int32, (tb, 1), 0)
    loss = jnp.where(rows < total_b, loss, 0.0)

    # Steady-state: pure elementwise VPU add, no cross-lane/sublane reduce.
    acc_ref[...] += loss

    @pl.when(i == tiles_per_core - 1)
    def _():
        # Single reduction + store in the epilogue only.
        total = jnp.sum(acc_ref[...])
        out_ref[...] = jnp.full((8, 128), total, jnp.float32)


def skip_gram_loss(v_emb, u_emb, v_pos, u_pos, neg_pos, *, tb=None,
                   num_cores=2, stream_dtype=None):
    """Scalar skip-gram negative-sampling loss (matches the PyTorch module)."""
    B = v_pos.shape[0]
    K = neg_pos.shape[1]
    D = v_emb.shape[1]
    assert B >= 1

    stream_dtype = jnp.dtype(stream_dtype) if stream_dtype is not None else v_emb.dtype
    itemsize = jnp.dtype(stream_dtype).itemsize

    if tb is None:
        # Keep the double-buffered input footprint (2 bufs x 3 streams) well under
        # the v7x 64 MiB VMEM; cap so per-step overhead is amortized.
        budget = 24 << 20
        tb = budget // (2 * 3 * D * itemsize)
        tb = int(max(16, min(1024, (tb // 16) * 16)))
    assert tb % 16 == 0, "tb must be a multiple of 16 (bf16 sublane packing)"

    # --- Embedding gather glue (XLA). Fold the K-sum into the gather so the
    #     kernel never sees the (B, K, D) intermediate.
    v = jnp.take(v_emb, v_pos, axis=0)                                    # (B, D)
    u = jnp.take(u_emb, u_pos, axis=0)                                    # (B, D)
    ns = jnp.take(u_emb, neg_pos.reshape(-1), axis=0).reshape(B, K, D).sum(axis=1)

    v = v.astype(stream_dtype)
    u = u.astype(stream_dtype)
    ns = ns.astype(stream_dtype)

    # Pad batch to a multiple of (num_cores * tb); padded rows masked in-kernel.
    chunk = num_cores * tb
    B_pad = ((B + chunk - 1) // chunk) * chunk
    if B_pad != B:
        pad = ((0, B_pad - B), (0, 0))
        v, u, ns = jnp.pad(v, pad), jnp.pad(u, pad), jnp.pad(ns, pad)

    tiles_per_core = B_pad // chunk
    in_map = lambda c, i: (c * tiles_per_core + i, 0)

    # Explicit VMEM limit: actual need + headroom, safe on all generations
    # (v5e/v6e scoped default is 16/32 MiB; v7x physical is 64 MiB).
    vmem_need = 2 * 3 * tb * D * itemsize + tb * 128 * 4 + (1 << 20)
    vmem_limit = int(min(max(vmem_need, 16 << 20), 48 << 20))

    out = pl.pallas_call(
        functools.partial(_skip_gram_kernel, tb=tb, total_b=B),
        out_shape=jax.ShapeDtypeStruct((num_cores * 8, 128), jnp.float32),
        grid_spec=pltpu.PrefetchScalarGridSpec(
            num_scalar_prefetch=0,
            grid=(num_cores, tiles_per_core),
            in_specs=[
                pl.BlockSpec((tb, D), in_map),
                pl.BlockSpec((tb, D), in_map),
                pl.BlockSpec((tb, D), in_map),
            ],
            out_specs=pl.BlockSpec((8, 128), lambda c, i: (c, 0)),
            scratch_shapes=[pltpu.VMEM((tb, 1), jnp.float32)],
        ),
        compiler_params=pltpu.CompilerParams(
            dimension_semantics=("parallel", "arbitrary"),
            vmem_limit_bytes=vmem_limit,
        ),
    )(v, u, ns)

    # One partial per core-shard, summed in the wrapper.
    partials = out[0::8, 0]                                   # (num_cores,)
    return -(jnp.sum(partials) / B)
    # TODO(synk): if production D stays < 128, pack multiple batch rows per
    # 128-lane row in the wrapper for full lane occupancy.


def _reference_loss(v_emb, u_emb, v_pos, u_pos, neg_pos):
    # Pure-JAX reference mirroring the PyTorch forward exactly.
    v = v_emb[v_pos]                                     # (B, D)
    u = u_emb[u_pos]                                     # (B, D)
    pos = jax.nn.log_sigmoid(jnp.sum(v * u, axis=1))     # (B,)
    neg = u_emb[neg_pos]                                 # (B, K, D)
    neg_val = jnp.einsum("bkd,bd->bk", neg, v)           # bmm(neg, v[:,:,None])
    negv = jax.nn.log_sigmoid(-jnp.sum(neg_val, axis=1))
    return -jnp.mean(pos + negv)


def _make_inputs(key, V, D, B, K):
    initrange = (2.0 / (V + D)) ** 0.5
    k1, k2, k3, k4, k5 = jax.random.split(key, 5)
    v_emb = jax.random.uniform(k1, (V, D), jnp.float32, -initrange, initrange)
    # NOTE: the module initializes u_emb.weight to zero; we use small random
    # values so the kernel computation is non-trivial for this synthetic test.
    u_emb = jax.random.uniform(k2, (V, D), jnp.float32, -initrange, initrange)
    v_pos = jax.random.randint(k3, (B,), 0, V)
    u_pos = jax.random.randint(k4, (B,), 0, V)
    neg_pos = jax.random.randint(k5, (B, K), 0, V)
    return v_emb, u_emb, v_pos, u_pos, neg_pos


if __name__ == "__main__":
    key = jax.random.PRNGKey(0)
    k_a, k_b = jax.random.split(key)

    # 1) Small shapes consistent with the module (f32, strict check).
    args = _make_inputs(k_a, V=50, D=32, B=8, K=8)
    loss = jax.block_until_ready(skip_gram_loss(*args))
    ref = _reference_loss(*args)
    assert jnp.allclose(loss, ref, atol=1e-5, rtol=1e-4), (loss, ref)

    # 2) Non-multiple batch (exercises padding + masking), f32, strict check.
    args2 = _make_inputs(k_b, V=300, D=64, B=1000, K=5)
    loss2 = jax.block_until_ready(skip_gram_loss(*args2))
    ref2 = _reference_loss(*args2)
    assert jnp.allclose(loss2, ref2, atol=1e-5, rtol=1e-4), (loss2, ref2)

    # 3) bf16 streaming (f32 accumulation in-kernel), looser tolerance.
    loss3 = jax.block_until_ready(
        skip_gram_loss(*args2, stream_dtype=jnp.bfloat16))
    assert jnp.allclose(loss3, ref2, atol=2e-2, rtol=2e-2), (loss3, ref2)

    print("KERNEL_OK")
</pallas_src>

<mosaic_0001>
module attributes {stable_mosaic.version = 11 : i64} {
  func.func @_skip_gram_kernel(%arg0: i32, %arg1: i32, %arg2: memref<1024x32xf32, #tpu.memory_space<vmem>>, %arg3: memref<1024x32xf32, #tpu.memory_space<vmem>>, %arg4: memref<1024x32xf32, #tpu.memory_space<vmem>>, %arg5: memref<8x128xf32, #tpu.memory_space<vmem>>, %arg6: memref<1024x1xf32, #tpu.memory_space<vmem>>) attributes {dimension_semantics = [#tpu.dimension_semantics<parallel>, #tpu.dimension_semantics<arbitrary>], iteration_bounds = array<i64: 2, 1>, scalar_prefetch = 0 : i64, scratch_operands = 1 : i64, tpu.core_type = #tpu.core_type<tc>, window_params = [{transform_indices = @transform_0, window_bounds = array<i64: 1024, 32>}, {transform_indices = @transform_1, window_bounds = array<i64: 1024, 32>}, {transform_indices = @transform_2, window_bounds = array<i64: 1024, 32>}, {transform_indices = @transform_3, window_bounds = array<i64: 8, 128>}]} {
    %c0_i32 = arith.constant 0 : i32
    %0 = arith.cmpi eq, %arg1, %c0_i32 : i32
    %1 = arith.extui %0 : i1 to i32
    %c0_i32_0 = arith.constant 0 : i32
    %2 = arith.cmpi ne, %1, %c0_i32_0 : i32
    scf.if %2 {
      %cst_23 = arith.constant 0.000000e+00 : f32
      %55 = vector.broadcast %cst_23 : f32 to vector<1024x1xf32>
      %c0_24 = arith.constant 0 : index
      %c0_25 = arith.constant 0 : index
      %56 = vector.load %arg6[%c0_24, %c0_25] : memref<1024x1xf32, #tpu.memory_space<vmem>>, vector<1024x1xf32>
      tpu.vector_store %arg6[%c0_24, %c0_25], %55 {strides = array<i32>} : memref<1024x1xf32, #tpu.memory_space<vmem>>, vector<1024x1xf32>,
    } else {
    }
    %c0 = arith.constant 0 : index
    %c0_1 = arith.constant 0 : index
    %3 = vector.load %arg2[%c0, %c0_1] : memref<1024x32xf32, #tpu.memory_space<vmem>>, vector<1024x32xf32>
    %c0_2 = arith.constant 0 : index
    %c0_3 = arith.constant 0 : index
    %4 = vector.load %arg3[%c0_2, %c0_3] : memref<1024x32xf32, #tpu.memory_space<vmem>>, vector<1024x32xf32>
    %c0_4 = arith.constant 0 : index
    %c0_5 = arith.constant 0 : index
    %5 = vector.load %arg4[%c0_4, %c0_5] : memref<1024x32xf32, #tpu.memory_space<vmem>>, vector<1024x32xf32>
    %6 = arith.mulf %3, %4 : vector<1024x32xf32>
    %cst = arith.constant dense<0.000000e+00> : vector<1024xf32>
    %7 = vector.multi_reduction <add>, %6, %cst [1] : vector<1024x32xf32> to vector<1024xf32>
    %8 = vector.shape_cast %7 : vector<1024xf32> to vector<1024x1xf32>
    %9 = arith.mulf %3, %5 : vector<1024x32xf32>
    %cst_6 = arith.constant dense<0.000000e+00> : vector<1024xf32>
    %10 = vector.multi_reduction <add>, %9, %cst_6 [1] : vector<1024x32xf32> to vector<1024xf32>
    %11 = vector.shape_cast %10 : vector<1024xf32> to vector<1024x1xf32>
    %cst_7 = arith.constant 0.000000e+00 : f32
    %12 = vector.broadcast %cst_7 : f32 to vector<1024x1xf32>
    %13 = arith.subf %12, %8 : vector<1024x1xf32>
    %cst_8 = arith.constant 0.000000e+00 : f32
    %14 = vector.broadcast %cst_8 : f32 to vector<1024x1xf32>
    %15 = arith.maximumf %13, %14 : vector<1024x1xf32>
    %16 = math.absf %8 : vector<1024x1xf32>
    %cst_9 = arith.constant 0.000000e+00 : f32
    %17 = vector.broadcast %cst_9 : f32 to vector<1024x1xf32>
    %18 = arith.subf %17, %16 : vector<1024x1xf32>
    %19 = math.exp %18 : vector<1024x1xf32>
    %20 = math.log1p %19 : vector<1024x1xf32>
    %21 = arith.addf %15, %20 : vector<1024x1xf32>
    %cst_10 = arith.constant 0.000000e+00 : f32
    %22 = vector.broadcast %cst_10 : f32 to vector<1024x1xf32>
    %23 = arith.subf %22, %21 : vector<1024x1xf32>
    %cst_11 = arith.constant 0.000000e+00 : f32
    %24 = vector.broadcast %cst_11 : f32 to vector<1024x1xf32>
    %25 = arith.subf %24, %11 : vector<1024x1xf32>
    %cst_12 = arith.constant 0.000000e+00 : f32
    %26 = vector.broadcast %cst_12 : f32 to vector<1024x1xf32>
    %27 = arith.subf %26, %25 : vector<1024x1xf32>
    %cst_13 = arith.constant 0.000000e+00 : f32
    %28 = vector.broadcast %cst_13 : f32 to vector<1024x1xf32>
    %29 = arith.maximumf %27, %28 : vector<1024x1xf32>
    %30 = math.absf %25 : vector<1024x1xf32>
    %cst_14 = arith.constant 0.000000e+00 : f32
    %31 = vector.broadcast %cst_14 : f32 to vector<1024x1xf32>
    %32 = arith.subf %31, %30 : vector<1024x1xf32>
    %33 = math.exp %32 : vector<1024x1xf32>
    %34 = math.log1p %33 : vector<1024x1xf32>
    %35 = arith.addf %29, %34 : vector<1024x1xf32>
    %cst_15 = arith.constant 0.000000e+00 : f32
    %36 = vector.broadcast %cst_15 : f32 to vector<1024x1xf32>
    %37 = arith.subf %36, %35 : vector<1024x1xf32>
    %38 = arith.addf %23, %37 : vector<1024x1xf32>
    %c1_i32 = arith.constant 1 : i32
    %39 = arith.muli %arg0, %c1_i32 : i32
    %40 = arith.addi %39, %arg1 : i32
    %c1024_i32 = arith.constant 1024 : i32
    %41 = arith.muli %40, %c1024_i32 : i32
    %42 = tpu.iota {dimensions = array<i32: 0>} : vector<1024x1xi32>
    %43 = vector.broadcast %41 : i32 to vector<1024x1xi32>
    %44 = arith.addi %43, %42 : vector<1024x1xi32>
    %c8_i32 = arith.constant 8 : i32
    %45 = vector.broadcast %c8_i32 : i32 to vector<1024x1xi32>
    %46 = arith.cmpi slt, %44, %45 : vector<1024x1xi32>
    %cst_16 = arith.constant 0.000000e+00 : f32
    %47 = vector.broadcast %cst_16 : f32 to vector<1024x1xf32>
    %48 = arith.select %46, %38, %47 : vector<1024x1xi1>, vector<1024x1xf32>
    %c0_17 = arith.constant 0 : index
    %c0_18 = arith.constant 0 : index
    %49 = vector.load %arg6[%c0_17, %c0_18] : memref<1024x1xf32, #tpu.memory_space<vmem>>, vector<1024x1xf32>
    %50 = arith.addf %49, %48 : vector<1024x1xf32>
    %c0_19 = arith.constant 0 : index
    %c0_20 = arith.constant 0 : index
    %51 = vector.load %arg6[%c0_19, %c0_20] : memref<1024x1xf32, #tpu.memory_space<vmem>>, vector<1024x1xf32>
    tpu.vector_store %arg6[%c0_19, %c0_20], %50 {strides = array<i32>} : memref<1024x1xf32, #tpu.memory_space<vmem>>, vector<1024x1xf32>,
    %c0_i32_21 = arith.constant 0 : i32
    %52 = arith.cmpi eq, %arg1, %c0_i32_21 : i32
    %53 = arith.extui %52 : i1 to i32
    %c0_i32_22 = arith.constant 0 : i32
    %54 = arith.cmpi ne, %53, %c0_i32_22 : i32
    scf.if %54 {
      %c0_23 = arith.constant 0 : index
      %c0_24 = arith.constant 0 : index
      %55 = vector.load %arg6[%c0_23, %c0_24] : memref<1024x1xf32, #tpu.memory_space<vmem>>, vector<1024x1xf32>
      %56 = vector.shape_cast %55 : vector<1024x1xf32> to vector<1x1024x1xf32>
      %cst_25 = arith.constant dense<0.000000e+00> : vector<1xf32>
      %57 = vector.multi_reduction <add>, %56, %cst_25 [1, 2] : vector<1x1024x1xf32> to vector<1xf32>
      %58 = vector.shape_cast %57 : vector<1xf32> to vector<1x1x1xf32>
      %59 = vector.extract %58[0, 0, 0] : f32 from vector<1x1x1xf32>
      %60 = vector.broadcast %59 : f32 to vector<8x128xf32>
      %c0_26 = arith.constant 0 : index
      %c0_27 = arith.constant 0 : index
      %61 = vector.load %arg5[%c0_26, %c0_27] : memref<8x128xf32, #tpu.memory_space<vmem>>, vector<8x128xf32>
      tpu.vector_store %arg5[%c0_26, %c0_27], %60 {strides = array<i32>} : memref<8x128xf32, #tpu.memory_space<vmem>>, vector<8x128xf32>,
    } else {
    }
    return
  }
  func.func @transform_0(%arg0: i32, %arg1: i32) -> (i32, i32) {
    %c1_i32 = arith.constant 1 : i32
    %0 = arith.muli %arg0, %c1_i32 : i32
    %1 = arith.addi %0, %arg1 : i32
    %c0_i32 = arith.constant 0 : i32
    %c0_i32_0 = arith.constant 0 : i32
    return %1, %c0_i32 : i32, i32
  }
  func.func @transform_1(%arg0: i32, %arg1: i32) -> (i32, i32) {
    %c1_i32 = arith.constant 1 : i32
    %0 = arith.muli %arg0, %c1_i32 : i32
    %1 = arith.addi %0, %arg1 : i32
    %c0_i32 = arith.constant 0 : i32
    %c0_i32_0 = arith.constant 0 : i32
    return %1, %c0_i32 : i32, i32
  }
  func.func @transform_2(%arg0: i32, %arg1: i32) -> (i32, i32) {
    %c1_i32 = arith.constant 1 : i32
    %0 = arith.muli %arg0, %c1_i32 : i32
    %1 = arith.addi %0, %arg1 : i32
    %c0_i32 = arith.constant 0 : i32
    %c0_i32_0 = arith.constant 0 : i32
    return %1, %c0_i32 : i32, i32
  }
  func.func @transform_3(%arg0: i32, %arg1: i32) -> (i32, i32) {
    %c0_i32 = arith.constant 0 : i32
    %c0_i32_0 = arith.constant 0 : i32
    return %arg0, %c0_i32 : i32, i32
  }
}

</mosaic_0001>

<llo_original>
// kernel: tpu_custom_call.1
$region0: #{tpu_custom_call.1}
  #allocation0 [shape = 'u32[]', space=smem, size = 0x4, offset = 0x4, fixed_abs, tag = 'smem constant byte address 0x4 - core index']
  #allocation1 [shape = 'u32[72,128]{1,0:T(1,128)}', space=vmem, size = 0x9000, scoped, tag = 'internal scratch']
  #allocation2 [shape = 'f32[1024,1]{1,0:T(8,128)}', space=vmem, size = 0x80000, scoped, tag = 'scratch operand']
  %s0 = inlined_call_operand.vmem [shape: f32[2048,32], index: 0, kind: input, shape index: {}]
  %s1 = inlined_call_operand.vmem [shape: f32[2048,32], index: 1, kind: input, shape index: {}]
  %s2 = inlined_call_operand.vmem [shape: f32[2048,32], index: 2, kind: input, shape index: {}]
  %s3 = inlined_call_operand.hbm [shape: f32[16,128], index: 3, kind: output, shape index: {}]
  %s4 = sld [smem:[#allocation0]]
  $region53: #{tpu_custom_call.1} parent=0
    _
  %s6 = ssub.s32 1, %s4
  %s7 = scalar_select 0, %s6, %s4
  $region1: #{tpu_custom_call.1} parent=0
    #allocation3 [shape = 'u8[8192]{0}', space=vmem, size = 0x2000, scoped, tag = 'output window, operand 0']
    #allocation4 [shape = 's32[2]{0}', space=sflag, size = 0x8, scoped, tag = 'scoped memory for tpu_custom_call.1']
    %8 = vsyncpa [#allocation4], 0
    %s9 = scalar_lea.sflag [#allocation4], 1
    %10 = vsyncpa %s9, 0
    loop: start=0, step=1, limit=4
    $region2: #{tpu_custom_call.1} parent=1 // loop_pre_header
      _
    $region3: #{tpu_custom_call.1} parent=1 // loop_header
      %s12 = sphi 0, %s16
      %p13 = scmp.ge.s32.totalorder %s12, 4
      %s19 = sphi 0, %s31
      %s20 = sphi 0, %s27
      %s21 = sphi 0, %s19
      %s22 = sphi 0, %s20
      %s23 = sphi 0, %s21
      %s24 = sphi 0, %s22
      %s36 = sphi 0, %s38
      %s39 = sphi 0, %s36
      %s40 = sphi 0, %s39
      %s56 = sphi 0, %s40
      %s64 = sphi 0, %s66
      %s67 = sphi 0, %s64
      %s68 = sphi 0, %s67
      %s84 = sphi 0, %s68
      %s92 = sphi 0, %s94
      %s95 = sphi 0, %s92
      %s96 = sphi 0, %s95
      %s112 = sphi 0, %s96
      %s118 = sphi 0, %s120
      %s121 = sphi 0, %s118
      %s122 = sphi 0, %s121
      %s138 = sphi 0, %s122
    $region4: #{tpu_custom_call.1} parent=1 // loop_header_branch
      %15 = sbr.rel (%p13) target = $region8
    $region5: #{tpu_custom_call.1} parent=1 // loop_body
      %s17 = ssub.s32 %s12, 1
      %s18 = ssub.s32 %s12, 2
      %s25 = sadd.s32 1, %s20
      %p26 = scmp.ge.s32.totalorder %s25, 1
      %s27 = scalar_select %p26, 0, %s25
      %s28 = sadd.s32 1, %s19
      %s29 = scalar_select %p26, %s28, %s19
      %p30 = scmp.ge.s32.totalorder %s29, 2
      %s31 = scalar_select %p30, 0, %s29
      %s32 = sadd.s32 %s19, %s20
      %s33 = sadd.s32 %s31, %s27
      %s34 = ssub.s32 %s32, %s33
      %p35 = scmp.eq.s32.totalorder %s34, 0
      %s37 = sadd.s32 %s36, 1
      %s38 = scalar_select %p35, %s36, %s37
      %p41 = pneg %p35
      %p42 = scmp.eq.s32.totalorder %s12, 1
      %p43 = por %p41, %p42
      %p44 = scmp.ne.s32.totalorder %s36, %s39
      %p45 = scmp.eq.s32.totalorder %s12, 0
      %p46 = por %p44, %p45
      %p47 = scmp.ne.s32.totalorder %s36, %s39
      %p48 = scmp.eq.s32.totalorder %s17, 1
      %p49 = por %p47, %p48
      %p50 = scmp.ne.s32.totalorder %s39, %s40
      %p51 = scmp.eq.s32.totalorder %s17, 0
      %p52 = por %p50, %p51
      %p53 = scmp.ne.s32.totalorder %s39, %s40
      %p54 = scmp.eq.s32.totalorder %s18, 1
      %p55 = por %p53, %p54
      %p57 = scmp.ne.s32.totalorder %s40, %s56
      %p58 = scmp.eq.s32.totalorder %s18, 0
      %p59 = por %p57, %p58
      %s60 = sadd.s32 %s19, %s20
      %s61 = sadd.s32 %s31, %s27
      %s62 = ssub.s32 %s60, %s61
      %p63 = scmp.eq.s32.totalorder %s62, 0
      %s65 = sadd.s32 %s64, 1
      %s66 = scalar_select %p63, %s64, %s65
      %p69 = pneg %p63
      %p70 = scmp.eq.s32.totalorder %s12, 1
      %p71 = por %p69, %p70
      %p72 = scmp.ne.s32.totalorder %s64, %s67
      %p73 = scmp.eq.s32.totalorder %s12, 0
      %p74 = por %p72, %p73
      %p75 = scmp.ne.s32.totalorder %s64, %s67
      %p76 = scmp.eq.s32.totalorder %s17, 1
      %p77 = por %p75, %p76
      %p78 = scmp.ne.s32.totalorder %s67, %s68
      %p79 = scmp.eq.s32.totalorder %s17, 0
      %p80 = por %p78, %p79
      %p81 = scmp.ne.s32.totalorder %s67, %s68
      %p82 = scmp.eq.s32.totalorder %s18, 1
      %p83 = por %p81, %p82
      %p85 = scmp.ne.s32.totalorder %s68, %s84
      %p86 = scmp.eq.s32.totalorder %s18, 0
      %p87 = por %p85, %p86
      %s88 = sadd.s32 %s19, %s20
      %s89 = sadd.s32 %s31, %s27
      %s90 = ssub.s32 %s88, %s89
      %p91 = scmp.eq.s32.totalorder %s90, 0
      %s93 = sadd.s32 %s92, 1
      %s94 = scalar_select %p91, %s92, %s93
      %p97 = pneg %p91
      %p98 = scmp.eq.s32.totalorder %s12, 1
      %p99 = por %p97, %p98
      %p100 = scmp.ne.s32.totalorder %s92, %s95
      %p101 = scmp.eq.s32.totalorder %s12, 0
      %p102 = por %p100, %p101
      %p103 = scmp.ne.s32.totalorder %s92, %s95
      %p104 = scmp.eq.s32.totalorder %s17, 1
      %p105 = por %p103, %p104
      %p106 = scmp.ne.s32.totalorder %s95, %s96
      %p107 = scmp.eq.s32.totalorder %s17, 0
      %p108 = por %p106, %p107
      %p109 = scmp.ne.s32.totalorder %s95, %s96
      %p110 = scmp.eq.s32.totalorder %s18, 1
      %p111 = por %p109, %p110
      %p113 = scmp.ne.s32.totalorder %s96, %s112
      %p114 = scmp.eq.s32.totalorder %s18, 0
      %p115 = por %p113, %p114
      %s116 = ssub.s32 %s19, %s31
      %p117 = scmp.eq.s32.totalorder %s116, 0
      %s119 = sadd.s32 %s118, 1
      %s120 = scalar_select %p117, %s118, %s119
      %p123 = pneg %p117
      %p124 = scmp.eq.s32.totalorder %s12, 1
      %p125 = por %p123, %p124
      %p126 = scmp.ne.s32.totalorder %s118, %s121
      %p127 = scmp.eq.s32.totalorder %s12, 0
      %p128 = por %p126, %p127
      %p129 = scmp.ne.s32.totalorder %s118, %s121
      %p130 = scmp.eq.s32.totalorder %s17, 1
      %p131 = por %p129, %p130
      %p132 = scmp.ne.s32.totalorder %s121, %s122
      %p133 = scmp.eq.s32.totalorder %s17, 0
      %p134 = por %p132, %p133
      %p135 = scmp.ne.s32.totalorder %s121, %s122
      %p136 = scmp.eq.s32.totalorder %s18, 1
      %p137 = por %p135, %p136
      %p139 = scmp.ne.s32.totalorder %s122, %s138
      %p140 = scmp.eq.s32.totalorder %s18, 0
      %p141 = por %p139, %p140
      %p142 = scmp.le.s32.totalorder 1, %s12
      %p143 = scmp.lt.s32.totalorder %s12, 3
      %p144 = pnand %p142, %p143
      %p145 = pneg %p144
      // Predicated region
      $region9: #{tpu_custom_call.1} parent=5 // pred_check
        _
      $region10: #{tpu_custom_call.1} parent=5 // pred_check_branch
        %147 = sbr.rel (%p144) target = $region12
      $region11: #{tpu_custom_call.1} parent=5 // pred_region
        %s148 = ssub.s32 %s12, 1
      $region12: #{tpu_custom_call.1} parent=5 // pred_fallthru
        _
      %p149 = scmp.lt.s32.totalorder %s12, 2
      // Predicated region
      $region13: #{tpu_custom_call.1} parent=5 // pred_check
        %p150 = pneg %p149
      $region14: #{tpu_custom_call.1} parent=5 // pred_check_branch
        %152 = sbr.rel (%p150) target = $region16
      $region15: #{tpu_custom_call.1} parent=5 // pred_region
        // Predicated region
        $region17: #{tpu_custom_call.1} parent=15 // pred_check
          %p153 = pneg %p46
        $region18: #{tpu_custom_call.1} parent=15 // pred_check_branch
          %155 = sbr.rel (%p153) target = $region20
        $region19: #{tpu_custom_call.1} parent=15 // pred_region
          %s156 = sadd.s32 %s19, %s20
          %s157 = smul.u32 128, %s156
          %p158 = scmp.lt.s32.totalorder %s157, 255
          %s159 = scalar_select %p158, %s157, 255
          %s160 = smul.addr %s159, 8
          %s161 = scalar_lea.vmem %s0, %s160
          %s162 = sadd.s32 %s19, %s20
          %s163 = smul.u32 128, %s162
        $region20: #{tpu_custom_call.1} parent=15 // pred_fallthru
          _
        // Predicated region
        $region21: #{tpu_custom_call.1} parent=15 // pred_check
          %p164 = pneg %p74
        $region22: #{tpu_custom_call.1} parent=15 // pred_check_branch
          %166 = sbr.rel (%p164) target = $region24
        $region23: #{tpu_custom_call.1} parent=15 // pred_region
          %s167 = sadd.s32 %s19, %s20
          %s168 = smul.u32 128, %s167
          %p169 = scmp.lt.s32.totalorder %s168, 255
          %s170 = scalar_select %p169, %s168, 255
          %s171 = smul.addr %s170, 8
          %s172 = scalar_lea.vmem %s1, %s171
          %s173 = sadd.s32 %s19, %s20
          %s174 = smul.u32 128, %s173
        $region24: #{tpu_custom_call.1} parent=15 // pred_fallthru
          _
        // Predicated region
        $region25: #{tpu_custom_call.1} parent=15 // pred_check
          %p175 = pneg %p102
        $region26: #{tpu_custom_call.1} parent=15 // pred_check_branch
          %177 = sbr.rel (%p175) target = $region28
        $region27: #{tpu_custom_call.1} parent=15 // pred_region
          %s178 = sadd.s32 %s19, %s20
          %s179 = smul.u32 128, %s178
          %p180 = scmp.lt.s32.totalorder %s179, 255
          %s181 = scalar_select %p180, %s179, 255
          %s182 = smul.addr %s181, 8
          %s183 = scalar_lea.vmem %s2, %s182
          %s184 = sadd.s32 %s19, %s20
          %s185 = smul.u32 128, %s184
        $region28: #{tpu_custom_call.1} parent=15 // pred_fallthru
          _
      $region16: #{tpu_custom_call.1} parent=5 // pred_fallthru
        _
      %p186 = scmp.le.s32.totalorder 1, %s12
      %p187 = scmp.lt.s32.totalorder %s12, 3
      %p188 = pnand %p186, %p187
      %p189 = pneg %p188
      // Predicated region
      $region29: #{tpu_custom_call.1} parent=5 // pred_check
        _
      $region30: #{tpu_custom_call.1} parent=5 // pred_check_branch
        %191 = sbr.rel (%p188) target = $region32
      $region31: #{tpu_custom_call.1} parent=5 // pred_region
        %s192 = ssub.s32 %s12, 1
        %s193 = sadd.s32 %s21, %s22
        %s194 = smul.u32 128, %s193
        %p195 = scmp.lt.s32.totalorder %s194, 255
        %s196 = scalar_select %p195, %s194, 255
        %s197 = smul.addr %s196, 8
        %s198 = scalar_lea.vmem %s0, %s197
        %p199 = pneg %p52
        %p200 = pneg %p49
        %s201 = sadd.s32 %s21, %s22
        %s202 = smul.u32 128, %s201
        %p203 = scmp.lt.s32.totalorder %s202, 255
        %s204 = scalar_select %p203, %s202, 255
        %s205 = smul.addr %s204, 8
        %s206 = scalar_lea.vmem %s1, %s205
        %p207 = pneg %p80
        %p208 = pneg %p77
        %s209 = sadd.s32 %s21, %s22
        %s210 = smul.u32 128, %s209
        %p211 = scmp.lt.s32.totalorder %s210, 255
        %s212 = scalar_select %p211, %s210, 255
        %s213 = smul.addr %s212, 8
        %s214 = scalar_lea.vmem %s2, %s213
        %p215 = pneg %p108
        %p216 = pneg %p105
        %p217 = pneg %p134
        %p218 = pneg %p131
        %s219 = sand.u32 %s121, 1
        %s220 = scalar_lea.sflag [#allocation4], %s219
        %s221 = sand.u32 %s121, 1
        %s222 = smul.addr %s221, 8
        %s223 = scalar_lea.vmem [#allocation3], %s222
        %s224 = sadd.s32 %s21, %s22
        %s225 = smul.u32 128, %s224
        %p226 = scmp.lt.s32.totalorder %s225, 255
        %s227 = scalar_select %p226, %s225, 255
        %s228 = smul.addr %s227, 8
        %s229 = scalar_lea.vmem %s0, %s228
        %s230 = sadd.s32 %s21, %s22
        %s231 = smul.u32 128, %s230
        %s232 = sadd.s32 %s21, %s22
        %s233 = smul.u32 128, %s232
        %p234 = scmp.lt.s32.totalorder %s233, 255
        %s235 = scalar_select %p234, %s233, 255
        %s236 = smul.addr %s235, 8
        %s237 = scalar_lea.vmem %s1, %s236
        %s238 = sadd.s32 %s21, %s22
        %s239 = smul.u32 128, %s238
        %s240 = sadd.s32 %s21, %s22
        %s241 = smul.u32 128, %s240
        %p242 = scmp.lt.s32.totalorder %s241, 255
        %s243 = scalar_select %p242, %s241, 255
        %s244 = smul.addr %s243, 8
        %s245 = scalar_lea.vmem %s2, %s244
        %s246 = sadd.s32 %s21, %s22
        %s247 = smul.u32 128, %s246
        %p248 = scmp.eq.s32.totalorder %s22, 0
        // Predicated region
        $region33: #{tpu_custom_call.1} parent=31 // pred_check
          %p249 = pneg %p248
        $region34: #{tpu_custom_call.1} parent=31 // pred_check_branch
          %251 = sbr.rel (%p249) target = $region36
        $region35: #{tpu_custom_call.1} parent=31 // pred_region
          %vm252 = vcmask 7168
          %253 = vst.msk [vmem:[#allocation2] sm:$0xff] %vm252, 0.0
          %254 = vst.msk [vmem:[#allocation2 + $0x8] sm:$0xff] %vm252, 0.0
          %255 = vst.msk [vmem:[#allocation2 + $0x10] sm:$0xff] %vm252, 0.0
          %256 = vst.msk [vmem:[#allocation2 + $0x18] sm:$0xff] %vm252, 0.0
          %257 = vst.msk [vmem:[#allocation2 + $0x20] sm:$0xff] %vm252, 0.0
          %258 = vst.msk [vmem:[#allocation2 + $0x28] sm:$0xff] %vm252, 0.0
          %259 = vst.msk [vmem:[#allocation2 + $0x30] sm:$0xff] %vm252, 0.0
          %260 = vst.msk [vmem:[#allocation2 + $0x38] sm:$0xff] %vm252, 0.0
          %261 = vst.msk [vmem:[#allocation2 + $0x40] sm:$0xff] %vm252, 0.0
          %262 = vst.msk [vmem:[#allocation2 + $0x48] sm:$0xff] %vm252, 0.0
          %263 = vst.msk [vmem:[#allocation2 + $0x50] sm:$0xff] %vm252, 0.0
          %264 = vst.msk [vmem:[#allocation2 + $0x58] sm:$0xff] %vm252, 0.0
          %265 = vst.msk [vmem:[#allocation2 + $0x60] sm:$0xff] %vm252, 0.0
          %266 = vst.msk [vmem:[#allocation2 + $0x68] sm:$0xff] %vm252, 0.0
          %267 = vst.msk [vmem:[#allocation2 + $0x70] sm:$0xff] %vm252, 0.0
          %268 = vst.msk [vmem:[#allocation2 + $0x78] sm:$0xff] %vm252, 0.0
          %269 = vst.msk [vmem:[#allocation2 + $0x80] sm:$0xff] %vm252, 0.0
          %270 = vst.msk [vmem:[#allocation2 + $0x88] sm:$0xff] %vm252, 0.0
          %271 = vst.msk [vmem:[#allocation2 + $0x90] sm:$0xff] %vm252, 0.0
          %272 = vst.msk [vmem:[#allocation2 + $0x98] sm:$0xff] %vm252, 0.0
          %273 = vst.msk [vmem:[#allocation2 + $0xa0] sm:$0xff] %vm252, 0.0
          %274 = vst.msk [vmem:[#allocation2 + $0xa8] sm:$0xff] %vm252, 0.0
          %275 = vst.msk [vmem:[#allocation2 + $0xb0] sm:$0xff] %vm252, 0.0
          %276 = vst.msk [vmem:[#allocation2 + $0xb8] sm:$0xff] %vm252, 0.0
          %277 = vst.msk [vmem:[#allocation2 + $0xc0] sm:$0xff] %vm252, 0.0
          %278 = vst.msk [vmem:[#allocation2 + $0xc8] sm:$0xff] %vm252, 0.0
          %279 = vst.msk [vmem:[#allocation2 + $0xd0] sm:$0xff] %vm252, 0.0
          %280 = vst.msk [vmem:[#allocation2 + $0xd8] sm:$0xff] %vm252, 0.0
          %281 = vst.msk [vmem:[#allocation2 + $0xe0] sm:$0xff] %vm252, 0.0
          %282 = vst.msk [vmem:[#allocation2 + $0xe8] sm:$0xff] %vm252, 0.0
          %283 = vst.msk [vmem:[#allocation2 + $0xf0] sm:$0xff] %vm252, 0.0
          %284 = vst.msk [vmem:[#allocation2 + $0xf8] sm:$0xff] %vm252, 0.0
          %285 = vst.msk [vmem:[#allocation2 + $0x100] sm:$0xff] %vm252, 0.0
          %286 = vst.msk [vmem:[#allocation2 + $0x108] sm:$0xff] %vm252, 0.0
          %287 = vst.msk [vmem:[#allocation2 + $0x110] sm:$0xff] %vm252, 0.0
          %288 = vst.msk [vmem:[#allocation2 + $0x118] sm:$0xff] %vm252, 0.0
          %289 = vst.msk [vmem:[#allocation2 + $0x120] sm:$0xff] %vm252, 0.0
          %290 = vst.msk [vmem:[#allocation2 + $0x128] sm:$0xff] %vm252, 0.0
          %291 = vst.msk [vmem:[#allocation2 + $0x130] sm:$0xff] %vm252, 0.0
          %292 = vst.msk [vmem:[#allocation2 + $0x138] sm:$0xff] %vm252, 0.0
          %293 = vst.msk [vmem:[#allocation2 + $0x140] sm:$0xff] %vm252, 0.0
          %294 = vst.msk [vmem:[#allocation2 + $0x148] sm:$0xff] %vm252, 0.0
          %295 = vst.msk [vmem:[#allocation2 + $0x150] sm:$0xff] %vm252, 0.0
          %296 = vst.msk [vmem:[#allocation2 + $0x158] sm:$0xff] %vm252, 0.0
          %297 = vst.msk [vmem:[#allocation2 + $0x160] sm:$0xff] %vm252, 0.0
          %298 = vst.msk [vmem:[#allocation2 + $0x168] sm:$0xff] %vm252, 0.0
          %299 = vst.msk [vmem:[#allocation2 + $0x170] sm:$0xff] %vm252, 0.0
          %300 = vst.msk [vmem:[#allocation2 + $0x178] sm:$0xff] %vm252, 0.0
          %301 = vst.msk [vmem:[#allocation2 + $0x180] sm:$0xff] %vm252, 0.0
          %302 = vst.msk [vmem:[#allocation2 + $0x188] sm:$0xff] %vm252, 0.0
          %303 = vst.msk [vmem:[#allocation2 + $0x190] sm:$0xff] %vm252, 0.0
          %304 = vst.msk [vmem:[#allocation2 + $0x198] sm:$0xff] %vm252, 0.0
          %305 = vst.msk [vmem:[#allocation2 + $0x1a0] sm:$0xff] %vm252, 0.0
          %306 = vst.msk [vmem:[#allocation2 + $0x1a8] sm:$0xff] %vm252, 0.0
          %307 = vst.msk [vmem:[#allocation2 + $0x1b0] sm:$0xff] %vm252, 0.0
          %308 = vst.msk [vmem:[#allocation2 + $0x1b8] sm:$0xff] %vm252, 0.0
          %309 = vst.msk [vmem:[#allocation2 + $0x1c0] sm:$0xff] %vm252, 0.0
          %310 = vst.msk [vmem:[#allocation2 + $0x1c8] sm:$0xff] %vm252, 0.0
          %311 = vst.msk [vmem:[#allocation2 + $0x1d0] sm:$0xff] %vm252, 0.0
          %312 = vst.msk [vmem:[#allocation2 + $0x1d8] sm:$0xff] %vm252, 0.0
          %313 = vst.msk [vmem:[#allocation2 + $0x1e0] sm:$0xff] %vm252, 0.0
          %314 = vst.msk [vmem:[#allocation2 + $0x1e8] sm:$0xff] %vm252, 0.0
          %315 = vst.msk [vmem:[#allocation2 + $0x1f0] sm:$0xff] %vm252, 0.0
          %316 = vst.msk [vmem:[#allocation2 + $0x1f8] sm:$0xff] %vm252, 0.0
          %317 = vst.msk [vmem:[#allocation2 + $0x200] sm:$0xff] %vm252, 0.0
          %318 = vst.msk [vmem:[#allocation2 + $0x208] sm:$0xff] %vm252, 0.0
          %319 = vst.msk [vmem:[#allocation2 + $0x210] sm:$0xff] %vm252, 0.0
          %320 = vst.msk [vmem:[#allocation2 + $0x218] sm:$0xff] %vm252, 0.0
          %321 = vst.msk [vmem:[#allocation2 + $0x220] sm:$0xff] %vm252, 0.0
          %322 = vst.msk [vmem:[#allocation2 + $0x228] sm:$0xff] %vm252, 0.0
          %323 = vst.msk [vmem:[#allocation2 + $0x230] sm:$0xff] %vm252, 0.0
          %324 = vst.msk [vmem:[#allocation2 + $0x238] sm:$0xff] %vm252, 0.0
          %325 = vst.msk [vmem:[#allocation2 + $0x240] sm:$0xff] %vm252, 0.0
          %326 = vst.msk [vmem:[#allocation2 + $0x248] sm:$0xff] %vm252, 0.0
          %327 = vst.msk [vmem:[#allocation2 + $0x250] sm:$0xff] %vm252, 0.0
          %328 = vst.msk [vmem:[#allocation2 + $0x258] sm:$0xff] %vm252, 0.0
          %329 = vst.msk [vmem:[#allocation2 + $0x260] sm:$0xff] %vm252, 0.0
          %330 = vst.msk [vmem:[#allocation2 + $0x268] sm:$0xff] %vm252, 0.0
          %331 = vst.msk [vmem:[#allocation2 + $0x270] sm:$0xff] %vm252, 0.0
          %332 = vst.msk [vmem:[#allocation2 + $0x278] sm:$0xff] %vm252, 0.0
          %333 = vst.msk [vmem:[#allocation2 + $0x280] sm:$0xff] %vm252, 0.0
          %334 = vst.msk [vmem:[#allocation2 + $0x288] sm:$0xff] %vm252, 0.0
          %335 = vst.msk [vmem:[#allocation2 + $0x290] sm:$0xff] %vm252, 0.0
          %336 = vst.msk [vmem:[#allocation2 + $0x298] sm:$0xff] %vm252, 0.0
          %337 = vst.msk [vmem:[#allocation2 + $0x2a0] sm:$0xff] %vm252, 0.0
          %338 = vst.msk [vmem:[#allocation2 + $0x2a8] sm:$0xff] %vm252, 0.0
          %339 = vst.msk [vmem:[#allocation2 + $0x2b0] sm:$0xff] %vm252, 0.0
          %340 = vst.msk [vmem:[#allocation2 + $0x2b8] sm:$0xff] %vm252, 0.0
          %341 = vst.msk [vmem:[#allocation2 + $0x2c0] sm:$0xff] %vm252, 0.0
          %342 = vst.msk [vmem:[#allocation2 + $0x2c8] sm:$0xff] %vm252, 0.0
          %343 = vst.msk [vmem:[#allocation2 + $0x2d0] sm:$0xff] %vm252, 0.0
          %344 = vst.msk [vmem:[#allocation2 + $0x2d8] sm:$0xff] %vm252, 0.0
          %345 = vst.msk [vmem:[#allocation2 + $0x2e0] sm:$0xff] %vm252, 0.0
          %346 = vst.msk [vmem:[#allocation2 + $0x2e8] sm:$0xff] %vm252, 0.0
          %347 = vst.msk [vmem:[#allocation2 + $0x2f0] sm:$0xff] %vm252, 0.0
          %348 = vst.msk [vmem:[#allocation2 + $0x2f8] sm:$0xff] %vm252, 0.0
          %349 = vst.msk [vmem:[#allocation2 + $0x300] sm:$0xff] %vm252, 0.0
          %350 = vst.msk [vmem:[#allocation2 + $0x308] sm:$0xff] %vm252, 0.0
          %351 = vst.msk [vmem:[#allocation2 + $0x310] sm:$0xff] %vm252, 0.0
          %352 = vst.msk [vmem:[#allocation2 + $0x318] sm:$0xff] %vm252, 0.0
          %353 = vst.msk [vmem:[#allocation2 + $0x320] sm:$0xff] %vm252, 0.0
          %354 = vst.msk [vmem:[#allocation2 + $0x328] sm:$0xff] %vm252, 0.0
          %355 = vst.msk [vmem:[#allocation2 + $0x330] sm:$0xff] %vm252, 0.0
          %356 = vst.msk [vmem:[#allocation2 + $0x338] sm:$0xff] %vm252, 0.0
          %357 = vst.msk [vmem:[#allocation2 + $0x340] sm:$0xff] %vm252, 0.0
          %358 = vst.msk [vmem:[#allocation2 + $0x348] sm:$0xff] %vm252, 0.0
          %359 = vst.msk [vmem:[#allocation2 + $0x350] sm:$0xff] %vm252, 0.0
          %360 = vst.msk [vmem:[#allocation2 + $0x358] sm:$0xff] %vm252, 0.0
          %361 = vst.msk [vmem:[#allocation2 + $0x360] sm:$0xff] %vm252, 0.0
          %362 = vst.msk [vmem:[#allocation2 + $0x368] sm:$0xff] %vm252, 0.0
          %363 = vst.msk [vmem:[#allocation2 + $0x370] sm:$0xff] %vm252, 0.0
          %364 = vst.msk [vmem:[#allocation2 + $0x378] sm:$0xff] %vm252, 0.0
          %365 = vst.msk [vmem:[#allocation2 + $0x380] sm:$0xff] %vm252, 0.0
          %366 = vst.msk [vmem:[#allocation2 + $0x388] sm:$0xff] %vm252, 0.0
          %367 = vst.msk [vmem:[#allocation2 + $0x390] sm:$0xff] %vm252, 0.0
          %368 = vst.msk [vmem:[#allocation2 + $0x398] sm:$0xff] %vm252, 0.0
          %369 = vst.msk [vmem:[#allocation2 + $0x3a0] sm:$0xff] %vm252, 0.0
          %370 = vst.msk [vmem:[#allocation2 + $0x3a8] sm:$0xff] %vm252, 0.0
          %371 = vst.msk [vmem:[#allocation2 + $0x3b0] sm:$0xff] %vm252, 0.0
          %372 = vst.msk [vmem:[#allocation2 + $0x3b8] sm:$0xff] %vm252, 0.0
          %373 = vst.msk [vmem:[#allocation2 + $0x3c0] sm:$0xff] %vm252, 0.0
          %374 = vst.msk [vmem:[#allocation2 + $0x3c8] sm:$0xff] %vm252, 0.0
          %375 = vst.msk [vmem:[#allocation2 + $0x3d0] sm:$0xff] %vm252, 0.0
          %376 = vst.msk [vmem:[#allocation2 + $0x3d8] sm:$0xff] %vm252, 0.0
          %377 = vst.msk [vmem:[#allocation2 + $0x3e0] sm:$0xff] %vm252, 0.0
          %378 = vst.msk [vmem:[#allocation2 + $0x3e8] sm:$0xff] %vm252, 0.0
          %379 = vst.msk [vmem:[#allocation2 + $0x3f0] sm:$0xff] %vm252, 0.0
          %380 = vst.msk [vmem:[#allocation2 + $0x3f8] sm:$0xff] %vm252, 0.0
        $region36: #{tpu_custom_call.1} parent=31 // pred_fallthru
          _
        %v381 = vld [vmem:[%s229] sm:$0xff]
        %v382 = vld [vmem:[%s229 + $0x8] sm:$0xff]
        %v383 = vld [vmem:[%s229 + $0x10] sm:$0xff]
        %v384 = vld [vmem:[%s229 + $0x18] sm:$0xff]
        %v385 = vld [vmem:[%s229 + $0x20] sm:$0xff]
        %v386 = vld [vmem:[%s229 + $0x28] sm:$0xff]
        %v387 = vld [vmem:[%s229 + $0x30] sm:$0xff]
        %v388 = vld [vmem:[%s229 + $0x38] sm:$0xff]
        %v389 = vld [vmem:[%s229 + $0x40] sm:$0xff]
        %v390 = vld [vmem:[%s229 + $0x48] sm:$0xff]
        %v391 = vld [vmem:[%s229 + $0x50] sm:$0xff]
        %v392 = vld [vmem:[%s229 + $0x58] sm:$0xff]
        %v393 = vld [vmem:[%s229 + $0x60] sm:$0xff]
        %v394 = vld [vmem:[%s229 + $0x68] sm:$0xff]
        %v395 = vld [vmem:[%s229 + $0x70] sm:$0xff]
        %v396 = vld [vmem:[%s229 + $0x78] sm:$0xff]
        %v397 = vld [vmem:[%s229 + $0x80] sm:$0xff]
        %v398 = vld [vmem:[%s229 + $0x88] sm:$0xff]
        %v399 = vld [vmem:[%s229 + $0x90] sm:$0xff]
        %v400 = vld [vmem:[%s229 + $0x98] sm:$0xff]
        %v401 = vld [vmem:[%s229 + $0xa0] sm:$0xff]
        %v402 = vld [vmem:[%s229 + $0xa8] sm:$0xff]
        %v403 = vld [vmem:[%s229 + $0xb0] sm:$0xff]
        %v404 = vld [vmem:[%s229 + $0xb8] sm:$0xff]
        %v405 = vld [vmem:[%s229 + $0xc0] sm:$0xff]
        %v406 = vld [vmem:[%s229 + $0xc8] sm:$0xff]
        %v407 = vld [vmem:[%s229 + $0xd0] sm:$0xff]
        %v408 = vld [vmem:[%s229 + $0xd8] sm:$0xff]
        %v409 = vld [vmem:[%s229 + $0xe0] sm:$0xff]
        %v410 = vld [vmem:[%s229 + $0xe8] sm:$0xff]
        %v411 = vld [vmem:[%s229 + $0xf0] sm:$0xff]
        %v412 = vld [vmem:[%s229 + $0xf8] sm:$0xff]
        %v413 = vld [vmem:[%s229 + $0x100] sm:$0xff]
        %v414 = vld [vmem:[%s229 + $0x108] sm:$0xff]
        %v415 = vld [vmem:[%s229 + $0x110] sm:$0xff]
        %v416 = vld [vmem:[%s229 + $0x118] sm:$0xff]
        %v417 = vld [vmem:[%s229 + $0x120] sm:$0xff]
        %v418 = vld [vmem:[%s229 + $0x128] sm:$0xff]
        %v419 = vld [vmem:[%s229 + $0x130] sm:$0xff]
        %v420 = vld [vmem:[%s229 + $0x138] sm:$0xff]
        %v421 = vld [vmem:[%s229 + $0x140] sm:$0xff]
        %v422 = vld [vmem:[%s229 + $0x148] sm:$0xff]
        %v423 = vld [vmem:[%s229 + $0x150] sm:$0xff]
        %v424 = vld [vmem:[%s229 + $0x158] sm:$0xff]
        %v425 = vld [vmem:[%s229 + $0x160] sm:$0xff]
        %v426 = vld [vmem:[%s229 + $0x168] sm:$0xff]
        %v427 = vld [vmem:[%s229 + $0x170] sm:$0xff]
        %v428 = vld [vmem:[%s229 + $0x178] sm:$0xff]
        %v429 = vld [vmem:[%s229 + $0x180] sm:$0xff]
        %v430 = vld [vmem:[%s229 + $0x188] sm:$0xff]
        %v431 = vld [vmem:[%s229 + $0x190] sm:$0xff]
        %v432 = vld [vmem:[%s229 + $0x198] sm:$0xff]
        %v433 = vld [vmem:[%s229 + $0x1a0] sm:$0xff]
        %v434 = vld [vmem:[%s229 + $0x1a8] sm:$0xff]
        %v435 = vld [vmem:[%s229 + $0x1b0] sm:$0xff]
        %v436 = vld [vmem:[%s229 + $0x1b8] sm:$0xff]
        %v437 = vld [vmem:[%s229 + $0x1c0] sm:$0xff]
        %v438 = vld [vmem:[%s229 + $0x1c8] sm:$0xff]
        %v439 = vld [vmem:[%s229 + $0x1d0] sm:$0xff]
        %v440 = vld [vmem:[%s229 + $0x1d8] sm:$0xff]
        %v441 = vld [vmem:[%s229 + $0x1e0] sm:$0xff]
        %v442 = vld [vmem:[%s229 + $0x1e8] sm:$0xff]
        %v443 = vld [vmem:[%s229 + $0x1f0] sm:$0xff]
        %v444 = vld [vmem:[%s229 + $0x1f8] sm:$0xff]
        %v445 = vld [vmem:[%s229 + $0x200] sm:$0xff]
        %v446 = vld [vmem:[%s229 + $0x208] sm:$0xff]
        %v447 = vld [vmem:[%s229 + $0x210] sm:$0xff]
        %v448 = vld [vmem:[%s229 + $0x218] sm:$0xff]
        %v449 = vld [vmem:[%s229 + $0x220] sm:$0xff]
        %v450 = vld [vmem:[%s229 + $0x228] sm:$0xff]
        %v451 = vld [vmem:[%s229 + $0x230] sm:$0xff]
        %v452 = vld [vmem:[%s229 + $0x238] sm:$0xff]
        %v453 = vld [vmem:[%s229 + $0x240] sm:$0xff]
        %v454 = vld [vmem:[%s229 + $0x248] sm:$0xff]
        %v455 = vld [vmem:[%s229 + $0x250] sm:$0xff]
        %v456 = vld [vmem:[%s229 + $0x258] sm:$0xff]
        %v457 = vld [vmem:[%s229 + $0x260] sm:$0xff]
        %v458 = vld [vmem:[%s229 + $0x268] sm:$0xff]
        %v459 = vld [vmem:[%s229 + $0x270] sm:$0xff]
        %v460 = vld [vmem:[%s229 + $0x278] sm:$0xff]
        %v461 = vld [vmem:[%s229 + $0x280] sm:$0xff]
        %v462 = vld [vmem:[%s229 + $0x288] sm:$0xff]
        %v463 = vld [vmem:[%s229 + $0x290] sm:$0xff]
        %v464 = vld [vmem:[%s229 + $0x298] sm:$0xff]
        %v465 = vld [vmem:[%s229 + $0x2a0] sm:$0xff]
        %v466 = vld [vmem:[%s229 + $0x2a8] sm:$0xff]
        %v467 = vld [vmem:[%s229 + $0x2b0] sm:$0xff]
        %v468 = vld [vmem:[%s229 + $0x2b8] sm:$0xff]
        %v469 = vld [vmem:[%s229 + $0x2c0] sm:$0xff]
        %v470 = vld [vmem:[%s229 + $0x2c8] sm:$0xff]
        %v471 = vld [vmem:[%s229 + $0x2d0] sm:$0xff]
        %v472 = vld [vmem:[%s229 + $0x2d8] sm:$0xff]
        %v473 = vld [vmem:[%s229 + $0x2e0] sm:$0xff]
        %v474 = vld [vmem:[%s229 + $0x2e8] sm:$0xff]
        %v475 = vld [vmem:[%s229 + $0x2f0] sm:$0xff]
        %v476 = vld [vmem:[%s229 + $0x2f8] sm:$0xff]
        %v477 = vld [vmem:[%s229 + $0x300] sm:$0xff]
        %v478 = vld [vmem:[%s229 + $0x308] sm:$0xff]
        %v479 = vld [vmem:[%s229 + $0x310] sm:$0xff]
        %v480 = vld [vmem:[%s229 + $0x318] sm:$0xff]
        %v481 = vld [vmem:[%s229 + $0x320] sm:$0xff]
        %v482 = vld [vmem:[%s229 + $0x328] sm:$0xff]
        %v483 = vld [vmem:[%s229 + $0x330] sm:$0xff]
        %v484 = vld [vmem:[%s229 + $0x338] sm:$0xff]
        %v485 = vld [vmem:[%s229 + $0x340] sm:$0xff]
        %v486 = vld [vmem:[%s229 + $0x348] sm:$0xff]
        %v487 = vld [vmem:[%s229 + $0x350] sm:$0xff]
        %v488 = vld [vmem:[%s229 + $0x358] sm:$0xff]
        %v489 = vld [vmem:[%s229 + $0x360] sm:$0xff]
        %v490 = vld [vmem:[%s229 + $0x368] sm:$0xff]
        %v491 = vld [vmem:[%s229 + $0x370] sm:$0xff]
        %v492 = vld [vmem:[%s229 + $0x378] sm:$0xff]
        %v493 = vld [vmem:[%s229 + $0x380] sm:$0xff]
        %v494 = vld [vmem:[%s229 + $0x388] sm:$0xff]
        %v495 = vld [vmem:[%s229 + $0x390] sm:$0xff]
        %v496 = vld [vmem:[%s229 + $0x398] sm:$0xff]
        %v497 = vld [vmem:[%s229 + $0x3a0] sm:$0xff]
        %v498 = vld [vmem:[%s229 + $0x3a8] sm:$0xff]
        %v499 = vld [vmem:[%s229 + $0x3b0] sm:$0xff]
        %v500 = vld [vmem:[%s229 + $0x3b8] sm:$0xff]
        %v501 = vld [vmem:[%s229 + $0x3c0] sm:$0xff]
        %v502 = vld [vmem:[%s229 + $0x3c8] sm:$0xff]
        %v503 = vld [vmem:[%s229 + $0x3d0] sm:$0xff]
        %v504 = vld [vmem:[%s229 + $0x3d8] sm:$0xff]
        %v505 = vld [vmem:[%s229 + $0x3e0] sm:$0xff]
        %v506 = vld [vmem:[%s229 + $0x3e8] sm:$0xff]
        %v507 = vld [vmem:[%s229 + $0x3f0] sm:$0xff]
        %v508 = vld [vmem:[%s229 + $0x3f8] sm:$0xff]
        %v509 = vld [vmem:[%s237] sm:$0xff]
        %v510 = vld [vmem:[%s237 + $0x8] sm:$0xff]
        %v511 = vld [vmem:[%s237 + $0x10] sm:$0xff]
        %v512 = vld [vmem:[%s237 + $0x18] sm:$0xff]
        %v513 = vld [vmem:[%s237 + $0x20] sm:$0xff]
        %v514 = vld [vmem:[%s237 + $0x28] sm:$0xff]
        %v515 = vld [vmem:[%s237 + $0x30] sm:$0xff]
        %v516 = vld [vmem:[%s237 + $0x38] sm:$0xff]
        %v517 = vld [vmem:[%s237 + $0x40] sm:$0xff]
        %v518 = vld [vmem:[%s237 + $0x48] sm:$0xff]
        %v519 = vld [vmem:[%s237 + $0x50] sm:$0xff]
        %v520 = vld [vmem:[%s237 + $0x58] sm:$0xff]
        %v521 = vld [vmem:[%s237 + $0x60] sm:$0xff]
        %v522 = vld [vmem:[%s237 + $0x68] sm:$0xff]
        %v523 = vld [vmem:[%s237 + $0x70] sm:$0xff]
        %v524 = vld [vmem:[%s237 + $0x78] sm:$0xff]
        %v525 = vld [vmem:[%s237 + $0x80] sm:$0xff]
        %v526 = vld [vmem:[%s237 + $0x88] sm:$0xff]
        %v527 = vld [vmem:[%s237 + $0x90] sm:$0xff]
        %v528 = vld [vmem:[%s237 + $0x98] sm:$0xff]
        %v529 = vld [vmem:[%s237 + $0xa0] sm:$0xff]
        %v530 = vld [vmem:[%s237 + $0xa8] sm:$0xff]
        %v531 = vld [vmem:[%s237 + $0xb0] sm:$0xff]
        %v532 = vld [vmem:[%s237 + $0xb8] sm:$0xff]
        %v533 = vld [vmem:[%s237 + $0xc0] sm:$0xff]
        %v534 = vld [vmem:[%s237 + $0xc8] sm:$0xff]
        %v535 = vld [vmem:[%s237 + $0xd0] sm:$0xff]
        %v536 = vld [vmem:[%s237 + $0xd8] sm:$0xff]
        %v537 = vld [vmem:[%s237 + $0xe0] sm:$0xff]
        %v538 = vld [vmem:[%s237 + $0xe8] sm:$0xff]
        %v539 = vld [vmem:[%s237 + $0xf0] sm:$0xff]
        %v540 = vld [vmem:[%s237 + $0xf8] sm:$0xff]
        %v541 = vld [vmem:[%s237 + $0x100] sm:$0xff]
        %v542 = vld [vmem:[%s237 + $0x108] sm:$0xff]
        %v543 = vld [vmem:[%s237 + $0x110] sm:$0xff]
        %v544 = vld [vmem:[%s237 + $0x118] sm:$0xff]
        %v545 = vld [vmem:[%s237 + $0x120] sm:$0xff]
        %v546 = vld [vmem:[%s237 + $0x128] sm:$0xff]
        %v547 = vld [vmem:[%s237 + $0x130] sm:$0xff]
        %v548 = vld [vmem:[%s237 + $0x138] sm:$0xff]
        %v549 = vld [vmem:[%s237 + $0x140] sm:$0xff]
        %v550 = vld [vmem:[%s237 + $0x148] sm:$0xff]
        %v551 = vld [vmem:[%s237 + $0x150] sm:$0xff]
        %v552 = vld [vmem:[%s237 + $0x158] sm:$0xff]
        %v553 = vld [vmem:[%s237 + $0x160] sm:$0xff]
        %v554 = vld [vmem:[%s237 + $0x168] sm:$0xff]
        %v555 = vld [vmem:[%s237 + $0x170] sm:$0xff]
        %v556 = vld [vmem:[%s237 + $0x178] sm:$0xff]
        %v557 = vld [vmem:[%s237 + $0x180] sm:$0xff]
        %v558 = vld [vmem:[%s237 + $0x188] sm:$0xff]
        %v559 = vld [vmem:[%s237 + $0x190] sm:$0xff]
        %v560 = vld [vmem:[%s237 + $0x198] sm:$0xff]
        %v561 = vld [vmem:[%s237 + $0x1a0] sm:$0xff]
        %v562 = vld [vmem:[%s237 + $0x1a8] sm:$0xff]
        %v563 = vld [vmem:[%s237 + $0x1b0] sm:$0xff]
        %v564 = vld [vmem:[%s237 + $0x1b8] sm:$0xff]
        %v565 = vld [vmem:[%s237 + $0x1c0] sm:$0xff]
        %v566 = vld [vmem:[%s237 + $0x1c8] sm:$0xff]
        %v567 = vld [vmem:[%s237 + $0x1d0] sm:$0xff]
        %v568 = vld [vmem:[%s237 + $0x1d8] sm:$0xff]
        %v569 = vld [vmem:[%s237 + $0x1e0] sm:$0xff]
        %v570 = vld [vmem:[%s237 + $0x1e8] sm:$0xff]
        %v571 = vld [vmem:[%s237 + $0x1f0] sm:$0xff]
        %v572 = vld [vmem:[%s237 + $0x1f8] sm:$0xff]
        %v573 = vld [vmem:[%s237 + $0x200] sm:$0xff]
        %v574 = vld [vmem:[%s237 + $0x208] sm:$0xff]
        %v575 = vld [vmem:[%s237 + $0x210] sm:$0xff]
        %v576 = vld [vmem:[%s237 + $0x218] sm:$0xff]
        %v577 = vld [vmem:[%s237 + $0x220] sm:$0xff]
        %v578 = vld [vmem:[%s237 + $0x228] sm:$0xff]
        %v579 = vld [vmem:[%s237 + $0x230] sm:$0xff]
        %v580 = vld [vmem:[%s237 + $0x238] sm:$0xff]
        %v581 = vld [vmem:[%s237 + $0x240] sm:$0xff]
        %v582 = vld [vmem:[%s237 + $0x248] sm:$0xff]
        %v583 = vld [vmem:[%s237 + $0x250] sm:$0xff]
        %v584 = vld [vmem:[%s237 + $0x258] sm:$0xff]
        %v585 = vld [vmem:[%s237 + $0x260] sm:$0xff]
        %v586 = vld [vmem:[%s237 + $0x268] sm:$0xff]
        %v587 = vld [vmem:[%s237 + $0x270] sm:$0xff]
        %v588 = vld [vmem:[%s237 + $0x278] sm:$0xff]
        %v589 = vld [vmem:[%s237 + $0x280] sm:$0xff]
        %v590 = vld [vmem:[%s237 + $0x288] sm:$0xff]
        %v591 = vld [vmem:[%s237 + $0x290] sm:$0xff]
        %v592 = vld [vmem:[%s237 + $0x298] sm:$0xff]
        %v593 = vld [vmem:[%s237 + $0x2a0] sm:$0xff]
        %v594 = vld [vmem:[%s237 + $0x2a8] sm:$0xff]
        %v595 = vld [vmem:[%s237 + $0x2b0] sm:$0xff]
        %v596 = vld [vmem:[%s237 + $0x2b8] sm:$0xff]
        %v597 = vld [vmem:[%s237 + $0x2c0] sm:$0xff]
        %v598 = vld [vmem:[%s237 + $0x2c8] sm:$0xff]
        %v599 = vld [vmem:[%s237 + $0x2d0] sm:$0xff]
        %v600 = vld [vmem:[%s237 + $0x2d8] sm:$0xff]
        %v601 = vld [vmem:[%s237 + $0x2e0] sm:$0xff]
        %v602 = vld [vmem:[%s237 + $0x2e8] sm:$0xff]
        %v603 = vld [vmem:[%s237 + $0x2f0] sm:$0xff]
        %v604 = vld [vmem:[%s237 + $0x2f8] sm:$0xff]
        %v605 = vld [vmem:[%s237 + $0x300] sm:$0xff]
        %v606 = vld [vmem:[%s237 + $0x308] sm:$0xff]
        %v607 = vld [vmem:[%s237 + $0x310] sm:$0xff]
        %v608 = vld [vmem:[%s237 + $0x318] sm:$0xff]
        %v609 = vld [vmem:[%s237 + $0x320] sm:$0xff]
        %v610 = vld [vmem:[%s237 + $0x328] sm:$0xff]
        %v611 = vld [vmem:[%s237 + $0x330] sm:$0xff]
        %v612 = vld [vmem:[%s237 + $0x338] sm:$0xff]
        %v613 = vld [vmem:[%s237 + $0x340] sm:$0xff]
        %v614 = vld [vmem:[%s237 + $0x348] sm:$0xff]
        %v615 = vld [vmem:[%s237 + $0x350] sm:$0xff]
        %v616 = vld [vmem:[%s237 + $0x358] sm:$0xff]
        %v617 = vld [vmem:[%s237 + $0x360] sm:$0xff]
        %v618 = vld [vmem:[%s237 + $0x368] sm:$0xff]
        %v619 = vld [vmem:[%s237 + $0x370] sm:$0xff]
        %v620 = vld [vmem:[%s237 + $0x378] sm:$0xff]
        %v621 = vld [vmem:[%s237 + $0x380] sm:$0xff]
        %v622 = vld [vmem:[%s237 + $0x388] sm:$0xff]
        %v623 = vld [vmem:[%s237 + $0x390] sm:$0xff]
        %v624 = vld [vmem:[%s237 + $0x398] sm:$0xff]
        %v625 = vld [vmem:[%s237 + $0x3a0] sm:$0xff]
        %v626 = vld [vmem:[%s237 + $0x3a8] sm:$0xff]
        %v627 = vld [vmem:[%s237 + $0x3b0] sm:$0xff]
        %v628 = vld [vmem:[%s237 + $0x3b8] sm:$0xff]
        %v629 = vld [vmem:[%s237 + $0x3c0] sm:$0xff]
        %v630 = vld [vmem:[%s237 + $0x3c8] sm:$0xff]
        %v631 = vld [vmem:[%s237 + $0x3d0] sm:$0xff]
        %v632 = vld [vmem:[%s237 + $0x3d8] sm:$0xff]
        %v633 = vld [vmem:[%s237 + $0x3e0] sm:$0xff]
        %v634 = vld [vmem:[%s237 + $0x3e8] sm:$0xff]
        %v635 = vld [vmem:[%s237 + $0x3f0] sm:$0xff]
        %v636 = vld [vmem:[%s237 + $0x3f8] sm:$0xff]
        %v637 = vld [vmem:[%s245] sm:$0xff]
        %v638 = vld [vmem:[%s245 + $0x8] sm:$0xff]
        %v639 = vld [vmem:[%s245 + $0x10] sm:$0xff]
        %v640 = vld [vmem:[%s245 + $0x18] sm:$0xff]
        %v641 = vld [vmem:[%s245 + $0x20] sm:$0xff]
        %v642 = vld [vmem:[%s245 + $0x28] sm:$0xff]
        %v643 = vld [vmem:[%s245 + $0x30] sm:$0xff]
        %v644 = vld [vmem:[%s245 + $0x38] sm:$0xff]
        %v645 = vld [vmem:[%s245 + $0x40] sm:$0xff]
        %v646 = vld [vmem:[%s245 + $0x48] sm:$0xff]
        %v647 = vld [vmem:[%s245 + $0x50] sm:$0xff]
        %v648 = vld [vmem:[%s245 + $0x58] sm:$0xff]
        %v649 = vld [vmem:[%s245 + $0x60] sm:$0xff]
        %v650 = vld [vmem:[%s245 + $0x68] sm:$0xff]
        %v651 = vld [vmem:[%s245 + $0x70] sm:$0xff]
        %v652 = vld [vmem:[%s245 + $0x78] sm:$0xff]
        %v653 = vld [vmem:[%s245 + $0x80] sm:$0xff]
        %v654 = vld [vmem:[%s245 + $0x88] sm:$0xff]
        %v655 = vld [vmem:[%s245 + $0x90] sm:$0xff]
        %v656 = vld [vmem:[%s245 + $0x98] sm:$0xff]
        %v657 = vld [vmem:[%s245 + $0xa0] sm:$0xff]
        %v658 = vld [vmem:[%s245 + $0xa8] sm:$0xff]
        %v659 = vld [vmem:[%s245 + $0xb0] sm:$0xff]
        %v660 = vld [vmem:[%s245 + $0xb8] sm:$0xff]
        %v661 = vld [vmem:[%s245 + $0xc0] sm:$0xff]
        %v662 = vld [vmem:[%s245 + $0xc8] sm:$0xff]
        %v663 = vld [vmem:[%s245 + $0xd0] sm:$0xff]
        %v664 = vld [vmem:[%s245 + $0xd8] sm:$0xff]
        %v665 = vld [vmem:[%s245 + $0xe0] sm:$0xff]
        %v666 = vld [vmem:[%s245 + $0xe8] sm:$0xff]
        %v667 = vld [vmem:[%s245 + $0xf0] sm:$0xff]
        %v668 = vld [vmem:[%s245 + $0xf8] sm:$0xff]
        %v669 = vld [vmem:[%s245 + $0x100] sm:$0xff]
        %v670 = vld [vmem:[%s245 + $0x108] sm:$0xff]
        %v671 = vld [vmem:[%s245 + $0x110] sm:$0xff]
        %v672 = vld [vmem:[%s245 + $0x118] sm:$0xff]
        %v673 = vld [vmem:[%s245 + $0x120] sm:$0xff]
        %v674 = vld [vmem:[%s245 + $0x128] sm:$0xff]
        %v675 = vld [vmem:[%s245 + $0x130] sm:$0xff]
        %v676 = vld [vmem:[%s245 + $0x138] sm:$0xff]
        %v677 = vld [vmem:[%s245 + $0x140] sm:$0xff]
        %v678 = vld [vmem:[%s245 + $0x148] sm:$0xff]
        %v679 = vld [vmem:[%s245 + $0x150] sm:$0xff]
        %v680 = vld [vmem:[%s245 + $0x158] sm:$0xff]
        %v681 = vld [vmem:[%s245 + $0x160] sm:$0xff]
        %v682 = vld [vmem:[%s245 + $0x168] sm:$0xff]
        %v683 = vld [vmem:[%s245 + $0x170] sm:$0xff]
        %v684 = vld [vmem:[%s245 + $0x178] sm:$0xff]
        %v685 = vld [vmem:[%s245 + $0x180] sm:$0xff]
        %v686 = vld [vmem:[%s245 + $0x188] sm:$0xff]
        %v687 = vld [vmem:[%s245 + $0x190] sm:$0xff]
        %v688 = vld [vmem:[%s245 + $0x198] sm:$0xff]
        %v689 = vld [vmem:[%s245 + $0x1a0] sm:$0xff]
        %v690 = vld [vmem:[%s245 + $0x1a8] sm:$0xff]
        %v691 = vld [vmem:[%s245 + $0x1b0] sm:$0xff]
        %v692 = vld [vmem:[%s245 + $0x1b8] sm:$0xff]
        %v693 = vld [vmem:[%s245 + $0x1c0] sm:$0xff]
        %v694 = vld [vmem:[%s245 + $0x1c8] sm:$0xff]
        %v695 = vld [vmem:[%s245 + $0x1d0] sm:$0xff]
        %v696 = vld [vmem:[%s245 + $0x1d8] sm:$0xff]
        %v697 = vld [vmem:[%s245 + $0x1e0] sm:$0xff]
        %v698 = vld [vmem:[%s245 + $0x1e8] sm:$0xff]
        %v699 = vld [vmem:[%s245 + $0x1f0] sm:$0xff]
        %v700 = vld [vmem:[%s245 + $0x1f8] sm:$0xff]
        %v701 = vld [vmem:[%s245 + $0x200] sm:$0xff]
        %v702 = vld [vmem:[%s245 + $0x208] sm:$0xff]
        %v703 = vld [vmem:[%s245 + $0x210] sm:$0xff]
        %v704 = vld [vmem:[%s245 + $0x218] sm:$0xff]
        %v705 = vld [vmem:[%s245 + $0x220] sm:$0xff]
        %v706 = vld [vmem:[%s245 + $0x228] sm:$0xff]
        %v707 = vld [vmem:[%s245 + $0x230] sm:$0xff]
        %v708 = vld [vmem:[%s245 + $0x238] sm:$0xff]
        %v709 = vld [vmem:[%s245 + $0x240] sm:$0xff]
        %v710 = vld [vmem:[%s245 + $0x248] sm:$0xff]
        %v711 = vld [vmem:[%s245 + $0x250] sm:$0xff]
        %v712 = vld [vmem:[%s245 + $0x258] sm:$0xff]
        %v713 = vld [vmem:[%s245 + $0x260] sm:$0xff]
        %v714 = vld [vmem:[%s245 + $0x268] sm:$0xff]
        %v715 = vld [vmem:[%s245 + $0x270] sm:$0xff]
        %v716 = vld [vmem:[%s245 + $0x278] sm:$0xff]
        %v717 = vld [vmem:[%s245 + $0x280] sm:$0xff]
        %v718 = vld [vmem:[%s245 + $0x288] sm:$0xff]
        %v719 = vld [vmem:[%s245 + $0x290] sm:$0xff]
        %v720 = vld [vmem:[%s245 + $0x298] sm:$0xff]
        %v721 = vld [vmem:[%s245 + $0x2a0] sm:$0xff]
        %v722 = vld [vmem:[%s245 + $0x2a8] sm:$0xff]
        %v723 = vld [vmem:[%s245 + $0x2b0] sm:$0xff]
        %v724 = vld [vmem:[%s245 + $0x2b8] sm:$0xff]
        %v725 = vld [vmem:[%s245 + $0x2c0] sm:$0xff]
        %v726 = vld [vmem:[%s245 + $0x2c8] sm:$0xff]
        %v727 = vld [vmem:[%s245 + $0x2d0] sm:$0xff]
        %v728 = vld [vmem:[%s245 + $0x2d8] sm:$0xff]
        %v729 = vld [vmem:[%s245 + $0x2e0] sm:$0xff]
        %v730 = vld [vmem:[%s245 + $0x2e8] sm:$0xff]
        %v731 = vld [vmem:[%s245 + $0x2f0] sm:$0xff]
        %v732 = vld [vmem:[%s245 + $0x2f8] sm:$0xff]
        %v733 = vld [vmem:[%s245 + $0x300] sm:$0xff]
        %v734 = vld [vmem:[%s245 + $0x308] sm:$0xff]
        %v735 = vld [vmem:[%s245 + $0x310] sm:$0xff]
        %v736 = vld [vmem:[%s245 + $0x318] sm:$0xff]
        %v737 = vld [vmem:[%s245 + $0x320] sm:$0xff]
        %v738 = vld [vmem:[%s245 + $0x328] sm:$0xff]
        %v739 = vld [vmem:[%s245 + $0x330] sm:$0xff]
        %v740 = vld [vmem:[%s245 + $0x338] sm:$0xff]
        %v741 = vld [vmem:[%s245 + $0x340] sm:$0xff]
        %v742 = vld [vmem:[%s245 + $0x348] sm:$0xff]
        %v743 = vld [vmem:[%s245 + $0x350] sm:$0xff]
        %v744 = vld [vmem:[%s245 + $0x358] sm:$0xff]
        %v745 = vld [vmem:[%s245 + $0x360] sm:$0xff]
        %v746 = vld [vmem:[%s245 + $0x368] sm:$0xff]
        %v747 = vld [vmem:[%s245 + $0x370] sm:$0xff]
        %v748 = vld [vmem:[%s245 + $0x378] sm:$0xff]
        %v749 = vld [vmem:[%s245 + $0x380] sm:$0xff]
        %v750 = vld [vmem:[%s245 + $0x388] sm:$0xff]
        %v751 = vld [vmem:[%s245 + $0x390] sm:$0xff]
        %v752 = vld [vmem:[%s245 + $0x398] sm:$0xff]
        %v753 = vld [vmem:[%s245 + $0x3a0] sm:$0xff]
        %v754 = vld [vmem:[%s245 + $0x3a8] sm:$0xff]
        %v755 = vld [vmem:[%s245 + $0x3b0] sm:$0xff]
        %v756 = vld [vmem:[%s245 + $0x3b8] sm:$0xff]
        %v757 = vld [vmem:[%s245 + $0x3c0] sm:$0xff]
        %v758 = vld [vmem:[%s245 + $0x3c8] sm:$0xff]
        %v759 = vld [vmem:[%s245 + $0x3d0] sm:$0xff]
        %v760 = vld [vmem:[%s245 + $0x3d8] sm:$0xff]
        %v761 = vld [vmem:[%s245 + $0x3e0] sm:$0xff]
        %v762 = vld [vmem:[%s245 + $0x3e8] sm:$0xff]
        %v763 = vld [vmem:[%s245 + $0x3f0] sm:$0xff]
        %v764 = vld [vmem:[%s245 + $0x3f8] sm:$0xff]
        %v765 = vmul.f32 %v381, %v509
        %v766 = vmul.f32 %v382, %v510
        %v767 = vmul.f32 %v383, %v511
        %v768 = vmul.f32 %v384, %v512
        %v769 = vmul.f32 %v385, %v513
        %v770 = vmul.f32 %v386, %v514
        %v771 = vmul.f32 %v387, %v515
        %v772 = vmul.f32 %v388, %v516
        %v773 = vmul.f32 %v389, %v517
        %v774 = vmul.f32 %v390, %v518
        %v775 = vmul.f32 %v391, %v519
        %v776 = vmul.f32 %v392, %v520
        %v777 = vmul.f32 %v393, %v521
        %v778 = vmul.f32 %v394, %v522
        %v779 = vmul.f32 %v395, %v523
        %v780 = vmul.f32 %v396, %v524
        %v781 = vmul.f32 %v397, %v525
        %v782 = vmul.f32 %v398, %v526
        %v783 = vmul.f32 %v399, %v527
        %v784 = vmul.f32 %v400, %v528
        %v785 = vmul.f32 %v401, %v529
        %v786 = vmul.f32 %v402, %v530
        %v787 = vmul.f32 %v403, %v531
        %v788 = vmul.f32 %v404, %v532
        %v789 = vmul.f32 %v405, %v533
        %v790 = vmul.f32 %v406, %v534
        %v791 = vmul.f32 %v407, %v535
        %v792 = vmul.f32 %v408, %v536
        %v793 = vmul.f32 %v409, %v537
        %v794 = vmul.f32 %v410, %v538
        %v795 = vmul.f32 %v411, %v539
        %v796 = vmul.f32 %v412, %v540
        %v797 = vmul.f32 %v413, %v541
        %v798 = vmul.f32 %v414, %v542
        %v799 = vmul.f32 %v415, %v543
        %v800 = vmul.f32 %v416, %v544
        %v801 = vmul.f32 %v417, %v545
        %v802 = vmul.f32 %v418, %v546
        %v803 = vmul.f32 %v419, %v547
        %v804 = vmul.f32 %v420, %v548
        %v805 = vmul.f32 %v421, %v549
        %v806 = vmul.f32 %v422, %v550
        %v807 = vmul.f32 %v423, %v551
        %v808 = vmul.f32 %v424, %v552
        %v809 = vmul.f32 %v425, %v553
        %v810 = vmul.f32 %v426, %v554
        %v811 = vmul.f32 %v427, %v555
        %v812 = vmul.f32 %v428, %v556
        %v813 = vmul.f32 %v429, %v557
        %v814 = vmul.f32 %v430, %v558
        %v815 = vmul.f32 %v431, %v559
        %v816 = vmul.f32 %v432, %v560
        %v817 = vmul.f32 %v433, %v561
        %v818 = vmul.f32 %v434, %v562
        %v819 = vmul.f32 %v435, %v563
        %v820 = vmul.f32 %v436, %v564
        %v821 = vmul.f32 %v437, %v565
        %v822 = vmul.f32 %v438, %v566
        %v823 = vmul.f32 %v439, %v567
        %v824 = vmul.f32 %v440, %v568
        %v825 = vmul.f32 %v441, %v569
        %v826 = vmul.f32 %v442, %v570
        %v827 = vmul.f32 %v443, %v571
        %v828 = vmul.f32 %v444, %v572
        %v829 = vmul.f32 %v445, %v573
        %v830 = vmul.f32 %v446, %v574
        %v831 = vmul.f32 %v447, %v575
        %v832 = vmul.f32 %v448, %v576
        %v833 = vmul.f32 %v449, %v577
        %v834 = vmul.f32 %v450, %v578
        %v835 = vmul.f32 %v451, %v579
        %v836 = vmul.f32 %v452, %v580
        %v837 = vmul.f32 %v453, %v581
        %v838 = vmul.f32 %v454, %v582
        %v839 = vmul.f32 %v455, %v583
        %v840 = vmul.f32 %v456, %v584
        %v841 = vmul.f32 %v457, %v585
        %v842 = vmul.f32 %v458, %v586
        %v843 = vmul.f32 %v459, %v587
        %v844 = vmul.f32 %v460, %v588
        %v845 = vmul.f32 %v461, %v589
        %v846 = vmul.f32 %v462, %v590
        %v847 = vmul.f32 %v463, %v591
        %v848 = vmul.f32 %v464, %v592
        %v849 = vmul.f32 %v465, %v593
        %v850 = vmul.f32 %v466, %v594
        %v851 = vmul.f32 %v467, %v595
        %v852 = vmul.f32 %v468, %v596
        %v853 = vmul.f32 %v469, %v597
        %v854 = vmul.f32 %v470, %v598
        %v855 = vmul.f32 %v471, %v599
        %v856 = vmul.f32 %v472, %v600
        %v857 = vmul.f32 %v473, %v601
        %v858 = vmul.f32 %v474, %v602
        %v859 = vmul.f32 %v475, %v603
        %v860 = vmul.f32 %v476, %v604
        %v861 = vmul.f32 %v477, %v605
        %v862 = vmul.f32 %v478, %v606
        %v863 = vmul.f32 %v479, %v607
        %v864 = vmul.f32 %v480, %v608
        %v865 = vmul.f32 %v481, %v609
        %v866 = vmul.f32 %v482, %v610
        %v867 = vmul.f32 %v483, %v611
        %v868 = vmul.f32 %v484, %v612
        %v869 = vmul.f32 %v485, %v613
        %v870 = vmul.f32 %v486, %v614
        %v871 = vmul.f32 %v487, %v615
        %v872 = vmul.f32 %v488, %v616
        %v873 = vmul.f32 %v489, %v617
        %v874 = vmul.f32 %v490, %v618
        %v875 = vmul.f32 %v491, %v619
        %v876 = vmul.f32 %v492, %v620
        %v877 = vmul.f32 %v493, %v621
        %v878 = vmul.f32 %v494, %v622
        %v879 = vmul.f32 %v495, %v623
        %v880 = vmul.f32 %v496, %v624
        %v881 = vmul.f32 %v497, %v625
        %v882 = vmul.f32 %v498, %v626
        %v883 = vmul.f32 %v499, %v627
        %v884 = vmul.f32 %v500, %v628
        %v885 = vmul.f32 %v501, %v629
        %v886 = vmul.f32 %v502, %v630
        %v887 = vmul.f32 %v503, %v631
        %v888 = vmul.f32 %v504, %v632
        %v889 = vmul.f32 %v505, %v633
        %v890 = vmul.f32 %v506, %v634
        %v891 = vmul.f32 %v507, %v635
        %v892 = vmul.f32 %v508, %v636
        %vm893 = vcmask 261120
        %v894 = vsel %vm893, %v765, 0.0
        %895 = vadd.xlane.f32.xlu0 %v894
        %v896 = vpop.xlane.xlu0 %895
        %v897 = vsel %vm893, %v766, 0.0
        %898 = vadd.xlane.f32.xlu0 %v897
        %v899 = vpop.xlane.xlu0 %898
        %v900 = vsel %vm893, %v767, 0.0
        %901 = vadd.xlane.f32.xlu0 %v900
        %v902 = vpop.xlane.xlu0 %901
        %v903 = vsel %vm893, %v768, 0.0
        %904 = vadd.xlane.f32.xlu0 %v903
        %v905 = vpop.xlane.xlu0 %904
        %v906 = vsel %vm893, %v769, 0.0
        %907 = vadd.xlane.f32.xlu0 %v906
        %v908 = vpop.xlane.xlu0 %907
        %v909 = vsel %vm893, %v770, 0.0
        %910 = vadd.xlane.f32.xlu0 %v909
        %v911 = vpop.xlane.xlu0 %910
        %v912 = vsel %vm893, %v771, 0.0
        %913 = vadd.xlane.f32.xlu0 %v912
        %v914 = vpop.xlane.xlu0 %913
        %v915 = vsel %vm893, %v772, 0.0
        %916 = vadd.xlane.f32.xlu0 %v915
        %v917 = vpop.xlane.xlu0 %916
        %v918 = vsel %vm893, %v773, 0.0
        %919 = vadd.xlane.f32.xlu0 %v918
        %v920 = vpop.xlane.xlu0 %919
        %v921 = vsel %vm893, %v774, 0.0
        %922 = vadd.xlane.f32.xlu0 %v921
        %v923 = vpop.xlane.xlu0 %922
        %v924 = vsel %vm893, %v775, 0.0
        %925 = vadd.xlane.f32.xlu0 %v924
        %v926 = vpop.xlane.xlu0 %925
        %v927 = vsel %vm893, %v776, 0.0
        %928 = vadd.xlane.f32.xlu0 %v927
        %v929 = vpop.xlane.xlu0 %928
        %v930 = vsel %vm893, %v777, 0.0
        %931 = vadd.xlane.f32.xlu0 %v930
        %v932 = vpop.xlane.xlu0 %931
        %v933 = vsel %vm893, %v778, 0.0
        %934 = vadd.xlane.f32.xlu0 %v933
        %v935 = vpop.xlane.xlu0 %934
        %v936 = vsel %vm893, %v779, 0.0
        %937 = vadd.xlane.f32.xlu0 %v936
        %v938 = vpop.xlane.xlu0 %937
        %v939 = vsel %vm893, %v780, 0.0
        %940 = vadd.xlane.f32.xlu0 %v939
        %v941 = vpop.xlane.xlu0 %940
        %v942 = vsel %vm893, %v781, 0.0
        %943 = vadd.xlane.f32.xlu0 %v942
        %v944 = vpop.xlane.xlu0 %943
        %v945 = vsel %vm893, %v782, 0.0
        %946 = vadd.xlane.f32.xlu0 %v945
        %v947 = vpop.xlane.xlu0 %946
        %v948 = vsel %vm893, %v783, 0.0
        %949 = vadd.xlane.f32.xlu0 %v948
        %v950 = vpop.xlane.xlu0 %949
        %v951 = vsel %vm893, %v784, 0.0
        %952 = vadd.xlane.f32.xlu0 %v951
        %v953 = vpop.xlane.xlu0 %952
        %v954 = vsel %vm893, %v785, 0.0
        %955 = vadd.xlane.f32.xlu0 %v954
        %v956 = vpop.xlane.xlu0 %955
        %v957 = vsel %vm893, %v786, 0.0
        %958 = vadd.xlane.f32.xlu0 %v957
        %v959 = vpop.xlane.xlu0 %958
        %v960 = vsel %vm893, %v787, 0.0
        %961 = vadd.xlane.f32.xlu0 %v960
        %v962 = vpop.xlane.xlu0 %961
        %v963 = vsel %vm893, %v788, 0.0
        %964 = vadd.xlane.f32.xlu0 %v963
        %v965 = vpop.xlane.xlu0 %964
        %v966 = vsel %vm893, %v789, 0.0
        %967 = vadd.xlane.f32.xlu0 %v966
        %v968 = vpop.xlane.xlu0 %967
        %v969 = vsel %vm893, %v790, 0.0
        %970 = vadd.xlane.f32.xlu0 %v969
        %v971 = vpop.xlane.xlu0 %970
        %v972 = vsel %vm893, %v791, 0.0
        %973 = vadd.xlane.f32.xlu0 %v972
        %v974 = vpop.xlane.xlu0 %973
        %v975 = vsel %vm893, %v792, 0.0
        %976 = vadd.xlane.f32.xlu0 %v975
        %v977 = vpop.xlane.xlu0 %976
        %v978 = vsel %vm893, %v793, 0.0
        %979 = vadd.xlane.f32.xlu0 %v978
        %v980 = vpop.xlane.xlu0 %979
        %v981 = vsel %vm893, %v794, 0.0
        %982 = vadd.xlane.f32.xlu0 %v981
        %v983 = vpop.xlane.xlu0 %982
        %v984 = vsel %vm893, %v795, 0.0
        %985 = vadd.xlane.f32.xlu0 %v984
        %v986 = vpop.xlane.xlu0 %985
        %v987 = vsel %vm893, %v796, 0.0
        %988 = vadd.xlane.f32.xlu0 %v987
        %v989 = vpop.xlane.xlu0 %988
        %v990 = vsel %vm893, %v797, 0.0
        %991 = vadd.xlane.f32.xlu0 %v990
        %v992 = vpop.xlane.xlu0 %991
        %v993 = vsel %vm893, %v798, 0.0
        %994 = vadd.xlane.f32.xlu0 %v993
        %v995 = vpop.xlane.xlu0 %994
        %v996 = vsel %vm893, %v799, 0.0
        %997 = vadd.xlane.f32.xlu0 %v996
        %v998 = vpop.xlane.xlu0 %997
        %v999 = vsel %vm893, %v800, 0.0
        %1000 = vadd.xlane.f32.xlu0 %v999
        %v1001 = vpop.xlane.xlu0 %1000
        %v1002 = vsel %vm893, %v801, 0.0
        %1003 = vadd.xlane.f32.xlu0 %v1002
        %v1004 = vpop.xlane.xlu0 %1003
        %v1005 = vsel %vm893, %v802, 0.0
        %1006 = vadd.xlane.f32.xlu0 %v1005
        %v1007 = vpop.xlane.xlu0 %1006
        %v1008 = vsel %vm893, %v803, 0.0
        %1009 = vadd.xlane.f32.xlu0 %v1008
        %v1010 = vpop.xlane.xlu0 %1009
        %v1011 = vsel %vm893, %v804, 0.0
        %1012 = vadd.xlane.f32.xlu0 %v1011
        %v1013 = vpop.xlane.xlu0 %1012
        %v1014 = vsel %vm893, %v805, 0.0
        %1015 = vadd.xlane.f32.xlu0 %v1014
        %v1016 = vpop.xlane.xlu0 %1015
        %v1017 = vsel %vm893, %v806, 0.0
        %1018 = vadd.xlane.f32.xlu0 %v1017
        %v1019 = vpop.xlane.xlu0 %1018
        %v1020 = vsel %vm893, %v807, 0.0
        %1021 = vadd.xlane.f32.xlu0 %v1020
        %v1022 = vpop.xlane.xlu0 %1021
        %v1023 = vsel %vm893, %v808, 0.0
        %1024 = vadd.xlane.f32.xlu0 %v1023
        %v1025 = vpop.xlane.xlu0 %1024
        %v1026 = vsel %vm893, %v809, 0.0
        %1027 = vadd.xlane.f32.xlu0 %v1026
        %v1028 = vpop.xlane.xlu0 %1027
        %v1029 = vsel %vm893, %v810, 0.0
        %1030 = vadd.xlane.f32.xlu0 %v1029
        %v1031 = vpop.xlane.xlu0 %1030
        %v1032 = vsel %vm893, %v811, 0.0
        %1033 = vadd.xlane.f32.xlu0 %v1032
        %v1034 = vpop.xlane.xlu0 %1033
        %v1035 = vsel %vm893, %v812, 0.0
        %1036 = vadd.xlane.f32.xlu0 %v1035
        %v1037 = vpop.xlane.xlu0 %1036
        %v1038 = vsel %vm893, %v813, 0.0
        %1039 = vadd.xlane.f32.xlu0 %v1038
        %v1040 = vpop.xlane.xlu0 %1039
        %v1041 = vsel %vm893, %v814, 0.0
        %1042 = vadd.xlane.f32.xlu0 %v1041
        %v1043 = vpop.xlane.xlu0 %1042
        %v1044 = vsel %vm893, %v815, 0.0
        %1045 = vadd.xlane.f32.xlu0 %v1044
        %v1046 = vpop.xlane.xlu0 %1045
        %v1047 = vsel %vm893, %v816, 0.0
        %1048 = vadd.xlane.f32.xlu0 %v1047
        %v1049 = vpop.xlane.xlu0 %1048
        %v1050 = vsel %vm893, %v817, 0.0
        %1051 = vadd.xlane.f32.xlu0 %v1050
        %v1052 = vpop.xlane.xlu0 %1051
        %v1053 = vsel %vm893, %v818, 0.0
        %1054 = vadd.xlane.f32.xlu0 %v1053
        %v1055 = vpop.xlane.xlu0 %1054
        %v1056 = vsel %vm893, %v819, 0.0
        %1057 = vadd.xlane.f32.xlu0 %v1056
        %v1058 = vpop.xlane.xlu0 %1057
        %v1059 = vsel %vm893, %v820, 0.0
        %1060 = vadd.xlane.f32.xlu0 %v1059
        %v1061 = vpop.xlane.xlu0 %1060
        %v1062 = vsel %vm893, %v821, 0.0
        %1063 = vadd.xlane.f32.xlu0 %v1062
        %v1064 = vpop.xlane.xlu0 %1063
        %v1065 = vsel %vm893, %v822, 0.0
        %1066 = vadd.xlane.f32.xlu0 %v1065
        %v1067 = vpop.xlane.xlu0 %1066
        %v1068 = vsel %vm893, %v823, 0.0
        %1069 = vadd.xlane.f32.xlu0 %v1068
        %v1070 = vpop.xlane.xlu0 %1069
        %v1071 = vsel %vm893, %v824, 0.0
        %1072 = vadd.xlane.f32.xlu0 %v1071
        %v1073 = vpop.xlane.xlu0 %1072
        %v1074 = vsel %vm893, %v825, 0.0
        %1075 = vadd.xlane.f32.xlu0 %v1074
        %v1076 = vpop.xlane.xlu0 %1075
        %v1077 = vsel %vm893, %v826, 0.0
        %1078 = vadd.xlane.f32.xlu0 %v1077
        %v1079 = vpop.xlane.xlu0 %1078
        %v1080 = vsel %vm893, %v827, 0.0
        %1081 = vadd.xlane.f32.xlu0 %v1080
        %v1082 = vpop.xlane.xlu0 %1081
        %v1083 = vsel %vm893, %v828, 0.0
        %1084 = vadd.xlane.f32.xlu0 %v1083
        %v1085 = vpop.xlane.xlu0 %1084
        %v1086 = vsel %vm893, %v829, 0.0
        %1087 = vadd.xlane.f32.xlu0 %v1086
        %v1088 = vpop.xlane.xlu0 %1087
        %v1089 = vsel %vm893, %v830, 0.0
        %1090 = vadd.xlane.f32.xlu0 %v1089
        %v1091 = vpop.xlane.xlu0 %1090
        %v1092 = vsel %vm893, %v831, 0.0
        %1093 = vadd.xlane.f32.xlu0 %v1092
        %v1094 = vpop.xlane.xlu0 %1093
        %v1095 = vsel %vm893, %v832, 0.0
        %1096 = vadd.xlane.f32.xlu0 %v1095
        %v1097 = vpop.xlane.xlu0 %1096
        %v1098 = vsel %vm893, %v833, 0.0
        %1099 = vadd.xlane.f32.xlu0 %v1098
        %v1100 = vpop.xlane.xlu0 %1099
        %v1101 = vsel %vm893, %v834, 0.0
        %1102 = vadd.xlane.f32.xlu0 %v1101
        %v1103 = vpop.xlane.xlu0 %1102
        %v1104 = vsel %vm893, %v835, 0.0
        %1105 = vadd.xlane.f32.xlu0 %v1104
        %v1106 = vpop.xlane.xlu0 %1105
        %v1107 = vsel %vm893, %v836, 0.0
        %1108 = vadd.xlane.f32.xlu0 %v1107
        %v1109 = vpop.xlane.xlu0 %1108
        %v1110 = vsel %vm893, %v837, 0.0
        %1111 = vadd.xlane.f32.xlu0 %v1110
        %v1112 = vpop.xlane.xlu0 %1111
        %v1113 = vsel %vm893, %v838, 0.0
        %1114 = vadd.xlane.f32.xlu0 %v1113
        %v1115 = vpop.xlane.xlu0 %1114
        %v1116 = vsel %vm893, %v839, 0.0
        %1117 = vadd.xlane.f32.xlu0 %v1116
        %v1118 = vpop.xlane.xlu0 %1117
        %v1119 = vsel %vm893, %v840, 0.0
        %1120 = vadd.xlane.f32.xlu0 %v1119
        %v1121 = vpop.xlane.xlu0 %1120
        %v1122 = vsel %vm893, %v841, 0.0
        %1123 = vadd.xlane.f32.xlu0 %v1122
        %v1124 = vpop.xlane.xlu0 %1123
        %v1125 = vsel %vm893, %v842, 0.0
        %1126 = vadd.xlane.f32.xlu0 %v1125
        %v1127 = vpop.xlane.xlu0 %1126
        %v1128 = vsel %vm893, %v843, 0.0
        %1129 = vadd.xlane.f32.xlu0 %v1128
        %v1130 = vpop.xlane.xlu0 %1129
        %v1131 = vsel %vm893, %v844, 0.0
        %1132 = vadd.xlane.f32.xlu0 %v1131
        %v1133 = vpop.xlane.xlu0 %1132
        %v1134 = vsel %vm893, %v845, 0.0
        %1135 = vadd.xlane.f32.xlu0 %v1134
        %v1136 = vpop.xlane.xlu0 %1135
        %v1137 = vsel %vm893, %v846, 0.0
        %1138 = vadd.xlane.f32.xlu0 %v1137
        %v1139 = vpop.xlane.xlu0 %1138
        %v1140 = vsel %vm893, %v847, 0.0
        %1141 = vadd.xlane.f32.xlu0 %v1140
        %v1142 = vpop.xlane.xlu0 %1141
        %v1143 = vsel %vm893, %v848, 0.0
        %1144 = vadd.xlane.f32.xlu0 %v1143
        %v1145 = vpop.xlane.xlu0 %1144
        %v1146 = vsel %vm893, %v849, 0.0
        %1147 = vadd.xlane.f32.xlu0 %v1146
        %v1148 = vpop.xlane.xlu0 %1147
        %v1149 = vsel %vm893, %v850, 0.0
        %1150 = vadd.xlane.f32.xlu0 %v1149
        %v1151 = vpop.xlane.xlu0 %1150
        %v1152 = vsel %vm893, %v851, 0.0
        %1153 = vadd.xlane.f32.xlu0 %v1152
        %v1154 = vpop.xlane.xlu0 %1153
        %v1155 = vsel %vm893, %v852, 0.0
        %1156 = vadd.xlane.f32.xlu0 %v1155
        %v1157 = vpop.xlane.xlu0 %1156
        %v1158 = vsel %vm893, %v853, 0.0
        %1159 = vadd.xlane.f32.xlu0 %v1158
        %v1160 = vpop.xlane.xlu0 %1159
        %v1161 = vsel %vm893, %v854, 0.0
        %1162 = vadd.xlane.f32.xlu0 %v1161
        %v1163 = vpop.xlane.xlu0 %1162
        %v1164 = vsel %vm893, %v855, 0.0
        %1165 = vadd.xlane.f32.xlu0 %v1164
        %v1166 = vpop.xlane.xlu0 %1165
        %v1167 = vsel %vm893, %v856, 0.0
        %1168 = vadd.xlane.f32.xlu0 %v1167
        %v1169 = vpop.xlane.xlu0 %1168
        %v1170 = vsel %vm893, %v857, 0.0
        %1171 = vadd.xlane.f32.xlu0 %v1170
        %v1172 = vpop.xlane.xlu0 %1171
        %v1173 = vsel %vm893, %v858, 0.0
        %1174 = vadd.xlane.f32.xlu0 %v1173
        %v1175 = vpop.xlane.xlu0 %1174
        %v1176 = vsel %vm893, %v859, 0.0
        %1177 = vadd.xlane.f32.xlu0 %v1176
        %v1178 = vpop.xlane.xlu0 %1177
        %v1179 = vsel %vm893, %v860, 0.0
        %1180 = vadd.xlane.f32.xlu0 %v1179
        %v1181 = vpop.xlane.xlu0 %1180
        %v1182 = vsel %vm893, %v861, 0.0
        %1183 = vadd.xlane.f32.xlu0 %v1182
        %v1184 = vpop.xlane.xlu0 %1183
        %v1185 = vsel %vm893, %v862, 0.0
        %1186 = vadd.xlane.f32.xlu0 %v1185
        %v1187 = vpop.xlane.xlu0 %1186
        %v1188 = vsel %vm893, %v863, 0.0
        %1189 = vadd.xlane.f32.xlu0 %v1188
        %v1190 = vpop.xlane.xlu0 %1189
        %v1191 = vsel %vm893, %v864, 0.0
        %1192 = vadd.xlane.f32.xlu0 %v1191
        %v1193 = vpop.xlane.xlu0 %1192
        %v1194 = vsel %vm893, %v865, 0.0
        %1195 = vadd.xlane.f32.xlu0 %v1194
        %v1196 = vpop.xlane.xlu0 %1195
        %v1197 = vsel %vm893, %v866, 0.0
        %1198 = vadd.xlane.f32.xlu0 %v1197
        %v1199 = vpop.xlane.xlu0 %1198
        %v1200 = vsel %vm893, %v867, 0.0
        %1201 = vadd.xlane.f32.xlu0 %v1200
        %v1202 = vpop.xlane.xlu0 %1201
        %v1203 = vsel %vm893, %v868, 0.0
        %1204 = vadd.xlane.f32.xlu0 %v1203
        %v1205 = vpop.xlane.xlu0 %1204
        %v1206 = vsel %vm893, %v869, 0.0
        %1207 = vadd.xlane.f32.xlu0 %v1206
        %v1208 = vpop.xlane.xlu0 %1207
        %v1209 = vsel %vm893, %v870, 0.0
        %1210 = vadd.xlane.f32.xlu0 %v1209
        %v1211 = vpop.xlane.xlu0 %1210
        %v1212 = vsel %vm893, %v871, 0.0
        %1213 = vadd.xlane.f32.xlu0 %v1212
        %v1214 = vpop.xlane.xlu0 %1213
        %v1215 = vsel %vm893, %v872, 0.0
        %1216 = vadd.xlane.f32.xlu0 %v1215
        %v1217 = vpop.xlane.xlu0 %1216
        %v1218 = vsel %vm893, %v873, 0.0
        %1219 = vadd.xlane.f32.xlu0 %v1218
        %v1220 = vpop.xlane.xlu0 %1219
        %v1221 = vsel %vm893, %v874, 0.0
        %1222 = vadd.xlane.f32.xlu0 %v1221
        %v1223 = vpop.xlane.xlu0 %1222
        %v1224 = vsel %vm893, %v875, 0.0
        %1225 = vadd.xlane.f32.xlu0 %v1224
        %v1226 = vpop.xlane.xlu0 %1225
        %v1227 = vsel %vm893, %v876, 0.0
        %1228 = vadd.xlane.f32.xlu0 %v1227
        %v1229 = vpop.xlane.xlu0 %1228
        %v1230 = vsel %vm893, %v877, 0.0
        %1231 = vadd.xlane.f32.xlu0 %v1230
        %v1232 = vpop.xlane.xlu0 %1231
        %v1233 = vsel %vm893, %v878, 0.0
        %1234 = vadd.xlane.f32.xlu0 %v1233
        %v1235 = vpop.xlane.xlu0 %1234
        %v1236 = vsel %vm893, %v879, 0.0
        %1237 = vadd.xlane.f32.xlu0 %v1236
        %v1238 = vpop.xlane.xlu0 %1237
        %v1239 = vsel %vm893, %v880, 0.0
        %1240 = vadd.xlane.f32.xlu0 %v1239
        %v1241 = vpop.xlane.xlu0 %1240
        %v1242 = vsel %vm893, %v881, 0.0
        %1243 = vadd.xlane.f32.xlu0 %v1242
        %v1244 = vpop.xlane.xlu0 %1243
        %v1245 = vsel %vm893, %v882, 0.0
        %1246 = vadd.xlane.f32.xlu0 %v1245
        %v1247 = vpop.xlane.xlu0 %1246
        %v1248 = vsel %vm893, %v883, 0.0
        %1249 = vadd.xlane.f32.xlu0 %v1248
        %v1250 = vpop.xlane.xlu0 %1249
        %v1251 = vsel %vm893, %v884, 0.0
        %1252 = vadd.xlane.f32.xlu0 %v1251
        %v1253 = vpop.xlane.xlu0 %1252
        %v1254 = vsel %vm893, %v885, 0.0
        %1255 = vadd.xlane.f32.xlu0 %v1254
        %v1256 = vpop.xlane.xlu0 %1255
        %v1257 = vsel %vm893, %v886, 0.0
        %1258 = vadd.xlane.f32.xlu0 %v1257
        %v1259 = vpop.xlane.xlu0 %1258
        %v1260 = vsel %vm893, %v887, 0.0
        %1261 = vadd.xlane.f32.xlu0 %v1260
        %v1262 = vpop.xlane.xlu0 %1261
        %v1263 = vsel %vm893, %v888, 0.0
        %1264 = vadd.xlane.f32.xlu0 %v1263
        %v1265 = vpop.xlane.xlu0 %1264
        %v1266 = vsel %vm893, %v889, 0.0
        %1267 = vadd.xlane.f32.xlu0 %v1266
        %v1268 = vpop.xlane.xlu0 %1267
        %v1269 = vsel %vm893, %v890, 0.0
        %1270 = vadd.xlane.f32.xlu0 %v1269
        %v1271 = vpop.xlane.xlu0 %1270
        %v1272 = vsel %vm893, %v891, 0.0
        %1273 = vadd.xlane.f32.xlu0 %v1272
        %v1274 = vpop.xlane.xlu0 %1273
        %v1275 = vsel %vm893, %v892, 0.0
        %1276 = vadd.xlane.f32.xlu0 %v1275
        %v1277 = vpop.xlane.xlu0 %1276
        %v1278 = vmul.f32 %v381, %v637
        %v1279 = vmul.f32 %v382, %v638
        %v1280 = vmul.f32 %v383, %v639
        %v1281 = vmul.f32 %v384, %v640
        %v1282 = vmul.f32 %v385, %v641
        %v1283 = vmul.f32 %v386, %v642
        %v1284 = vmul.f32 %v387, %v643
        %v1285 = vmul.f32 %v388, %v644
        %v1286 = vmul.f32 %v389, %v645
        %v1287 = vmul.f32 %v390, %v646
        %v1288 = vmul.f32 %v391, %v647
        %v1289 = vmul.f32 %v392, %v648
        %v1290 = vmul.f32 %v393, %v649
        %v1291 = vmul.f32 %v394, %v650
        %v1292 = vmul.f32 %v395, %v651
        %v1293 = vmul.f32 %v396, %v652
        %v1294 = vmul.f32 %v397, %v653
        %v1295 = vmul.f32 %v398, %v654
        %v1296 = vmul.f32 %v399, %v655
        %v1297 = vmul.f32 %v400, %v656
        %v1298 = vmul.f32 %v401, %v657
        %v1299 = vmul.f32 %v402, %v658
        %v1300 = vmul.f32 %v403, %v659
        %v1301 = vmul.f32 %v404, %v660
        %v1302 = vmul.f32 %v405, %v661
        %v1303 = vmul.f32 %v406, %v662
        %v1304 = vmul.f32 %v407, %v663
        %v1305 = vmul.f32 %v408, %v664
        %v1306 = vmul.f32 %v409, %v665
        %v1307 = vmul.f32 %v410, %v666
        %v1308 = vmul.f32 %v411, %v667
        %v1309 = vmul.f32 %v412, %v668
        %v1310 = vmul.f32 %v413, %v669
        %v1311 = vmul.f32 %v414, %v670
        %v1312 = vmul.f32 %v415, %v671
        %v1313 = vmul.f32 %v416, %v672
        %v1314 = vmul.f32 %v417, %v673
        %v1315 = vmul.f32 %v418, %v674
        %v1316 = vmul.f32 %v419, %v675
        %v1317 = vmul.f32 %v420, %v676
        %v1318 = vmul.f32 %v421, %v677
        %v1319 = vmul.f32 %v422, %v678
        %v1320 = vmul.f32 %v423, %v679
        %v1321 = vmul.f32 %v424, %v680
        %v1322 = vmul.f32 %v425, %v681
        %v1323 = vmul.f32 %v426, %v682
        %v1324 = vmul.f32 %v427, %v683
        %v1325 = vmul.f32 %v428, %v684
        %v1326 = vmul.f32 %v429, %v685
        %v1327 = vmul.f32 %v430, %v686
        %v1328 = vmul.f32 %v431, %v687
        %v1329 = vmul.f32 %v432, %v688
        %v1330 = vmul.f32 %v433, %v689
        %v1331 = vmul.f32 %v434, %v690
        %v1332 = vmul.f32 %v435, %v691
        %v1333 = vmul.f32 %v436, %v692
        %v1334 = vmul.f32 %v437, %v693
        %v1335 = vmul.f32 %v438, %v694
        %v1336 = vmul.f32 %v439, %v695
        %v1337 = vmul.f32 %v440, %v696
        %v1338 = vmul.f32 %v441, %v697
        %v1339 = vmul.f32 %v442, %v698
        %v1340 = vmul.f32 %v443, %v699
        %v1341 = vmul.f32 %v444, %v700
        %v1342 = vmul.f32 %v445, %v701
        %v1343 = vmul.f32 %v446, %v702
        %v1344 = vmul.f32 %v447, %v703
        %v1345 = vmul.f32 %v448, %v704
        %v1346 = vmul.f32 %v449, %v705
        %v1347 = vmul.f32 %v450, %v706
        %v1348 = vmul.f32 %v451, %v707
        %v1349 = vmul.f32 %v452, %v708
        %v1350 = vmul.f32 %v453, %v709
        %v1351 = vmul.f32 %v454, %v710
        %v1352 = vmul.f32 %v455, %v711
        %v1353 = vmul.f32 %v456, %v712
        %v1354 = vmul.f32 %v457, %v713
        %v1355 = vmul.f32 %v458, %v714
        %v1356 = vmul.f32 %v459, %v715
        %v1357 = vmul.f32 %v460, %v716
        %v1358 = vmul.f32 %v461, %v717
        %v1359 = vmul.f32 %v462, %v718
        %v1360 = vmul.f32 %v463, %v719
        %v1361 = vmul.f32 %v464, %v720
        %v1362 = vmul.f32 %v465, %v721
        %v1363 = vmul.f32 %v466, %v722
        %v1364 = vmul.f32 %v467, %v723
        %v1365 = vmul.f32 %v468, %v724
        %v1366 = vmul.f32 %v469, %v725
        %v1367 = vmul.f32 %v470, %v726
        %v1368 = vmul.f32 %v471, %v727
        %v1369 = vmul.f32 %v472, %v728
        %v1370 = vmul.f32 %v473, %v729
        %v1371 = vmul.f32 %v474, %v730
        %v1372 = vmul.f32 %v475, %v731
        %v1373 = vmul.f32 %v476, %v732
        %v1374 = vmul.f32 %v477, %v733
        %v1375 = vmul.f32 %v478, %v734
        %v1376 = vmul.f32 %v479, %v735
        %v1377 = vmul.f32 %v480, %v736
        %v1378 = vmul.f32 %v481, %v737
        %v1379 = vmul.f32 %v482, %v738
        %v1380 = vmul.f32 %v483, %v739
        %v1381 = vmul.f32 %v484, %v740
        %v1382 = vmul.f32 %v485, %v741
        %v1383 = vmul.f32 %v486, %v742
        %v1384 = vmul.f32 %v487, %v743
        %v1385 = vmul.f32 %v488, %v744
        %v1386 = vmul.f32 %v489, %v745
        %v1387 = vmul.f32 %v490, %v746
        %v1388 = vmul.f32 %v491, %v747
        %v1389 = vmul.f32 %v492, %v748
        %v1390 = vmul.f32 %v493, %v749
        %v1391 = vmul.f32 %v494, %v750
        %v1392 = vmul.f32 %v495, %v751
        %v1393 = vmul.f32 %v496, %v752
        %v1394 = vmul.f32 %v497, %v753
        %v1395 = vmul.f32 %v498, %v754
        %v1396 = vmul.f32 %v499, %v755
        %v1397 = vmul.f32 %v500, %v756
        %v1398 = vmul.f32 %v501, %v757
        %v1399 = vmul.f32 %v502, %v758
        %v1400 = vmul.f32 %v503, %v759
        %v1401 = vmul.f32 %v504, %v760
        %v1402 = vmul.f32 %v505, %v761
        %v1403 = vmul.f32 %v506, %v762
        %v1404 = vmul.f32 %v507, %v763
        %v1405 = vmul.f32 %v508, %v764
        %v1406 = vsel %vm893, %v1278, 0.0
        %1407 = vadd.xlane.f32.xlu0 %v1406
        %v1408 = vpop.xlane.xlu0 %1407
        %v1409 = vsel %vm893, %v1279, 0.0
        %1410 = vadd.xlane.f32.xlu0 %v1409
        %v1411 = vpop.xlane.xlu0 %1410
        %v1412 = vsel %vm893, %v1280, 0.0
        %1413 = vadd.xlane.f32.xlu0 %v1412
        %v1414 = vpop.xlane.xlu0 %1413
        %v1415 = vsel %vm893, %v1281, 0.0
        %1416 = vadd.xlane.f32.xlu0 %v1415
        %v1417 = vpop.xlane.xlu0 %1416
        %v1418 = vsel %vm893, %v1282, 0.0
        %1419 = vadd.xlane.f32.xlu0 %v1418
        %v1420 = vpop.xlane.xlu0 %1419
        %v1421 = vsel %vm893, %v1283, 0.0
        %1422 = vadd.xlane.f32.xlu0 %v1421
        %v1423 = vpop.xlane.xlu0 %1422
        %v1424 = vsel %vm893, %v1284, 0.0
        %1425 = vadd.xlane.f32.xlu0 %v1424
        %v1426 = vpop.xlane.xlu0 %1425
        %v1427 = vsel %vm893, %v1285, 0.0
        %1428 = vadd.xlane.f32.xlu0 %v1427
        %v1429 = vpop.xlane.xlu0 %1428
        %v1430 = vsel %vm893, %v1286, 0.0
        %1431 = vadd.xlane.f32.xlu0 %v1430
        %v1432 = vpop.xlane.xlu0 %1431
        %v1433 = vsel %vm893, %v1287, 0.0
        %1434 = vadd.xlane.f32.xlu0 %v1433
        %v1435 = vpop.xlane.xlu0 %1434
        %v1436 = vsel %vm893, %v1288, 0.0
        %1437 = vadd.xlane.f32.xlu0 %v1436
        %v1438 = vpop.xlane.xlu0 %1437
        %v1439 = vsel %vm893, %v1289, 0.0
        %1440 = vadd.xlane.f32.xlu0 %v1439
        %v1441 = vpop.xlane.xlu0 %1440
        %v1442 = vsel %vm893, %v1290, 0.0
        %1443 = vadd.xlane.f32.xlu0 %v1442
        %v1444 = vpop.xlane.xlu0 %1443
        %v1445 = vsel %vm893, %v1291, 0.0
        %1446 = vadd.xlane.f32.xlu0 %v1445
        %v1447 = vpop.xlane.xlu0 %1446
        %v1448 = vsel %vm893, %v1292, 0.0
        %1449 = vadd.xlane.f32.xlu0 %v1448
        %v1450 = vpop.xlane.xlu0 %1449
        %v1451 = vsel %vm893, %v1293, 0.0
        %1452 = vadd.xlane.f32.xlu0 %v1451
        %v1453 = vpop.xlane.xlu0 %1452
        %v1454 = vsel %vm893, %v1294, 0.0
        %1455 = vadd.xlane.f32.xlu0 %v1454
        %v1456 = vpop.xlane.xlu0 %1455
        %v1457 = vsel %vm893, %v1295, 0.0
        %1458 = vadd.xlane.f32.xlu0 %v1457
        %v1459 = vpop.xlane.xlu0 %1458
        %v1460 = vsel %vm893, %v1296, 0.0
        %1461 = vadd.xlane.f32.xlu0 %v1460
        %v1462 = vpop.xlane.xlu0 %1461
        %v1463 = vsel %vm893, %v1297, 0.0
        %1464 = vadd.xlane.f32.xlu0 %v1463
        %v1465 = vpop.xlane.xlu0 %1464
        %v1466 = vsel %vm893, %v1298, 0.0
        %1467 = vadd.xlane.f32.xlu0 %v1466
        %v1468 = vpop.xlane.xlu0 %1467
        %v1469 = vsel %vm893, %v1299, 0.0
        %1470 = vadd.xlane.f32.xlu0 %v1469
        %v1471 = vpop.xlane.xlu0 %1470
        %v1472 = vsel %vm893, %v1300, 0.0
        %1473 = vadd.xlane.f32.xlu0 %v1472
        %v1474 = vpop.xlane.xlu0 %1473
        %v1475 = vsel %vm893, %v1301, 0.0
        %1476 = vadd.xlane.f32.xlu0 %v1475
        %v1477 = vpop.xlane.xlu0 %1476
        %v1478 = vsel %vm893, %v1302, 0.0
        %1479 = vadd.xlane.f32.xlu0 %v1478
        %v1480 = vpop.xlane.xlu0 %1479
        %v1481 = vsel %vm893, %v1303, 0.0
        %1482 = vadd.xlane.f32.xlu0 %v1481
        %v1483 = vpop.xlane.xlu0 %1482
        %v1484 = vsel %vm893, %v1304, 0.0
        %1485 = vadd.xlane.f32.xlu0 %v1484
        %v1486 = vpop.xlane.xlu0 %1485
        %v1487 = vsel %vm893, %v1305, 0.0
        %1488 = vadd.xlane.f32.xlu0 %v1487
        %v1489 = vpop.xlane.xlu0 %1488
        %v1490 = vsel %vm893, %v1306, 0.0
        %1491 = vadd.xlane.f32.xlu0 %v1490
        %v1492 = vpop.xlane.xlu0 %1491
        %v1493 = vsel %vm893, %v1307, 0.0
        %1494 = vadd.xlane.f32.xlu0 %v1493
        %v1495 = vpop.xlane.xlu0 %1494
        %v1496 = vsel %vm893, %v1308, 0.0
        %1497 = vadd.xlane.f32.xlu0 %v1496
        %v1498 = vpop.xlane.xlu0 %1497
        %v1499 = vsel %vm893, %v1309, 0.0
        %1500 = vadd.xlane.f32.xlu0 %v1499
        %v1501 = vpop.xlane.xlu0 %1500
        %v1502 = vsel %vm893, %v1310, 0.0
        %1503 = vadd.xlane.f32.xlu0 %v1502
        %v1504 = vpop.xlane.xlu0 %1503
        %v1505 = vsel %vm893, %v1311, 0.0
        %1506 = vadd.xlane.f32.xlu0 %v1505
        %v1507 = vpop.xlane.xlu0 %1506
        %v1508 = vsel %vm893, %v1312, 0.0
        %1509 = vadd.xlane.f32.xlu0 %v1508
        %v1510 = vpop.xlane.xlu0 %1509
        %v1511 = vsel %vm893, %v1313, 0.0
        %1512 = vadd.xlane.f32.xlu0 %v1511
        %v1513 = vpop.xlane.xlu0 %1512
        %v1514 = vsel %vm893, %v1314, 0.0
        %1515 = vadd.xlane.f32.xlu0 %v1514
        %v1516 = vpop.xlane.xlu0 %1515
        %v1517 = vsel %vm893, %v1315, 0.0
        %1518 = vadd.xlane.f32.xlu0 %v1517
        %v1519 = vpop.xlane.xlu0 %1518
        %v1520 = vsel %vm893, %v1316, 0.0
        %1521 = vadd.xlane.f32.xlu0 %v1520
        %v1522 = vpop.xlane.xlu0 %1521
        %v1523 = vsel %vm893, %v1317, 0.0
        %1524 = vadd.xlane.f32.xlu0 %v1523
        %v1525 = vpop.xlane.xlu0 %1524
        %v1526 = vsel %vm893, %v1318, 0.0
        %1527 = vadd.xlane.f32.xlu0 %v1526
        %v1528 = vpop.xlane.xlu0 %1527
        %v1529 = vsel %vm893, %v1319, 0.0
        %1530 = vadd.xlane.f32.xlu0 %v1529
        %v1531 = vpop.xlane.xlu0 %1530
        %v1532 = vsel %vm893, %v1320, 0.0
        %1533 = vadd.xlane.f32.xlu0 %v1532
        %v1534 = vpop.xlane.xlu0 %1533
        %v1535 = vsel %vm893, %v1321, 0.0
        %1536 = vadd.xlane.f32.xlu0 %v1535
        %v1537 = vpop.xlane.xlu0 %1536
        %v1538 = vsel %vm893, %v1322, 0.0
        %1539 = vadd.xlane.f32.xlu0 %v1538
        %v1540 = vpop.xlane.xlu0 %1539
        %v1541 = vsel %vm893, %v1323, 0.0
        %1542 = vadd.xlane.f32.xlu0 %v1541
        %v1543 = vpop.xlane.xlu0 %1542
        %v1544 = vsel %vm893, %v1324, 0.0
        %1545 = vadd.xlane.f32.xlu0 %v1544
        %v1546 = vpop.xlane.xlu0 %1545
        %v1547 = vsel %vm893, %v1325, 0.0
        %1548 = vadd.xlane.f32.xlu0 %v1547
        %v1549 = vpop.xlane.xlu0 %1548
        %v1550 = vsel %vm893, %v1326, 0.0
        %1551 = vadd.xlane.f32.xlu0 %v1550
        %v1552 = vpop.xlane.xlu0 %1551
        %v1553 = vsel %vm893, %v1327, 0.0
        %1554 = vadd.xlane.f32.xlu0 %v1553
        %v1555 = vpop.xlane.xlu0 %1554
        %v1556 = vsel %vm893, %v1328, 0.0
        %1557 = vadd.xlane.f32.xlu0 %v1556
        %v1558 = vpop.xlane.xlu0 %1557
        %v1559 = vsel %vm893, %v1329, 0.0
        %1560 = vadd.xlane.f32.xlu0 %v1559
        %v1561 = vpop.xlane.xlu0 %1560
        %v1562 = vsel %vm893, %v1330, 0.0
        %1563 = vadd.xlane.f32.xlu0 %v1562
        %v1564 = vpop.xlane.xlu0 %1563
        %v1565 = vsel %vm893, %v1331, 0.0
        %1566 = vadd.xlane.f32.xlu0 %v1565
        %v1567 = vpop.xlane.xlu0 %1566
        %v1568 = vsel %vm893, %v1332, 0.0
        %1569 = vadd.xlane.f32.xlu0 %v1568
        %v1570 = vpop.xlane.xlu0 %1569
        %v1571 = vsel %vm893, %v1333, 0.0
        %1572 = vadd.xlane.f32.xlu0 %v1571
        %v1573 = vpop.xlane.xlu0 %1572
        %v1574 = vsel %vm893, %v1334, 0.0
        %1575 = vadd.xlane.f32.xlu0 %v1574
        %v1576 = vpop.xlane.xlu0 %1575
        %v1577 = vsel %vm893, %v1335, 0.0
        %1578 = vadd.xlane.f32.xlu0 %v1577
        %v1579 = vpop.xlane.xlu0 %1578
        %v1580 = vsel %vm893, %v1336, 0.0
        %1581 = vadd.xlane.f32.xlu0 %v1580
        %v1582 = vpop.xlane.xlu0 %1581
        %v1583 = vsel %vm893, %v1337, 0.0
        %1584 = vadd.xlane.f32.xlu0 %v1583
        %v1585 = vpop.xlane.xlu0 %1584
        %v1586 = vsel %vm893, %v1338, 0.0
        %1587 = vadd.xlane.f32.xlu0 %v1586
        %v1588 = vpop.xlane.xlu0 %1587
        %v1589 = vsel %vm893, %v1339, 0.0
        %1590 = vadd.xlane.f32.xlu0 %v1589
        %v1591 = vpop.xlane.xlu0 %1590
        %v1592 = vsel %vm893, %v1340, 0.0
        %1593 = vadd.xlane.f32.xlu0 %v1592
        %v1594 = vpop.xlane.xlu0 %1593
        %v1595 = vsel %vm893, %v1341, 0.0
        %1596 = vadd.xlane.f32.xlu0 %v1595
        %v1597 = vpop.xlane.xlu0 %1596
        %v1598 = vsel %vm893, %v1342, 0.0
        %1599 = vadd.xlane.f32.xlu0 %v1598
        %v1600 = vpop.xlane.xlu0 %1599
        %v1601 = vsel %vm893, %v1343, 0.0
        %1602 = vadd.xlane.f32.xlu0 %v1601
        %v1603 = vpop.xlane.xlu0 %1602
        %v1604 = vsel %vm893, %v1344, 0.0
        %1605 = vadd.xlane.f32.xlu0 %v1604
        %v1606 = vpop.xlane.xlu0 %1605
        %v1607 = vsel %vm893, %v1345, 0.0
        %1608 = vadd.xlane.f32.xlu0 %v1607
        %v1609 = vpop.xlane.xlu0 %1608
        %v1610 = vsel %vm893, %v1346, 0.0
        %1611 = vadd.xlane.f32.xlu0 %v1610
        %v1612 = vpop.xlane.xlu0 %1611
        %v1613 = vsel %vm893, %v1347, 0.0
        %1614 = vadd.xlane.f32.xlu0 %v1613
        %v1615 = vpop.xlane.xlu0 %1614
        %v1616 = vsel %vm893, %v1348, 0.0
        %1617 = vadd.xlane.f32.xlu0 %v1616
        %v1618 = vpop.xlane.xlu0 %1617
        %v1619 = vsel %vm893, %v1349, 0.0
        %1620 = vadd.xlane.f32.xlu0 %v1619
        %v1621 = vpop.xlane.xlu0 %1620
        %v1622 = vsel %vm893, %v1350, 0.0
        %1623 = vadd.xlane.f32.xlu0 %v1622
        %v1624 = vpop.xlane.xlu0 %1623
        %v1625 = vsel %vm893, %v1351, 0.0
        %1626 = vadd.xlane.f32.xlu0 %v1625
        %v1627 = vpop.xlane.xlu0 %1626
        %v1628 = vsel %vm893, %v1352, 0.0
        %1629 = vadd.xlane.f32.xlu0 %v1628
        %v1630 = vpop.xlane.xlu0 %1629
        %v1631 = vsel %vm893, %v1353, 0.0
        %1632 = vadd.xlane.f32.xlu0 %v1631
        %v1633 = vpop.xlane.xlu0 %1632
        %v1634 = vsel %vm893, %v1354, 0.0
        %1635 = vadd.xlane.f32.xlu0 %v1634
        %v1636 = vpop.xlane.xlu0 %1635
        %v1637 = vsel %vm893, %v1355, 0.0
        %1638 = vadd.xlane.f32.xlu0 %v1637
        %v1639 = vpop.xlane.xlu0 %1638
        %v1640 = vsel %vm893, %v1356, 0.0
        %1641 = vadd.xlane.f32.xlu0 %v1640
        %v1642 = vpop.xlane.xlu0 %1641
        %v1643 = vsel %vm893, %v1357, 0.0
        %1644 = vadd.xlane.f32.xlu0 %v1643
        %v1645 = vpop.xlane.xlu0 %1644
        %v1646 = vsel %vm893, %v1358, 0.0
        %1647 = vadd.xlane.f32.xlu0 %v1646
        %v1648 = vpop.xlane.xlu0 %1647
        %v1649 = vsel %vm893, %v1359, 0.0
        %1650 = vadd.xlane.f32.xlu0 %v1649
        %v1651 = vpop.xlane.xlu0 %1650
        %v1652 = vsel %vm893, %v1360, 0.0
        %1653 = vadd.xlane.f32.xlu0 %v1652
        %v1654 = vpop.xlane.xlu0 %1653
        %v1655 = vsel %vm893, %v1361, 0.0
        %1656 = vadd.xlane.f32.xlu0 %v1655
        %v1657 = vpop.xlane.xlu0 %1656
        %v1658 = vsel %vm893, %v1362, 0.0
        %1659 = vadd.xlane.f32.xlu0 %v1658
        %v1660 = vpop.xlane.xlu0 %1659
        %v1661 = vsel %vm893, %v1363, 0.0
        %1662 = vadd.xlane.f32.xlu0 %v1661
        %v1663 = vpop.xlane.xlu0 %1662
        %v1664 = vsel %vm893, %v1364, 0.0
        %1665 = vadd.xlane.f32.xlu0 %v1664
        %v1666 = vpop.xlane.xlu0 %1665
        %v1667 = vsel %vm893, %v1365, 0.0
        %1668 = vadd.xlane.f32.xlu0 %v1667
        %v1669 = vpop.xlane.xlu0 %1668
        %v1670 = vsel %vm893, %v1366, 0.0
        %1671 = vadd.xlane.f32.xlu0 %v1670
        %v1672 = vpop.xlane.xlu0 %1671
        %v1673 = vsel %vm893, %v1367, 0.0
        %1674 = vadd.xlane.f32.xlu0 %v1673
        %v1675 = vpop.xlane.xlu0 %1674
        %v1676 = vsel %vm893, %v1368, 0.0
        %1677 = vadd.xlane.f32.xlu0 %v1676
        %v1678 = vpop.xlane.xlu0 %1677
        %v1679 = vsel %vm893, %v1369, 0.0
        %1680 = vadd.xlane.f32.xlu0 %v1679
        %v1681 = vpop.xlane.xlu0 %1680
        %v1682 = vsel %vm893, %v1370, 0.0
        %1683 = vadd.xlane.f32.xlu0 %v1682
        %v1684 = vpop.xlane.xlu0 %1683
        %v1685 = vsel %vm893, %v1371, 0.0
        %1686 = vadd.xlane.f32.xlu0 %v1685
        %v1687 = vpop.xlane.xlu0 %1686
        %v1688 = vsel %vm893, %v1372, 0.0
        %1689 = vadd.xlane.f32.xlu0 %v1688
        %v1690 = vpop.xlane.xlu0 %1689
        %v1691 = vsel %vm893, %v1373, 0.0
        %1692 = vadd.xlane.f32.xlu0 %v1691
        %v1693 = vpop.xlane.xlu0 %1692
        %v1694 = vsel %vm893, %v1374, 0.0
        %1695 = vadd.xlane.f32.xlu0 %v1694
        %v1696 = vpop.xlane.xlu0 %1695
        %v1697 = vsel %vm893, %v1375, 0.0
        %1698 = vadd.xlane.f32.xlu0 %v1697
        %v1699 = vpop.xlane.xlu0 %1698
        %v1700 = vsel %vm893, %v1376, 0.0
        %1701 = vadd.xlane.f32.xlu0 %v1700
        %v1702 = vpop.xlane.xlu0 %1701
        %v1703 = vsel %vm893, %v1377, 0.0
        %1704 = vadd.xlane.f32.xlu0 %v1703
        %v1705 = vpop.xlane.xlu0 %1704
        %v1706 = vsel %vm893, %v1378, 0.0
        %1707 = vadd.xlane.f32.xlu0 %v1706
        %v1708 = vpop.xlane.xlu0 %1707
        %v1709 = vsel %vm893, %v1379, 0.0
        %1710 = vadd.xlane.f32.xlu0 %v1709
        %v1711 = vpop.xlane.xlu0 %1710
        %v1712 = vsel %vm893, %v1380, 0.0
        %1713 = vadd.xlane.f32.xlu0 %v1712
        %v1714 = vpop.xlane.xlu0 %1713
        %v1715 = vsel %vm893, %v1381, 0.0
        %1716 = vadd.xlane.f32.xlu0 %v1715
        %v1717 = vpop.xlane.xlu0 %1716
        %v1718 = vsel %vm893, %v1382, 0.0
        %1719 = vadd.xlane.f32.xlu0 %v1718
        %v1720 = vpop.xlane.xlu0 %1719
        %v1721 = vsel %vm893, %v1383, 0.0
        %1722 = vadd.xlane.f32.xlu0 %v1721
        %v1723 = vpop.xlane.xlu0 %1722
        %v1724 = vsel %vm893, %v1384, 0.0
        %1725 = vadd.xlane.f32.xlu0 %v1724
        %v1726 = vpop.xlane.xlu0 %1725
        %v1727 = vsel %vm893, %v1385, 0.0
        %1728 = vadd.xlane.f32.xlu0 %v1727
        %v1729 = vpop.xlane.xlu0 %1728
        %v1730 = vsel %vm893, %v1386, 0.0
        %1731 = vadd.xlane.f32.xlu0 %v1730
        %v1732 = vpop.xlane.xlu0 %1731
        %v1733 = vsel %vm893, %v1387, 0.0
        %1734 = vadd.xlane.f32.xlu0 %v1733
        %v1735 = vpop.xlane.xlu0 %1734
        %v1736 = vsel %vm893, %v1388, 0.0
        %1737 = vadd.xlane.f32.xlu0 %v1736
        %v1738 = vpop.xlane.xlu0 %1737
        %v1739 = vsel %vm893, %v1389, 0.0
        %1740 = vadd.xlane.f32.xlu0 %v1739
        %v1741 = vpop.xlane.xlu0 %1740
        %v1742 = vsel %vm893, %v1390, 0.0
        %1743 = vadd.xlane.f32.xlu0 %v1742
        %v1744 = vpop.xlane.xlu0 %1743
        %v1745 = vsel %vm893, %v1391, 0.0
        %1746 = vadd.xlane.f32.xlu0 %v1745
        %v1747 = vpop.xlane.xlu0 %1746
        %v1748 = vsel %vm893, %v1392, 0.0
        %1749 = vadd.xlane.f32.xlu0 %v1748
        %v1750 = vpop.xlane.xlu0 %1749
        %v1751 = vsel %vm893, %v1393, 0.0
        %1752 = vadd.xlane.f32.xlu0 %v1751
        %v1753 = vpop.xlane.xlu0 %1752
        %v1754 = vsel %vm893, %v1394, 0.0
        %1755 = vadd.xlane.f32.xlu0 %v1754
        %v1756 = vpop.xlane.xlu0 %1755
        %v1757 = vsel %vm893, %v1395, 0.0
        %1758 = vadd.xlane.f32.xlu0 %v1757
        %v1759 = vpop.xlane.xlu0 %1758
        %v1760 = vsel %vm893, %v1396, 0.0
        %1761 = vadd.xlane.f32.xlu0 %v1760
        %v1762 = vpop.xlane.xlu0 %1761
        %v1763 = vsel %vm893, %v1397, 0.0
        %1764 = vadd.xlane.f32.xlu0 %v1763
        %v1765 = vpop.xlane.xlu0 %1764
        %v1766 = vsel %vm893, %v1398, 0.0
        %1767 = vadd.xlane.f32.xlu0 %v1766
        %v1768 = vpop.xlane.xlu0 %1767
        %v1769 = vsel %vm893, %v1399, 0.0
        %1770 = vadd.xlane.f32.xlu0 %v1769
        %v1771 = vpop.xlane.xlu0 %1770
        %v1772 = vsel %vm893, %v1400, 0.0
        %1773 = vadd.xlane.f32.xlu0 %v1772
        %v1774 = vpop.xlane.xlu0 %1773
        %v1775 = vsel %vm893, %v1401, 0.0
        %1776 = vadd.xlane.f32.xlu0 %v1775
        %v1777 = vpop.xlane.xlu0 %1776
        %v1778 = vsel %vm893, %v1402, 0.0
        %1779 = vadd.xlane.f32.xlu0 %v1778
        %v1780 = vpop.xlane.xlu0 %1779
        %v1781 = vsel %vm893, %v1403, 0.0
        %1782 = vadd.xlane.f32.xlu0 %v1781
        %v1783 = vpop.xlane.xlu0 %1782
        %v1784 = vsel %vm893, %v1404, 0.0
        %1785 = vadd.xlane.f32.xlu0 %v1784
        %v1786 = vpop.xlane.xlu0 %1785
        %v1787 = vsel %vm893, %v1405, 0.0
        %1788 = vadd.xlane.f32.xlu0 %v1787
        %v1789 = vpop.xlane.xlu0 %1788
        %v1790 = vsub.f32 0.0, %v896
        %v1791 = vsub.f32 0.0, %v899
        %v1792 = vsub.f32 0.0, %v902
        %v1793 = vsub.f32 0.0, %v905
        %v1794 = vsub.f32 0.0, %v908
        %v1795 = vsub.f32 0.0, %v911
        %v1796 = vsub.f32 0.0, %v914
        %v1797 = vsub.f32 0.0, %v917
        %v1798 = vsub.f32 0.0, %v920
        %v1799 = vsub.f32 0.0, %v923
        %v1800 = vsub.f32 0.0, %v926
        %v1801 = vsub.f32 0.0, %v929
        %v1802 = vsub.f32 0.0, %v932
        %v1803 = vsub.f32 0.0, %v935
        %v1804 = vsub.f32 0.0, %v938
        %v1805 = vsub.f32 0.0, %v941
        %v1806 = vsub.f32 0.0, %v944
        %v1807 = vsub.f32 0.0, %v947
        %v1808 = vsub.f32 0.0, %v950
        %v1809 = vsub.f32 0.0, %v953
        %v1810 = vsub.f32 0.0, %v956
        %v1811 = vsub.f32 0.0, %v959
        %v1812 = vsub.f32 0.0, %v962
        %v1813 = vsub.f32 0.0, %v965
        %v1814 = vsub.f32 0.0, %v968
        %v1815 = vsub.f32 0.0, %v971
        %v1816 = vsub.f32 0.0, %v974
        %v1817 = vsub.f32 0.0, %v977
        %v1818 = vsub.f32 0.0, %v980
        %v1819 = vsub.f32 0.0, %v983
        %v1820 = vsub.f32 0.0, %v986
        %v1821 = vsub.f32 0.0, %v989
        %v1822 = vsub.f32 0.0, %v992
        %v1823 = vsub.f32 0.0, %v995
        %v1824 = vsub.f32 0.0, %v998
        %v1825 = vsub.f32 0.0, %v1001
        %v1826 = vsub.f32 0.0, %v1004
        %v1827 = vsub.f32 0.0, %v1007
        %v1828 = vsub.f32 0.0, %v1010
        %v1829 = vsub.f32 0.0, %v1013
        %v1830 = vsub.f32 0.0, %v1016
        %v1831 = vsub.f32 0.0, %v1019
        %v1832 = vsub.f32 0.0, %v1022
        %v1833 = vsub.f32 0.0, %v1025
        %v1834 = vsub.f32 0.0, %v1028
        %v1835 = vsub.f32 0.0, %v1031
        %v1836 = vsub.f32 0.0, %v1034
        %v1837 = vsub.f32 0.0, %v1037
        %v1838 = vsub.f32 0.0, %v1040
        %v1839 = vsub.f32 0.0, %v1043
        %v1840 = vsub.f32 0.0, %v1046
        %v1841 = vsub.f32 0.0, %v1049
        %v1842 = vsub.f32 0.0, %v1052
        %v1843 = vsub.f32 0.0, %v1055
        %v1844 = vsub.f32 0.0, %v1058
        %v1845 = vsub.f32 0.0, %v1061
        %v1846 = vsub.f32 0.0, %v1064
        %v1847 = vsub.f32 0.0, %v1067
        %v1848 = vsub.f32 0.0, %v1070
        %v1849 = vsub.f32 0.0, %v1073
        %v1850 = vsub.f32 0.0, %v1076
        %v1851 = vsub.f32 0.0, %v1079
        %v1852 = vsub.f32 0.0, %v1082
        %v1853 = vsub.f32 0.0, %v1085
        %v1854 = vsub.f32 0.0, %v1088
        %v1855 = vsub.f32 0.0, %v1091
        %v1856 = vsub.f32 0.0, %v1094
        %v1857 = vsub.f32 0.0, %v1097
        %v1858 = vsub.f32 0.0, %v1100
        %v1859 = vsub.f32 0.0, %v1103
        %v1860 = vsub.f32 0.0, %v1106
        %v1861 = vsub.f32 0.0, %v1109
        %v1862 = vsub.f32 0.0, %v1112
        %v1863 = vsub.f32 0.0, %v1115
        %v1864 = vsub.f32 0.0, %v1118
        %v1865 = vsub.f32 0.0, %v1121
        %v1866 = vsub.f32 0.0, %v1124
        %v1867 = vsub.f32 0.0, %v1127
        %v1868 = vsub.f32 0.0, %v1130
        %v1869 = vsub.f32 0.0, %v1133
        %v1870 = vsub.f32 0.0, %v1136
        %v1871 = vsub.f32 0.0, %v1139
        %v1872 = vsub.f32 0.0, %v1142
        %v1873 = vsub.f32 0.0, %v1145
        %v1874 = vsub.f32 0.0, %v1148
        %v1875 = vsub.f32 0.0, %v1151
        %v1876 = vsub.f32 0.0, %v1154
        %v1877 = vsub.f32 0.0, %v1157
        %v1878 = vsub.f32 0.0, %v1160
        %v1879 = vsub.f32 0.0, %v1163
        %v1880 = vsub.f32 0.0, %v1166
        %v1881 = vsub.f32 0.0, %v1169
        %v1882 = vsub.f32 0.0, %v1172
        %v1883 = vsub.f32 0.0, %v1175
        %v1884 = vsub.f32 0.0, %v1178
        %v1885 = vsub.f32 0.0, %v1181
        %v1886 = vsub.f32 0.0, %v1184
        %v1887 = vsub.f32 0.0, %v1187
        %v1888 = vsub.f32 0.0, %v1190
        %v1889 = vsub.f32 0.0, %v1193
        %v1890 = vsub.f32 0.0, %v1196
        %v1891 = vsub.f32 0.0, %v1199
        %v1892 = vsub.f32 0.0, %v1202
        %v1893 = vsub.f32 0.0, %v1205
        %v1894 = vsub.f32 0.0, %v1208
        %v1895 = vsub.f32 0.0, %v1211
        %v1896 = vsub.f32 0.0, %v1214
        %v1897 = vsub.f32 0.0, %v1217
        %v1898 = vsub.f32 0.0, %v1220
        %v1899 = vsub.f32 0.0, %v1223
        %v1900 = vsub.f32 0.0, %v1226
        %v1901 = vsub.f32 0.0, %v1229
        %v1902 = vsub.f32 0.0, %v1232
        %v1903 = vsub.f32 0.0, %v1235
        %v1904 = vsub.f32 0.0, %v1238
        %v1905 = vsub.f32 0.0, %v1241
        %v1906 = vsub.f32 0.0, %v1244
        %v1907 = vsub.f32 0.0, %v1247
        %v1908 = vsub.f32 0.0, %v1250
        %v1909 = vsub.f32 0.0, %v1253
        %v1910 = vsub.f32 0.0, %v1256
        %v1911 = vsub.f32 0.0, %v1259
        %v1912 = vsub.f32 0.0, %v1262
        %v1913 = vsub.f32 0.0, %v1265
        %v1914 = vsub.f32 0.0, %v1268
        %v1915 = vsub.f32 0.0, %v1271
        %v1916 = vsub.f32 0.0, %v1274
        %v1917 = vsub.f32 0.0, %v1277
        %v1918 = vmax.f32 %v1790, 0.0
        %v1919 = vmax.f32 %v1791, 0.0
        %v1920 = vmax.f32 %v1792, 0.0
        %v1921 = vmax.f32 %v1793, 0.0
        %v1922 = vmax.f32 %v1794, 0.0
        %v1923 = vmax.f32 %v1795, 0.0
        %v1924 = vmax.f32 %v1796, 0.0
        %v1925 = vmax.f32 %v1797, 0.0
        %v1926 = vmax.f32 %v1798, 0.0
        %v1927 = vmax.f32 %v1799, 0.0
        %v1928 = vmax.f32 %v1800, 0.0
        %v1929 = vmax.f32 %v1801, 0.0
        %v1930 = vmax.f32 %v1802, 0.0
        %v1931 = vmax.f32 %v1803, 0.0
        %v1932 = vmax.f32 %v1804, 0.0
        %v1933 = vmax.f32 %v1805, 0.0
        %v1934 = vmax.f32 %v1806, 0.0
        %v1935 = vmax.f32 %v1807, 0.0
        %v1936 = vmax.f32 %v1808, 0.0
        %v1937 = vmax.f32 %v1809, 0.0
        %v1938 = vmax.f32 %v1810, 0.0
        %v1939 = vmax.f32 %v1811, 0.0
        %v1940 = vmax.f32 %v1812, 0.0
        %v1941 = vmax.f32 %v1813, 0.0
        %v1942 = vmax.f32 %v1814, 0.0
        %v1943 = vmax.f32 %v1815, 0.0
        %v1944 = vmax.f32 %v1816, 0.0
        %v1945 = vmax.f32 %v1817, 0.0
        %v1946 = vmax.f32 %v1818, 0.0
        %v1947 = vmax.f32 %v1819, 0.0
        %v1948 = vmax.f32 %v1820, 0.0
        %v1949 = vmax.f32 %v1821, 0.0
        %v1950 = vmax.f32 %v1822, 0.0
        %v1951 = vmax.f32 %v1823, 0.0
        %v1952 = vmax.f32 %v1824, 0.0
        %v1953 = vmax.f32 %v1825, 0.0
        %v1954 = vmax.f32 %v1826, 0.0
        %v1955 = vmax.f32 %v1827, 0.0
        %v1956 = vmax.f32 %v1828, 0.0
        %v1957 = vmax.f32 %v1829, 0.0
        %v1958 = vmax.f32 %v1830, 0.0
        %v1959 = vmax.f32 %v1831, 0.0
        %v1960 = vmax.f32 %v1832, 0.0
        %v1961 = vmax.f32 %v1833, 0.0
        %v1962 = vmax.f32 %v1834, 0.0
        %v1963 = vmax.f32 %v1835, 0.0
        %v1964 = vmax.f32 %v1836, 0.0
        %v1965 = vmax.f32 %v1837, 0.0
        %v1966 = vmax.f32 %v1838, 0.0
        %v1967 = vmax.f32 %v1839, 0.0
        %v1968 = vmax.f32 %v1840, 0.0
        %v1969 = vmax.f32 %v1841, 0.0
        %v1970 = vmax.f32 %v1842, 0.0
        %v1971 = vmax.f32 %v1843, 0.0
        %v1972 = vmax.f32 %v1844, 0.0
        %v1973 = vmax.f32 %v1845, 0.0
        %v1974 = vmax.f32 %v1846, 0.0
        %v1975 = vmax.f32 %v1847, 0.0
        %v1976 = vmax.f32 %v1848, 0.0
        %v1977 = vmax.f32 %v1849, 0.0
        %v1978 = vmax.f32 %v1850, 0.0
        %v1979 = vmax.f32 %v1851, 0.0
        %v1980 = vmax.f32 %v1852, 0.0
        %v1981 = vmax.f32 %v1853, 0.0
        %v1982 = vmax.f32 %v1854, 0.0
        %v1983 = vmax.f32 %v1855, 0.0
        %v1984 = vmax.f32 %v1856, 0.0
        %v1985 = vmax.f32 %v1857, 0.0
        %v1986 = vmax.f32 %v1858, 0.0
        %v1987 = vmax.f32 %v1859, 0.0
        %v1988 = vmax.f32 %v1860, 0.0
        %v1989 = vmax.f32 %v1861, 0.0
        %v1990 = vmax.f32 %v1862, 0.0
        %v1991 = vmax.f32 %v1863, 0.0
        %v1992 = vmax.f32 %v1864, 0.0
        %v1993 = vmax.f32 %v1865, 0.0
        %v1994 = vmax.f32 %v1866, 0.0
        %v1995 = vmax.f32 %v1867, 0.0
        %v1996 = vmax.f32 %v1868, 0.0
        %v1997 = vmax.f32 %v1869, 0.0
        %v1998 = vmax.f32 %v1870, 0.0
        %v1999 = vmax.f32 %v1871, 0.0
        %v2000 = vmax.f32 %v1872, 0.0
        %v2001 = vmax.f32 %v1873, 0.0
        %v2002 = vmax.f32 %v1874, 0.0
        %v2003 = vmax.f32 %v1875, 0.0
        %v2004 = vmax.f32 %v1876, 0.0
        %v2005 = vmax.f32 %v1877, 0.0
        %v2006 = vmax.f32 %v1878, 0.0
        %v2007 = vmax.f32 %v1879, 0.0
        %v2008 = vmax.f32 %v1880, 0.0
        %v2009 = vmax.f32 %v1881, 0.0
        %v2010 = vmax.f32 %v1882, 0.0
        %v2011 = vmax.f32 %v1883, 0.0
        %v2012 = vmax.f32 %v1884, 0.0
        %v2013 = vmax.f32 %v1885, 0.0
        %v2014 = vmax.f32 %v1886, 0.0
        %v2015 = vmax.f32 %v1887, 0.0
        %v2016 = vmax.f32 %v1888, 0.0
        %v2017 = vmax.f32 %v1889, 0.0
        %v2018 = vmax.f32 %v1890, 0.0
        %v2019 = vmax.f32 %v1891, 0.0
        %v2020 = vmax.f32 %v1892, 0.0
        %v2021 = vmax.f32 %v1893, 0.0
        %v2022 = vmax.f32 %v1894, 0.0
        %v2023 = vmax.f32 %v1895, 0.0
        %v2024 = vmax.f32 %v1896, 0.0
        %v2025 = vmax.f32 %v1897, 0.0
        %v2026 = vmax.f32 %v1898, 0.0
        %v2027 = vmax.f32 %v1899, 0.0
        %v2028 = vmax.f32 %v1900, 0.0
        %v2029 = vmax.f32 %v1901, 0.0
        %v2030 = vmax.f32 %v1902, 0.0
        %v2031 = vmax.f32 %v1903, 0.0
        %v2032 = vmax.f32 %v1904, 0.0
        %v2033 = vmax.f32 %v1905, 0.0
        %v2034 = vmax.f32 %v1906, 0.0
        %v2035 = vmax.f32 %v1907, 0.0
        %v2036 = vmax.f32 %v1908, 0.0
        %v2037 = vmax.f32 %v1909, 0.0
        %v2038 = vmax.f32 %v1910, 0.0
        %v2039 = vmax.f32 %v1911, 0.0
        %v2040 = vmax.f32 %v1912, 0.0
        %v2041 = vmax.f32 %v1913, 0.0
        %v2042 = vmax.f32 %v1914, 0.0
        %v2043 = vmax.f32 %v1915, 0.0
        %v2044 = vmax.f32 %v1916, 0.0
        %v2045 = vmax.f32 %v1917, 0.0
        %v2046 = vand.u32 2147483647, %v896
        %v2047 = vand.u32 2147483647, %v899
        %v2048 = vand.u32 2147483647, %v902
        %v2049 = vand.u32 2147483647, %v905
        %v2050 = vand.u32 2147483647, %v908
        %v2051 = vand.u32 2147483647, %v911
        %v2052 = vand.u32 2147483647, %v914
        %v2053 = vand.u32 2147483647, %v917
        %v2054 = vand.u32 2147483647, %v920
        %v2055 = vand.u32 2147483647, %v923
        %v2056 = vand.u32 2147483647, %v926
        %v2057 = vand.u32 2147483647, %v929
        %v2058 = vand.u32 2147483647, %v932
        %v2059 = vand.u32 2147483647, %v935
        %v2060 = vand.u32 2147483647, %v938
        %v2061 = vand.u32 2147483647, %v941
        %v2062 = vand.u32 2147483647, %v944
        %v2063 = vand.u32 2147483647, %v947
        %v2064 = vand.u32 2147483647, %v950
        %v2065 = vand.u32 2147483647, %v953
        %v2066 = vand.u32 2147483647, %v956
        %v2067 = vand.u32 2147483647, %v959
        %v2068 = vand.u32 2147483647, %v962
        %v2069 = vand.u32 2147483647, %v965
        %v2070 = vand.u32 2147483647, %v968
        %v2071 = vand.u32 2147483647, %v971
        %v2072 = vand.u32 2147483647, %v974
        %v2073 = vand.u32 2147483647, %v977
        %v2074 = vand.u32 2147483647, %v980
        %v2075 = vand.u32 2147483647, %v983
        %v2076 = vand.u32 2147483647, %v986
        %v2077 = vand.u32 2147483647, %v989
        %v2078 = vand.u32 2147483647, %v992
        %v2079 = vand.u32 2147483647, %v995
        %v2080 = vand.u32 2147483647, %v998
        %v2081 = vand.u32 2147483647, %v1001
        %v2082 = vand.u32 2147483647, %v1004
        %v2083 = vand.u32 2147483647, %v1007
        %v2084 = vand.u32 2147483647, %v1010
        %v2085 = vand.u32 2147483647, %v1013
        %v2086 = vand.u32 2147483647, %v1016
        %v2087 = vand.u32 2147483647, %v1019
        %v2088 = vand.u32 2147483647, %v1022
        %v2089 = vand.u32 2147483647, %v1025
        %v2090 = vand.u32 2147483647, %v1028
        %v2091 = vand.u32 2147483647, %v1031
        %v2092 = vand.u32 2147483647, %v1034
        %v2093 = vand.u32 2147483647, %v1037
        %v2094 = vand.u32 2147483647, %v1040
        %v2095 = vand.u32 2147483647, %v1043
        %v2096 = vand.u32 2147483647, %v1046
        %v2097 = vand.u32 2147483647, %v1049
        %v2098 = vand.u32 2147483647, %v1052
        %v2099 = vand.u32 2147483647, %v1055
        %v2100 = vand.u32 2147483647, %v1058
        %v2101 = vand.u32 2147483647, %v1061
        %v2102 = vand.u32 2147483647, %v1064
        %v2103 = vand.u32 2147483647, %v1067
        %v2104 = vand.u32 2147483647, %v1070
        %v2105 = vand.u32 2147483647, %v1073
        %v2106 = vand.u32 2147483647, %v1076
        %v2107 = vand.u32 2147483647, %v1079
        %v2108 = vand.u32 2147483647, %v1082
        %v2109 = vand.u32 2147483647, %v1085
        %v2110 = vand.u32 2147483647, %v1088
        %v2111 = vand.u32 2147483647, %v1091
        %v2112 = vand.u32 2147483647, %v1094
        %v2113 = vand.u32 2147483647, %v1097
        %v2114 = vand.u32 2147483647, %v1100
        %v2115 = vand.u32 2147483647, %v1103
        %v2116 = vand.u32 2147483647, %v1106
        %v2117 = vand.u32 2147483647, %v1109
        %v2118 = vand.u32 2147483647, %v1112
        %v2119 = vand.u32 2147483647, %v1115
        %v2120 = vand.u32 2147483647, %v1118
        %v2121 = vand.u32 2147483647, %v1121
        %v2122 = vand.u32 2147483647, %v1124
        %v2123 = vand.u32 2147483647, %v1127
        %v2124 = vand.u32 2147483647, %v1130
        %v2125 = vand.u32 2147483647, %v1133
        %v2126 = vand.u32 2147483647, %v1136
        %v2127 = vand.u32 2147483647, %v1139
        %v2128 = vand.u32 2147483647, %v1142
        %v2129 = vand.u32 2147483647, %v1145
        %v2130 = vand.u32 2147483647, %v1148
        %v2131 = vand.u32 2147483647, %v1151
        %v2132 = vand.u32 2147483647, %v1154
        %v2133 = vand.u32 2147483647, %v1157
        %v2134 = vand.u32 2147483647, %v1160
        %v2135 = vand.u32 2147483647, %v1163
        %v2136 = vand.u32 2147483647, %v1166
        %v2137 = vand.u32 2147483647, %v1169
        %v2138 = vand.u32 2147483647, %v1172
        %v2139 = vand.u32 2147483647, %v1175
        %v2140 = vand.u32 2147483647, %v1178
        %v2141 = vand.u32 2147483647, %v1181
        %v2142 = vand.u32 2147483647, %v1184
        %v2143 = vand.u32 2147483647, %v1187
        %v2144 = vand.u32 2147483647, %v1190
        %v2145 = vand.u32 2147483647, %v1193
        %v2146 = vand.u32 2147483647, %v1196
        %v2147 = vand.u32 2147483647, %v1199
        %v2148 = vand.u32 2147483647, %v1202
        %v2149 = vand.u32 2147483647, %v1205
        %v2150 = vand.u32 2147483647, %v1208
        %v2151 = vand.u32 2147483647, %v1211
        %v2152 = vand.u32 2147483647, %v1214
        %v2153 = vand.u32 2147483647, %v1217
        %v2154 = vand.u32 2147483647, %v1220
        %v2155 = vand.u32 2147483647, %v1223
        %v2156 = vand.u32 2147483647, %v1226
        %v2157 = vand.u32 2147483647, %v1229
        %v2158 = vand.u32 2147483647, %v1232
        %v2159 = vand.u32 2147483647, %v1235
        %v2160 = vand.u32 2147483647, %v1238
        %v2161 = vand.u32 2147483647, %v1241
        %v2162 = vand.u32 2147483647, %v1244
        %v2163 = vand.u32 2147483647, %v1247
        %v2164 = vand.u32 2147483647, %v1250
        %v2165 = vand.u32 2147483647, %v1253
        %v2166 = vand.u32 2147483647, %v1256
        %v2167 = vand.u32 2147483647, %v1259
        %v2168 = vand.u32 2147483647, %v1262
        %v2169 = vand.u32 2147483647, %v1265
        %v2170 = vand.u32 2147483647, %v1268
        %v2171 = vand.u32 2147483647, %v1271
        %v2172 = vand.u32 2147483647, %v1274
        %v2173 = vand.u32 2147483647, %v1277
        %v2174 = vsub.f32 0.0, %v2046
        %v2175 = vsub.f32 0.0, %v2047
        %v2176 = vsub.f32 0.0, %v2048
        %v2177 = vsub.f32 0.0, %v2049
        %v2178 = vsub.f32 0.0, %v2050
        %v2179 = vsub.f32 0.0, %v2051
        %v2180 = vsub.f32 0.0, %v2052
        %v2181 = vsub.f32 0.0, %v2053
        %v2182 = vsub.f32 0.0, %v2054
        %v2183 = vsub.f32 0.0, %v2055
        %v2184 = vsub.f32 0.0, %v2056
        %v2185 = vsub.f32 0.0, %v2057
        %v2186 = vsub.f32 0.0, %v2058
        %v2187 = vsub.f32 0.0, %v2059
        %v2188 = vsub.f32 0.0, %v2060
        %v2189 = vsub.f32 0.0, %v2061
        %v2190 = vsub.f32 0.0, %v2062
        %v2191 = vsub.f32 0.0, %v2063
        %v2192 = vsub.f32 0.0, %v2064
        %v2193 = vsub.f32 0.0, %v2065
        %v2194 = vsub.f32 0.0, %v2066
        %v2195 = vsub.f32 0.0, %v2067
        %v2196 = vsub.f32 0.0, %v2068
        %v2197 = vsub.f32 0.0, %v2069
        %v2198 = vsub.f32 0.0, %v2070
        %v2199 = vsub.f32 0.0, %v2071
        %v2200 = vsub.f32 0.0, %v2072
        %v2201 = vsub.f32 0.0, %v2073
        %v2202 = vsub.f32 0.0, %v2074
        %v2203 = vsub.f32 0.0, %v2075
        %v2204 = vsub.f32 0.0, %v2076
        %v2205 = vsub.f32 0.0, %v2077
        %v2206 = vsub.f32 0.0, %v2078
        %v2207 = vsub.f32 0.0, %v2079
        %v2208 = vsub.f32 0.0, %v2080
        %v2209 = vsub.f32 0.0, %v2081
        %v2210 = vsub.f32 0.0, %v2082
        %v2211 = vsub.f32 0.0, %v2083
        %v2212 = vsub.f32 0.0, %v2084
        %v2213 = vsub.f32 0.0, %v2085
        %v2214 = vsub.f32 0.0, %v2086
        %v2215 = vsub.f32 0.0, %v2087
        %v2216 = vsub.f32 0.0, %v2088
        %v2217 = vsub.f32 0.0, %v2089
        %v2218 = vsub.f32 0.0, %v2090
        %v2219 = vsub.f32 0.0, %v2091
        %v2220 = vsub.f32 0.0, %v2092
        %v2221 = vsub.f32 0.0, %v2093
        %v2222 = vsub.f32 0.0, %v2094
        %v2223 = vsub.f32 0.0, %v2095
        %v2224 = vsub.f32 0.0, %v2096
        %v2225 = vsub.f32 0.0, %v2097
        %v2226 = vsub.f32 0.0, %v2098
        %v2227 = vsub.f32 0.0, %v2099
        %v2228 = vsub.f32 0.0, %v2100
        %v2229 = vsub.f32 0.0, %v2101
        %v2230 = vsub.f32 0.0, %v2102
        %v2231 = vsub.f32 0.0, %v2103
        %v2232 = vsub.f32 0.0, %v2104
        %v2233 = vsub.f32 0.0, %v2105
        %v2234 = vsub.f32 0.0, %v2106
        %v2235 = vsub.f32 0.0, %v2107
        %v2236 = vsub.f32 0.0, %v2108
        %v2237 = vsub.f32 0.0, %v2109
        %v2238 = vsub.f32 0.0, %v2110
        %v2239 = vsub.f32 0.0, %v2111
        %v2240 = vsub.f32 0.0, %v2112
        %v2241 = vsub.f32 0.0, %v2113
        %v2242 = vsub.f32 0.0, %v2114
        %v2243 = vsub.f32 0.0, %v2115
        %v2244 = vsub.f32 0.0, %v2116
        %v2245 = vsub.f32 0.0, %v2117
        %v2246 = vsub.f32 0.0, %v2118
        %v2247 = vsub.f32 0.0, %v2119
        %v2248 = vsub.f32 0.0, %v2120
        %v2249 = vsub.f32 0.0, %v2121
        %v2250 = vsub.f32 0.0, %v2122
        %v2251 = vsub.f32 0.0, %v2123
        %v2252 = vsub.f32 0.0, %v2124
        %v2253 = vsub.f32 0.0, %v2125
        %v2254 = vsub.f32 0.0, %v2126
        %v2255 = vsub.f32 0.0, %v2127
        %v2256 = vsub.f32 0.0, %v2128
        %v2257 = vsub.f32 0.0, %v2129
        %v2258 = vsub.f32 0.0, %v2130
        %v2259 = vsub.f32 0.0, %v2131
        %v2260 = vsub.f32 0.0, %v2132
        %v2261 = vsub.f32 0.0, %v2133
        %v2262 = vsub.f32 0.0, %v2134
        %v2263 = vsub.f32 0.0, %v2135
        %v2264 = vsub.f32 0.0, %v2136
        %v2265 = vsub.f32 0.0, %v2137
        %v2266 = vsub.f32 0.0, %v2138
        %v2267 = vsub.f32 0.0, %v2139
        %v2268 = vsub.f32 0.0, %v2140
        %v2269 = vsub.f32 0.0, %v2141
        %v2270 = vsub.f32 0.0, %v2142
        %v2271 = vsub.f32 0.0, %v2143
        %v2272 = vsub.f32 0.0, %v2144
        %v2273 = vsub.f32 0.0, %v2145
        %v2274 = vsub.f32 0.0, %v2146
        %v2275 = vsub.f32 0.0, %v2147
        %v2276 = vsub.f32 0.0, %v2148
        %v2277 = vsub.f32 0.0, %v2149
        %v2278 = vsub.f32 0.0, %v2150
        %v2279 = vsub.f32 0.0, %v2151
        %v2280 = vsub.f32 0.0, %v2152
        %v2281 = vsub.f32 0.0, %v2153
        %v2282 = vsub.f32 0.0, %v2154
        %v2283 = vsub.f32 0.0, %v2155
        %v2284 = vsub.f32 0.0, %v2156
        %v2285 = vsub.f32 0.0, %v2157
        %v2286 = vsub.f32 0.0, %v2158
        %v2287 = vsub.f32 0.0, %v2159
        %v2288 = vsub.f32 0.0, %v2160
        %v2289 = vsub.f32 0.0, %v2161
        %v2290 = vsub.f32 0.0, %v2162
        %v2291 = vsub.f32 0.0, %v2163
        %v2292 = vsub.f32 0.0, %v2164
        %v2293 = vsub.f32 0.0, %v2165
        %v2294 = vsub.f32 0.0, %v2166
        %v2295 = vsub.f32 0.0, %v2167
        %v2296 = vsub.f32 0.0, %v2168
        %v2297 = vsub.f32 0.0, %v2169
        %v2298 = vsub.f32 0.0, %v2170
        %v2299 = vsub.f32 0.0, %v2171
        %v2300 = vsub.f32 0.0, %v2172
        %v2301 = vsub.f32 0.0, %v2173
        %v2302 = vmul.f32 %v2174, 1.442695
        %v2303 = vpow.pop %v2302
        %v2304 = vmul.f32 %v2175, 1.442695
        %v2305 = vpow.pop %v2304
        %v2306 = vmul.f32 %v2176, 1.442695
        %v2307 = vpow.pop %v2306
        %v2308 = vmul.f32 %v2177, 1.442695
        %v2309 = vpow.pop %v2308
        %v2310 = vmul.f32 %v2178, 1.442695
        %v2311 = vpow.pop %v2310
        %v2312 = vmul.f32 %v2179, 1.442695
        %v2313 = vpow.pop %v2312
        %v2314 = vmul.f32 %v2180, 1.442695
        %v2315 = vpow.pop %v2314
        %v2316 = vmul.f32 %v2181, 1.442695
        %v2317 = vpow.pop %v2316
        %v2318 = vmul.f32 %v2182, 1.442695
        %v2319 = vpow.pop %v2318
        %v2320 = vmul.f32 %v2183, 1.442695
        %v2321 = vpow.pop %v2320
        %v2322 = vmul.f32 %v2184, 1.442695
        %v2323 = vpow.pop %v2322
        %v2324 = vmul.f32 %v2185, 1.442695
        %v2325 = vpow.pop %v2324
        %v2326 = vmul.f32 %v2186, 1.442695
        %v2327 = vpow.pop %v2326
        %v2328 = vmul.f32 %v2187, 1.442695
        %v2329 = vpow.pop %v2328
        %v2330 = vmul.f32 %v2188, 1.442695
        %v2331 = vpow.pop %v2330
        %v2332 = vmul.f32 %v2189, 1.442695
        %v2333 = vpow.pop %v2332
        %v2334 = vmul.f32 %v2190, 1.442695
        %v2335 = vpow.pop %v2334
        %v2336 = vmul.f32 %v2191, 1.442695
        %v2337 = vpow.pop %v2336
        %v2338 = vmul.f32 %v2192, 1.442695
        %v2339 = vpow.pop %v2338
        %v2340 = vmul.f32 %v2193, 1.442695
        %v2341 = vpow.pop %v2340
        %v2342 = vmul.f32 %v2194, 1.442695
        %v2343 = vpow.pop %v2342
        %v2344 = vmul.f32 %v2195, 1.442695
        %v2345 = vpow.pop %v2344
        %v2346 = vmul.f32 %v2196, 1.442695
        %v2347 = vpow.pop %v2346
        %v2348 = vmul.f32 %v2197, 1.442695
        %v2349 = vpow.pop %v2348
        %v2350 = vmul.f32 %v2198, 1.442695
        %v2351 = vpow.pop %v2350
        %v2352 = vmul.f32 %v2199, 1.442695
        %v2353 = vpow.pop %v2352
        %v2354 = vmul.f32 %v2200, 1.442695
        %v2355 = vpow.pop %v2354
        %v2356 = vmul.f32 %v2201, 1.442695
        %v2357 = vpow.pop %v2356
        %v2358 = vmul.f32 %v2202, 1.442695
        %v2359 = vpow.pop %v2358
        %v2360 = vmul.f32 %v2203, 1.442695
        %v2361 = vpow.pop %v2360
        %v2362 = vmul.f32 %v2204, 1.442695
        %v2363 = vpow.pop %v2362
        %v2364 = vmul.f32 %v2205, 1.442695
        %v2365 = vpow.pop %v2364
        %v2366 = vmul.f32 %v2206, 1.442695
        %v2367 = vpow.pop %v2366
        %v2368 = vmul.f32 %v2207, 1.442695
        %v2369 = vpow.pop %v2368
        %v2370 = vmul.f32 %v2208, 1.442695
        %v2371 = vpow.pop %v2370
        %v2372 = vmul.f32 %v2209, 1.442695
        %v2373 = vpow.pop %v2372
        %v2374 = vmul.f32 %v2210, 1.442695
        %v2375 = vpow.pop %v2374
        %v2376 = vmul.f32 %v2211, 1.442695
        %v2377 = vpow.pop %v2376
        %v2378 = vmul.f32 %v2212, 1.442695
        %v2379 = vpow.pop %v2378
        %v2380 = vmul.f32 %v2213, 1.442695
        %v2381 = vpow.pop %v2380
        %v2382 = vmul.f32 %v2214, 1.442695
        %v2383 = vpow.pop %v2382
        %v2384 = vmul.f32 %v2215, 1.442695
        %v2385 = vpow.pop %v2384
        %v2386 = vmul.f32 %v2216, 1.442695
        %v2387 = vpow.pop %v2386
        %v2388 = vmul.f32 %v2217, 1.442695
        %v2389 = vpow.pop %v2388
        %v2390 = vmul.f32 %v2218, 1.442695
        %v2391 = vpow.pop %v2390
        %v2392 = vmul.f32 %v2219, 1.442695
        %v2393 = vpow.pop %v2392
        %v2394 = vmul.f32 %v2220, 1.442695
        %v2395 = vpow.pop %v2394
        %v2396 = vmul.f32 %v2221, 1.442695
        %v2397 = vpow.pop %v2396
        %v2398 = vmul.f32 %v2222, 1.442695
        %v2399 = vpow.pop %v2398
        %v2400 = vmul.f32 %v2223, 1.442695
        %v2401 = vpow.pop %v2400
        %v2402 = vmul.f32 %v2224, 1.442695
        %v2403 = vpow.pop %v2402
        %v2404 = vmul.f32 %v2225, 1.442695
        %v2405 = vpow.pop %v2404
        %v2406 = vmul.f32 %v2226, 1.442695
        %v2407 = vpow.pop %v2406
        %v2408 = vmul.f32 %v2227, 1.442695
        %v2409 = vpow.pop %v2408
        %v2410 = vmul.f32 %v2228, 1.442695
        %v2411 = vpow.pop %v2410
        %v2412 = vmul.f32 %v2229, 1.442695
        %v2413 = vpow.pop %v2412
        %v2414 = vmul.f32 %v2230, 1.442695
        %v2415 = vpow.pop %v2414
        %v2416 = vmul.f32 %v2231, 1.442695
        %v2417 = vpow.pop %v2416
        %v2418 = vmul.f32 %v2232, 1.442695
        %v2419 = vpow.pop %v2418
        %v2420 = vmul.f32 %v2233, 1.442695
        %v2421 = vpow.pop %v2420
        %v2422 = vmul.f32 %v2234, 1.442695
        %v2423 = vpow.pop %v2422
        %v2424 = vmul.f32 %v2235, 1.442695
        %v2425 = vpow.pop %v2424
        %v2426 = vmul.f32 %v2236, 1.442695
        %v2427 = vpow.pop %v2426
        %v2428 = vmul.f32 %v2237, 1.442695
        %v2429 = vpow.pop %v2428
        %v2430 = vmul.f32 %v2238, 1.442695
        %v2431 = vpow.pop %v2430
        %v2432 = vmul.f32 %v2239, 1.442695
        %v2433 = vpow.pop %v2432
        %v2434 = vmul.f32 %v2240, 1.442695
        %v2435 = vpow.pop %v2434
        %v2436 = vmul.f32 %v2241, 1.442695
        %v2437 = vpow.pop %v2436
        %v2438 = vmul.f32 %v2242, 1.442695
        %v2439 = vpow.pop %v2438
        %v2440 = vmul.f32 %v2243, 1.442695
        %v2441 = vpow.pop %v2440
        %v2442 = vmul.f32 %v2244, 1.442695
        %v2443 = vpow.pop %v2442
        %v2444 = vmul.f32 %v2245, 1.442695
        %v2445 = vpow.pop %v2444
        %v2446 = vmul.f32 %v2246, 1.442695
        %v2447 = vpow.pop %v2446
        %v2448 = vmul.f32 %v2247, 1.442695
        %v2449 = vpow.pop %v2448
        %v2450 = vmul.f32 %v2248, 1.442695
        %v2451 = vpow.pop %v2450
        %v2452 = vmul.f32 %v2249, 1.442695
        %v2453 = vpow.pop %v2452
        %v2454 = vmul.f32 %v2250, 1.442695
        %v2455 = vpow.pop %v2454
        %v2456 = vmul.f32 %v2251, 1.442695
        %v2457 = vpow.pop %v2456
        %v2458 = vmul.f32 %v2252, 1.442695
        %v2459 = vpow.pop %v2458
        %v2460 = vmul.f32 %v2253, 1.442695
        %v2461 = vpow.pop %v2460
        %v2462 = vmul.f32 %v2254, 1.442695
        %v2463 = vpow.pop %v2462
        %v2464 = vmul.f32 %v2255, 1.442695
        %v2465 = vpow.pop %v2464
        %v2466 = vmul.f32 %v2256, 1.442695
        %v2467 = vpow.pop %v2466
        %v2468 = vmul.f32 %v2257, 1.442695
        %v2469 = vpow.pop %v2468
        %v2470 = vmul.f32 %v2258, 1.442695
        %v2471 = vpow.pop %v2470
        %v2472 = vmul.f32 %v2259, 1.442695
        %v2473 = vpow.pop %v2472
        %v2474 = vmul.f32 %v2260, 1.442695
        %v2475 = vpow.pop %v2474
        %v2476 = vmul.f32 %v2261, 1.442695
        %v2477 = vpow.pop %v2476
        %v2478 = vmul.f32 %v2262, 1.442695
        %v2479 = vpow.pop %v2478
        %v2480 = vmul.f32 %v2263, 1.442695
        %v2481 = vpow.pop %v2480
        %v2482 = vmul.f32 %v2264, 1.442695
        %v2483 = vpow.pop %v2482
        %v2484 = vmul.f32 %v2265, 1.442695
        %v2485 = vpow.pop %v2484
        %v2486 = vmul.f32 %v2266, 1.442695
        %v2487 = vpow.pop %v2486
        %v2488 = vmul.f32 %v2267, 1.442695
        %v2489 = vpow.pop %v2488
        %v2490 = vmul.f32 %v2268, 1.442695
        %v2491 = vpow.pop %v2490
        %v2492 = vmul.f32 %v2269, 1.442695
        %v2493 = vpow.pop %v2492
        %v2494 = vmul.f32 %v2270, 1.442695
        %v2495 = vpow.pop %v2494
        %v2496 = vmul.f32 %v2271, 1.442695
        %v2497 = vpow.pop %v2496
        %v2498 = vmul.f32 %v2272, 1.442695
        %v2499 = vpow.pop %v2498
        %v2500 = vmul.f32 %v2273, 1.442695
        %v2501 = vpow.pop %v2500
        %v2502 = vmul.f32 %v2274, 1.442695
        %v2503 = vpow.pop %v2502
        %v2504 = vmul.f32 %v2275, 1.442695
        %v2505 = vpow.pop %v2504
        %v2506 = vmul.f32 %v2276, 1.442695
        %v2507 = vpow.pop %v2506
        %v2508 = vmul.f32 %v2277, 1.442695
        %v2509 = vpow.pop %v2508
        %v2510 = vmul.f32 %v2278, 1.442695
        %v2511 = vpow.pop %v2510
        %v2512 = vmul.f32 %v2279, 1.442695
        %v2513 = vpow.pop %v2512
        %v2514 = vmul.f32 %v2280, 1.442695
        %v2515 = vpow.pop %v2514
        %v2516 = vmul.f32 %v2281, 1.442695
        %v2517 = vpow.pop %v2516
        %v2518 = vmul.f32 %v2282, 1.442695
        %v2519 = vpow.pop %v2518
        %v2520 = vmul.f32 %v2283, 1.442695
        %v2521 = vpow.pop %v2520
        %v2522 = vmul.f32 %v2284, 1.442695
        %v2523 = vpow.pop %v2522
        %v2524 = vmul.f32 %v2285, 1.442695
        %v2525 = vpow.pop %v2524
        %v2526 = vmul.f32 %v2286, 1.442695
        %v2527 = vpow.pop %v2526
        %v2528 = vmul.f32 %v2287, 1.442695
        %v2529 = vpow.pop %v2528
        %v2530 = vmul.f32 %v2288, 1.442695
        %v2531 = vpow.pop %v2530
        %v2532 = vmul.f32 %v2289, 1.442695
        %v2533 = vpow.pop %v2532
        %v2534 = vmul.f32 %v2290, 1.442695
        %v2535 = vpow.pop %v2534
        %v2536 = vmul.f32 %v2291, 1.442695
        %v2537 = vpow.pop %v2536
        %v2538 = vmul.f32 %v2292, 1.442695
        %v2539 = vpow.pop %v2538
        %v2540 = vmul.f32 %v2293, 1.442695
        %v2541 = vpow.pop %v2540
        %v2542 = vmul.f32 %v2294, 1.442695
        %v2543 = vpow.pop %v2542
        %v2544 = vmul.f32 %v2295, 1.442695
        %v2545 = vpow.pop %v2544
        %v2546 = vmul.f32 %v2296, 1.442695
        %v2547 = vpow.pop %v2546
        %v2548 = vmul.f32 %v2297, 1.442695
        %v2549 = vpow.pop %v2548
        %v2550 = vmul.f32 %v2298, 1.442695
        %v2551 = vpow.pop %v2550
        %v2552 = vmul.f32 %v2299, 1.442695
        %v2553 = vpow.pop %v2552
        %v2554 = vmul.f32 %v2300, 1.442695
        %v2555 = vpow.pop %v2554
        %v2556 = vmul.f32 %v2301, 1.442695
        %v2557 = vpow.pop %v2556
        %v2558 = vadd.f32 %v2303, 1.0
        %v2559 = vlog2.pop %v2558
        %v2560 = vmul.f32 %v2559, 0.6931472
        %v2561 = vmul.f32 -0.5, %v2303
        %v2562 = vadd.f32 %v2561, 1.0
        %v2563 = vmul.f32 %v2562, %v2303
        %v2564 = vand.u32 2147483647, %v2303
        %vm2565 = vcmp.lt.f32.partialorder %v2564, 0.0004427343
        %v2566 = vsel %vm2565, %v2563, %v2560
        %v2567 = vadd.f32 %v2305, 1.0
        %v2568 = vlog2.pop %v2567
        %v2569 = vmul.f32 %v2568, 0.6931472
        %v2570 = vmul.f32 -0.5, %v2305
        %v2571 = vadd.f32 %v2570, 1.0
        %v2572 = vmul.f32 %v2571, %v2305
        %v2573 = vand.u32 2147483647, %v2305
        %vm2574 = vcmp.lt.f32.partialorder %v2573, 0.0004427343
        %v2575 = vsel %vm2574, %v2572, %v2569
        %v2576 = vadd.f32 %v2307, 1.0
        %v2577 = vlog2.pop %v2576
        %v2578 = vmul.f32 %v2577, 0.6931472
        %v2579 = vmul.f32 -0.5, %v2307
        %v2580 = vadd.f32 %v2579, 1.0
        %v2581 = vmul.f32 %v2580, %v2307
        %v2582 = vand.u32 2147483647, %v2307
        %vm2583 = vcmp.lt.f32.partialorder %v2582, 0.0004427343
        %v2584 = vsel %vm2583, %v2581, %v2578
        %v2585 = vadd.f32 %v2309, 1.0
        %v2586 = vlog2.pop %v2585
        %v2587 = vmul.f32 %v2586, 0.6931472
        %v2588 = vmul.f32 -0.5, %v2309
        %v2589 = vadd.f32 %v2588, 1.0
        %v2590 = vmul.f32 %v2589, %v2309
        %v2591 = vand.u32 2147483647, %v2309
        %vm2592 = vcmp.lt.f32.partialorder %v2591, 0.0004427343
        %v2593 = vsel %vm2592, %v2590, %v2587
        %v2594 = vadd.f32 %v2311, 1.0
        %v2595 = vlog2.pop %v2594
        %v2596 = vmul.f32 %v2595, 0.6931472
        %v2597 = vmul.f32 -0.5, %v2311
        %v2598 = vadd.f32 %v2597, 1.0
        %v2599 = vmul.f32 %v2598, %v2311
        %v2600 = vand.u32 2147483647, %v2311
        %vm2601 = vcmp.lt.f32.partialorder %v2600, 0.0004427343
        %v2602 = vsel %vm2601, %v2599, %v2596
        %v2603 = vadd.f32 %v2313, 1.0
        %v2604 = vlog2.pop %v2603
        %v2605 = vmul.f32 %v2604, 0.6931472
        %v2606 = vmul.f32 -0.5, %v2313
        %v2607 = vadd.f32 %v2606, 1.0
        %v2608 = vmul.f32 %v2607, %v2313
        %v2609 = vand.u32 2147483647, %v2313
        %vm2610 = vcmp.lt.f32.partialorder %v2609, 0.0004427343
        %v2611 = vsel %vm2610, %v2608, %v2605
        %v2612 = vadd.f32 %v2315, 1.0
        %v2613 = vlog2.pop %v2612
        %v2614 = vmul.f32 %v2613, 0.6931472
        %v2615 = vmul.f32 -0.5, %v2315
        %v2616 = vadd.f32 %v2615, 1.0
        %v2617 = vmul.f32 %v2616, %v2315
        %v2618 = vand.u32 2147483647, %v2315
        %vm2619 = vcmp.lt.f32.partialorder %v2618, 0.0004427343
        %v2620 = vsel %vm2619, %v2617, %v2614
        %v2621 = vadd.f32 %v2317, 1.0
        %v2622 = vlog2.pop %v2621
        %v2623 = vmul.f32 %v2622, 0.6931472
        %v2624 = vmul.f32 -0.5, %v2317
        %v2625 = vadd.f32 %v2624, 1.0
        %v2626 = vmul.f32 %v2625, %v2317
        %v2627 = vand.u32 2147483647, %v2317
        %vm2628 = vcmp.lt.f32.partialorder %v2627, 0.0004427343
        %v2629 = vsel %vm2628, %v2626, %v2623
        %v2630 = vadd.f32 %v2319, 1.0
        %v2631 = vlog2.pop %v2630
        %v2632 = vmul.f32 %v2631, 0.6931472
        %v2633 = vmul.f32 -0.5, %v2319
        %v2634 = vadd.f32 %v2633, 1.0
        %v2635 = vmul.f32 %v2634, %v2319
        %v2636 = vand.u32 2147483647, %v2319
        %vm2637 = vcmp.lt.f32.partialorder %v2636, 0.0004427343
        %v2638 = vsel %vm2637, %v2635, %v2632
        %v2639 = vadd.f32 %v2321, 1.0
        %v2640 = vlog2.pop %v2639
        %v2641 = vmul.f32 %v2640, 0.6931472
        %v2642 = vmul.f32 -0.5, %v2321
        %v2643 = vadd.f32 %v2642, 1.0
        %v2644 = vmul.f32 %v2643, %v2321
        %v2645 = vand.u32 2147483647, %v2321
        %vm2646 = vcmp.lt.f32.partialorder %v2645, 0.0004427343
        %v2647 = vsel %vm2646, %v2644, %v2641
        %v2648 = vadd.f32 %v2323, 1.0
        %v2649 = vlog2.pop %v2648
        %v2650 = vmul.f32 %v2649, 0.6931472
        %v2651 = vmul.f32 -0.5, %v2323
        %v2652 = vadd.f32 %v2651, 1.0
        %v2653 = vmul.f32 %v2652, %v2323
        %v2654 = vand.u32 2147483647, %v2323
        %vm2655 = vcmp.lt.f32.partialorder %v2654, 0.0004427343
        %v2656 = vsel %vm2655, %v2653, %v2650
        %v2657 = vadd.f32 %v2325, 1.0
        %v2658 = vlog2.pop %v2657
        %v2659 = vmul.f32 %v2658, 0.6931472
        %v2660 = vmul.f32 -0.5, %v2325
        %v2661 = vadd.f32 %v2660, 1.0
        %v2662 = vmul.f32 %v2661, %v2325
        %v2663 = vand.u32 2147483647, %v2325
        %vm2664 = vcmp.lt.f32.partialorder %v2663, 0.0004427343
        %v2665 = vsel %vm2664, %v2662, %v2659
        %v2666 = vadd.f32 %v2327, 1.0
        %v2667 = vlog2.pop %v2666
        %v2668 = vmul.f32 %v2667, 0.6931472
        %v2669 = vmul.f32 -0.5, %v2327
        %v2670 = vadd.f32 %v2669, 1.0
        %v2671 = vmul.f32 %v2670, %v2327
        %v2672 = vand.u32 2147483647, %v2327
        %vm2673 = vcmp.lt.f32.partialorder %v2672, 0.0004427343
        %v2674 = vsel %vm2673, %v2671, %v2668
        %v2675 = vadd.f32 %v2329, 1.0
        %v2676 = vlog2.pop %v2675
        %v2677 = vmul.f32 %v2676, 0.6931472
        %v2678 = vmul.f32 -0.5, %v2329
        %v2679 = vadd.f32 %v2678, 1.0
        %v2680 = vmul.f32 %v2679, %v2329
        %v2681 = vand.u32 2147483647, %v2329
        %vm2682 = vcmp.lt.f32.partialorder %v2681, 0.0004427343
        %v2683 = vsel %vm2682, %v2680, %v2677
        %v2684 = vadd.f32 %v2331, 1.0
        %v2685 = vlog2.pop %v2684
        %v2686 = vmul.f32 %v2685, 0.6931472
        %v2687 = vmul.f32 -0.5, %v2331
        %v2688 = vadd.f32 %v2687, 1.0
        %v2689 = vmul.f32 %v2688, %v2331
        %v2690 = vand.u32 2147483647, %v2331
        %vm2691 = vcmp.lt.f32.partialorder %v2690, 0.0004427343
        %v2692 = vsel %vm2691, %v2689, %v2686
        %v2693 = vadd.f32 %v2333, 1.0
        %v2694 = vlog2.pop %v2693
        %v2695 = vmul.f32 %v2694, 0.6931472
        %v2696 = vmul.f32 -0.5, %v2333
        %v2697 = vadd.f32 %v2696, 1.0
        %v2698 = vmul.f32 %v2697, %v2333
        %v2699 = vand.u32 2147483647, %v2333
        %vm2700 = vcmp.lt.f32.partialorder %v2699, 0.0004427343
        %v2701 = vsel %vm2700, %v2698, %v2695
        %v2702 = vadd.f32 %v2335, 1.0
        %v2703 = vlog2.pop %v2702
        %v2704 = vmul.f32 %v2703, 0.6931472
        %v2705 = vmul.f32 -0.5, %v2335
        %v2706 = vadd.f32 %v2705, 1.0
        %v2707 = vmul.f32 %v2706, %v2335
        %v2708 = vand.u32 2147483647, %v2335
        %vm2709 = vcmp.lt.f32.partialorder %v2708, 0.0004427343
        %v2710 = vsel %vm2709, %v2707, %v2704
        %v2711 = vadd.f32 %v2337, 1.0
        %v2712 = vlog2.pop %v2711
        %v2713 = vmul.f32 %v2712, 0.6931472
        %v2714 = vmul.f32 -0.5, %v2337
        %v2715 = vadd.f32 %v2714, 1.0
        %v2716 = vmul.f32 %v2715, %v2337
        %v2717 = vand.u32 2147483647, %v2337
        %vm2718 = vcmp.lt.f32.partialorder %v2717, 0.0004427343
        %v2719 = vsel %vm2718, %v2716, %v2713
        %v2720 = vadd.f32 %v2339, 1.0
        %v2721 = vlog2.pop %v2720
        %v2722 = vmul.f32 %v2721, 0.6931472
        %v2723 = vmul.f32 -0.5, %v2339
        %v2724 = vadd.f32 %v2723, 1.0
        %v2725 = vmul.f32 %v2724, %v2339
        %v2726 = vand.u32 2147483647, %v2339
        %vm2727 = vcmp.lt.f32.partialorder %v2726, 0.0004427343
        %v2728 = vsel %vm2727, %v2725, %v2722
        %v2729 = vadd.f32 %v2341, 1.0
        %v2730 = vlog2.pop %v2729
        %v2731 = vmul.f32 %v2730, 0.6931472
        %v2732 = vmul.f32 -0.5, %v2341
        %v2733 = vadd.f32 %v2732, 1.0
        %v2734 = vmul.f32 %v2733, %v2341
        %v2735 = vand.u32 2147483647, %v2341
        %vm2736 = vcmp.lt.f32.partialorder %v2735, 0.0004427343
        %v2737 = vsel %vm2736, %v2734, %v2731
        %v2738 = vadd.f32 %v2343, 1.0
        %v2739 = vlog2.pop %v2738
        %v2740 = vmul.f32 %v2739, 0.6931472
        %v2741 = vmul.f32 -0.5, %v2343
        %v2742 = vadd.f32 %v2741, 1.0
        %v2743 = vmul.f32 %v2742, %v2343
        %v2744 = vand.u32 2147483647, %v2343
        %vm2745 = vcmp.lt.f32.partialorder %v2744, 0.0004427343
        %v2746 = vsel %vm2745, %v2743, %v2740
        %v2747 = vadd.f32 %v2345, 1.0
        %v2748 = vlog2.pop %v2747
        %v2749 = vmul.f32 %v2748, 0.6931472
        %v2750 = vmul.f32 -0.5, %v2345
        %v2751 = vadd.f32 %v2750, 1.0
        %v2752 = vmul.f32 %v2751, %v2345
        %v2753 = vand.u32 2147483647, %v2345
        %vm2754 = vcmp.lt.f32.partialorder %v2753, 0.0004427343
        %v2755 = vsel %vm2754, %v2752, %v2749
        %v2756 = vadd.f32 %v2347, 1.0
        %v2757 = vlog2.pop %v2756
        %v2758 = vmul.f32 %v2757, 0.6931472
        %v2759 = vmul.f32 -0.5, %v2347
        %v2760 = vadd.f32 %v2759, 1.0
        %v2761 = vmul.f32 %v2760, %v2347
        %v2762 = vand.u32 2147483647, %v2347
        %vm2763 = vcmp.lt.f32.partialorder %v2762, 0.0004427343
        %v2764 = vsel %vm2763, %v2761, %v2758
        %v2765 = vadd.f32 %v2349, 1.0
        %v2766 = vlog2.pop %v2765
        %v2767 = vmul.f32 %v2766, 0.6931472
        %v2768 = vmul.f32 -0.5, %v2349
        %v2769 = vadd.f32 %v2768, 1.0
        %v2770 = vmul.f32 %v2769, %v2349
        %v2771 = vand.u32 2147483647, %v2349
        %vm2772 = vcmp.lt.f32.partialorder %v2771, 0.0004427343
        %v2773 = vsel %vm2772, %v2770, %v2767
        %v2774 = vadd.f32 %v2351, 1.0
        %v2775 = vlog2.pop %v2774
        %v2776 = vmul.f32 %v2775, 0.6931472
        %v2777 = vmul.f32 -0.5, %v2351
        %v2778 = vadd.f32 %v2777, 1.0
        %v2779 = vmul.f32 %v2778, %v2351
        %v2780 = vand.u32 2147483647, %v2351
        %vm2781 = vcmp.lt.f32.partialorder %v2780, 0.0004427343
        %v2782 = vsel %vm2781, %v2779, %v2776
        %v2783 = vadd.f32 %v2353, 1.0
        %v2784 = vlog2.pop %v2783
        %v2785 = vmul.f32 %v2784, 0.6931472
        %v2786 = vmul.f32 -0.5, %v2353
        %v2787 = vadd.f32 %v2786, 1.0
        %v2788 = vmul.f32 %v2787, %v2353
        %v2789 = vand.u32 2147483647, %v2353
        %vm2790 = vcmp.lt.f32.partialorder %v2789, 0.0004427343
        %v2791 = vsel %vm2790, %v2788, %v2785
        %v2792 = vadd.f32 %v2355, 1.0
        %v2793 = vlog2.pop %v2792
        %v2794 = vmul.f32 %v2793, 0.6931472
        %v2795 = vmul.f32 -0.5, %v2355
        %v2796 = vadd.f32 %v2795, 1.0
        %v2797 = vmul.f32 %v2796, %v2355
        %v2798 = vand.u32 2147483647, %v2355
        %vm2799 = vcmp.lt.f32.partialorder %v2798, 0.0004427343
        %v2800 = vsel %vm2799, %v2797, %v2794
        %v2801 = vadd.f32 %v2357, 1.0
        %v2802 = vlog2.pop %v2801
        %v2803 = vmul.f32 %v2802, 0.6931472
        %v2804 = vmul.f32 -0.5, %v2357
        %v2805 = vadd.f32 %v2804, 1.0
        %v2806 = vmul.f32 %v2805, %v2357
        %v2807 = vand.u32 2147483647, %v2357
        %vm2808 = vcmp.lt.f32.partialorder %v2807, 0.0004427343
        %v2809 = vsel %vm2808, %v2806, %v2803
        %v2810 = vadd.f32 %v2359, 1.0
        %v2811 = vlog2.pop %v2810
        %v2812 = vmul.f32 %v2811, 0.6931472
        %v2813 = vmul.f32 -0.5, %v2359
        %v2814 = vadd.f32 %v2813, 1.0
        %v2815 = vmul.f32 %v2814, %v2359
        %v2816 = vand.u32 2147483647, %v2359
        %vm2817 = vcmp.lt.f32.partialorder %v2816, 0.0004427343
        %v2818 = vsel %vm2817, %v2815, %v2812
        %v2819 = vadd.f32 %v2361, 1.0
        %v2820 = vlog2.pop %v2819
        %v2821 = vmul.f32 %v2820, 0.6931472
        %v2822 = vmul.f32 -0.5, %v2361
        %v2823 = vadd.f32 %v2822, 1.0
        %v2824 = vmul.f32 %v2823, %v2361
        %v2825 = vand.u32 2147483647, %v2361
        %vm2826 = vcmp.lt.f32.partialorder %v2825, 0.0004427343
        %v2827 = vsel %vm2826, %v2824, %v2821
        %v2828 = vadd.f32 %v2363, 1.0
        %v2829 = vlog2.pop %v2828
        %v2830 = vmul.f32 %v2829, 0.6931472
        %v2831 = vmul.f32 -0.5, %v2363
        %v2832 = vadd.f32 %v2831, 1.0
        %v2833 = vmul.f32 %v2832, %v2363
        %v2834 = vand.u32 2147483647, %v2363
        %vm2835 = vcmp.lt.f32.partialorder %v2834, 0.0004427343
        %v2836 = vsel %vm2835, %v2833, %v2830
        %v2837 = vadd.f32 %v2365, 1.0
        %v2838 = vlog2.pop %v2837
        %v2839 = vmul.f32 %v2838, 0.6931472
        %v2840 = vmul.f32 -0.5, %v2365
        %v2841 = vadd.f32 %v2840, 1.0
        %v2842 = vmul.f32 %v2841, %v2365
        %v2843 = vand.u32 2147483647, %v2365
        %vm2844 = vcmp.lt.f32.partialorder %v2843, 0.0004427343
        %v2845 = vsel %vm2844, %v2842, %v2839
        %v2846 = vadd.f32 %v2367, 1.0
        %v2847 = vlog2.pop %v2846
        %v2848 = vmul.f32 %v2847, 0.6931472
        %v2849 = vmul.f32 -0.5, %v2367
        %v2850 = vadd.f32 %v2849, 1.0
        %v2851 = vmul.f32 %v2850, %v2367
        %v2852 = vand.u32 2147483647, %v2367
        %vm2853 = vcmp.lt.f32.partialorder %v2852, 0.0004427343
        %v2854 = vsel %vm2853, %v2851, %v2848
        %v2855 = vadd.f32 %v2369, 1.0
        %v2856 = vlog2.pop %v2855
        %v2857 = vmul.f32 %v2856, 0.6931472
        %v2858 = vmul.f32 -0.5, %v2369
        %v2859 = vadd.f32 %v2858, 1.0
        %v2860 = vmul.f32 %v2859, %v2369
        %v2861 = vand.u32 2147483647, %v2369
        %vm2862 = vcmp.lt.f32.partialorder %v2861, 0.0004427343
        %v2863 = vsel %vm2862, %v2860, %v2857
        %v2864 = vadd.f32 %v2371, 1.0
        %v2865 = vlog2.pop %v2864
        %v2866 = vmul.f32 %v2865, 0.6931472
        %v2867 = vmul.f32 -0.5, %v2371
        %v2868 = vadd.f32 %v2867, 1.0
        %v2869 = vmul.f32 %v2868, %v2371
        %v2870 = vand.u32 2147483647, %v2371
        %vm2871 = vcmp.lt.f32.partialorder %v2870, 0.0004427343
        %v2872 = vsel %vm2871, %v2869, %v2866
        %v2873 = vadd.f32 %v2373, 1.0
        %v2874 = vlog2.pop %v2873
        %v2875 = vmul.f32 %v2874, 0.6931472
        %v2876 = vmul.f32 -0.5, %v2373
        %v2877 = vadd.f32 %v2876, 1.0
        %v2878 = vmul.f32 %v2877, %v2373
        %v2879 = vand.u32 2147483647, %v2373
        %vm2880 = vcmp.lt.f32.partialorder %v2879, 0.0004427343
        %v2881 = vsel %vm2880, %v2878, %v2875
        %v2882 = vadd.f32 %v2375, 1.0
        %v2883 = vlog2.pop %v2882
        %v2884 = vmul.f32 %v2883, 0.6931472
        %v2885 = vmul.f32 -0.5, %v2375
        %v2886 = vadd.f32 %v2885, 1.0
        %v2887 = vmul.f32 %v2886, %v2375
        %v2888 = vand.u32 2147483647, %v2375
        %vm2889 = vcmp.lt.f32.partialorder %v2888, 0.0004427343
        %v2890 = vsel %vm2889, %v2887, %v2884
        %v2891 = vadd.f32 %v2377, 1.0
        %v2892 = vlog2.pop %v2891
        %v2893 = vmul.f32 %v2892, 0.6931472
        %v2894 = vmul.f32 -0.5, %v2377
        %v2895 = vadd.f32 %v2894, 1.0
        %v2896 = vmul.f32 %v2895, %v2377
        %v2897 = vand.u32 2147483647, %v2377
        %vm2898 = vcmp.lt.f32.partialorder %v2897, 0.0004427343
        %v2899 = vsel %vm2898, %v2896, %v2893
        %v2900 = vadd.f32 %v2379, 1.0
        %v2901 = vlog2.pop %v2900
        %v2902 = vmul.f32 %v2901, 0.6931472
        %v2903 = vmul.f32 -0.5, %v2379
        %v2904 = vadd.f32 %v2903, 1.0
        %v2905 = vmul.f32 %v2904, %v2379
        %v2906 = vand.u32 2147483647, %v2379
        %vm2907 = vcmp.lt.f32.partialorder %v2906, 0.0004427343
        %v2908 = vsel %vm2907, %v2905, %v2902
        %v2909 = vadd.f32 %v2381, 1.0
        %v2910 = vlog2.pop %v2909
        %v2911 = vmul.f32 %v2910, 0.6931472
        %v2912 = vmul.f32 -0.5, %v2381
        %v2913 = vadd.f32 %v2912, 1.0
        %v2914 = vmul.f32 %v2913, %v2381
        %v2915 = vand.u32 2147483647, %v2381
        %vm2916 = vcmp.lt.f32.partialorder %v2915, 0.0004427343
        %v2917 = vsel %vm2916, %v2914, %v2911
        %v2918 = vadd.f32 %v2383, 1.0
        %v2919 = vlog2.pop %v2918
        %v2920 = vmul.f32 %v2919, 0.6931472
        %v2921 = vmul.f32 -0.5, %v2383
        %v2922 = vadd.f32 %v2921, 1.0
        %v2923 = vmul.f32 %v2922, %v2383
        %v2924 = vand.u32 2147483647, %v2383
        %vm2925 = vcmp.lt.f32.partialorder %v2924, 0.0004427343
        %v2926 = vsel %vm2925, %v2923, %v2920
        %v2927 = vadd.f32 %v2385, 1.0
        %v2928 = vlog2.pop %v2927
        %v2929 = vmul.f32 %v2928, 0.6931472
        %v2930 = vmul.f32 -0.5, %v2385
        %v2931 = vadd.f32 %v2930, 1.0
        %v2932 = vmul.f32 %v2931, %v2385
        %v2933 = vand.u32 2147483647, %v2385
        %vm2934 = vcmp.lt.f32.partialorder %v2933, 0.0004427343
        %v2935 = vsel %vm2934, %v2932, %v2929
        %v2936 = vadd.f32 %v2387, 1.0
        %v2937 = vlog2.pop %v2936
        %v2938 = vmul.f32 %v2937, 0.6931472
        %v2939 = vmul.f32 -0.5, %v2387
        %v2940 = vadd.f32 %v2939, 1.0
        %v2941 = vmul.f32 %v2940, %v2387
        %v2942 = vand.u32 2147483647, %v2387
        %vm2943 = vcmp.lt.f32.partialorder %v2942, 0.0004427343
        %v2944 = vsel %vm2943, %v2941, %v2938
        %v2945 = vadd.f32 %v2389, 1.0
        %v2946 = vlog2.pop %v2945
        %v2947 = vmul.f32 %v2946, 0.6931472
        %v2948 = vmul.f32 -0.5, %v2389
        %v2949 = vadd.f32 %v2948, 1.0
        %v2950 = vmul.f32 %v2949, %v2389
        %v2951 = vand.u32 2147483647, %v2389
        %vm2952 = vcmp.lt.f32.partialorder %v2951, 0.0004427343
        %v2953 = vsel %vm2952, %v2950, %v2947
        %v2954 = vadd.f32 %v2391, 1.0
        %v2955 = vlog2.pop %v2954
        %v2956 = vmul.f32 %v2955, 0.6931472
        %v2957 = vmul.f32 -0.5, %v2391
        %v2958 = vadd.f32 %v2957, 1.0
        %v2959 = vmul.f32 %v2958, %v2391
        %v2960 = vand.u32 2147483647, %v2391
        %vm2961 = vcmp.lt.f32.partialorder %v2960, 0.0004427343
        %v2962 = vsel %vm2961, %v2959, %v2956
        %v2963 = vadd.f32 %v2393, 1.0
        %v2964 = vlog2.pop %v2963
        %v2965 = vmul.f32 %v2964, 0.6931472
        %v2966 = vmul.f32 -0.5, %v2393
        %v2967 = vadd.f32 %v2966, 1.0
        %v2968 = vmul.f32 %v2967, %v2393
        %v2969 = vand.u32 2147483647, %v2393
        %vm2970 = vcmp.lt.f32.partialorder %v2969, 0.0004427343
        %v2971 = vsel %vm2970, %v2968, %v2965
        %v2972 = vadd.f32 %v2395, 1.0
        %v2973 = vlog2.pop %v2972
        %v2974 = vmul.f32 %v2973, 0.6931472
        %v2975 = vmul.f32 -0.5, %v2395
        %v2976 = vadd.f32 %v2975, 1.0
        %v2977 = vmul.f32 %v2976, %v2395
        %v2978 = vand.u32 2147483647, %v2395
        %vm2979 = vcmp.lt.f32.partialorder %v2978, 0.0004427343
        %v2980 = vsel %vm2979, %v2977, %v2974
        %v2981 = vadd.f32 %v2397, 1.0
        %v2982 = vlog2.pop %v2981
        %v2983 = vmul.f32 %v2982, 0.6931472
        %v2984 = vmul.f32 -0.5, %v2397
        %v2985 = vadd.f32 %v2984, 1.0
        %v2986 = vmul.f32 %v2985, %v2397
        %v2987 = vand.u32 2147483647, %v2397
        %vm2988 = vcmp.lt.f32.partialorder %v2987, 0.0004427343
        %v2989 = vsel %vm2988, %v2986, %v2983
        %v2990 = vadd.f32 %v2399, 1.0
        %v2991 = vlog2.pop %v2990
        %v2992 = vmul.f32 %v2991, 0.6931472
        %v2993 = vmul.f32 -0.5, %v2399
        %v2994 = vadd.f32 %v2993, 1.0
        %v2995 = vmul.f32 %v2994, %v2399
        %v2996 = vand.u32 2147483647, %v2399
        %vm2997 = vcmp.lt.f32.partialorder %v2996, 0.0004427343
        %v2998 = vsel %vm2997, %v2995, %v2992
        %v2999 = vadd.f32 %v2401, 1.0
        %v3000 = vlog2.pop %v2999
        %v3001 = vmul.f32 %v3000, 0.6931472
        %v3002 = vmul.f32 -0.5, %v2401
        %v3003 = vadd.f32 %v3002, 1.0
        %v3004 = vmul.f32 %v3003, %v2401
        %v3005 = vand.u32 2147483647, %v2401
        %vm3006 = vcmp.lt.f32.partialorder %v3005, 0.0004427343
        %v3007 = vsel %vm3006, %v3004, %v3001
        %v3008 = vadd.f32 %v2403, 1.0
        %v3009 = vlog2.pop %v3008
        %v3010 = vmul.f32 %v3009, 0.6931472
        %v3011 = vmul.f32 -0.5, %v2403
        %v3012 = vadd.f32 %v3011, 1.0
        %v3013 = vmul.f32 %v3012, %v2403
        %v3014 = vand.u32 2147483647, %v2403
        %vm3015 = vcmp.lt.f32.partialorder %v3014, 0.0004427343
        %v3016 = vsel %vm3015, %v3013, %v3010
        %v3017 = vadd.f32 %v2405, 1.0
        %v3018 = vlog2.pop %v3017
        %v3019 = vmul.f32 %v3018, 0.6931472
        %v3020 = vmul.f32 -0.5, %v2405
        %v3021 = vadd.f32 %v3020, 1.0
        %v3022 = vmul.f32 %v3021, %v2405
        %v3023 = vand.u32 2147483647, %v2405
        %vm3024 = vcmp.lt.f32.partialorder %v3023, 0.0004427343
        %v3025 = vsel %vm3024, %v3022, %v3019
        %v3026 = vadd.f32 %v2407, 1.0
        %v3027 = vlog2.pop %v3026
        %v3028 = vmul.f32 %v3027, 0.6931472
        %v3029 = vmul.f32 -0.5, %v2407
        %v3030 = vadd.f32 %v3029, 1.0
        %v3031 = vmul.f32 %v3030, %v2407
        %v3032 = vand.u32 2147483647, %v2407
        %vm3033 = vcmp.lt.f32.partialorder %v3032, 0.0004427343
        %v3034 = vsel %vm3033, %v3031, %v3028
        %v3035 = vadd.f32 %v2409, 1.0
        %v3036 = vlog2.pop %v3035
        %v3037 = vmul.f32 %v3036, 0.6931472
        %v3038 = vmul.f32 -0.5, %v2409
        %v3039 = vadd.f32 %v3038, 1.0
        %v3040 = vmul.f32 %v3039, %v2409
        %v3041 = vand.u32 2147483647, %v2409
        %vm3042 = vcmp.lt.f32.partialorder %v3041, 0.0004427343
        %v3043 = vsel %vm3042, %v3040, %v3037
        %v3044 = vadd.f32 %v2411, 1.0
        %v3045 = vlog2.pop %v3044
        %v3046 = vmul.f32 %v3045, 0.6931472
        %v3047 = vmul.f32 -0.5, %v2411
        %v3048 = vadd.f32 %v3047, 1.0
        %v3049 = vmul.f32 %v3048, %v2411
        %v3050 = vand.u32 2147483647, %v2411
        %vm3051 = vcmp.lt.f32.partialorder %v3050, 0.0004427343
        %v3052 = vsel %vm3051, %v3049, %v3046
        %v3053 = vadd.f32 %v2413, 1.0
        %v3054 = vlog2.pop %v3053
        %v3055 = vmul.f32 %v3054, 0.6931472
        %v3056 = vmul.f32 -0.5, %v2413
        %v3057 = vadd.f32 %v3056, 1.0
        %v3058 = vmul.f32 %v3057, %v2413
        %v3059 = vand.u32 2147483647, %v2413
        %vm3060 = vcmp.lt.f32.partialorder %v3059, 0.0004427343
        %v3061 = vsel %vm3060, %v3058, %v3055
        %v3062 = vadd.f32 %v2415, 1.0
        %v3063 = vlog2.pop %v3062
        %v3064 = vmul.f32 %v3063, 0.6931472
        %v3065 = vmul.f32 -0.5, %v2415
        %v3066 = vadd.f32 %v3065, 1.0
        %v3067 = vmul.f32 %v3066, %v2415
        %v3068 = vand.u32 2147483647, %v2415
        %vm3069 = vcmp.lt.f32.partialorder %v3068, 0.0004427343
        %v3070 = vsel %vm3069, %v3067, %v3064
        %v3071 = vadd.f32 %v2417, 1.0
        %v3072 = vlog2.pop %v3071
        %v3073 = vmul.f32 %v3072, 0.6931472
        %v3074 = vmul.f32 -0.5, %v2417
        %v3075 = vadd.f32 %v3074, 1.0
        %v3076 = vmul.f32 %v3075, %v2417
        %v3077 = vand.u32 2147483647, %v2417
        %vm3078 = vcmp.lt.f32.partialorder %v3077, 0.0004427343
        %v3079 = vsel %vm3078, %v3076, %v3073
        %v3080 = vadd.f32 %v2419, 1.0
        %v3081 = vlog2.pop %v3080
        %v3082 = vmul.f32 %v3081, 0.6931472
        %v3083 = vmul.f32 -0.5, %v2419
        %v3084 = vadd.f32 %v3083, 1.0
        %v3085 = vmul.f32 %v3084, %v2419
        %v3086 = vand.u32 2147483647, %v2419
        %vm3087 = vcmp.lt.f32.partialorder %v3086, 0.0004427343
        %v3088 = vsel %vm3087, %v3085, %v3082
        %v3089 = vadd.f32 %v2421, 1.0
        %v3090 = vlog2.pop %v3089
        %v3091 = vmul.f32 %v3090, 0.6931472
        %v3092 = vmul.f32 -0.5, %v2421
        %v3093 = vadd.f32 %v3092, 1.0
        %v3094 = vmul.f32 %v3093, %v2421
        %v3095 = vand.u32 2147483647, %v2421
        %vm3096 = vcmp.lt.f32.partialorder %v3095, 0.0004427343
        %v3097 = vsel %vm3096, %v3094, %v3091
        %v3098 = vadd.f32 %v2423, 1.0
        %v3099 = vlog2.pop %v3098
        %v3100 = vmul.f32 %v3099, 0.6931472
        %v3101 = vmul.f32 -0.5, %v2423
        %v3102 = vadd.f32 %v3101, 1.0
        %v3103 = vmul.f32 %v3102, %v2423
        %v3104 = vand.u32 2147483647, %v2423
        %vm3105 = vcmp.lt.f32.partialorder %v3104, 0.0004427343
        %v3106 = vsel %vm3105, %v3103, %v3100
        %v3107 = vadd.f32 %v2425, 1.0
        %v3108 = vlog2.pop %v3107
        %v3109 = vmul.f32 %v3108, 0.6931472
        %v3110 = vmul.f32 -0.5, %v2425
        %v3111 = vadd.f32 %v3110, 1.0
        %v3112 = vmul.f32 %v3111, %v2425
        %v3113 = vand.u32 2147483647, %v2425
        %vm3114 = vcmp.lt.f32.partialorder %v3113, 0.0004427343
        %v3115 = vsel %vm3114, %v3112, %v3109
        %v3116 = vadd.f32 %v2427, 1.0
        %v3117 = vlog2.pop %v3116
        %v3118 = vmul.f32 %v3117, 0.6931472
        %v3119 = vmul.f32 -0.5, %v2427
        %v3120 = vadd.f32 %v3119, 1.0
        %v3121 = vmul.f32 %v3120, %v2427
        %v3122 = vand.u32 2147483647, %v2427
        %vm3123 = vcmp.lt.f32.partialorder %v3122, 0.0004427343
        %v3124 = vsel %vm3123, %v3121, %v3118
        %v3125 = vadd.f32 %v2429, 1.0
        %v3126 = vlog2.pop %v3125
        %v3127 = vmul.f32 %v3126, 0.6931472
        %v3128 = vmul.f32 -0.5, %v2429
        %v3129 = vadd.f32 %v3128, 1.0
        %v3130 = vmul.f32 %v3129, %v2429
        %v3131 = vand.u32 2147483647, %v2429
        %vm3132 = vcmp.lt.f32.partialorder %v3131, 0.0004427343
        %v3133 = vsel %vm3132, %v3130, %v3127
        %v3134 = vadd.f32 %v2431, 1.0
        %v3135 = vlog2.pop %v3134
        %v3136 = vmul.f32 %v3135, 0.6931472
        %v3137 = vmul.f32 -0.5, %v2431
        %v3138 = vadd.f32 %v3137, 1.0
        %v3139 = vmul.f32 %v3138, %v2431
        %v3140 = vand.u32 2147483647, %v2431
        %vm3141 = vcmp.lt.f32.partialorder %v3140, 0.0004427343
        %v3142 = vsel %vm3141, %v3139, %v3136
        %v3143 = vadd.f32 %v2433, 1.0
        %v3144 = vlog2.pop %v3143
        %v3145 = vmul.f32 %v3144, 0.6931472
        %v3146 = vmul.f32 -0.5, %v2433
        %v3147 = vadd.f32 %v3146, 1.0
        %v3148 = vmul.f32 %v3147, %v2433
        %v3149 = vand.u32 2147483647, %v2433
        %vm3150 = vcmp.lt.f32.partialorder %v3149, 0.0004427343
        %v3151 = vsel %vm3150, %v3148, %v3145
        %v3152 = vadd.f32 %v2435, 1.0
        %v3153 = vlog2.pop %v3152
        %v3154 = vmul.f32 %v3153, 0.6931472
        %v3155 = vmul.f32 -0.5, %v2435
        %v3156 = vadd.f32 %v3155, 1.0
        %v3157 = vmul.f32 %v3156, %v2435
        %v3158 = vand.u32 2147483647, %v2435
        %vm3159 = vcmp.lt.f32.partialorder %v3158, 0.0004427343
        %v3160 = vsel %vm3159, %v3157, %v3154
        %v3161 = vadd.f32 %v2437, 1.0
        %v3162 = vlog2.pop %v3161
        %v3163 = vmul.f32 %v3162, 0.6931472
        %v3164 = vmul.f32 -0.5, %v2437
        %v3165 = vadd.f32 %v3164, 1.0
        %v3166 = vmul.f32 %v3165, %v2437
        %v3167 = vand.u32 2147483647, %v2437
        %vm3168 = vcmp.lt.f32.partialorder %v3167, 0.0004427343
        %v3169 = vsel %vm3168, %v3166, %v3163
        %v3170 = vadd.f32 %v2439, 1.0
        %v3171 = vlog2.pop %v3170
        %v3172 = vmul.f32 %v3171, 0.6931472
        %v3173 = vmul.f32 -0.5, %v2439
        %v3174 = vadd.f32 %v3173, 1.0
        %v3175 = vmul.f32 %v3174, %v2439
        %v3176 = vand.u32 2147483647, %v2439
        %vm3177 = vcmp.lt.f32.partialorder %v3176, 0.0004427343
        %v3178 = vsel %vm3177, %v3175, %v3172
        %v3179 = vadd.f32 %v2441, 1.0
        %v3180 = vlog2.pop %v3179
        %v3181 = vmul.f32 %v3180, 0.6931472
        %v3182 = vmul.f32 -0.5, %v2441
        %v3183 = vadd.f32 %v3182, 1.0
        %v3184 = vmul.f32 %v3183, %v2441
        %v3185 = vand.u32 2147483647, %v2441
        %vm3186 = vcmp.lt.f32.partialorder %v3185, 0.0004427343
        %v3187 = vsel %vm3186, %v3184, %v3181
        %v3188 = vadd.f32 %v2443, 1.0
        %v3189 = vlog2.pop %v3188
        %v3190 = vmul.f32 %v3189, 0.6931472
        %v3191 = vmul.f32 -0.5, %v2443
        %v3192 = vadd.f32 %v3191, 1.0
        %v3193 = vmul.f32 %v3192, %v2443
        %v3194 = vand.u32 2147483647, %v2443
        %vm3195 = vcmp.lt.f32.partialorder %v3194, 0.0004427343
        %v3196 = vsel %vm3195, %v3193, %v3190
        %v3197 = vadd.f32 %v2445, 1.0
        %v3198 = vlog2.pop %v3197
        %v3199 = vmul.f32 %v3198, 0.6931472
        %v3200 = vmul.f32 -0.5, %v2445
        %v3201 = vadd.f32 %v3200, 1.0
        %v3202 = vmul.f32 %v3201, %v2445
        %v3203 = vand.u32 2147483647, %v2445
        %vm3204 = vcmp.lt.f32.partialorder %v3203, 0.0004427343
        %v3205 = vsel %vm3204, %v3202, %v3199
        %v3206 = vadd.f32 %v2447, 1.0
        %v3207 = vlog2.pop %v3206
        %v3208 = vmul.f32 %v3207, 0.6931472
        %v3209 = vmul.f32 -0.5, %v2447
        %v3210 = vadd.f32 %v3209, 1.0
        %v3211 = vmul.f32 %v3210, %v2447
        %v3212 = vand.u32 2147483647, %v2447
        %vm3213 = vcmp.lt.f32.partialorder %v3212, 0.0004427343
        %v3214 = vsel %vm3213, %v3211, %v3208
        %v3215 = vadd.f32 %v2449, 1.0
        %v3216 = vlog2.pop %v3215
        %v3217 = vmul.f32 %v3216, 0.6931472
        %v3218 = vmul.f32 -0.5, %v2449
        %v3219 = vadd.f32 %v3218, 1.0
        %v3220 = vmul.f32 %v3219, %v2449
        %v3221 = vand.u32 2147483647, %v2449
        %vm3222 = vcmp.lt.f32.partialorder %v3221, 0.0004427343
        %v3223 = vsel %vm3222, %v3220, %v3217
        %v3224 = vadd.f32 %v2451, 1.0
        %v3225 = vlog2.pop %v3224
        %v3226 = vmul.f32 %v3225, 0.6931472
        %v3227 = vmul.f32 -0.5, %v2451
        %v3228 = vadd.f32 %v3227, 1.0
        %v3229 = vmul.f32 %v3228, %v2451
        %v3230 = vand.u32 2147483647, %v2451
        %vm3231 = vcmp.lt.f32.partialorder %v3230, 0.0004427343
        %v3232 = vsel %vm3231, %v3229, %v3226
        %v3233 = vadd.f32 %v2453, 1.0
        %v3234 = vlog2.pop %v3233
        %v3235 = vmul.f32 %v3234, 0.6931472
        %v3236 = vmul.f32 -0.5, %v2453
        %v3237 = vadd.f32 %v3236, 1.0
        %v3238 = vmul.f32 %v3237, %v2453
        %v3239 = vand.u32 2147483647, %v2453
        %vm3240 = vcmp.lt.f32.partialorder %v3239, 0.0004427343
        %v3241 = vsel %vm3240, %v3238, %v3235
        %v3242 = vadd.f32 %v2455, 1.0
        %v3243 = vlog2.pop %v3242
        %v3244 = vmul.f32 %v3243, 0.6931472
        %v3245 = vmul.f32 -0.5, %v2455
        %v3246 = vadd.f32 %v3245, 1.0
        %v3247 = vmul.f32 %v3246, %v2455
        %v3248 = vand.u32 2147483647, %v2455
        %vm3249 = vcmp.lt.f32.partialorder %v3248, 0.0004427343
        %v3250 = vsel %vm3249, %v3247, %v3244
        %v3251 = vadd.f32 %v2457, 1.0
        %v3252 = vlog2.pop %v3251
        %v3253 = vmul.f32 %v3252, 0.6931472
        %v3254 = vmul.f32 -0.5, %v2457
        %v3255 = vadd.f32 %v3254, 1.0
        %v3256 = vmul.f32 %v3255, %v2457
        %v3257 = vand.u32 2147483647, %v2457
        %vm3258 = vcmp.lt.f32.partialorder %v3257, 0.0004427343
        %v3259 = vsel %vm3258, %v3256, %v3253
        %v3260 = vadd.f32 %v2459, 1.0
        %v3261 = vlog2.pop %v3260
        %v3262 = vmul.f32 %v3261, 0.6931472
        %v3263 = vmul.f32 -0.5, %v2459
        %v3264 = vadd.f32 %v3263, 1.0
        %v3265 = vmul.f32 %v3264, %v2459
        %v3266 = vand.u32 2147483647, %v2459
        %vm3267 = vcmp.lt.f32.partialorder %v3266, 0.0004427343
        %v3268 = vsel %vm3267, %v3265, %v3262
        %v3269 = vadd.f32 %v2461, 1.0
        %v3270 = vlog2.pop %v3269
        %v3271 = vmul.f32 %v3270, 0.6931472
        %v3272 = vmul.f32 -0.5, %v2461
        %v3273 = vadd.f32 %v3272, 1.0
        %v3274 = vmul.f32 %v3273, %v2461
        %v3275 = vand.u32 2147483647, %v2461
        %vm3276 = vcmp.lt.f32.partialorder %v3275, 0.0004427343
        %v3277 = vsel %vm3276, %v3274, %v3271
        %v3278 = vadd.f32 %v2463, 1.0
        %v3279 = vlog2.pop %v3278
        %v3280 = vmul.f32 %v3279, 0.6931472
        %v3281 = vmul.f32 -0.5, %v2463
        %v3282 = vadd.f32 %v3281, 1.0
        %v3283 = vmul.f32 %v3282, %v2463
        %v3284 = vand.u32 2147483647, %v2463
        %vm3285 = vcmp.lt.f32.partialorder %v3284, 0.0004427343
        %v3286 = vsel %vm3285, %v3283, %v3280
        %v3287 = vadd.f32 %v2465, 1.0
        %v3288 = vlog2.pop %v3287
        %v3289 = vmul.f32 %v3288, 0.6931472
        %v3290 = vmul.f32 -0.5, %v2465
        %v3291 = vadd.f32 %v3290, 1.0
        %v3292 = vmul.f32 %v3291, %v2465
        %v3293 = vand.u32 2147483647, %v2465
        %vm3294 = vcmp.lt.f32.partialorder %v3293, 0.0004427343
        %v3295 = vsel %vm3294, %v3292, %v3289
        %v3296 = vadd.f32 %v2467, 1.0
        %v3297 = vlog2.pop %v3296
        %v3298 = vmul.f32 %v3297, 0.6931472
        %v3299 = vmul.f32 -0.5, %v2467
        %v3300 = vadd.f32 %v3299, 1.0
        %v3301 = vmul.f32 %v3300, %v2467
        %v3302 = vand.u32 2147483647, %v2467
        %vm3303 = vcmp.lt.f32.partialorder %v3302, 0.0004427343
        %v3304 = vsel %vm3303, %v3301, %v3298
        %v3305 = vadd.f32 %v2469, 1.0
        %v3306 = vlog2.pop %v3305
        %v3307 = vmul.f32 %v3306, 0.6931472
        %v3308 = vmul.f32 -0.5, %v2469
        %v3309 = vadd.f32 %v3308, 1.0
        %v3310 = vmul.f32 %v3309, %v2469
        %v3311 = vand.u32 2147483647, %v2469
        %vm3312 = vcmp.lt.f32.partialorder %v3311, 0.0004427343
        %v3313 = vsel %vm3312, %v3310, %v3307
        %v3314 = vadd.f32 %v2471, 1.0
        %v3315 = vlog2.pop %v3314
        %v3316 = vmul.f32 %v3315, 0.6931472
        %v3317 = vmul.f32 -0.5, %v2471
        %v3318 = vadd.f32 %v3317, 1.0
        %v3319 = vmul.f32 %v3318, %v2471
        %v3320 = vand.u32 2147483647, %v2471
        %vm3321 = vcmp.lt.f32.partialorder %v3320, 0.0004427343
        %v3322 = vsel %vm3321, %v3319, %v3316
        %v3323 = vadd.f32 %v2473, 1.0
        %v3324 = vlog2.pop %v3323
        %v3325 = vmul.f32 %v3324, 0.6931472
        %v3326 = vmul.f32 -0.5, %v2473
        %v3327 = vadd.f32 %v3326, 1.0
        %v3328 = vmul.f32 %v3327, %v2473
        %v3329 = vand.u32 2147483647, %v2473
        %vm3330 = vcmp.lt.f32.partialorder %v3329, 0.0004427343
        %v3331 = vsel %vm3330, %v3328, %v3325
        %v3332 = vadd.f32 %v2475, 1.0
        %v3333 = vlog2.pop %v3332
        %v3334 = vmul.f32 %v3333, 0.6931472
        %v3335 = vmul.f32 -0.5, %v2475
        %v3336 = vadd.f32 %v3335, 1.0
        %v3337 = vmul.f32 %v3336, %v2475
        %v3338 = vand.u32 2147483647, %v2475
        %vm3339 = vcmp.lt.f32.partialorder %v3338, 0.0004427343
        %v3340 = vsel %vm3339, %v3337, %v3334
        %v3341 = vadd.f32 %v2477, 1.0
        %v3342 = vlog2.pop %v3341
        %v3343 = vmul.f32 %v3342, 0.6931472
        %v3344 = vmul.f32 -0.5, %v2477
        %v3345 = vadd.f32 %v3344, 1.0
        %v3346 = vmul.f32 %v3345, %v2477
        %v3347 = vand.u32 2147483647, %v2477
        %vm3348 = vcmp.lt.f32.partialorder %v3347, 0.0004427343
        %v3349 = vsel %vm3348, %v3346, %v3343
        %v3350 = vadd.f32 %v2479, 1.0
        %v3351 = vlog2.pop %v3350
        %v3352 = vmul.f32 %v3351, 0.6931472
        %v3353 = vmul.f32 -0.5, %v2479
        %v3354 = vadd.f32 %v3353, 1.0
        %v3355 = vmul.f32 %v3354, %v2479
        %v3356 = vand.u32 2147483647, %v2479
        %vm3357 = vcmp.lt.f32.partialorder %v3356, 0.0004427343
        %v3358 = vsel %vm3357, %v3355, %v3352
        %v3359 = vadd.f32 %v2481, 1.0
        %v3360 = vlog2.pop %v3359
        %v3361 = vmul.f32 %v3360, 0.6931472
        %v3362 = vmul.f32 -0.5, %v2481
        %v3363 = vadd.f32 %v3362, 1.0
        %v3364 = vmul.f32 %v3363, %v2481
        %v3365 = vand.u32 2147483647, %v2481
        %vm3366 = vcmp.lt.f32.partialorder %v3365, 0.0004427343
        %v3367 = vsel %vm3366, %v3364, %v3361
        %v3368 = vadd.f32 %v2483, 1.0
        %v3369 = vlog2.pop %v3368
        %v3370 = vmul.f32 %v3369, 0.6931472
        %v3371 = vmul.f32 -0.5, %v2483
        %v3372 = vadd.f32 %v3371, 1.0
        %v3373 = vmul.f32 %v3372, %v2483
        %v3374 = vand.u32 2147483647, %v2483
        %vm3375 = vcmp.lt.f32.partialorder %v3374, 0.0004427343
        %v3376 = vsel %vm3375, %v3373, %v3370
        %v3377 = vadd.f32 %v2485, 1.0
        %v3378 = vlog2.pop %v3377
        %v3379 = vmul.f32 %v3378, 0.6931472
        %v3380 = vmul.f32 -0.5, %v2485
        %v3381 = vadd.f32 %v3380, 1.0
        %v3382 = vmul.f32 %v3381, %v2485
        %v3383 = vand.u32 2147483647, %v2485
        %vm3384 = vcmp.lt.f32.partialorder %v3383, 0.0004427343
        %v3385 = vsel %vm3384, %v3382, %v3379
        %v3386 = vadd.f32 %v2487, 1.0
        %v3387 = vlog2.pop %v3386
        %v3388 = vmul.f32 %v3387, 0.6931472
        %v3389 = vmul.f32 -0.5, %v2487
        %v3390 = vadd.f32 %v3389, 1.0
        %v3391 = vmul.f32 %v3390, %v2487
        %v3392 = vand.u32 2147483647, %v2487
        %vm3393 = vcmp.lt.f32.partialorder %v3392, 0.0004427343
        %v3394 = vsel %vm3393, %v3391, %v3388
        %v3395 = vadd.f32 %v2489, 1.0
        %v3396 = vlog2.pop %v3395
        %v3397 = vmul.f32 %v3396, 0.6931472
        %v3398 = vmul.f32 -0.5, %v2489
        %v3399 = vadd.f32 %v3398, 1.0
        %v3400 = vmul.f32 %v3399, %v2489
        %v3401 = vand.u32 2147483647, %v2489
        %vm3402 = vcmp.lt.f32.partialorder %v3401, 0.0004427343
        %v3403 = vsel %vm3402, %v3400, %v3397
        %v3404 = vadd.f32 %v2491, 1.0
        %v3405 = vlog2.pop %v3404
        %v3406 = vmul.f32 %v3405, 0.6931472
        %v3407 = vmul.f32 -0.5, %v2491
        %v3408 = vadd.f32 %v3407, 1.0
        %v3409 = vmul.f32 %v3408, %v2491
        %v3410 = vand.u32 2147483647, %v2491
        %vm3411 = vcmp.lt.f32.partialorder %v3410, 0.0004427343
        %v3412 = vsel %vm3411, %v3409, %v3406
        %v3413 = vadd.f32 %v2493, 1.0
        %v3414 = vlog2.pop %v3413
        %v3415 = vmul.f32 %v3414, 0.6931472
        %v3416 = vmul.f32 -0.5, %v2493
        %v3417 = vadd.f32 %v3416, 1.0
        %v3418 = vmul.f32 %v3417, %v2493
        %v3419 = vand.u32 2147483647, %v2493
        %vm3420 = vcmp.lt.f32.partialorder %v3419, 0.0004427343
        %v3421 = vsel %vm3420, %v3418, %v3415
        %v3422 = vadd.f32 %v2495, 1.0
        %v3423 = vlog2.pop %v3422
        %v3424 = vmul.f32 %v3423, 0.6931472
        %v3425 = vmul.f32 -0.5, %v2495
        %v3426 = vadd.f32 %v3425, 1.0
        %v3427 = vmul.f32 %v3426, %v2495
        %v3428 = vand.u32 2147483647, %v2495
        %vm3429 = vcmp.lt.f32.partialorder %v3428, 0.0004427343
        %v3430 = vsel %vm3429, %v3427, %v3424
        %v3431 = vadd.f32 %v2497, 1.0
        %v3432 = vlog2.pop %v3431
        %v3433 = vmul.f32 %v3432, 0.6931472
        %v3434 = vmul.f32 -0.5, %v2497
        %v3435 = vadd.f32 %v3434, 1.0
        %v3436 = vmul.f32 %v3435, %v2497
        %v3437 = vand.u32 2147483647, %v2497
        %vm3438 = vcmp.lt.f32.partialorder %v3437, 0.0004427343
        %v3439 = vsel %vm3438, %v3436, %v3433
        %v3440 = vadd.f32 %v2499, 1.0
        %v3441 = vlog2.pop %v3440
        %v3442 = vmul.f32 %v3441, 0.6931472
        %v3443 = vmul.f32 -0.5, %v2499
        %v3444 = vadd.f32 %v3443, 1.0
        %v3445 = vmul.f32 %v3444, %v2499
        %v3446 = vand.u32 2147483647, %v2499
        %vm3447 = vcmp.lt.f32.partialorder %v3446, 0.0004427343
        %v3448 = vsel %vm3447, %v3445, %v3442
        %v3449 = vadd.f32 %v2501, 1.0
        %v3450 = vlog2.pop %v3449
        %v3451 = vmul.f32 %v3450, 0.6931472
        %v3452 = vmul.f32 -0.5, %v2501
        %v3453 = vadd.f32 %v3452, 1.0
        %v3454 = vmul.f32 %v3453, %v2501
        %v3455 = vand.u32 2147483647, %v2501
        %vm3456 = vcmp.lt.f32.partialorder %v3455, 0.0004427343
        %v3457 = vsel %vm3456, %v3454, %v3451
        %v3458 = vadd.f32 %v2503, 1.0
        %v3459 = vlog2.pop %v3458
        %v3460 = vmul.f32 %v3459, 0.6931472
        %v3461 = vmul.f32 -0.5, %v2503
        %v3462 = vadd.f32 %v3461, 1.0
        %v3463 = vmul.f32 %v3462, %v2503
        %v3464 = vand.u32 2147483647, %v2503
        %vm3465 = vcmp.lt.f32.partialorder %v3464, 0.0004427343
        %v3466 = vsel %vm3465, %v3463, %v3460
        %v3467 = vadd.f32 %v2505, 1.0
        %v3468 = vlog2.pop %v3467
        %v3469 = vmul.f32 %v3468, 0.6931472
        %v3470 = vmul.f32 -0.5, %v2505
        %v3471 = vadd.f32 %v3470, 1.0
        %v3472 = vmul.f32 %v3471, %v2505
        %v3473 = vand.u32 2147483647, %v2505
        %vm3474 = vcmp.lt.f32.partialorder %v3473, 0.0004427343
        %v3475 = vsel %vm3474, %v3472, %v3469
        %v3476 = vadd.f32 %v2507, 1.0
        %v3477 = vlog2.pop %v3476
        %v3478 = vmul.f32 %v3477, 0.6931472
        %v3479 = vmul.f32 -0.5, %v2507
        %v3480 = vadd.f32 %v3479, 1.0
        %v3481 = vmul.f32 %v3480, %v2507
        %v3482 = vand.u32 2147483647, %v2507
        %vm3483 = vcmp.lt.f32.partialorder %v3482, 0.0004427343
        %v3484 = vsel %vm3483, %v3481, %v3478
        %v3485 = vadd.f32 %v2509, 1.0
        %v3486 = vlog2.pop %v3485
        %v3487 = vmul.f32 %v3486, 0.6931472
        %v3488 = vmul.f32 -0.5, %v2509
        %v3489 = vadd.f32 %v3488, 1.0
        %v3490 = vmul.f32 %v3489, %v2509
        %v3491 = vand.u32 2147483647, %v2509
        %vm3492 = vcmp.lt.f32.partialorder %v3491, 0.0004427343
        %v3493 = vsel %vm3492, %v3490, %v3487
        %v3494 = vadd.f32 %v2511, 1.0
        %v3495 = vlog2.pop %v3494
        %v3496 = vmul.f32 %v3495, 0.6931472
        %v3497 = vmul.f32 -0.5, %v2511
        %v3498 = vadd.f32 %v3497, 1.0
        %v3499 = vmul.f32 %v3498, %v2511
        %v3500 = vand.u32 2147483647, %v2511
        %vm3501 = vcmp.lt.f32.partialorder %v3500, 0.0004427343
        %v3502 = vsel %vm3501, %v3499, %v3496
        %v3503 = vadd.f32 %v2513, 1.0
        %v3504 = vlog2.pop %v3503
        %v3505 = vmul.f32 %v3504, 0.6931472
        %v3506 = vmul.f32 -0.5, %v2513
        %v3507 = vadd.f32 %v3506, 1.0
        %v3508 = vmul.f32 %v3507, %v2513
        %v3509 = vand.u32 2147483647, %v2513
        %vm3510 = vcmp.lt.f32.partialorder %v3509, 0.0004427343
        %v3511 = vsel %vm3510, %v3508, %v3505
        %v3512 = vadd.f32 %v2515, 1.0
        %v3513 = vlog2.pop %v3512
        %v3514 = vmul.f32 %v3513, 0.6931472
        %v3515 = vmul.f32 -0.5, %v2515
        %v3516 = vadd.f32 %v3515, 1.0
        %v3517 = vmul.f32 %v3516, %v2515
        %v3518 = vand.u32 2147483647, %v2515
        %vm3519 = vcmp.lt.f32.partialorder %v3518, 0.0004427343
        %v3520 = vsel %vm3519, %v3517, %v3514
        %v3521 = vadd.f32 %v2517, 1.0
        %v3522 = vlog2.pop %v3521
        %v3523 = vmul.f32 %v3522, 0.6931472
        %v3524 = vmul.f32 -0.5, %v2517
        %v3525 = vadd.f32 %v3524, 1.0
        %v3526 = vmul.f32 %v3525, %v2517
        %v3527 = vand.u32 2147483647, %v2517
        %vm3528 = vcmp.lt.f32.partialorder %v3527, 0.0004427343
        %v3529 = vsel %vm3528, %v3526, %v3523
        %v3530 = vadd.f32 %v2519, 1.0
        %v3531 = vlog2.pop %v3530
        %v3532 = vmul.f32 %v3531, 0.6931472
        %v3533 = vmul.f32 -0.5, %v2519
        %v3534 = vadd.f32 %v3533, 1.0
        %v3535 = vmul.f32 %v3534, %v2519
        %v3536 = vand.u32 2147483647, %v2519
        %vm3537 = vcmp.lt.f32.partialorder %v3536, 0.0004427343
        %v3538 = vsel %vm3537, %v3535, %v3532
        %v3539 = vadd.f32 %v2521, 1.0
        %v3540 = vlog2.pop %v3539
        %v3541 = vmul.f32 %v3540, 0.6931472
        %v3542 = vmul.f32 -0.5, %v2521
        %v3543 = vadd.f32 %v3542, 1.0
        %v3544 = vmul.f32 %v3543, %v2521
        %v3545 = vand.u32 2147483647, %v2521
        %vm3546 = vcmp.lt.f32.partialorder %v3545, 0.0004427343
        %v3547 = vsel %vm3546, %v3544, %v3541
        %v3548 = vadd.f32 %v2523, 1.0
        %v3549 = vlog2.pop %v3548
        %v3550 = vmul.f32 %v3549, 0.6931472
        %v3551 = vmul.f32 -0.5, %v2523
        %v3552 = vadd.f32 %v3551, 1.0
        %v3553 = vmul.f32 %v3552, %v2523
        %v3554 = vand.u32 2147483647, %v2523
        %vm3555 = vcmp.lt.f32.partialorder %v3554, 0.0004427343
        %v3556 = vsel %vm3555, %v3553, %v3550
        %v3557 = vadd.f32 %v2525, 1.0
        %v3558 = vlog2.pop %v3557
        %v3559 = vmul.f32 %v3558, 0.6931472
        %v3560 = vmul.f32 -0.5, %v2525
        %v3561 = vadd.f32 %v3560, 1.0
        %v3562 = vmul.f32 %v3561, %v2525
        %v3563 = vand.u32 2147483647, %v2525
        %vm3564 = vcmp.lt.f32.partialorder %v3563, 0.0004427343
        %v3565 = vsel %vm3564, %v3562, %v3559
        %v3566 = vadd.f32 %v2527, 1.0
        %v3567 = vlog2.pop %v3566
        %v3568 = vmul.f32 %v3567, 0.6931472
        %v3569 = vmul.f32 -0.5, %v2527
        %v3570 = vadd.f32 %v3569, 1.0
        %v3571 = vmul.f32 %v3570, %v2527
        %v3572 = vand.u32 2147483647, %v2527
        %vm3573 = vcmp.lt.f32.partialorder %v3572, 0.0004427343
        %v3574 = vsel %vm3573, %v3571, %v3568
        %v3575 = vadd.f32 %v2529, 1.0
        %v3576 = vlog2.pop %v3575
        %v3577 = vmul.f32 %v3576, 0.6931472
        %v3578 = vmul.f32 -0.5, %v2529
        %v3579 = vadd.f32 %v3578, 1.0
        %v3580 = vmul.f32 %v3579, %v2529
        %v3581 = vand.u32 2147483647, %v2529
        %vm3582 = vcmp.lt.f32.partialorder %v3581, 0.0004427343
        %v3583 = vsel %vm3582, %v3580, %v3577
        %v3584 = vadd.f32 %v2531, 1.0
        %v3585 = vlog2.pop %v3584
        %v3586 = vmul.f32 %v3585, 0.6931472
        %v3587 = vmul.f32 -0.5, %v2531
        %v3588 = vadd.f32 %v3587, 1.0
        %v3589 = vmul.f32 %v3588, %v2531
        %v3590 = vand.u32 2147483647, %v2531
        %vm3591 = vcmp.lt.f32.partialorder %v3590, 0.0004427343
        %v3592 = vsel %vm3591, %v3589, %v3586
        %v3593 = vadd.f32 %v2533, 1.0
        %v3594 = vlog2.pop %v3593
        %v3595 = vmul.f32 %v3594, 0.6931472
        %v3596 = vmul.f32 -0.5, %v2533
        %v3597 = vadd.f32 %v3596, 1.0
        %v3598 = vmul.f32 %v3597, %v2533
        %v3599 = vand.u32 2147483647, %v2533
        %vm3600 = vcmp.lt.f32.partialorder %v3599, 0.0004427343
        %v3601 = vsel %vm3600, %v3598, %v3595
        %v3602 = vadd.f32 %v2535, 1.0
        %v3603 = vlog2.pop %v3602
        %v3604 = vmul.f32 %v3603, 0.6931472
        %v3605 = vmul.f32 -0.5, %v2535
        %v3606 = vadd.f32 %v3605, 1.0
        %v3607 = vmul.f32 %v3606, %v2535
        %v3608 = vand.u32 2147483647, %v2535
        %vm3609 = vcmp.lt.f32.partialorder %v3608, 0.0004427343
        %v3610 = vsel %vm3609, %v3607, %v3604
        %v3611 = vadd.f32 %v2537, 1.0
        %v3612 = vlog2.pop %v3611
        %v3613 = vmul.f32 %v3612, 0.6931472
        %v3614 = vmul.f32 -0.5, %v2537
        %v3615 = vadd.f32 %v3614, 1.0
        %v3616 = vmul.f32 %v3615, %v2537
        %v3617 = vand.u32 2147483647, %v2537
        %vm3618 = vcmp.lt.f32.partialorder %v3617, 0.0004427343
        %v3619 = vsel %vm3618, %v3616, %v3613
        %v3620 = vadd.f32 %v2539, 1.0
        %v3621 = vlog2.pop %v3620
        %v3622 = vmul.f32 %v3621, 0.6931472
        %v3623 = vmul.f32 -0.5, %v2539
        %v3624 = vadd.f32 %v3623, 1.0
        %v3625 = vmul.f32 %v3624, %v2539
        %v3626 = vand.u32 2147483647, %v2539
        %vm3627 = vcmp.lt.f32.partialorder %v3626, 0.0004427343
        %v3628 = vsel %vm3627, %v3625, %v3622
        %v3629 = vadd.f32 %v2541, 1.0
        %v3630 = vlog2.pop %v3629
        %v3631 = vmul.f32 %v3630, 0.6931472
        %v3632 = vmul.f32 -0.5, %v2541
        %v3633 = vadd.f32 %v3632, 1.0
        %v3634 = vmul.f32 %v3633, %v2541
        %v3635 = vand.u32 2147483647, %v2541
        %vm3636 = vcmp.lt.f32.partialorder %v3635, 0.0004427343
        %v3637 = vsel %vm3636, %v3634, %v3631
        %v3638 = vadd.f32 %v2543, 1.0
        %v3639 = vlog2.pop %v3638
        %v3640 = vmul.f32 %v3639, 0.6931472
        %v3641 = vmul.f32 -0.5, %v2543
        %v3642 = vadd.f32 %v3641, 1.0
        %v3643 = vmul.f32 %v3642, %v2543
        %v3644 = vand.u32 2147483647, %v2543
        %vm3645 = vcmp.lt.f32.partialorder %v3644, 0.0004427343
        %v3646 = vsel %vm3645, %v3643, %v3640
        %v3647 = vadd.f32 %v2545, 1.0
        %v3648 = vlog2.pop %v3647
        %v3649 = vmul.f32 %v3648, 0.6931472
        %v3650 = vmul.f32 -0.5, %v2545
        %v3651 = vadd.f32 %v3650, 1.0
        %v3652 = vmul.f32 %v3651, %v2545
        %v3653 = vand.u32 2147483647, %v2545
        %vm3654 = vcmp.lt.f32.partialorder %v3653, 0.0004427343
        %v3655 = vsel %vm3654, %v3652, %v3649
        %v3656 = vadd.f32 %v2547, 1.0
        %v3657 = vlog2.pop %v3656
        %v3658 = vmul.f32 %v3657, 0.6931472
        %v3659 = vmul.f32 -0.5, %v2547
        %v3660 = vadd.f32 %v3659, 1.0
        %v3661 = vmul.f32 %v3660, %v2547
        %v3662 = vand.u32 2147483647, %v2547
        %vm3663 = vcmp.lt.f32.partialorder %v3662, 0.0004427343
        %v3664 = vsel %vm3663, %v3661, %v3658
        %v3665 = vadd.f32 %v2549, 1.0
        %v3666 = vlog2.pop %v3665
        %v3667 = vmul.f32 %v3666, 0.6931472
        %v3668 = vmul.f32 -0.5, %v2549
        %v3669 = vadd.f32 %v3668, 1.0
        %v3670 = vmul.f32 %v3669, %v2549
        %v3671 = vand.u32 2147483647, %v2549
        %vm3672 = vcmp.lt.f32.partialorder %v3671, 0.0004427343
        %v3673 = vsel %vm3672, %v3670, %v3667
        %v3674 = vadd.f32 %v2551, 1.0
        %v3675 = vlog2.pop %v3674
        %v3676 = vmul.f32 %v3675, 0.6931472
        %v3677 = vmul.f32 -0.5, %v2551
        %v3678 = vadd.f32 %v3677, 1.0
        %v3679 = vmul.f32 %v3678, %v2551
        %v3680 = vand.u32 2147483647, %v2551
        %vm3681 = vcmp.lt.f32.partialorder %v3680, 0.0004427343
        %v3682 = vsel %vm3681, %v3679, %v3676
        %v3683 = vadd.f32 %v2553, 1.0
        %v3684 = vlog2.pop %v3683
        %v3685 = vmul.f32 %v3684, 0.6931472
        %v3686 = vmul.f32 -0.5, %v2553
        %v3687 = vadd.f32 %v3686, 1.0
        %v3688 = vmul.f32 %v3687, %v2553
        %v3689 = vand.u32 2147483647, %v2553
        %vm3690 = vcmp.lt.f32.partialorder %v3689, 0.0004427343
        %v3691 = vsel %vm3690, %v3688, %v3685
        %v3692 = vadd.f32 %v2555, 1.0
        %v3693 = vlog2.pop %v3692
        %v3694 = vmul.f32 %v3693, 0.6931472
        %v3695 = vmul.f32 -0.5, %v2555
        %v3696 = vadd.f32 %v3695, 1.0
        %v3697 = vmul.f32 %v3696, %v2555
        %v3698 = vand.u32 2147483647, %v2555
        %vm3699 = vcmp.lt.f32.partialorder %v3698, 0.0004427343
        %v3700 = vsel %vm3699, %v3697, %v3694
        %v3701 = vadd.f32 %v2557, 1.0
        %v3702 = vlog2.pop %v3701
        %v3703 = vmul.f32 %v3702, 0.6931472
        %v3704 = vmul.f32 -0.5, %v2557
        %v3705 = vadd.f32 %v3704, 1.0
        %v3706 = vmul.f32 %v3705, %v2557
        %v3707 = vand.u32 2147483647, %v2557
        %vm3708 = vcmp.lt.f32.partialorder %v3707, 0.0004427343
        %v3709 = vsel %vm3708, %v3706, %v3703
        %v3710 = vadd.f32 %v1918, %v2566
        %v3711 = vadd.f32 %v1919, %v2575
        %v3712 = vadd.f32 %v1920, %v2584
        %v3713 = vadd.f32 %v1921, %v2593
        %v3714 = vadd.f32 %v1922, %v2602
        %v3715 = vadd.f32 %v1923, %v2611
        %v3716 = vadd.f32 %v1924, %v2620
        %v3717 = vadd.f32 %v1925, %v2629
        %v3718 = vadd.f32 %v1926, %v2638
        %v3719 = vadd.f32 %v1927, %v2647
        %v3720 = vadd.f32 %v1928, %v2656
        %v3721 = vadd.f32 %v1929, %v2665
        %v3722 = vadd.f32 %v1930, %v2674
        %v3723 = vadd.f32 %v1931, %v2683
        %v3724 = vadd.f32 %v1932, %v2692
        %v3725 = vadd.f32 %v1933, %v2701
        %v3726 = vadd.f32 %v1934, %v2710
        %v3727 = vadd.f32 %v1935, %v2719
        %v3728 = vadd.f32 %v1936, %v2728
        %v3729 = vadd.f32 %v1937, %v2737
        %v3730 = vadd.f32 %v1938, %v2746
        %v3731 = vadd.f32 %v1939, %v2755
        %v3732 = vadd.f32 %v1940, %v2764
        %v3733 = vadd.f32 %v1941, %v2773
        %v3734 = vadd.f32 %v1942, %v2782
        %v3735 = vadd.f32 %v1943, %v2791
        %v3736 = vadd.f32 %v1944, %v2800
        %v3737 = vadd.f32 %v1945, %v2809
        %v3738 = vadd.f32 %v1946, %v2818
        %v3739 = vadd.f32 %v1947, %v2827
        %v3740 = vadd.f32 %v1948, %v2836
        %v3741 = vadd.f32 %v1949, %v2845
        %v3742 = vadd.f32 %v1950, %v2854
        %v3743 = vadd.f32 %v1951, %v2863
        %v3744 = vadd.f32 %v1952, %v2872
        %v3745 = vadd.f32 %v1953, %v2881
        %v3746 = vadd.f32 %v1954, %v2890
        %v3747 = vadd.f32 %v1955, %v2899
        %v3748 = vadd.f32 %v1956, %v2908
        %v3749 = vadd.f32 %v1957, %v2917
        %v3750 = vadd.f32 %v1958, %v2926
        %v3751 = vadd.f32 %v1959, %v2935
        %v3752 = vadd.f32 %v1960, %v2944
        %v3753 = vadd.f32 %v1961, %v2953
        %v3754 = vadd.f32 %v1962, %v2962
        %v3755 = vadd.f32 %v1963, %v2971
        %v3756 = vadd.f32 %v1964, %v2980
        %v3757 = vadd.f32 %v1965, %v2989
        %v3758 = vadd.f32 %v1966, %v2998
        %v3759 = vadd.f32 %v1967, %v3007
        %v3760 = vadd.f32 %v1968, %v3016
        %v3761 = vadd.f32 %v1969, %v3025
        %v3762 = vadd.f32 %v1970, %v3034
        %v3763 = vadd.f32 %v1971, %v3043
        %v3764 = vadd.f32 %v1972, %v3052
        %v3765 = vadd.f32 %v1973, %v3061
        %v3766 = vadd.f32 %v1974, %v3070
        %v3767 = vadd.f32 %v1975, %v3079
        %v3768 = vadd.f32 %v1976, %v3088
        %v3769 = vadd.f32 %v1977, %v3097
        %v3770 = vadd.f32 %v1978, %v3106
        %v3771 = vadd.f32 %v1979, %v3115
        %v3772 = vadd.f32 %v1980, %v3124
        %v3773 = vadd.f32 %v1981, %v3133
        %v3774 = vadd.f32 %v1982, %v3142
        %v3775 = vadd.f32 %v1983, %v3151
        %v3776 = vadd.f32 %v1984, %v3160
        %v3777 = vadd.f32 %v1985, %v3169
        %v3778 = vadd.f32 %v1986, %v3178
        %v3779 = vadd.f32 %v1987, %v3187
        %v3780 = vadd.f32 %v1988, %v3196
        %v3781 = vadd.f32 %v1989, %v3205
        %v3782 = vadd.f32 %v1990, %v3214
        %v3783 = vadd.f32 %v1991, %v3223
        %v3784 = vadd.f32 %v1992, %v3232
        %v3785 = vadd.f32 %v1993, %v3241
        %v3786 = vadd.f32 %v1994, %v3250
        %v3787 = vadd.f32 %v1995, %v3259
        %v3788 = vadd.f32 %v1996, %v3268
        %v3789 = vadd.f32 %v1997, %v3277
        %v3790 = vadd.f32 %v1998, %v3286
        %v3791 = vadd.f32 %v1999, %v3295
        %v3792 = vadd.f32 %v2000, %v3304
        %v3793 = vadd.f32 %v2001, %v3313
        %v3794 = vadd.f32 %v2002, %v3322
        %v3795 = vadd.f32 %v2003, %v3331
        %v3796 = vadd.f32 %v2004, %v3340
        %v3797 = vadd.f32 %v2005, %v3349
        %v3798 = vadd.f32 %v2006, %v3358
        %v3799 = vadd.f32 %v2007, %v3367
        %v3800 = vadd.f32 %v2008, %v3376
        %v3801 = vadd.f32 %v2009, %v3385
        %v3802 = vadd.f32 %v2010, %v3394
        %v3803 = vadd.f32 %v2011, %v3403
        %v3804 = vadd.f32 %v2012, %v3412
        %v3805 = vadd.f32 %v2013, %v3421
        %v3806 = vadd.f32 %v2014, %v3430
        %v3807 = vadd.f32 %v2015, %v3439
        %v3808 = vadd.f32 %v2016, %v3448
        %v3809 = vadd.f32 %v2017, %v3457
        %v3810 = vadd.f32 %v2018, %v3466
        %v3811 = vadd.f32 %v2019, %v3475
        %v3812 = vadd.f32 %v2020, %v3484
        %v3813 = vadd.f32 %v2021, %v3493
        %v3814 = vadd.f32 %v2022, %v3502
        %v3815 = vadd.f32 %v2023, %v3511
        %v3816 = vadd.f32 %v2024, %v3520
        %v3817 = vadd.f32 %v2025, %v3529
        %v3818 = vadd.f32 %v2026, %v3538
        %v3819 = vadd.f32 %v2027, %v3547
        %v3820 = vadd.f32 %v2028, %v3556
        %v3821 = vadd.f32 %v2029, %v3565
        %v3822 = vadd.f32 %v2030, %v3574
        %v3823 = vadd.f32 %v2031, %v3583
        %v3824 = vadd.f32 %v2032, %v3592
        %v3825 = vadd.f32 %v2033, %v3601
        %v3826 = vadd.f32 %v2034, %v3610
        %v3827 = vadd.f32 %v2035, %v3619
        %v3828 = vadd.f32 %v2036, %v3628
        %v3829 = vadd.f32 %v2037, %v3637
        %v3830 = vadd.f32 %v2038, %v3646
        %v3831 = vadd.f32 %v2039, %v3655
        %v3832 = vadd.f32 %v2040, %v3664
        %v3833 = vadd.f32 %v2041, %v3673
        %v3834 = vadd.f32 %v2042, %v3682
        %v3835 = vadd.f32 %v2043, %v3691
        %v3836 = vadd.f32 %v2044, %v3700
        %v3837 = vadd.f32 %v2045, %v3709
        %v3838 = vsub.f32 0.0, %v3710
        %v3839 = vsub.f32 0.0, %v3711
        %v3840 = vsub.f32 0.0, %v3712
        %v3841 = vsub.f32 0.0, %v3713
        %v3842 = vsub.f32 0.0, %v3714
        %v3843 = vsub.f32 0.0, %v3715
        %v3844 = vsub.f32 0.0, %v3716
        %v3845 = vsub.f32 0.0, %v3717
        %v3846 = vsub.f32 0.0, %v3718
        %v3847 = vsub.f32 0.0, %v3719
        %v3848 = vsub.f32 0.0, %v3720
        %v3849 = vsub.f32 0.0, %v3721
        %v3850 = vsub.f32 0.0, %v3722
        %v3851 = vsub.f32 0.0, %v3723
        %v3852 = vsub.f32 0.0, %v3724
        %v3853 = vsub.f32 0.0, %v3725
        %v3854 = vsub.f32 0.0, %v3726
        %v3855 = vsub.f32 0.0, %v3727
        %v3856 = vsub.f32 0.0, %v3728
        %v3857 = vsub.f32 0.0, %v3729
        %v3858 = vsub.f32 0.0, %v3730
        %v3859 = vsub.f32 0.0, %v3731
        %v3860 = vsub.f32 0.0, %v3732
        %v3861 = vsub.f32 0.0, %v3733
        %v3862 = vsub.f32 0.0, %v3734
        %v3863 = vsub.f32 0.0, %v3735
        %v3864 = vsub.f32 0.0, %v3736
        %v3865 = vsub.f32 0.0, %v3737
        %v3866 = vsub.f32 0.0, %v3738
        %v3867 = vsub.f32 0.0, %v3739
        %v3868 = vsub.f32 0.0, %v3740
        %v3869 = vsub.f32 0.0, %v3741
        %v3870 = vsub.f32 0.0, %v3742
        %v3871 = vsub.f32 0.0, %v3743
        %v3872 = vsub.f32 0.0, %v3744
        %v3873 = vsub.f32 0.0, %v3745
        %v3874 = vsub.f32 0.0, %v3746
        %v3875 = vsub.f32 0.0, %v3747
        %v3876 = vsub.f32 0.0, %v3748
        %v3877 = vsub.f32 0.0, %v3749
        %v3878 = vsub.f32 0.0, %v3750
        %v3879 = vsub.f32 0.0, %v3751
        %v3880 = vsub.f32 0.0, %v3752
        %v3881 = vsub.f32 0.0, %v3753
        %v3882 = vsub.f32 0.0, %v3754
        %v3883 = vsub.f32 0.0, %v3755
        %v3884 = vsub.f32 0.0, %v3756
        %v3885 = vsub.f32 0.0, %v3757
        %v3886 = vsub.f32 0.0, %v3758
        %v3887 = vsub.f32 0.0, %v3759
        %v3888 = vsub.f32 0.0, %v3760
        %v3889 = vsub.f32 0.0, %v3761
        %v3890 = vsub.f32 0.0, %v3762
        %v3891 = vsub.f32 0.0, %v3763
        %v3892 = vsub.f32 0.0, %v3764
        %v3893 = vsub.f32 0.0, %v3765
        %v3894 = vsub.f32 0.0, %v3766
        %v3895 = vsub.f32 0.0, %v3767
        %v3896 = vsub.f32 0.0, %v3768
        %v3897 = vsub.f32 0.0, %v3769
        %v3898 = vsub.f32 0.0, %v3770
        %v3899 = vsub.f32 0.0, %v3771
        %v3900 = vsub.f32 0.0, %v3772
        %v3901 = vsub.f32 0.0, %v3773
        %v3902 = vsub.f32 0.0, %v3774
        %v3903 = vsub.f32 0.0, %v3775
        %v3904 = vsub.f32 0.0, %v3776
        %v3905 = vsub.f32 0.0, %v3777
        %v3906 = vsub.f32 0.0, %v3778
        %v3907 = vsub.f32 0.0, %v3779
        %v3908 = vsub.f32 0.0, %v3780
        %v3909 = vsub.f32 0.0, %v3781
        %v3910 = vsub.f32 0.0, %v3782
        %v3911 = vsub.f32 0.0, %v3783
        %v3912 = vsub.f32 0.0, %v3784
        %v3913 = vsub.f32 0.0, %v3785
        %v3914 = vsub.f32 0.0, %v3786
        %v3915 = vsub.f32 0.0, %v3787
        %v3916 = vsub.f32 0.0, %v3788
        %v3917 = vsub.f32 0.0, %v3789
        %v3918 = vsub.f32 0.0, %v3790
        %v3919 = vsub.f32 0.0, %v3791
        %v3920 = vsub.f32 0.0, %v3792
        %v3921 = vsub.f32 0.0, %v3793
        %v3922 = vsub.f32 0.0, %v3794
        %v3923 = vsub.f32 0.0, %v3795
        %v3924 = vsub.f32 0.0, %v3796
        %v3925 = vsub.f32 0.0, %v3797
        %v3926 = vsub.f32 0.0, %v3798
        %v3927 = vsub.f32 0.0, %v3799
        %v3928 = vsub.f32 0.0, %v3800
        %v3929 = vsub.f32 0.0, %v3801
        %v3930 = vsub.f32 0.0, %v3802
        %v3931 = vsub.f32 0.0, %v3803
        %v3932 = vsub.f32 0.0, %v3804
        %v3933 = vsub.f32 0.0, %v3805
        %v3934 = vsub.f32 0.0, %v3806
        %v3935 = vsub.f32 0.0, %v3807
        %v3936 = vsub.f32 0.0, %v3808
        %v3937 = vsub.f32 0.0, %v3809
        %v3938 = vsub.f32 0.0, %v3810
        %v3939 = vsub.f32 0.0, %v3811
        %v3940 = vsub.f32 0.0, %v3812
        %v3941 = vsub.f32 0.0, %v3813
        %v3942 = vsub.f32 0.0, %v3814
        %v3943 = vsub.f32 0.0, %v3815
        %v3944 = vsub.f32 0.0, %v3816
        %v3945 = vsub.f32 0.0, %v3817
        %v3946 = vsub.f32 0.0, %v3818
        %v3947 = vsub.f32 0.0, %v3819
        %v3948 = vsub.f32 0.0, %v3820
        %v3949 = vsub.f32 0.0, %v3821
        %v3950 = vsub.f32 0.0, %v3822
        %v3951 = vsub.f32 0.0, %v3823
        %v3952 = vsub.f32 0.0, %v3824
        %v3953 = vsub.f32 0.0, %v3825
        %v3954 = vsub.f32 0.0, %v3826
        %v3955 = vsub.f32 0.0, %v3827
        %v3956 = vsub.f32 0.0, %v3828
        %v3957 = vsub.f32 0.0, %v3829
        %v3958 = vsub.f32 0.0, %v3830
        %v3959 = vsub.f32 0.0, %v3831
        %v3960 = vsub.f32 0.0, %v3832
        %v3961 = vsub.f32 0.0, %v3833
        %v3962 = vsub.f32 0.0, %v3834
        %v3963 = vsub.f32 0.0, %v3835
        %v3964 = vsub.f32 0.0, %v3836
        %v3965 = vsub.f32 0.0, %v3837
        %v3966 = vsub.f32 0.0, %v1408
        %v3967 = vsub.f32 0.0, %v1411
        %v3968 = vsub.f32 0.0, %v1414
        %v3969 = vsub.f32 0.0, %v1417
        %v3970 = vsub.f32 0.0, %v1420
        %v3971 = vsub.f32 0.0, %v1423
        %v3972 = vsub.f32 0.0, %v1426
        %v3973 = vsub.f32 0.0, %v1429
        %v3974 = vsub.f32 0.0, %v1432
        %v3975 = vsub.f32 0.0, %v1435
        %v3976 = vsub.f32 0.0, %v1438
        %v3977 = vsub.f32 0.0, %v1441
        %v3978 = vsub.f32 0.0, %v1444
        %v3979 = vsub.f32 0.0, %v1447
        %v3980 = vsub.f32 0.0, %v1450
        %v3981 = vsub.f32 0.0, %v1453
        %v3982 = vsub.f32 0.0, %v1456
        %v3983 = vsub.f32 0.0, %v1459
        %v3984 = vsub.f32 0.0, %v1462
        %v3985 = vsub.f32 0.0, %v1465
        %v3986 = vsub.f32 0.0, %v1468
        %v3987 = vsub.f32 0.0, %v1471
        %v3988 = vsub.f32 0.0, %v1474
        %v3989 = vsub.f32 0.0, %v1477
        %v3990 = vsub.f32 0.0, %v1480
        %v3991 = vsub.f32 0.0, %v1483
        %v3992 = vsub.f32 0.0, %v1486
        %v3993 = vsub.f32 0.0, %v1489
        %v3994 = vsub.f32 0.0, %v1492
        %v3995 = vsub.f32 0.0, %v1495
        %v3996 = vsub.f32 0.0, %v1498
        %v3997 = vsub.f32 0.0, %v1501
        %v3998 = vsub.f32 0.0, %v1504
        %v3999 = vsub.f32 0.0, %v1507
        %v4000 = vsub.f32 0.0, %v1510
        %v4001 = vsub.f32 0.0, %v1513
        %v4002 = vsub.f32 0.0, %v1516
        %v4003 = vsub.f32 0.0, %v1519
        %v4004 = vsub.f32 0.0, %v1522
        %v4005 = vsub.f32 0.0, %v1525
        %v4006 = vsub.f32 0.0, %v1528
        %v4007 = vsub.f32 0.0, %v1531
        %v4008 = vsub.f32 0.0, %v1534
        %v4009 = vsub.f32 0.0, %v1537
        %v4010 = vsub.f32 0.0, %v1540
        %v4011 = vsub.f32 0.0, %v1543
        %v4012 = vsub.f32 0.0, %v1546
        %v4013 = vsub.f32 0.0, %v1549
        %v4014 = vsub.f32 0.0, %v1552
        %v4015 = vsub.f32 0.0, %v1555
        %v4016 = vsub.f32 0.0, %v1558
        %v4017 = vsub.f32 0.0, %v1561
        %v4018 = vsub.f32 0.0, %v1564
        %v4019 = vsub.f32 0.0, %v1567
        %v4020 = vsub.f32 0.0, %v1570
        %v4021 = vsub.f32 0.0, %v1573
        %v4022 = vsub.f32 0.0, %v1576
        %v4023 = vsub.f32 0.0, %v1579
        %v4024 = vsub.f32 0.0, %v1582
        %v4025 = vsub.f32 0.0, %v1585
        %v4026 = vsub.f32 0.0, %v1588
        %v4027 = vsub.f32 0.0, %v1591
        %v4028 = vsub.f32 0.0, %v1594
        %v4029 = vsub.f32 0.0, %v1597
        %v4030 = vsub.f32 0.0, %v1600
        %v4031 = vsub.f32 0.0, %v1603
        %v4032 = vsub.f32 0.0, %v1606
        %v4033 = vsub.f32 0.0, %v1609
        %v4034 = vsub.f32 0.0, %v1612
        %v4035 = vsub.f32 0.0, %v1615
        %v4036 = vsub.f32 0.0, %v1618
        %v4037 = vsub.f32 0.0, %v1621
        %v4038 = vsub.f32 0.0, %v1624
        %v4039 = vsub.f32 0.0, %v1627
        %v4040 = vsub.f32 0.0, %v1630
        %v4041 = vsub.f32 0.0, %v1633
        %v4042 = vsub.f32 0.0, %v1636
        %v4043 = vsub.f32 0.0, %v1639
        %v4044 = vsub.f32 0.0, %v1642
        %v4045 = vsub.f32 0.0, %v1645
        %v4046 = vsub.f32 0.0, %v1648
        %v4047 = vsub.f32 0.0, %v1651
        %v4048 = vsub.f32 0.0, %v1654
        %v4049 = vsub.f32 0.0, %v1657
        %v4050 = vsub.f32 0.0, %v1660
        %v4051 = vsub.f32 0.0, %v1663
        %v4052 = vsub.f32 0.0, %v1666
        %v4053 = vsub.f32 0.0, %v1669
        %v4054 = vsub.f32 0.0, %v1672
        %v4055 = vsub.f32 0.0, %v1675
        %v4056 = vsub.f32 0.0, %v1678
        %v4057 = vsub.f32 0.0, %v1681
        %v4058 = vsub.f32 0.0, %v1684
        %v4059 = vsub.f32 0.0, %v1687
        %v4060 = vsub.f32 0.0, %v1690
        %v4061 = vsub.f32 0.0, %v1693
        %v4062 = vsub.f32 0.0, %v1696
        %v4063 = vsub.f32 0.0, %v1699
        %v4064 = vsub.f32 0.0, %v1702
        %v4065 = vsub.f32 0.0, %v1705
        %v4066 = vsub.f32 0.0, %v1708
        %v4067 = vsub.f32 0.0, %v1711
        %v4068 = vsub.f32 0.0, %v1714
        %v4069 = vsub.f32 0.0, %v1717
        %v4070 = vsub.f32 0.0, %v1720
        %v4071 = vsub.f32 0.0, %v1723
        %v4072 = vsub.f32 0.0, %v1726
        %v4073 = vsub.f32 0.0, %v1729
        %v4074 = vsub.f32 0.0, %v1732
        %v4075 = vsub.f32 0.0, %v1735
        %v4076 = vsub.f32 0.0, %v1738
        %v4077 = vsub.f32 0.0, %v1741
        %v4078 = vsub.f32 0.0, %v1744
        %v4079 = vsub.f32 0.0, %v1747
        %v4080 = vsub.f32 0.0, %v1750
        %v4081 = vsub.f32 0.0, %v1753
        %v4082 = vsub.f32 0.0, %v1756
        %v4083 = vsub.f32 0.0, %v1759
        %v4084 = vsub.f32 0.0, %v1762
        %v4085 = vsub.f32 0.0, %v1765
        %v4086 = vsub.f32 0.0, %v1768
        %v4087 = vsub.f32 0.0, %v1771
        %v4088 = vsub.f32 0.0, %v1774
        %v4089 = vsub.f32 0.0, %v1777
        %v4090 = vsub.f32 0.0, %v1780
        %v4091 = vsub.f32 0.0, %v1783
        %v4092 = vsub.f32 0.0, %v1786
        %v4093 = vsub.f32 0.0, %v1789
        %v4094 = vsub.f32 0.0, %v3966
        %v4095 = vsub.f32 0.0, %v3967
        %v4096 = vsub.f32 0.0, %v3968
        %v4097 = vsub.f32 0.0, %v3969
        %v4098 = vsub.f32 0.0, %v3970
        %v4099 = vsub.f32 0.0, %v3971
        %v4100 = vsub.f32 0.0, %v3972
        %v4101 = vsub.f32 0.0, %v3973
        %v4102 = vsub.f32 0.0, %v3974
        %v4103 = vsub.f32 0.0, %v3975
        %v4104 = vsub.f32 0.0, %v3976
        %v4105 = vsub.f32 0.0, %v3977
        %v4106 = vsub.f32 0.0, %v3978
        %v4107 = vsub.f32 0.0, %v3979
        %v4108 = vsub.f32 0.0, %v3980
        %v4109 = vsub.f32 0.0, %v3981
        %v4110 = vsub.f32 0.0, %v3982
        %v4111 = vsub.f32 0.0, %v3983
        %v4112 = vsub.f32 0.0, %v3984
        %v4113 = vsub.f32 0.0, %v3985
        %v4114 = vsub.f32 0.0, %v3986
        %v4115 = vsub.f32 0.0, %v3987
        %v4116 = vsub.f32 0.0, %v3988
        %v4117 = vsub.f32 0.0, %v3989
        %v4118 = vsub.f32 0.0, %v3990
        %v4119 = vsub.f32 0.0, %v3991
        %v4120 = vsub.f32 0.0, %v3992
        %v4121 = vsub.f32 0.0, %v3993
        %v4122 = vsub.f32 0.0, %v3994
        %v4123 = vsub.f32 0.0, %v3995
        %v4124 = vsub.f32 0.0, %v3996
        %v4125 = vsub.f32 0.0, %v3997
        %v4126 = vsub.f32 0.0, %v3998
        %v4127 = vsub.f32 0.0, %v3999
        %v4128 = vsub.f32 0.0, %v4000
        %v4129 = vsub.f32 0.0, %v4001
        %v4130 = vsub.f32 0.0, %v4002
        %v4131 = vsub.f32 0.0, %v4003
        %v4132 = vsub.f32 0.0, %v4004
        %v4133 = vsub.f32 0.0, %v4005
        %v4134 = vsub.f32 0.0, %v4006
        %v4135 = vsub.f32 0.0, %v4007
        %v4136 = vsub.f32 0.0, %v4008
        %v4137 = vsub.f32 0.0, %v4009
        %v4138 = vsub.f32 0.0, %v4010
        %v4139 = vsub.f32 0.0, %v4011
        %v4140 = vsub.f32 0.0, %v4012
        %v4141 = vsub.f32 0.0, %v4013
        %v4142 = vsub.f32 0.0, %v4014
        %v4143 = vsub.f32 0.0, %v4015
        %v4144 = vsub.f32 0.0, %v4016
        %v4145 = vsub.f32 0.0, %v4017
        %v4146 = vsub.f32 0.0, %v4018
        %v4147 = vsub.f32 0.0, %v4019
        %v4148 = vsub.f32 0.0, %v4020
        %v4149 = vsub.f32 0.0, %v4021
        %v4150 = vsub.f32 0.0, %v4022
        %v4151 = vsub.f32 0.0, %v4023
        %v4152 = vsub.f32 0.0, %v4024
        %v4153 = vsub.f32 0.0, %v4025
        %v4154 = vsub.f32 0.0, %v4026
        %v4155 = vsub.f32 0.0, %v4027
        %v4156 = vsub.f32 0.0, %v4028
        %v4157 = vsub.f32 0.0, %v4029
        %v4158 = vsub.f32 0.0, %v4030
        %v4159 = vsub.f32 0.0, %v4031
        %v4160 = vsub.f32 0.0, %v4032
        %v4161 = vsub.f32 0.0, %v4033
        %v4162 = vsub.f32 0.0, %v4034
        %v4163 = vsub.f32 0.0, %v4035
        %v4164 = vsub.f32 0.0, %v4036
        %v4165 = vsub.f32 0.0, %v4037
        %v4166 = vsub.f32 0.0, %v4038
        %v4167 = vsub.f32 0.0, %v4039
        %v4168 = vsub.f32 0.0, %v4040
        %v4169 = vsub.f32 0.0, %v4041
        %v4170 = vsub.f32 0.0, %v4042
        %v4171 = vsub.f32 0.0, %v4043
        %v4172 = vsub.f32 0.0, %v4044
        %v4173 = vsub.f32 0.0, %v4045
        %v4174 = vsub.f32 0.0, %v4046
        %v4175 = vsub.f32 0.0, %v4047
        %v4176 = vsub.f32 0.0, %v4048
        %v4177 = vsub.f32 0.0, %v4049
        %v4178 = vsub.f32 0.0, %v4050
        %v4179 = vsub.f32 0.0, %v4051
        %v4180 = vsub.f32 0.0, %v4052
        %v4181 = vsub.f32 0.0, %v4053
        %v4182 = vsub.f32 0.0, %v4054
        %v4183 = vsub.f32 0.0, %v4055
        %v4184 = vsub.f32 0.0, %v4056
        %v4185 = vsub.f32 0.0, %v4057
        %v4186 = vsub.f32 0.0, %v4058
        %v4187 = vsub.f32 0.0, %v4059
        %v4188 = vsub.f32 0.0, %v4060
        %v4189 = vsub.f32 0.0, %v4061
        %v4190 = vsub.f32 0.0, %v4062
        %v4191 = vsub.f32 0.0, %v4063
        %v4192 = vsub.f32 0.0, %v4064
        %v4193 = vsub.f32 0.0, %v4065
        %v4194 = vsub.f32 0.0, %v4066
        %v4195 = vsub.f32 0.0, %v4067
        %v4196 = vsub.f32 0.0, %v4068
        %v4197 = vsub.f32 0.0, %v4069
        %v4198 = vsub.f32 0.0, %v4070
        %v4199 = vsub.f32 0.0, %v4071
        %v4200 = vsub.f32 0.0, %v4072
        %v4201 = vsub.f32 0.0, %v4073
        %v4202 = vsub.f32 0.0, %v4074
        %v4203 = vsub.f32 0.0, %v4075
        %v4204 = vsub.f32 0.0, %v4076
        %v4205 = vsub.f32 0.0, %v4077
        %v4206 = vsub.f32 0.0, %v4078
        %v4207 = vsub.f32 0.0, %v4079
        %v4208 = vsub.f32 0.0, %v4080
        %v4209 = vsub.f32 0.0, %v4081
        %v4210 = vsub.f32 0.0, %v4082
        %v4211 = vsub.f32 0.0, %v4083
        %v4212 = vsub.f32 0.0, %v4084
        %v4213 = vsub.f32 0.0, %v4085
        %v4214 = vsub.f32 0.0, %v4086
        %v4215 = vsub.f32 0.0, %v4087
        %v4216 = vsub.f32 0.0, %v4088
        %v4217 = vsub.f32 0.0, %v4089
        %v4218 = vsub.f32 0.0, %v4090
        %v4219 = vsub.f32 0.0, %v4091
        %v4220 = vsub.f32 0.0, %v4092
        %v4221 = vsub.f32 0.0, %v4093
        %v4222 = vmax.f32 %v4094, 0.0
        %v4223 = vmax.f32 %v4095, 0.0
        %v4224 = vmax.f32 %v4096, 0.0
        %v4225 = vmax.f32 %v4097, 0.0
        %v4226 = vmax.f32 %v4098, 0.0
        %v4227 = vmax.f32 %v4099, 0.0
        %v4228 = vmax.f32 %v4100, 0.0
        %v4229 = vmax.f32 %v4101, 0.0
        %v4230 = vmax.f32 %v4102, 0.0
        %v4231 = vmax.f32 %v4103, 0.0
        %v4232 = vmax.f32 %v4104, 0.0
        %v4233 = vmax.f32 %v4105, 0.0
        %v4234 = vmax.f32 %v4106, 0.0
        %v4235 = vmax.f32 %v4107, 0.0
        %v4236 = vmax.f32 %v4108, 0.0
        %v4237 = vmax.f32 %v4109, 0.0
        %v4238 = vmax.f32 %v4110, 0.0
        %v4239 = vmax.f32 %v4111, 0.0
        %v4240 = vmax.f32 %v4112, 0.0
        %v4241 = vmax.f32 %v4113, 0.0
        %v4242 = vmax.f32 %v4114, 0.0
        %v4243 = vmax.f32 %v4115, 0.0
        %v4244 = vmax.f32 %v4116, 0.0
        %v4245 = vmax.f32 %v4117, 0.0
        %v4246 = vmax.f32 %v4118, 0.0
        %v4247 = vmax.f32 %v4119, 0.0
        %v4248 = vmax.f32 %v4120, 0.0
        %v4249 = vmax.f32 %v4121, 0.0
        %v4250 = vmax.f32 %v4122, 0.0
        %v4251 = vmax.f32 %v4123, 0.0
        %v4252 = vmax.f32 %v4124, 0.0
        %v4253 = vmax.f32 %v4125, 0.0
        %v4254 = vmax.f32 %v4126, 0.0
        %v4255 = vmax.f32 %v4127, 0.0
        %v4256 = vmax.f32 %v4128, 0.0
        %v4257 = vmax.f32 %v4129, 0.0
        %v4258 = vmax.f32 %v4130, 0.0
        %v4259 = vmax.f32 %v4131, 0.0
        %v4260 = vmax.f32 %v4132, 0.0
        %v4261 = vmax.f32 %v4133, 0.0
        %v4262 = vmax.f32 %v4134, 0.0
        %v4263 = vmax.f32 %v4135, 0.0
        %v4264 = vmax.f32 %v4136, 0.0
        %v4265 = vmax.f32 %v4137, 0.0
        %v4266 = vmax.f32 %v4138, 0.0
        %v4267 = vmax.f32 %v4139, 0.0
        %v4268 = vmax.f32 %v4140, 0.0
        %v4269 = vmax.f32 %v4141, 0.0
        %v4270 = vmax.f32 %v4142, 0.0
        %v4271 = vmax.f32 %v4143, 0.0
        %v4272 = vmax.f32 %v4144, 0.0
        %v4273 = vmax.f32 %v4145, 0.0
        %v4274 = vmax.f32 %v4146, 0.0
        %v4275 = vmax.f32 %v4147, 0.0
        %v4276 = vmax.f32 %v4148, 0.0
        %v4277 = vmax.f32 %v4149, 0.0
        %v4278 = vmax.f32 %v4150, 0.0
        %v4279 = vmax.f32 %v4151, 0.0
        %v4280 = vmax.f32 %v4152, 0.0
        %v4281 = vmax.f32 %v4153, 0.0
        %v4282 = vmax.f32 %v4154, 0.0
        %v4283 = vmax.f32 %v4155, 0.0
        %v4284 = vmax.f32 %v4156, 0.0
        %v4285 = vmax.f32 %v4157, 0.0
        %v4286 = vmax.f32 %v4158, 0.0
        %v4287 = vmax.f32 %v4159, 0.0
        %v4288 = vmax.f32 %v4160, 0.0
        %v4289 = vmax.f32 %v4161, 0.0
        %v4290 = vmax.f32 %v4162, 0.0
        %v4291 = vmax.f32 %v4163, 0.0
        %v4292 = vmax.f32 %v4164, 0.0
        %v4293 = vmax.f32 %v4165, 0.0
        %v4294 = vmax.f32 %v4166, 0.0
        %v4295 = vmax.f32 %v4167, 0.0
        %v4296 = vmax.f32 %v4168, 0.0
        %v4297 = vmax.f32 %v4169, 0.0
        %v4298 = vmax.f32 %v4170, 0.0
        %v4299 = vmax.f32 %v4171, 0.0
        %v4300 = vmax.f32 %v4172, 0.0
        %v4301 = vmax.f32 %v4173, 0.0
        %v4302 = vmax.f32 %v4174, 0.0
        %v4303 = vmax.f32 %v4175, 0.0
        %v4304 = vmax.f32 %v4176, 0.0
        %v4305 = vmax.f32 %v4177, 0.0
        %v4306 = vmax.f32 %v4178, 0.0
        %v4307 = vmax.f32 %v4179, 0.0
        %v4308 = vmax.f32 %v4180, 0.0
        %v4309 = vmax.f32 %v4181, 0.0
        %v4310 = vmax.f32 %v4182, 0.0
        %v4311 = vmax.f32 %v4183, 0.0
        %v4312 = vmax.f32 %v4184, 0.0
        %v4313 = vmax.f32 %v4185, 0.0
        %v4314 = vmax.f32 %v4186, 0.0
        %v4315 = vmax.f32 %v4187, 0.0
        %v4316 = vmax.f32 %v4188, 0.0
        %v4317 = vmax.f32 %v4189, 0.0
        %v4318 = vmax.f32 %v4190, 0.0
        %v4319 = vmax.f32 %v4191, 0.0
        %v4320 = vmax.f32 %v4192, 0.0
        %v4321 = vmax.f32 %v4193, 0.0
        %v4322 = vmax.f32 %v4194, 0.0
        %v4323 = vmax.f32 %v4195, 0.0
        %v4324 = vmax.f32 %v4196, 0.0
        %v4325 = vmax.f32 %v4197, 0.0
        %v4326 = vmax.f32 %v4198, 0.0
        %v4327 = vmax.f32 %v4199, 0.0
        %v4328 = vmax.f32 %v4200, 0.0
        %v4329 = vmax.f32 %v4201, 0.0
        %v4330 = vmax.f32 %v4202, 0.0
        %v4331 = vmax.f32 %v4203, 0.0
        %v4332 = vmax.f32 %v4204, 0.0
        %v4333 = vmax.f32 %v4205, 0.0
        %v4334 = vmax.f32 %v4206, 0.0
        %v4335 = vmax.f32 %v4207, 0.0
        %v4336 = vmax.f32 %v4208, 0.0
        %v4337 = vmax.f32 %v4209, 0.0
        %v4338 = vmax.f32 %v4210, 0.0
        %v4339 = vmax.f32 %v4211, 0.0
        %v4340 = vmax.f32 %v4212, 0.0
        %v4341 = vmax.f32 %v4213, 0.0
        %v4342 = vmax.f32 %v4214, 0.0
        %v4343 = vmax.f32 %v4215, 0.0
        %v4344 = vmax.f32 %v4216, 0.0
        %v4345 = vmax.f32 %v4217, 0.0
        %v4346 = vmax.f32 %v4218, 0.0
        %v4347 = vmax.f32 %v4219, 0.0
        %v4348 = vmax.f32 %v4220, 0.0
        %v4349 = vmax.f32 %v4221, 0.0
        %v4350 = vand.u32 2147483647, %v3966
        %v4351 = vand.u32 2147483647, %v3967
        %v4352 = vand.u32 2147483647, %v3968
        %v4353 = vand.u32 2147483647, %v3969
        %v4354 = vand.u32 2147483647, %v3970
        %v4355 = vand.u32 2147483647, %v3971
        %v4356 = vand.u32 2147483647, %v3972
        %v4357 = vand.u32 2147483647, %v3973
        %v4358 = vand.u32 2147483647, %v3974
        %v4359 = vand.u32 2147483647, %v3975
        %v4360 = vand.u32 2147483647, %v3976
        %v4361 = vand.u32 2147483647, %v3977
        %v4362 = vand.u32 2147483647, %v3978
        %v4363 = vand.u32 2147483647, %v3979
        %v4364 = vand.u32 2147483647, %v3980
        %v4365 = vand.u32 2147483647, %v3981
        %v4366 = vand.u32 2147483647, %v3982
        %v4367 = vand.u32 2147483647, %v3983
        %v4368 = vand.u32 2147483647, %v3984
        %v4369 = vand.u32 2147483647, %v3985
        %v4370 = vand.u32 2147483647, %v3986
        %v4371 = vand.u32 2147483647, %v3987
        %v4372 = vand.u32 2147483647, %v3988
        %v4373 = vand.u32 2147483647, %v3989
        %v4374 = vand.u32 2147483647, %v3990
        %v4375 = vand.u32 2147483647, %v3991
        %v4376 = vand.u32 2147483647, %v3992
        %v4377 = vand.u32 2147483647, %v3993
        %v4378 = vand.u32 2147483647, %v3994
        %v4379 = vand.u32 2147483647, %v3995
        %v4380 = vand.u32 2147483647, %v3996
        %v4381 = vand.u32 2147483647, %v3997
        %v4382 = vand.u32 2147483647, %v3998
        %v4383 = vand.u32 2147483647, %v3999
        %v4384 = vand.u32 2147483647, %v4000
        %v4385 = vand.u32 2147483647, %v4001
        %v4386 = vand.u32 2147483647, %v4002
        %v4387 = vand.u32 2147483647, %v4003
        %v4388 = vand.u32 2147483647, %v4004
        %v4389 = vand.u32 2147483647, %v4005
        %v4390 = vand.u32 2147483647, %v4006
        %v4391 = vand.u32 2147483647, %v4007
        %v4392 = vand.u32 2147483647, %v4008
        %v4393 = vand.u32 2147483647, %v4009
        %v4394 = vand.u32 2147483647, %v4010
        %v4395 = vand.u32 2147483647, %v4011
        %v4396 = vand.u32 2147483647, %v4012
        %v4397 = vand.u32 2147483647, %v4013
        %v4398 = vand.u32 2147483647, %v4014
        %v4399 = vand.u32 2147483647, %v4015
        %v4400 = vand.u32 2147483647, %v4016
        %v4401 = vand.u32 2147483647, %v4017
        %v4402 = vand.u32 2147483647, %v4018
        %v4403 = vand.u32 2147483647, %v4019
        %v4404 = vand.u32 2147483647, %v4020
        %v4405 = vand.u32 2147483647, %v4021
        %v4406 = vand.u32 2147483647, %v4022
        %v4407 = vand.u32 2147483647, %v4023
        %v4408 = vand.u32 2147483647, %v4024
        %v4409 = vand.u32 2147483647, %v4025
        %v4410 = vand.u32 2147483647, %v4026
        %v4411 = vand.u32 2147483647, %v4027
        %v4412 = vand.u32 2147483647, %v4028
        %v4413 = vand.u32 2147483647, %v4029
        %v4414 = vand.u32 2147483647, %v4030
        %v4415 = vand.u32 2147483647, %v4031
        %v4416 = vand.u32 2147483647, %v4032
        %v4417 = vand.u32 2147483647, %v4033
        %v4418 = vand.u32 2147483647, %v4034
        %v4419 = vand.u32 2147483647, %v4035
        %v4420 = vand.u32 2147483647, %v4036
        %v4421 = vand.u32 2147483647, %v4037
        %v4422 = vand.u32 2147483647, %v4038
        %v4423 = vand.u32 2147483647, %v4039
        %v4424 = vand.u32 2147483647, %v4040
        %v4425 = vand.u32 2147483647, %v4041
        %v4426 = vand.u32 2147483647, %v4042
        %v4427 = vand.u32 2147483647, %v4043
        %v4428 = vand.u32 2147483647, %v4044
        %v4429 = vand.u32 2147483647, %v4045
        %v4430 = vand.u32 2147483647, %v4046
        %v4431 = vand.u32 2147483647, %v4047
        %v4432 = vand.u32 2147483647, %v4048
        %v4433 = vand.u32 2147483647, %v4049
        %v4434 = vand.u32 2147483647, %v4050
        %v4435 = vand.u32 2147483647, %v4051
        %v4436 = vand.u32 2147483647, %v4052
        %v4437 = vand.u32 2147483647, %v4053
        %v4438 = vand.u32 2147483647, %v4054
        %v4439 = vand.u32 2147483647, %v4055
        %v4440 = vand.u32 2147483647, %v4056
        %v4441 = vand.u32 2147483647, %v4057
        %v4442 = vand.u32 2147483647, %v4058
        %v4443 = vand.u32 2147483647, %v4059
        %v4444 = vand.u32 2147483647, %v4060
        %v4445 = vand.u32 2147483647, %v4061
        %v4446 = vand.u32 2147483647, %v4062
        %v4447 = vand.u32 2147483647, %v4063
        %v4448 = vand.u32 2147483647, %v4064
        %v4449 = vand.u32 2147483647, %v4065
        %v4450 = vand.u32 2147483647, %v4066
        %v4451 = vand.u32 2147483647, %v4067
        %v4452 = vand.u32 2147483647, %v4068
        %v4453 = vand.u32 2147483647, %v4069
        %v4454 = vand.u32 2147483647, %v4070
        %v4455 = vand.u32 2147483647, %v4071
        %v4456 = vand.u32 2147483647, %v4072
        %v4457 = vand.u32 2147483647, %v4073
        %v4458 = vand.u32 2147483647, %v4074
        %v4459 = vand.u32 2147483647, %v4075
        %v4460 = vand.u32 2147483647, %v4076
        %v4461 = vand.u32 2147483647, %v4077
        %v4462 = vand.u32 2147483647, %v4078
        %v4463 = vand.u32 2147483647, %v4079
        %v4464 = vand.u32 2147483647, %v4080
        %v4465 = vand.u32 2147483647, %v4081
        %v4466 = vand.u32 2147483647, %v4082
        %v4467 = vand.u32 2147483647, %v4083
        %v4468 = vand.u32 2147483647, %v4084
        %v4469 = vand.u32 2147483647, %v4085
        %v4470 = vand.u32 2147483647, %v4086
        %v4471 = vand.u32 2147483647, %v4087
        %v4472 = vand.u32 2147483647, %v4088
        %v4473 = vand.u32 2147483647, %v4089
        %v4474 = vand.u32 2147483647, %v4090
        %v4475 = vand.u32 2147483647, %v4091
        %v4476 = vand.u32 2147483647, %v4092
        %v4477 = vand.u32 2147483647, %v4093
        %v4478 = vsub.f32 0.0, %v4350
        %v4479 = vsub.f32 0.0, %v4351
        %v4480 = vsub.f32 0.0, %v4352
        %v4481 = vsub.f32 0.0, %v4353
        %v4482 = vsub.f32 0.0, %v4354
        %v4483 = vsub.f32 0.0, %v4355
        %v4484 = vsub.f32 0.0, %v4356
        %v4485 = vsub.f32 0.0, %v4357
        %v4486 = vsub.f32 0.0, %v4358
        %v4487 = vsub.f32 0.0, %v4359
        %v4488 = vsub.f32 0.0, %v4360
        %v4489 = vsub.f32 0.0, %v4361
        %v4490 = vsub.f32 0.0, %v4362
        %v4491 = vsub.f32 0.0, %v4363
        %v4492 = vsub.f32 0.0, %v4364
        %v4493 = vsub.f32 0.0, %v4365
        %v4494 = vsub.f32 0.0, %v4366
        %v4495 = vsub.f32 0.0, %v4367
        %v4496 = vsub.f32 0.0, %v4368
        %v4497 = vsub.f32 0.0, %v4369
        %v4498 = vsub.f32 0.0, %v4370
        %v4499 = vsub.f32 0.0, %v4371
        %v4500 = vsub.f32 0.0, %v4372
        %v4501 = vsub.f32 0.0, %v4373
        %v4502 = vsub.f32 0.0, %v4374
        %v4503 = vsub.f32 0.0, %v4375
        %v4504 = vsub.f32 0.0, %v4376
        %v4505 = vsub.f32 0.0, %v4377
        %v4506 = vsub.f32 0.0, %v4378
        %v4507 = vsub.f32 0.0, %v4379
        %v4508 = vsub.f32 0.0, %v4380
        %v4509 = vsub.f32 0.0, %v4381
        %v4510 = vsub.f32 0.0, %v4382
        %v4511 = vsub.f32 0.0, %v4383
        %v4512 = vsub.f32 0.0, %v4384
        %v4513 = vsub.f32 0.0, %v4385
        %v4514 = vsub.f32 0.0, %v4386
        %v4515 = vsub.f32 0.0, %v4387
        %v4516 = vsub.f32 0.0, %v4388
        %v4517 = vsub.f32 0.0, %v4389
        %v4518 = vsub.f32 0.0, %v4390
        %v4519 = vsub.f32 0.0, %v4391
        %v4520 = vsub.f32 0.0, %v4392
        %v4521 = vsub.f32 0.0, %v4393
        %v4522 = vsub.f32 0.0, %v4394
        %v4523 = vsub.f32 0.0, %v4395
        %v4524 = vsub.f32 0.0, %v4396
        %v4525 = vsub.f32 0.0, %v4397
        %v4526 = vsub.f32 0.0, %v4398
        %v4527 = vsub.f32 0.0, %v4399
        %v4528 = vsub.f32 0.0, %v4400
        %v4529 = vsub.f32 0.0, %v4401
        %v4530 = vsub.f32 0.0, %v4402
        %v4531 = vsub.f32 0.0, %v4403
        %v4532 = vsub.f32 0.0, %v4404
        %v4533 = vsub.f32 0.0, %v4405
        %v4534 = vsub.f32 0.0, %v4406
        %v4535 = vsub.f32 0.0, %v4407
        %v4536 = vsub.f32 0.0, %v4408
        %v4537 = vsub.f32 0.0, %v4409
        %v4538 = vsub.f32 0.0, %v4410
        %v4539 = vsub.f32 0.0, %v4411
        %v4540 = vsub.f32 0.0, %v4412
        %v4541 = vsub.f32 0.0, %v4413
        %v4542 = vsub.f32 0.0, %v4414
        %v4543 = vsub.f32 0.0, %v4415
        %v4544 = vsub.f32 0.0, %v4416
        %v4545 = vsub.f32 0.0, %v4417
        %v4546 = vsub.f32 0.0, %v4418
        %v4547 = vsub.f32 0.0, %v4419
        %v4548 = vsub.f32 0.0, %v4420
        %v4549 = vsub.f32 0.0, %v4421
        %v4550 = vsub.f32 0.0, %v4422
        %v4551 = vsub.f32 0.0, %v4423
        %v4552 = vsub.f32 0.0, %v4424
        %v4553 = vsub.f32 0.0, %v4425
        %v4554 = vsub.f32 0.0, %v4426
        %v4555 = vsub.f32 0.0, %v4427
        %v4556 = vsub.f32 0.0, %v4428
        %v4557 = vsub.f32 0.0, %v4429
        %v4558 = vsub.f32 0.0, %v4430
        %v4559 = vsub.f32 0.0, %v4431
        %v4560 = vsub.f32 0.0, %v4432
        %v4561 = vsub.f32 0.0, %v4433
        %v4562 = vsub.f32 0.0, %v4434
        %v4563 = vsub.f32 0.0, %v4435
        %v4564 = vsub.f32 0.0, %v4436
        %v4565 = vsub.f32 0.0, %v4437
        %v4566 = vsub.f32 0.0, %v4438
        %v4567 = vsub.f32 0.0, %v4439
        %v4568 = vsub.f32 0.0, %v4440
        %v4569 = vsub.f32 0.0, %v4441
        %v4570 = vsub.f32 0.0, %v4442
        %v4571 = vsub.f32 0.0, %v4443
        %v4572 = vsub.f32 0.0, %v4444
        %v4573 = vsub.f32 0.0, %v4445
        %v4574 = vsub.f32 0.0, %v4446
        %v4575 = vsub.f32 0.0, %v4447
        %v4576 = vsub.f32 0.0, %v4448
        %v4577 = vsub.f32 0.0, %v4449
        %v4578 = vsub.f32 0.0, %v4450
        %v4579 = vsub.f32 0.0, %v4451
        %v4580 = vsub.f32 0.0, %v4452
        %v4581 = vsub.f32 0.0, %v4453
        %v4582 = vsub.f32 0.0, %v4454
        %v4583 = vsub.f32 0.0, %v4455
        %v4584 = vsub.f32 0.0, %v4456
        %v4585 = vsub.f32 0.0, %v4457
        %v4586 = vsub.f32 0.0, %v4458
        %v4587 = vsub.f32 0.0, %v4459
        %v4588 = vsub.f32 0.0, %v4460
        %v4589 = vsub.f32 0.0, %v4461
        %v4590 = vsub.f32 0.0, %v4462
        %v4591 = vsub.f32 0.0, %v4463
        %v4592 = vsub.f32 0.0, %v4464
        %v4593 = vsub.f32 0.0, %v4465
        %v4594 = vsub.f32 0.0, %v4466
        %v4595 = vsub.f32 0.0, %v4467
        %v4596 = vsub.f32 0.0, %v4468
        %v4597 = vsub.f32 0.0, %v4469
        %v4598 = vsub.f32 0.0, %v4470
        %v4599 = vsub.f32 0.0, %v4471
        %v4600 = vsub.f32 0.0, %v4472
        %v4601 = vsub.f32 0.0, %v4473
        %v4602 = vsub.f32 0.0, %v4474
        %v4603 = vsub.f32 0.0, %v4475
        %v4604 = vsub.f32 0.0, %v4476
        %v4605 = vsub.f32 0.0, %v4477
        %v4606 = vmul.f32 %v4478, 1.442695
        %v4607 = vpow.pop %v4606
        %v4608 = vmul.f32 %v4479, 1.442695
        %v4609 = vpow.pop %v4608
        %v4610 = vmul.f32 %v4480, 1.442695
        %v4611 = vpow.pop %v4610
        %v4612 = vmul.f32 %v4481, 1.442695
        %v4613 = vpow.pop %v4612
        %v4614 = vmul.f32 %v4482, 1.442695
        %v4615 = vpow.pop %v4614
        %v4616 = vmul.f32 %v4483, 1.442695
        %v4617 = vpow.pop %v4616
        %v4618 = vmul.f32 %v4484, 1.442695
        %v4619 = vpow.pop %v4618
        %v4620 = vmul.f32 %v4485, 1.442695
        %v4621 = vpow.pop %v4620
        %v4622 = vmul.f32 %v4486, 1.442695
        %v4623 = vpow.pop %v4622
        %v4624 = vmul.f32 %v4487, 1.442695
        %v4625 = vpow.pop %v4624
        %v4626 = vmul.f32 %v4488, 1.442695
        %v4627 = vpow.pop %v4626
        %v4628 = vmul.f32 %v4489, 1.442695
        %v4629 = vpow.pop %v4628
        %v4630 = vmul.f32 %v4490, 1.442695
        %v4631 = vpow.pop %v4630
        %v4632 = vmul.f32 %v4491, 1.442695
        %v4633 = vpow.pop %v4632
        %v4634 = vmul.f32 %v4492, 1.442695
        %v4635 = vpow.pop %v4634
        %v4636 = vmul.f32 %v4493, 1.442695
        %v4637 = vpow.pop %v4636
        %v4638 = vmul.f32 %v4494, 1.442695
        %v4639 = vpow.pop %v4638
        %v4640 = vmul.f32 %v4495, 1.442695
        %v4641 = vpow.pop %v4640
        %v4642 = vmul.f32 %v4496, 1.442695
        %v4643 = vpow.pop %v4642
        %v4644 = vmul.f32 %v4497, 1.442695
        %v4645 = vpow.pop %v4644
        %v4646 = vmul.f32 %v4498, 1.442695
        %v4647 = vpow.pop %v4646
        %v4648 = vmul.f32 %v4499, 1.442695
        %v4649 = vpow.pop %v4648
        %v4650 = vmul.f32 %v4500, 1.442695
        %v4651 = vpow.pop %v4650
        %v4652 = vmul.f32 %v4501, 1.442695
        %v4653 = vpow.pop %v4652
        %v4654 = vmul.f32 %v4502, 1.442695
        %v4655 = vpow.pop %v4654
        %v4656 = vmul.f32 %v4503, 1.442695
        %v4657 = vpow.pop %v4656
        %v4658 = vmul.f32 %v4504, 1.442695
        %v4659 = vpow.pop %v4658
        %v4660 = vmul.f32 %v4505, 1.442695
        %v4661 = vpow.pop %v4660
        %v4662 = vmul.f32 %v4506, 1.442695
        %v4663 = vpow.pop %v4662
        %v4664 = vmul.f32 %v4507, 1.442695
        %v4665 = vpow.pop %v4664
        %v4666 = vmul.f32 %v4508, 1.442695
        %v4667 = vpow.pop %v4666
        %v4668 = vmul.f32 %v4509, 1.442695
        %v4669 = vpow.pop %v4668
        %v4670 = vmul.f32 %v4510, 1.442695
        %v4671 = vpow.pop %v4670
        %v4672 = vmul.f32 %v4511, 1.442695
        %v4673 = vpow.pop %v4672
        %v4674 = vmul.f32 %v4512, 1.442695
        %v4675 = vpow.pop %v4674
        %v4676 = vmul.f32 %v4513, 1.442695
        %v4677 = vpow.pop %v4676
        %v4678 = vmul.f32 %v4514, 1.442695
        %v4679 = vpow.pop %v4678
        %v4680 = vmul.f32 %v4515, 1.442695
        %v4681 = vpow.pop %v4680
        %v4682 = vmul.f32 %v4516, 1.442695
        %v4683 = vpow.pop %v4682
        %v4684 = vmul.f32 %v4517, 1.442695
        %v4685 = vpow.pop %v4684
        %v4686 = vmul.f32 %v4518, 1.442695
        %v4687 = vpow.pop %v4686
        %v4688 = vmul.f32 %v4519, 1.442695
        %v4689 = vpow.pop %v4688
        %v4690 = vmul.f32 %v4520, 1.442695
        %v4691 = vpow.pop %v4690
        %v4692 = vmul.f32 %v4521, 1.442695
        %v4693 = vpow.pop %v4692
        %v4694 = vmul.f32 %v4522, 1.442695
        %v4695 = vpow.pop %v4694
        %v4696 = vmul.f32 %v4523, 1.442695
        %v4697 = vpow.pop %v4696
        %v4698 = vmul.f32 %v4524, 1.442695
        %v4699 = vpow.pop %v4698
        %v4700 = vmul.f32 %v4525, 1.442695
        %v4701 = vpow.pop %v4700
        %v4702 = vmul.f32 %v4526, 1.442695
        %v4703 = vpow.pop %v4702
        %v4704 = vmul.f32 %v4527, 1.442695
        %v4705 = vpow.pop %v4704
        %v4706 = vmul.f32 %v4528, 1.442695
        %v4707 = vpow.pop %v4706
        %v4708 = vmul.f32 %v4529, 1.442695
        %v4709 = vpow.pop %v4708
        %v4710 = vmul.f32 %v4530, 1.442695
        %v4711 = vpow.pop %v4710
        %v4712 = vmul.f32 %v4531, 1.442695
        %v4713 = vpow.pop %v4712
        %v4714 = vmul.f32 %v4532, 1.442695
        %v4715 = vpow.pop %v4714
        %v4716 = vmul.f32 %v4533, 1.442695
        %v4717 = vpow.pop %v4716
        %v4718 = vmul.f32 %v4534, 1.442695
        %v4719 = vpow.pop %v4718
        %v4720 = vmul.f32 %v4535, 1.442695
        %v4721 = vpow.pop %v4720
        %v4722 = vmul.f32 %v4536, 1.442695
        %v4723 = vpow.pop %v4722
        %v4724 = vmul.f32 %v4537, 1.442695
        %v4725 = vpow.pop %v4724
        %v4726 = vmul.f32 %v4538, 1.442695
        %v4727 = vpow.pop %v4726
        %v4728 = vmul.f32 %v4539, 1.442695
        %v4729 = vpow.pop %v4728
        %v4730 = vmul.f32 %v4540, 1.442695
        %v4731 = vpow.pop %v4730
        %v4732 = vmul.f32 %v4541, 1.442695
        %v4733 = vpow.pop %v4732
        %v4734 = vmul.f32 %v4542, 1.442695
        %v4735 = vpow.pop %v4734
        %v4736 = vmul.f32 %v4543, 1.442695
        %v4737 = vpow.pop %v4736
        %v4738 = vmul.f32 %v4544, 1.442695
        %v4739 = vpow.pop %v4738
        %v4740 = vmul.f32 %v4545, 1.442695
        %v4741 = vpow.pop %v4740
        %v4742 = vmul.f32 %v4546, 1.442695
        %v4743 = vpow.pop %v4742
        %v4744 = vmul.f32 %v4547, 1.442695
        %v4745 = vpow.pop %v4744
        %v4746 = vmul.f32 %v4548, 1.442695
        %v4747 = vpow.pop %v4746
        %v4748 = vmul.f32 %v4549, 1.442695
        %v4749 = vpow.pop %v4748
        %v4750 = vmul.f32 %v4550, 1.442695
        %v4751 = vpow.pop %v4750
        %v4752 = vmul.f32 %v4551, 1.442695
        %v4753 = vpow.pop %v4752
        %v4754 = vmul.f32 %v4552, 1.442695
        %v4755 = vpow.pop %v4754
        %v4756 = vmul.f32 %v4553, 1.442695
        %v4757 = vpow.pop %v4756
        %v4758 = vmul.f32 %v4554, 1.442695
        %v4759 = vpow.pop %v4758
        %v4760 = vmul.f32 %v4555, 1.442695
        %v4761 = vpow.pop %v4760
        %v4762 = vmul.f32 %v4556, 1.442695
        %v4763 = vpow.pop %v4762
        %v4764 = vmul.f32 %v4557, 1.442695
        %v4765 = vpow.pop %v4764
        %v4766 = vmul.f32 %v4558, 1.442695
        %v4767 = vpow.pop %v4766
        %v4768 = vmul.f32 %v4559, 1.442695
        %v4769 = vpow.pop %v4768
        %v4770 = vmul.f32 %v4560, 1.442695
        %v4771 = vpow.pop %v4770
        %v4772 = vmul.f32 %v4561, 1.442695
        %v4773 = vpow.pop %v4772
        %v4774 = vmul.f32 %v4562, 1.442695
        %v4775 = vpow.pop %v4774
        %v4776 = vmul.f32 %v4563, 1.442695
        %v4777 = vpow.pop %v4776
        %v4778 = vmul.f32 %v4564, 1.442695
        %v4779 = vpow.pop %v4778
        %v4780 = vmul.f32 %v4565, 1.442695
        %v4781 = vpow.pop %v4780
        %v4782 = vmul.f32 %v4566, 1.442695
        %v4783 = vpow.pop %v4782
        %v4784 = vmul.f32 %v4567, 1.442695
        %v4785 = vpow.pop %v4784
        %v4786 = vmul.f32 %v4568, 1.442695
        %v4787 = vpow.pop %v4786
        %v4788 = vmul.f32 %v4569, 1.442695
        %v4789 = vpow.pop %v4788
        %v4790 = vmul.f32 %v4570, 1.442695
        %v4791 = vpow.pop %v4790
        %v4792 = vmul.f32 %v4571, 1.442695
        %v4793 = vpow.pop %v4792
        %v4794 = vmul.f32 %v4572, 1.442695
        %v4795 = vpow.pop %v4794
        %v4796 = vmul.f32 %v4573, 1.442695
        %v4797 = vpow.pop %v4796
        %v4798 = vmul.f32 %v4574, 1.442695
        %v4799 = vpow.pop %v4798
        %v4800 = vmul.f32 %v4575, 1.442695
        %v4801 = vpow.pop %v4800
        %v4802 = vmul.f32 %v4576, 1.442695
        %v4803 = vpow.pop %v4802
        %v4804 = vmul.f32 %v4577, 1.442695
        %v4805 = vpow.pop %v4804
        %v4806 = vmul.f32 %v4578, 1.442695
        %v4807 = vpow.pop %v4806
        %v4808 = vmul.f32 %v4579, 1.442695
        %v4809 = vpow.pop %v4808
        %v4810 = vmul.f32 %v4580, 1.442695
        %v4811 = vpow.pop %v4810
        %v4812 = vmul.f32 %v4581, 1.442695
        %v4813 = vpow.pop %v4812
        %v4814 = vmul.f32 %v4582, 1.442695
        %v4815 = vpow.pop %v4814
        %v4816 = vmul.f32 %v4583, 1.442695
        %v4817 = vpow.pop %v4816
        %v4818 = vmul.f32 %v4584, 1.442695
        %v4819 = vpow.pop %v4818
        %v4820 = vmul.f32 %v4585, 1.442695
        %v4821 = vpow.pop %v4820
        %v4822 = vmul.f32 %v4586, 1.442695
        %v4823 = vpow.pop %v4822
        %v4824 = vmul.f32 %v4587, 1.442695
        %v4825 = vpow.pop %v4824
        %v4826 = vmul.f32 %v4588, 1.442695
        %v4827 = vpow.pop %v4826
        %v4828 = vmul.f32 %v4589, 1.442695
        %v4829 = vpow.pop %v4828
        %v4830 = vmul.f32 %v4590, 1.442695
        %v4831 = vpow.pop %v4830
        %v4832 = vmul.f32 %v4591, 1.442695
        %v4833 = vpow.pop %v4832
        %v4834 = vmul.f32 %v4592, 1.442695
        %v4835 = vpow.pop %v4834
        %v4836 = vmul.f32 %v4593, 1.442695
        %v4837 = vpow.pop %v4836
        %v4838 = vmul.f32 %v4594, 1.442695
        %v4839 = vpow.pop %v4838
        %v4840 = vmul.f32 %v4595, 1.442695
        %v4841 = vpow.pop %v4840
        %v4842 = vmul.f32 %v4596, 1.442695
        %v4843 = vpow.pop %v4842
        %v4844 = vmul.f32 %v4597, 1.442695
        %v4845 = vpow.pop %v4844
        %v4846 = vmul.f32 %v4598, 1.442695
        %v4847 = vpow.pop %v4846
        %v4848 = vmul.f32 %v4599, 1.442695
        %v4849 = vpow.pop %v4848
        %v4850 = vmul.f32 %v4600, 1.442695
        %v4851 = vpow.pop %v4850
        %v4852 = vmul.f32 %v4601, 1.442695
        %v4853 = vpow.pop %v4852
        %v4854 = vmul.f32 %v4602, 1.442695
        %v4855 = vpow.pop %v4854
        %v4856 = vmul.f32 %v4603, 1.442695
        %v4857 = vpow.pop %v4856
        %v4858 = vmul.f32 %v4604, 1.442695
        %v4859 = vpow.pop %v4858
        %v4860 = vmul.f32 %v4605, 1.442695
        %v4861 = vpow.pop %v4860
        %v4862 = vadd.f32 %v4607, 1.0
        %v4863 = vlog2.pop %v4862
        %v4864 = vmul.f32 %v4863, 0.6931472
        %v4865 = vmul.f32 -0.5, %v4607
        %v4866 = vadd.f32 %v4865, 1.0
        %v4867 = vmul.f32 %v4866, %v4607
        %v4868 = vand.u32 2147483647, %v4607
        %vm4869 = vcmp.lt.f32.partialorder %v4868, 0.0004427343
        %v4870 = vsel %vm4869, %v4867, %v4864
        %v4871 = vadd.f32 %v4609, 1.0
        %v4872 = vlog2.pop %v4871
        %v4873 = vmul.f32 %v4872, 0.6931472
        %v4874 = vmul.f32 -0.5, %v4609
        %v4875 = vadd.f32 %v4874, 1.0
        %v4876 = vmul.f32 %v4875, %v4609
        %v4877 = vand.u32 2147483647, %v4609
        %vm4878 = vcmp.lt.f32.partialorder %v4877, 0.0004427343
        %v4879 = vsel %vm4878, %v4876, %v4873
        %v4880 = vadd.f32 %v4611, 1.0
        %v4881 = vlog2.pop %v4880
        %v4882 = vmul.f32 %v4881, 0.6931472
        %v4883 = vmul.f32 -0.5, %v4611
        %v4884 = vadd.f32 %v4883, 1.0
        %v4885 = vmul.f32 %v4884, %v4611
        %v4886 = vand.u32 2147483647, %v4611
        %vm4887 = vcmp.lt.f32.partialorder %v4886, 0.0004427343
        %v4888 = vsel %vm4887, %v4885, %v4882
        %v4889 = vadd.f32 %v4613, 1.0
        %v4890 = vlog2.pop %v4889
        %v4891 = vmul.f32 %v4890, 0.6931472
        %v4892 = vmul.f32 -0.5, %v4613
        %v4893 = vadd.f32 %v4892, 1.0
        %v4894 = vmul.f32 %v4893, %v4613
        %v4895 = vand.u32 2147483647, %v4613
        %vm4896 = vcmp.lt.f32.partialorder %v4895, 0.0004427343
        %v4897 = vsel %vm4896, %v4894, %v4891
        %v4898 = vadd.f32 %v4615, 1.0
        %v4899 = vlog2.pop %v4898
        %v4900 = vmul.f32 %v4899, 0.6931472
        %v4901 = vmul.f32 -0.5, %v4615
        %v4902 = vadd.f32 %v4901, 1.0
        %v4903 = vmul.f32 %v4902, %v4615
        %v4904 = vand.u32 2147483647, %v4615
        %vm4905 = vcmp.lt.f32.partialorder %v4904, 0.0004427343
        %v4906 = vsel %vm4905, %v4903, %v4900
        %v4907 = vadd.f32 %v4617, 1.0
        %v4908 = vlog2.pop %v4907
        %v4909 = vmul.f32 %v4908, 0.6931472
        %v4910 = vmul.f32 -0.5, %v4617
        %v4911 = vadd.f32 %v4910, 1.0
        %v4912 = vmul.f32 %v4911, %v4617
        %v4913 = vand.u32 2147483647, %v4617
        %vm4914 = vcmp.lt.f32.partialorder %v4913, 0.0004427343
        %v4915 = vsel %vm4914, %v4912, %v4909
        %v4916 = vadd.f32 %v4619, 1.0
        %v4917 = vlog2.pop %v4916
        %v4918 = vmul.f32 %v4917, 0.6931472
        %v4919 = vmul.f32 -0.5, %v4619
        %v4920 = vadd.f32 %v4919, 1.0
        %v4921 = vmul.f32 %v4920, %v4619
        %v4922 = vand.u32 2147483647, %v4619
        %vm4923 = vcmp.lt.f32.partialorder %v4922, 0.0004427343
        %v4924 = vsel %vm4923, %v4921, %v4918
        %v4925 = vadd.f32 %v4621, 1.0
        %v4926 = vlog2.pop %v4925
        %v4927 = vmul.f32 %v4926, 0.6931472
        %v4928 = vmul.f32 -0.5, %v4621
        %v4929 = vadd.f32 %v4928, 1.0
        %v4930 = vmul.f32 %v4929, %v4621
        %v4931 = vand.u32 2147483647, %v4621
        %vm4932 = vcmp.lt.f32.partialorder %v4931, 0.0004427343
        %v4933 = vsel %vm4932, %v4930, %v4927
        %v4934 = vadd.f32 %v4623, 1.0
        %v4935 = vlog2.pop %v4934
        %v4936 = vmul.f32 %v4935, 0.6931472
        %v4937 = vmul.f32 -0.5, %v4623
        %v4938 = vadd.f32 %v4937, 1.0
        %v4939 = vmul.f32 %v4938, %v4623
        %v4940 = vand.u32 2147483647, %v4623
        %vm4941 = vcmp.lt.f32.partialorder %v4940, 0.0004427343
        %v4942 = vsel %vm4941, %v4939, %v4936
        %v4943 = vadd.f32 %v4625, 1.0
        %v4944 = vlog2.pop %v4943
        %v4945 = vmul.f32 %v4944, 0.6931472
        %v4946 = vmul.f32 -0.5, %v4625
        %v4947 = vadd.f32 %v4946, 1.0
        %v4948 = vmul.f32 %v4947, %v4625
        %v4949 = vand.u32 2147483647, %v4625
        %vm4950 = vcmp.lt.f32.partialorder %v4949, 0.0004427343
        %v4951 = vsel %vm4950, %v4948, %v4945
        %v4952 = vadd.f32 %v4627, 1.0
        %v4953 = vlog2.pop %v4952
        %v4954 = vmul.f32 %v4953, 0.6931472
        %v4955 = vmul.f32 -0.5, %v4627
        %v4956 = vadd.f32 %v4955, 1.0
        %v4957 = vmul.f32 %v4956, %v4627
        %v4958 = vand.u32 2147483647, %v4627
        %vm4959 = vcmp.lt.f32.partialorder %v4958, 0.0004427343
        %v4960 = vsel %vm4959, %v4957, %v4954
        %v4961 = vadd.f32 %v4629, 1.0
        %v4962 = vlog2.pop %v4961
        %v4963 = vmul.f32 %v4962, 0.6931472
        %v4964 = vmul.f32 -0.5, %v4629
        %v4965 = vadd.f32 %v4964, 1.0
        %v4966 = vmul.f32 %v4965, %v4629
        %v4967 = vand.u32 2147483647, %v4629
        %vm4968 = vcmp.lt.f32.partialorder %v4967, 0.0004427343
        %v4969 = vsel %vm4968, %v4966, %v4963
        %v4970 = vadd.f32 %v4631, 1.0
        %v4971 = vlog2.pop %v4970
        %v4972 = vmul.f32 %v4971, 0.6931472
        %v4973 = vmul.f32 -0.5, %v4631
        %v4974 = vadd.f32 %v4973, 1.0
        %v4975 = vmul.f32 %v4974, %v4631
        %v4976 = vand.u32 2147483647, %v4631
        %vm4977 = vcmp.lt.f32.partialorder %v4976, 0.0004427343
        %v4978 = vsel %vm4977, %v4975, %v4972
        %v4979 = vadd.f32 %v4633, 1.0
        %v4980 = vlog2.pop %v4979
        %v4981 = vmul.f32 %v4980, 0.6931472
        %v4982 = vmul.f32 -0.5, %v4633
        %v4983 = vadd.f32 %v4982, 1.0
        %v4984 = vmul.f32 %v4983, %v4633
        %v4985 = vand.u32 2147483647, %v4633
        %vm4986 = vcmp.lt.f32.partialorder %v4985, 0.0004427343
        %v4987 = vsel %vm4986, %v4984, %v4981
        %v4988 = vadd.f32 %v4635, 1.0
        %v4989 = vlog2.pop %v4988
        %v4990 = vmul.f32 %v4989, 0.6931472
        %v4991 = vmul.f32 -0.5, %v4635
        %v4992 = vadd.f32 %v4991, 1.0
        %v4993 = vmul.f32 %v4992, %v4635
        %v4994 = vand.u32 2147483647, %v4635
        %vm4995 = vcmp.lt.f32.partialorder %v4994, 0.0004427343
        %v4996 = vsel %vm4995, %v4993, %v4990
        %v4997 = vadd.f32 %v4637, 1.0
        %v4998 = vlog2.pop %v4997
        %v4999 = vmul.f32 %v4998, 0.6931472
        %v5000 = vmul.f32 -0.5, %v4637
        %v5001 = vadd.f32 %v5000, 1.0
        %v5002 = vmul.f32 %v5001, %v4637
        %v5003 = vand.u32 2147483647, %v4637
        %vm5004 = vcmp.lt.f32.partialorder %v5003, 0.0004427343
        %v5005 = vsel %vm5004, %v5002, %v4999
        %v5006 = vadd.f32 %v4639, 1.0
        %v5007 = vlog2.pop %v5006
        %v5008 = vmul.f32 %v5007, 0.6931472
        %v5009 = vmul.f32 -0.5, %v4639
        %v5010 = vadd.f32 %v5009, 1.0
        %v5011 = vmul.f32 %v5010, %v4639
        %v5012 = vand.u32 2147483647, %v4639
        %vm5013 = vcmp.lt.f32.partialorder %v5012, 0.0004427343
        %v5014 = vsel %vm5013, %v5011, %v5008
        %v5015 = vadd.f32 %v4641, 1.0
        %v5016 = vlog2.pop %v5015
        %v5017 = vmul.f32 %v5016, 0.6931472
        %v5018 = vmul.f32 -0.5, %v4641
        %v5019 = vadd.f32 %v5018, 1.0
        %v5020 = vmul.f32 %v5019, %v4641
        %v5021 = vand.u32 2147483647, %v4641
        %vm5022 = vcmp.lt.f32.partialorder %v5021, 0.0004427343
        %v5023 = vsel %vm5022, %v5020, %v5017
        %v5024 = vadd.f32 %v4643, 1.0
        %v5025 = vlog2.pop %v5024
        %v5026 = vmul.f32 %v5025, 0.6931472
        %v5027 = vmul.f32 -0.5, %v4643
        %v5028 = vadd.f32 %v5027, 1.0
        %v5029 = vmul.f32 %v5028, %v4643
        %v5030 = vand.u32 2147483647, %v4643
        %vm5031 = vcmp.lt.f32.partialorder %v5030, 0.0004427343
        %v5032 = vsel %vm5031, %v5029, %v5026
        %v5033 = vadd.f32 %v4645, 1.0
        %v5034 = vlog2.pop %v5033
        %v5035 = vmul.f32 %v5034, 0.6931472
        %v5036 = vmul.f32 -0.5, %v4645
        %v5037 = vadd.f32 %v5036, 1.0
        %v5038 = vmul.f32 %v5037, %v4645
        %v5039 = vand.u32 2147483647, %v4645
        %vm5040 = vcmp.lt.f32.partialorder %v5039, 0.0004427343
        %v5041 = vsel %vm5040, %v5038, %v5035
        %v5042 = vadd.f32 %v4647, 1.0
        %v5043 = vlog2.pop %v5042
        %v5044 = vmul.f32 %v5043, 0.6931472
        %v5045 = vmul.f32 -0.5, %v4647
        %v5046 = vadd.f32 %v5045, 1.0
        %v5047 = vmul.f32 %v5046, %v4647
        %v5048 = vand.u32 2147483647, %v4647
        %vm5049 = vcmp.lt.f32.partialorder %v5048, 0.0004427343
        %v5050 = vsel %vm5049, %v5047, %v5044
        %v5051 = vadd.f32 %v4649, 1.0
        %v5052 = vlog2.pop %v5051
        %v5053 = vmul.f32 %v5052, 0.6931472
        %v5054 = vmul.f32 -0.5, %v4649
        %v5055 = vadd.f32 %v5054, 1.0
        %v5056 = vmul.f32 %v5055, %v4649
        %v5057 = vand.u32 2147483647, %v4649
        %vm5058 = vcmp.lt.f32.partialorder %v5057, 0.0004427343
        %v5059 = vsel %vm5058, %v5056, %v5053
        %v5060 = vadd.f32 %v4651, 1.0
        %v5061 = vlog2.pop %v5060
        %v5062 = vmul.f32 %v5061, 0.6931472
        %v5063 = vmul.f32 -0.5, %v4651
        %v5064 = vadd.f32 %v5063, 1.0
        %v5065 = vmul.f32 %v5064, %v4651
        %v5066 = vand.u32 2147483647, %v4651
        %vm5067 = vcmp.lt.f32.partialorder %v5066, 0.0004427343
        %v5068 = vsel %vm5067, %v5065, %v5062
        %v5069 = vadd.f32 %v4653, 1.0
        %v5070 = vlog2.pop %v5069
        %v5071 = vmul.f32 %v5070, 0.6931472
        %v5072 = vmul.f32 -0.5, %v4653
        %v5073 = vadd.f32 %v5072, 1.0
        %v5074 = vmul.f32 %v5073, %v4653
        %v5075 = vand.u32 2147483647, %v4653
        %vm5076 = vcmp.lt.f32.partialorder %v5075, 0.0004427343
        %v5077 = vsel %vm5076, %v5074, %v5071
        %v5078 = vadd.f32 %v4655, 1.0
        %v5079 = vlog2.pop %v5078
        %v5080 = vmul.f32 %v5079, 0.6931472
        %v5081 = vmul.f32 -0.5, %v4655
        %v5082 = vadd.f32 %v5081, 1.0
        %v5083 = vmul.f32 %v5082, %v4655
        %v5084 = vand.u32 2147483647, %v4655
        %vm5085 = vcmp.lt.f32.partialorder %v5084, 0.0004427343
        %v5086 = vsel %vm5085, %v5083, %v5080
        %v5087 = vadd.f32 %v4657, 1.0
        %v5088 = vlog2.pop %v5087
        %v5089 = vmul.f32 %v5088, 0.6931472
        %v5090 = vmul.f32 -0.5, %v4657
        %v5091 = vadd.f32 %v5090, 1.0
        %v5092 = vmul.f32 %v5091, %v4657
        %v5093 = vand.u32 2147483647, %v4657
        %vm5094 = vcmp.lt.f32.partialorder %v5093, 0.0004427343
        %v5095 = vsel %vm5094, %v5092, %v5089
        %v5096 = vadd.f32 %v4659, 1.0
        %v5097 = vlog2.pop %v5096
        %v5098 = vmul.f32 %v5097, 0.6931472
        %v5099 = vmul.f32 -0.5, %v4659
        %v5100 = vadd.f32 %v5099, 1.0
        %v5101 = vmul.f32 %v5100, %v4659
        %v5102 = vand.u32 2147483647, %v4659
        %vm5103 = vcmp.lt.f32.partialorder %v5102, 0.0004427343
        %v5104 = vsel %vm5103, %v5101, %v5098
        %v5105 = vadd.f32 %v4661, 1.0
        %v5106 = vlog2.pop %v5105
        %v5107 = vmul.f32 %v5106, 0.6931472
        %v5108 = vmul.f32 -0.5, %v4661
        %v5109 = vadd.f32 %v5108, 1.0
        %v5110 = vmul.f32 %v5109, %v4661
        %v5111 = vand.u32 2147483647, %v4661
        %vm5112 = vcmp.lt.f32.partialorder %v5111, 0.0004427343
        %v5113 = vsel %vm5112, %v5110, %v5107
        %v5114 = vadd.f32 %v4663, 1.0
        %v5115 = vlog2.pop %v5114
        %v5116 = vmul.f32 %v5115, 0.6931472
        %v5117 = vmul.f32 -0.5, %v4663
        %v5118 = vadd.f32 %v5117, 1.0
        %v5119 = vmul.f32 %v5118, %v4663
        %v5120 = vand.u32 2147483647, %v4663
        %vm5121 = vcmp.lt.f32.partialorder %v5120, 0.0004427343
        %v5122 = vsel %vm5121, %v5119, %v5116
        %v5123 = vadd.f32 %v4665, 1.0
        %v5124 = vlog2.pop %v5123
        %v5125 = vmul.f32 %v5124, 0.6931472
        %v5126 = vmul.f32 -0.5, %v4665
        %v5127 = vadd.f32 %v5126, 1.0
        %v5128 = vmul.f32 %v5127, %v4665
        %v5129 = vand.u32 2147483647, %v4665
        %vm5130 = vcmp.lt.f32.partialorder %v5129, 0.0004427343
        %v5131 = vsel %vm5130, %v5128, %v5125
        %v5132 = vadd.f32 %v4667, 1.0
        %v5133 = vlog2.pop %v5132
        %v5134 = vmul.f32 %v5133, 0.6931472
        %v5135 = vmul.f32 -0.5, %v4667
        %v5136 = vadd.f32 %v5135, 1.0
        %v5137 = vmul.f32 %v5136, %v4667
        %v5138 = vand.u32 2147483647, %v4667
        %vm5139 = vcmp.lt.f32.partialorder %v5138, 0.0004427343
        %v5140 = vsel %vm5139, %v5137, %v5134
        %v5141 = vadd.f32 %v4669, 1.0
        %v5142 = vlog2.pop %v5141
        %v5143 = vmul.f32 %v5142, 0.6931472
        %v5144 = vmul.f32 -0.5, %v4669
        %v5145 = vadd.f32 %v5144, 1.0
        %v5146 = vmul.f32 %v5145, %v4669
        %v5147 = vand.u32 2147483647, %v4669
        %vm5148 = vcmp.lt.f32.partialorder %v5147, 0.0004427343
        %v5149 = vsel %vm5148, %v5146, %v5143
        %v5150 = vadd.f32 %v4671, 1.0
        %v5151 = vlog2.pop %v5150
        %v5152 = vmul.f32 %v5151, 0.6931472
        %v5153 = vmul.f32 -0.5, %v4671
        %v5154 = vadd.f32 %v5153, 1.0
        %v5155 = vmul.f32 %v5154, %v4671
        %v5156 = vand.u32 2147483647, %v4671
        %vm5157 = vcmp.lt.f32.partialorder %v5156, 0.0004427343
        %v5158 = vsel %vm5157, %v5155, %v5152
        %v5159 = vadd.f32 %v4673, 1.0
        %v5160 = vlog2.pop %v5159
        %v5161 = vmul.f32 %v5160, 0.6931472
        %v5162 = vmul.f32 -0.5, %v4673
        %v5163 = vadd.f32 %v5162, 1.0
        %v5164 = vmul.f32 %v5163, %v4673
        %v5165 = vand.u32 2147483647, %v4673
        %vm5166 = vcmp.lt.f32.partialorder %v5165, 0.0004427343
        %v5167 = vsel %vm5166, %v5164, %v5161
        %v5168 = vadd.f32 %v4675, 1.0
        %v5169 = vlog2.pop %v5168
        %v5170 = vmul.f32 %v5169, 0.6931472
        %v5171 = vmul.f32 -0.5, %v4675
        %v5172 = vadd.f32 %v5171, 1.0
        %v5173 = vmul.f32 %v5172, %v4675
        %v5174 = vand.u32 2147483647, %v4675
        %vm5175 = vcmp.lt.f32.partialorder %v5174, 0.0004427343
        %v5176 = vsel %vm5175, %v5173, %v5170
        %v5177 = vadd.f32 %v4677, 1.0
        %v5178 = vlog2.pop %v5177
        %v5179 = vmul.f32 %v5178, 0.6931472
        %v5180 = vmul.f32 -0.5, %v4677
        %v5181 = vadd.f32 %v5180, 1.0
        %v5182 = vmul.f32 %v5181, %v4677
        %v5183 = vand.u32 2147483647, %v4677
        %vm5184 = vcmp.lt.f32.partialorder %v5183, 0.0004427343
        %v5185 = vsel %vm5184, %v5182, %v5179
        %v5186 = vadd.f32 %v4679, 1.0
        %v5187 = vlog2.pop %v5186
        %v5188 = vmul.f32 %v5187, 0.6931472
        %v5189 = vmul.f32 -0.5, %v4679
        %v5190 = vadd.f32 %v5189, 1.0
        %v5191 = vmul.f32 %v5190, %v4679
        %v5192 = vand.u32 2147483647, %v4679
        %vm5193 = vcmp.lt.f32.partialorder %v5192, 0.0004427343
        %v5194 = vsel %vm5193, %v5191, %v5188
        %v5195 = vadd.f32 %v4681, 1.0
        %v5196 = vlog2.pop %v5195
        %v5197 = vmul.f32 %v5196, 0.6931472
        %v5198 = vmul.f32 -0.5, %v4681
        %v5199 = vadd.f32 %v5198, 1.0
        %v5200 = vmul.f32 %v5199, %v4681
        %v5201 = vand.u32 2147483647, %v4681
        %vm5202 = vcmp.lt.f32.partialorder %v5201, 0.0004427343
        %v5203 = vsel %vm5202, %v5200, %v5197
        %v5204 = vadd.f32 %v4683, 1.0
        %v5205 = vlog2.pop %v5204
        %v5206 = vmul.f32 %v5205, 0.6931472
        %v5207 = vmul.f32 -0.5, %v4683
        %v5208 = vadd.f32 %v5207, 1.0
        %v5209 = vmul.f32 %v5208, %v4683
        %v5210 = vand.u32 2147483647, %v4683
        %vm5211 = vcmp.lt.f32.partialorder %v5210, 0.0004427343
        %v5212 = vsel %vm5211, %v5209, %v5206
        %v5213 = vadd.f32 %v4685, 1.0
        %v5214 = vlog2.pop %v5213
        %v5215 = vmul.f32 %v5214, 0.6931472
        %v5216 = vmul.f32 -0.5, %v4685
        %v5217 = vadd.f32 %v5216, 1.0
        %v5218 = vmul.f32 %v5217, %v4685
        %v5219 = vand.u32 2147483647, %v4685
        %vm5220 = vcmp.lt.f32.partialorder %v5219, 0.0004427343
        %v5221 = vsel %vm5220, %v5218, %v5215
        %v5222 = vadd.f32 %v4687, 1.0
        %v5223 = vlog2.pop %v5222
        %v5224 = vmul.f32 %v5223, 0.6931472
        %v5225 = vmul.f32 -0.5, %v4687
        %v5226 = vadd.f32 %v5225, 1.0
        %v5227 = vmul.f32 %v5226, %v4687
        %v5228 = vand.u32 2147483647, %v4687
        %vm5229 = vcmp.lt.f32.partialorder %v5228, 0.0004427343
        %v5230 = vsel %vm5229, %v5227, %v5224
        %v5231 = vadd.f32 %v4689, 1.0
        %v5232 = vlog2.pop %v5231
        %v5233 = vmul.f32 %v5232, 0.6931472
        %v5234 = vmul.f32 -0.5, %v4689
        %v5235 = vadd.f32 %v5234, 1.0
        %v5236 = vmul.f32 %v5235, %v4689
        %v5237 = vand.u32 2147483647, %v4689
        %vm5238 = vcmp.lt.f32.partialorder %v5237, 0.0004427343
        %v5239 = vsel %vm5238, %v5236, %v5233
        %v5240 = vadd.f32 %v4691, 1.0
        %v5241 = vlog2.pop %v5240
        %v5242 = vmul.f32 %v5241, 0.6931472
        %v5243 = vmul.f32 -0.5, %v4691
        %v5244 = vadd.f32 %v5243, 1.0
        %v5245 = vmul.f32 %v5244, %v4691
        %v5246 = vand.u32 2147483647, %v4691
        %vm5247 = vcmp.lt.f32.partialorder %v5246, 0.0004427343
        %v5248 = vsel %vm5247, %v5245, %v5242
        %v5249 = vadd.f32 %v4693, 1.0
        %v5250 = vlog2.pop %v5249
        %v5251 = vmul.f32 %v5250, 0.6931472
        %v5252 = vmul.f32 -0.5, %v4693
        %v5253 = vadd.f32 %v5252, 1.0
        %v5254 = vmul.f32 %v5253, %v4693
        %v5255 = vand.u32 2147483647, %v4693
        %vm5256 = vcmp.lt.f32.partialorder %v5255, 0.0004427343
        %v5257 = vsel %vm5256, %v5254, %v5251
        %v5258 = vadd.f32 %v4695, 1.0
        %v5259 = vlog2.pop %v5258
        %v5260 = vmul.f32 %v5259, 0.6931472
        %v5261 = vmul.f32 -0.5, %v4695
        %v5262 = vadd.f32 %v5261, 1.0
        %v5263 = vmul.f32 %v5262, %v4695
        %v5264 = vand.u32 2147483647, %v4695
        %vm5265 = vcmp.lt.f32.partialorder %v5264, 0.0004427343
        %v5266 = vsel %vm5265, %v5263, %v5260
        %v5267 = vadd.f32 %v4697, 1.0
        %v5268 = vlog2.pop %v5267
        %v5269 = vmul.f32 %v5268, 0.6931472
        %v5270 = vmul.f32 -0.5, %v4697
        %v5271 = vadd.f32 %v5270, 1.0
        %v5272 = vmul.f32 %v5271, %v4697
        %v5273 = vand.u32 2147483647, %v4697
        %vm5274 = vcmp.lt.f32.partialorder %v5273, 0.0004427343
        %v5275 = vsel %vm5274, %v5272, %v5269
        %v5276 = vadd.f32 %v4699, 1.0
        %v5277 = vlog2.pop %v5276
        %v5278 = vmul.f32 %v5277, 0.6931472
        %v5279 = vmul.f32 -0.5, %v4699
        %v5280 = vadd.f32 %v5279, 1.0
        %v5281 = vmul.f32 %v5280, %v4699
        %v5282 = vand.u32 2147483647, %v4699
        %vm5283 = vcmp.lt.f32.partialorder %v5282, 0.0004427343
        %v5284 = vsel %vm5283, %v5281, %v5278
        %v5285 = vadd.f32 %v4701, 1.0
        %v5286 = vlog2.pop %v5285
        %v5287 = vmul.f32 %v5286, 0.6931472
        %v5288 = vmul.f32 -0.5, %v4701
        %v5289 = vadd.f32 %v5288, 1.0
        %v5290 = vmul.f32 %v5289, %v4701
        %v5291 = vand.u32 2147483647, %v4701
        %vm5292 = vcmp.lt.f32.partialorder %v5291, 0.0004427343
        %v5293 = vsel %vm5292, %v5290, %v5287
        %v5294 = vadd.f32 %v4703, 1.0
        %v5295 = vlog2.pop %v5294
        %v5296 = vmul.f32 %v5295, 0.6931472
        %v5297 = vmul.f32 -0.5, %v4703
        %v5298 = vadd.f32 %v5297, 1.0
        %v5299 = vmul.f32 %v5298, %v4703
        %v5300 = vand.u32 2147483647, %v4703
        %vm5301 = vcmp.lt.f32.partialorder %v5300, 0.0004427343
        %v5302 = vsel %vm5301, %v5299, %v5296
        %v5303 = vadd.f32 %v4705, 1.0
        %v5304 = vlog2.pop %v5303
        %v5305 = vmul.f32 %v5304, 0.6931472
        %v5306 = vmul.f32 -0.5, %v4705
        %v5307 = vadd.f32 %v5306, 1.0
        %v5308 = vmul.f32 %v5307, %v4705
        %v5309 = vand.u32 2147483647, %v4705
        %vm5310 = vcmp.lt.f32.partialorder %v5309, 0.0004427343
        %v5311 = vsel %vm5310, %v5308, %v5305
        %v5312 = vadd.f32 %v4707, 1.0
        %v5313 = vlog2.pop %v5312
        %v5314 = vmul.f32 %v5313, 0.6931472
        %v5315 = vmul.f32 -0.5, %v4707
        %v5316 = vadd.f32 %v5315, 1.0
        %v5317 = vmul.f32 %v5316, %v4707
        %v5318 = vand.u32 2147483647, %v4707
        %vm5319 = vcmp.lt.f32.partialorder %v5318, 0.0004427343
        %v5320 = vsel %vm5319, %v5317, %v5314
        %v5321 = vadd.f32 %v4709, 1.0
        %v5322 = vlog2.pop %v5321
        %v5323 = vmul.f32 %v5322, 0.6931472
        %v5324 = vmul.f32 -0.5, %v4709
        %v5325 = vadd.f32 %v5324, 1.0
        %v5326 = vmul.f32 %v5325, %v4709
        %v5327 = vand.u32 2147483647, %v4709
        %vm5328 = vcmp.lt.f32.partialorder %v5327, 0.0004427343
        %v5329 = vsel %vm5328, %v5326, %v5323
        %v5330 = vadd.f32 %v4711, 1.0
        %v5331 = vlog2.pop %v5330
        %v5332 = vmul.f32 %v5331, 0.6931472
        %v5333 = vmul.f32 -0.5, %v4711
        %v5334 = vadd.f32 %v5333, 1.0
        %v5335 = vmul.f32 %v5334, %v4711
        %v5336 = vand.u32 2147483647, %v4711
        %vm5337 = vcmp.lt.f32.partialorder %v5336, 0.0004427343
        %v5338 = vsel %vm5337, %v5335, %v5332
        %v5339 = vadd.f32 %v4713, 1.0
        %v5340 = vlog2.pop %v5339
        %v5341 = vmul.f32 %v5340, 0.6931472
        %v5342 = vmul.f32 -0.5, %v4713
        %v5343 = vadd.f32 %v5342, 1.0
        %v5344 = vmul.f32 %v5343, %v4713
        %v5345 = vand.u32 2147483647, %v4713
        %vm5346 = vcmp.lt.f32.partialorder %v5345, 0.0004427343
        %v5347 = vsel %vm5346, %v5344, %v5341
        %v5348 = vadd.f32 %v4715, 1.0
        %v5349 = vlog2.pop %v5348
        %v5350 = vmul.f32 %v5349, 0.6931472
        %v5351 = vmul.f32 -0.5, %v4715
        %v5352 = vadd.f32 %v5351, 1.0
        %v5353 = vmul.f32 %v5352, %v4715
        %v5354 = vand.u32 2147483647, %v4715
        %vm5355 = vcmp.lt.f32.partialorder %v5354, 0.0004427343
        %v5356 = vsel %vm5355, %v5353, %v5350
        %v5357 = vadd.f32 %v4717, 1.0
        %v5358 = vlog2.pop %v5357
        %v5359 = vmul.f32 %v5358, 0.6931472
        %v5360 = vmul.f32 -0.5, %v4717
        %v5361 = vadd.f32 %v5360, 1.0
        %v5362 = vmul.f32 %v5361, %v4717
        %v5363 = vand.u32 2147483647, %v4717
        %vm5364 = vcmp.lt.f32.partialorder %v5363, 0.0004427343
        %v5365 = vsel %vm5364, %v5362, %v5359
        %v5366 = vadd.f32 %v4719, 1.0
        %v5367 = vlog2.pop %v5366
        %v5368 = vmul.f32 %v5367, 0.6931472
        %v5369 = vmul.f32 -0.5, %v4719
        %v5370 = vadd.f32 %v5369, 1.0
        %v5371 = vmul.f32 %v5370, %v4719
        %v5372 = vand.u32 2147483647, %v4719
        %vm5373 = vcmp.lt.f32.partialorder %v5372, 0.0004427343
        %v5374 = vsel %vm5373, %v5371, %v5368
        %v5375 = vadd.f32 %v4721, 1.0
        %v5376 = vlog2.pop %v5375
        %v5377 = vmul.f32 %v5376, 0.6931472
        %v5378 = vmul.f32 -0.5, %v4721
        %v5379 = vadd.f32 %v5378, 1.0
        %v5380 = vmul.f32 %v5379, %v4721
        %v5381 = vand.u32 2147483647, %v4721
        %vm5382 = vcmp.lt.f32.partialorder %v5381, 0.0004427343
        %v5383 = vsel %vm5382, %v5380, %v5377
        %v5384 = vadd.f32 %v4723, 1.0
        %v5385 = vlog2.pop %v5384
        %v5386 = vmul.f32 %v5385, 0.6931472
        %v5387 = vmul.f32 -0.5, %v4723
        %v5388 = vadd.f32 %v5387, 1.0
        %v5389 = vmul.f32 %v5388, %v4723
        %v5390 = vand.u32 2147483647, %v4723
        %vm5391 = vcmp.lt.f32.partialorder %v5390, 0.0004427343
        %v5392 = vsel %vm5391, %v5389, %v5386
        %v5393 = vadd.f32 %v4725, 1.0
        %v5394 = vlog2.pop %v5393
        %v5395 = vmul.f32 %v5394, 0.6931472
        %v5396 = vmul.f32 -0.5, %v4725
        %v5397 = vadd.f32 %v5396, 1.0
        %v5398 = vmul.f32 %v5397, %v4725
        %v5399 = vand.u32 2147483647, %v4725
        %vm5400 = vcmp.lt.f32.partialorder %v5399, 0.0004427343
        %v5401 = vsel %vm5400, %v5398, %v5395
        %v5402 = vadd.f32 %v4727, 1.0
        %v5403 = vlog2.pop %v5402
        %v5404 = vmul.f32 %v5403, 0.6931472
        %v5405 = vmul.f32 -0.5, %v4727
        %v5406 = vadd.f32 %v5405, 1.0
        %v5407 = vmul.f32 %v5406, %v4727
        %v5408 = vand.u32 2147483647, %v4727
        %vm5409 = vcmp.lt.f32.partialorder %v5408, 0.0004427343
        %v5410 = vsel %vm5409, %v5407, %v5404
        %v5411 = vadd.f32 %v4729, 1.0
        %v5412 = vlog2.pop %v5411
        %v5413 = vmul.f32 %v5412, 0.6931472
        %v5414 = vmul.f32 -0.5, %v4729
        %v5415 = vadd.f32 %v5414, 1.0
        %v5416 = vmul.f32 %v5415, %v4729
        %v5417 = vand.u32 2147483647, %v4729
        %vm5418 = vcmp.lt.f32.partialorder %v5417, 0.0004427343
        %v5419 = vsel %vm5418, %v5416, %v5413
        %v5420 = vadd.f32 %v4731, 1.0
        %v5421 = vlog2.pop %v5420
        %v5422 = vmul.f32 %v5421, 0.6931472
        %v5423 = vmul.f32 -0.5, %v4731
        %v5424 = vadd.f32 %v5423, 1.0
        %v5425 = vmul.f32 %v5424, %v4731
        %v5426 = vand.u32 2147483647, %v4731
        %vm5427 = vcmp.lt.f32.partialorder %v5426, 0.0004427343
        %v5428 = vsel %vm5427, %v5425, %v5422
        %v5429 = vadd.f32 %v4733, 1.0
        %v5430 = vlog2.pop %v5429
        %v5431 = vmul.f32 %v5430, 0.6931472
        %v5432 = vmul.f32 -0.5, %v4733
        %v5433 = vadd.f32 %v5432, 1.0
        %v5434 = vmul.f32 %v5433, %v4733
        %v5435 = vand.u32 2147483647, %v4733
        %vm5436 = vcmp.lt.f32.partialorder %v5435, 0.0004427343
        %v5437 = vsel %vm5436, %v5434, %v5431
        %v5438 = vadd.f32 %v4735, 1.0
        %v5439 = vlog2.pop %v5438
        %v5440 = vmul.f32 %v5439, 0.6931472
        %v5441 = vmul.f32 -0.5, %v4735
        %v5442 = vadd.f32 %v5441, 1.0
        %v5443 = vmul.f32 %v5442, %v4735
        %v5444 = vand.u32 2147483647, %v4735
        %vm5445 = vcmp.lt.f32.partialorder %v5444, 0.0004427343
        %v5446 = vsel %vm5445, %v5443, %v5440
        %v5447 = vadd.f32 %v4737, 1.0
        %v5448 = vlog2.pop %v5447
        %v5449 = vmul.f32 %v5448, 0.6931472
        %v5450 = vmul.f32 -0.5, %v4737
        %v5451 = vadd.f32 %v5450, 1.0
        %v5452 = vmul.f32 %v5451, %v4737
        %v5453 = vand.u32 2147483647, %v4737
        %vm5454 = vcmp.lt.f32.partialorder %v5453, 0.0004427343
        %v5455 = vsel %vm5454, %v5452, %v5449
        %v5456 = vadd.f32 %v4739, 1.0
        %v5457 = vlog2.pop %v5456
        %v5458 = vmul.f32 %v5457, 0.6931472
        %v5459 = vmul.f32 -0.5, %v4739
        %v5460 = vadd.f32 %v5459, 1.0
        %v5461 = vmul.f32 %v5460, %v4739
        %v5462 = vand.u32 2147483647, %v4739
        %vm5463 = vcmp.lt.f32.partialorder %v5462, 0.0004427343
        %v5464 = vsel %vm5463, %v5461, %v5458
        %v5465 = vadd.f32 %v4741, 1.0
        %v5466 = vlog2.pop %v5465
        %v5467 = vmul.f32 %v5466, 0.6931472
        %v5468 = vmul.f32 -0.5, %v4741
        %v5469 = vadd.f32 %v5468, 1.0
        %v5470 = vmul.f32 %v5469, %v4741
        %v5471 = vand.u32 2147483647, %v4741
        %vm5472 = vcmp.lt.f32.partialorder %v5471, 0.0004427343
        %v5473 = vsel %vm5472, %v5470, %v5467
        %v5474 = vadd.f32 %v4743, 1.0
        %v5475 = vlog2.pop %v5474
        %v5476 = vmul.f32 %v5475, 0.6931472
        %v5477 = vmul.f32 -0.5, %v4743
        %v5478 = vadd.f32 %v5477, 1.0
        %v5479 = vmul.f32 %v5478, %v4743
        %v5480 = vand.u32 2147483647, %v4743
        %vm5481 = vcmp.lt.f32.partialorder %v5480, 0.0004427343
        %v5482 = vsel %vm5481, %v5479, %v5476
        %v5483 = vadd.f32 %v4745, 1.0
        %v5484 = vlog2.pop %v5483
        %v5485 = vmul.f32 %v5484, 0.6931472
        %v5486 = vmul.f32 -0.5, %v4745
        %v5487 = vadd.f32 %v5486, 1.0
        %v5488 = vmul.f32 %v5487, %v4745
        %v5489 = vand.u32 2147483647, %v4745
        %vm5490 = vcmp.lt.f32.partialorder %v5489, 0.0004427343
        %v5491 = vsel %vm5490, %v5488, %v5485
        %v5492 = vadd.f32 %v4747, 1.0
        %v5493 = vlog2.pop %v5492
        %v5494 = vmul.f32 %v5493, 0.6931472
        %v5495 = vmul.f32 -0.5, %v4747
        %v5496 = vadd.f32 %v5495, 1.0
        %v5497 = vmul.f32 %v5496, %v4747
        %v5498 = vand.u32 2147483647, %v4747
        %vm5499 = vcmp.lt.f32.partialorder %v5498, 0.0004427343
        %v5500 = vsel %vm5499, %v5497, %v5494
        %v5501 = vadd.f32 %v4749, 1.0
        %v5502 = vlog2.pop %v5501
        %v5503 = vmul.f32 %v5502, 0.6931472
        %v5504 = vmul.f32 -0.5, %v4749
        %v5505 = vadd.f32 %v5504, 1.0
        %v5506 = vmul.f32 %v5505, %v4749
        %v5507 = vand.u32 2147483647, %v4749
        %vm5508 = vcmp.lt.f32.partialorder %v5507, 0.0004427343
        %v5509 = vsel %vm5508, %v5506, %v5503
        %v5510 = vadd.f32 %v4751, 1.0
        %v5511 = vlog2.pop %v5510
        %v5512 = vmul.f32 %v5511, 0.6931472
        %v5513 = vmul.f32 -0.5, %v4751
        %v5514 = vadd.f32 %v5513, 1.0
        %v5515 = vmul.f32 %v5514, %v4751
        %v5516 = vand.u32 2147483647, %v4751
        %vm5517 = vcmp.lt.f32.partialorder %v5516, 0.0004427343
        %v5518 = vsel %vm5517, %v5515, %v5512
        %v5519 = vadd.f32 %v4753, 1.0
        %v5520 = vlog2.pop %v5519
        %v5521 = vmul.f32 %v5520, 0.6931472
        %v5522 = vmul.f32 -0.5, %v4753
        %v5523 = vadd.f32 %v5522, 1.0
        %v5524 = vmul.f32 %v5523, %v4753
        %v5525 = vand.u32 2147483647, %v4753
        %vm5526 = vcmp.lt.f32.partialorder %v5525, 0.0004427343
        %v5527 = vsel %vm5526, %v5524, %v5521
        %v5528 = vadd.f32 %v4755, 1.0
        %v5529 = vlog2.pop %v5528
        %v5530 = vmul.f32 %v5529, 0.6931472
        %v5531 = vmul.f32 -0.5, %v4755
        %v5532 = vadd.f32 %v5531, 1.0
        %v5533 = vmul.f32 %v5532, %v4755
        %v5534 = vand.u32 2147483647, %v4755
        %vm5535 = vcmp.lt.f32.partialorder %v5534, 0.0004427343
        %v5536 = vsel %vm5535, %v5533, %v5530
        %v5537 = vadd.f32 %v4757, 1.0
        %v5538 = vlog2.pop %v5537
        %v5539 = vmul.f32 %v5538, 0.6931472
        %v5540 = vmul.f32 -0.5, %v4757
        %v5541 = vadd.f32 %v5540, 1.0
        %v5542 = vmul.f32 %v5541, %v4757
        %v5543 = vand.u32 2147483647, %v4757
        %vm5544 = vcmp.lt.f32.partialorder %v5543, 0.0004427343
        %v5545 = vsel %vm5544, %v5542, %v5539
        %v5546 = vadd.f32 %v4759, 1.0
        %v5547 = vlog2.pop %v5546
        %v5548 = vmul.f32 %v5547, 0.6931472
        %v5549 = vmul.f32 -0.5, %v4759
        %v5550 = vadd.f32 %v5549, 1.0
        %v5551 = vmul.f32 %v5550, %v4759
        %v5552 = vand.u32 2147483647, %v4759
        %vm5553 = vcmp.lt.f32.partialorder %v5552, 0.0004427343
        %v5554 = vsel %vm5553, %v5551, %v5548
        %v5555 = vadd.f32 %v4761, 1.0
        %v5556 = vlog2.pop %v5555
        %v5557 = vmul.f32 %v5556, 0.6931472
        %v5558 = vmul.f32 -0.5, %v4761
        %v5559 = vadd.f32 %v5558, 1.0
        %v5560 = vmul.f32 %v5559, %v4761
        %v5561 = vand.u32 2147483647, %v4761
        %vm5562 = vcmp.lt.f32.partialorder %v5561, 0.0004427343
        %v5563 = vsel %vm5562, %v5560, %v5557
        %v5564 = vadd.f32 %v4763, 1.0
        %v5565 = vlog2.pop %v5564
        %v5566 = vmul.f32 %v5565, 0.6931472
        %v5567 = vmul.f32 -0.5, %v4763
        %v5568 = vadd.f32 %v5567, 1.0
        %v5569 = vmul.f32 %v5568, %v4763
        %v5570 = vand.u32 2147483647, %v4763
        %vm5571 = vcmp.lt.f32.partialorder %v5570, 0.0004427343
        %v5572 = vsel %vm5571, %v5569, %v5566
        %v5573 = vadd.f32 %v4765, 1.0
        %v5574 = vlog2.pop %v5573
        %v5575 = vmul.f32 %v5574, 0.6931472
        %v5576 = vmul.f32 -0.5, %v4765
        %v5577 = vadd.f32 %v5576, 1.0
        %v5578 = vmul.f32 %v5577, %v4765
        %v5579 = vand.u32 2147483647, %v4765
        %vm5580 = vcmp.lt.f32.partialorder %v5579, 0.0004427343
        %v5581 = vsel %vm5580, %v5578, %v5575
        %v5582 = vadd.f32 %v4767, 1.0
        %v5583 = vlog2.pop %v5582
        %v5584 = vmul.f32 %v5583, 0.6931472
        %v5585 = vmul.f32 -0.5, %v4767
        %v5586 = vadd.f32 %v5585, 1.0
        %v5587 = vmul.f32 %v5586, %v4767
        %v5588 = vand.u32 2147483647, %v4767
        %vm5589 = vcmp.lt.f32.partialorder %v5588, 0.0004427343
        %v5590 = vsel %vm5589, %v5587, %v5584
        %v5591 = vadd.f32 %v4769, 1.0
        %v5592 = vlog2.pop %v5591
        %v5593 = vmul.f32 %v5592, 0.6931472
        %v5594 = vmul.f32 -0.5, %v4769
        %v5595 = vadd.f32 %v5594, 1.0
        %v5596 = vmul.f32 %v5595, %v4769
        %v5597 = vand.u32 2147483647, %v4769
        %vm5598 = vcmp.lt.f32.partialorder %v5597, 0.0004427343
        %v5599 = vsel %vm5598, %v5596, %v5593
        %v5600 = vadd.f32 %v4771, 1.0
        %v5601 = vlog2.pop %v5600
        %v5602 = vmul.f32 %v5601, 0.6931472
        %v5603 = vmul.f32 -0.5, %v4771
        %v5604 = vadd.f32 %v5603, 1.0
        %v5605 = vmul.f32 %v5604, %v4771
        %v5606 = vand.u32 2147483647, %v4771
        %vm5607 = vcmp.lt.f32.partialorder %v5606, 0.0004427343
        %v5608 = vsel %vm5607, %v5605, %v5602
        %v5609 = vadd.f32 %v4773, 1.0
        %v5610 = vlog2.pop %v5609
        %v5611 = vmul.f32 %v5610, 0.6931472
        %v5612 = vmul.f32 -0.5, %v4773
        %v5613 = vadd.f32 %v5612, 1.0
        %v5614 = vmul.f32 %v5613, %v4773
        %v5615 = vand.u32 2147483647, %v4773
        %vm5616 = vcmp.lt.f32.partialorder %v5615, 0.0004427343
        %v5617 = vsel %vm5616, %v5614, %v5611
        %v5618 = vadd.f32 %v4775, 1.0
        %v5619 = vlog2.pop %v5618
        %v5620 = vmul.f32 %v5619, 0.6931472
        %v5621 = vmul.f32 -0.5, %v4775
        %v5622 = vadd.f32 %v5621, 1.0
        %v5623 = vmul.f32 %v5622, %v4775
        %v5624 = vand.u32 2147483647, %v4775
        %vm5625 = vcmp.lt.f32.partialorder %v5624, 0.0004427343
        %v5626 = vsel %vm5625, %v5623, %v5620
        %v5627 = vadd.f32 %v4777, 1.0
        %v5628 = vlog2.pop %v5627
        %v5629 = vmul.f32 %v5628, 0.6931472
        %v5630 = vmul.f32 -0.5, %v4777
        %v5631 = vadd.f32 %v5630, 1.0
        %v5632 = vmul.f32 %v5631, %v4777
        %v5633 = vand.u32 2147483647, %v4777
        %vm5634 = vcmp.lt.f32.partialorder %v5633, 0.0004427343
        %v5635 = vsel %vm5634, %v5632, %v5629
        %v5636 = vadd.f32 %v4779, 1.0
        %v5637 = vlog2.pop %v5636
        %v5638 = vmul.f32 %v5637, 0.6931472
        %v5639 = vmul.f32 -0.5, %v4779
        %v5640 = vadd.f32 %v5639, 1.0
        %v5641 = vmul.f32 %v5640, %v4779
        %v5642 = vand.u32 2147483647, %v4779
        %vm5643 = vcmp.lt.f32.partialorder %v5642, 0.0004427343
        %v5644 = vsel %vm5643, %v5641, %v5638
        %v5645 = vadd.f32 %v4781, 1.0
        %v5646 = vlog2.pop %v5645
        %v5647 = vmul.f32 %v5646, 0.6931472
        %v5648 = vmul.f32 -0.5, %v4781
        %v5649 = vadd.f32 %v5648, 1.0
        %v5650 = vmul.f32 %v5649, %v4781
        %v5651 = vand.u32 2147483647, %v4781
        %vm5652 = vcmp.lt.f32.partialorder %v5651, 0.0004427343
        %v5653 = vsel %vm5652, %v5650, %v5647
        %v5654 = vadd.f32 %v4783, 1.0
        %v5655 = vlog2.pop %v5654
        %v5656 = vmul.f32 %v5655, 0.6931472
        %v5657 = vmul.f32 -0.5, %v4783
        %v5658 = vadd.f32 %v5657, 1.0
        %v5659 = vmul.f32 %v5658, %v4783
        %v5660 = vand.u32 2147483647, %v4783
        %vm5661 = vcmp.lt.f32.partialorder %v5660, 0.0004427343
        %v5662 = vsel %vm5661, %v5659, %v5656
        %v5663 = vadd.f32 %v4785, 1.0
        %v5664 = vlog2.pop %v5663
        %v5665 = vmul.f32 %v5664, 0.6931472
        %v5666 = vmul.f32 -0.5, %v4785
        %v5667 = vadd.f32 %v5666, 1.0
        %v5668 = vmul.f32 %v5667, %v4785
        %v5669 = vand.u32 2147483647, %v4785
        %vm5670 = vcmp.lt.f32.partialorder %v5669, 0.0004427343
        %v5671 = vsel %vm5670, %v5668, %v5665
        %v5672 = vadd.f32 %v4787, 1.0
        %v5673 = vlog2.pop %v5672
        %v5674 = vmul.f32 %v5673, 0.6931472
        %v5675 = vmul.f32 -0.5, %v4787
        %v5676 = vadd.f32 %v5675, 1.0
        %v5677 = vmul.f32 %v5676, %v4787
        %v5678 = vand.u32 2147483647, %v4787
        %vm5679 = vcmp.lt.f32.partialorder %v5678, 0.0004427343
        %v5680 = vsel %vm5679, %v5677, %v5674
        %v5681 = vadd.f32 %v4789, 1.0
        %v5682 = vlog2.pop %v5681
        %v5683 = vmul.f32 %v5682, 0.6931472
        %v5684 = vmul.f32 -0.5, %v4789
        %v5685 = vadd.f32 %v5684, 1.0
        %v5686 = vmul.f32 %v5685, %v4789
        %v5687 = vand.u32 2147483647, %v4789
        %vm5688 = vcmp.lt.f32.partialorder %v5687, 0.0004427343
        %v5689 = vsel %vm5688, %v5686, %v5683
        %v5690 = vadd.f32 %v4791, 1.0
        %v5691 = vlog2.pop %v5690
        %v5692 = vmul.f32 %v5691, 0.6931472
        %v5693 = vmul.f32 -0.5, %v4791
        %v5694 = vadd.f32 %v5693, 1.0
        %v5695 = vmul.f32 %v5694, %v4791
        %v5696 = vand.u32 2147483647, %v4791
        %vm5697 = vcmp.lt.f32.partialorder %v5696, 0.0004427343
        %v5698 = vsel %vm5697, %v5695, %v5692
        %v5699 = vadd.f32 %v4793, 1.0
        %v5700 = vlog2.pop %v5699
        %v5701 = vmul.f32 %v5700, 0.6931472
        %v5702 = vmul.f32 -0.5, %v4793
        %v5703 = vadd.f32 %v5702, 1.0
        %v5704 = vmul.f32 %v5703, %v4793
        %v5705 = vand.u32 2147483647, %v4793
        %vm5706 = vcmp.lt.f32.partialorder %v5705, 0.0004427343
        %v5707 = vsel %vm5706, %v5704, %v5701
        %v5708 = vadd.f32 %v4795, 1.0
        %v5709 = vlog2.pop %v5708
        %v5710 = vmul.f32 %v5709, 0.6931472
        %v5711 = vmul.f32 -0.5, %v4795
        %v5712 = vadd.f32 %v5711, 1.0
        %v5713 = vmul.f32 %v5712, %v4795
        %v5714 = vand.u32 2147483647, %v4795
        %vm5715 = vcmp.lt.f32.partialorder %v5714, 0.0004427343
        %v5716 = vsel %vm5715, %v5713, %v5710
        %v5717 = vadd.f32 %v4797, 1.0
        %v5718 = vlog2.pop %v5717
        %v5719 = vmul.f32 %v5718, 0.6931472
        %v5720 = vmul.f32 -0.5, %v4797
        %v5721 = vadd.f32 %v5720, 1.0
        %v5722 = vmul.f32 %v5721, %v4797
        %v5723 = vand.u32 2147483647, %v4797
        %vm5724 = vcmp.lt.f32.partialorder %v5723, 0.0004427343
        %v5725 = vsel %vm5724, %v5722, %v5719
        %v5726 = vadd.f32 %v4799, 1.0
        %v5727 = vlog2.pop %v5726
        %v5728 = vmul.f32 %v5727, 0.6931472
        %v5729 = vmul.f32 -0.5, %v4799
        %v5730 = vadd.f32 %v5729, 1.0
        %v5731 = vmul.f32 %v5730, %v4799
        %v5732 = vand.u32 2147483647, %v4799
        %vm5733 = vcmp.lt.f32.partialorder %v5732, 0.0004427343
        %v5734 = vsel %vm5733, %v5731, %v5728
        %v5735 = vadd.f32 %v4801, 1.0
        %v5736 = vlog2.pop %v5735
        %v5737 = vmul.f32 %v5736, 0.6931472
        %v5738 = vmul.f32 -0.5, %v4801
        %v5739 = vadd.f32 %v5738, 1.0
        %v5740 = vmul.f32 %v5739, %v4801
        %v5741 = vand.u32 2147483647, %v4801
        %vm5742 = vcmp.lt.f32.partialorder %v5741, 0.0004427343
        %v5743 = vsel %vm5742, %v5740, %v5737
        %v5744 = vadd.f32 %v4803, 1.0
        %v5745 = vlog2.pop %v5744
        %v5746 = vmul.f32 %v5745, 0.6931472
        %v5747 = vmul.f32 -0.5, %v4803
        %v5748 = vadd.f32 %v5747, 1.0
        %v5749 = vmul.f32 %v5748, %v4803
        %v5750 = vand.u32 2147483647, %v4803
        %vm5751 = vcmp.lt.f32.partialorder %v5750, 0.0004427343
        %v5752 = vsel %vm5751, %v5749, %v5746
        %v5753 = vadd.f32 %v4805, 1.0
        %v5754 = vlog2.pop %v5753
        %v5755 = vmul.f32 %v5754, 0.6931472
        %v5756 = vmul.f32 -0.5, %v4805
        %v5757 = vadd.f32 %v5756, 1.0
        %v5758 = vmul.f32 %v5757, %v4805
        %v5759 = vand.u32 2147483647, %v4805
        %vm5760 = vcmp.lt.f32.partialorder %v5759, 0.0004427343
        %v5761 = vsel %vm5760, %v5758, %v5755
        %v5762 = vadd.f32 %v4807, 1.0
        %v5763 = vlog2.pop %v5762
        %v5764 = vmul.f32 %v5763, 0.6931472
        %v5765 = vmul.f32 -0.5, %v4807
        %v5766 = vadd.f32 %v5765, 1.0
        %v5767 = vmul.f32 %v5766, %v4807
        %v5768 = vand.u32 2147483647, %v4807
        %vm5769 = vcmp.lt.f32.partialorder %v5768, 0.0004427343
        %v5770 = vsel %vm5769, %v5767, %v5764
        %v5771 = vadd.f32 %v4809, 1.0
        %v5772 = vlog2.pop %v5771
        %v5773 = vmul.f32 %v5772, 0.6931472
        %v5774 = vmul.f32 -0.5, %v4809
        %v5775 = vadd.f32 %v5774, 1.0
        %v5776 = vmul.f32 %v5775, %v4809
        %v5777 = vand.u32 2147483647, %v4809
        %vm5778 = vcmp.lt.f32.partialorder %v5777, 0.0004427343
        %v5779 = vsel %vm5778, %v5776, %v5773
        %v5780 = vadd.f32 %v4811, 1.0
        %v5781 = vlog2.pop %v5780
        %v5782 = vmul.f32 %v5781, 0.6931472
        %v5783 = vmul.f32 -0.5, %v4811
        %v5784 = vadd.f32 %v5783, 1.0
        %v5785 = vmul.f32 %v5784, %v4811
        %v5786 = vand.u32 2147483647, %v4811
        %vm5787 = vcmp.lt.f32.partialorder %v5786, 0.0004427343
        %v5788 = vsel %vm5787, %v5785, %v5782
        %v5789 = vadd.f32 %v4813, 1.0
        %v5790 = vlog2.pop %v5789
        %v5791 = vmul.f32 %v5790, 0.6931472
        %v5792 = vmul.f32 -0.5, %v4813
        %v5793 = vadd.f32 %v5792, 1.0
        %v5794 = vmul.f32 %v5793, %v4813
        %v5795 = vand.u32 2147483647, %v4813
        %vm5796 = vcmp.lt.f32.partialorder %v5795, 0.0004427343
        %v5797 = vsel %vm5796, %v5794, %v5791
        %v5798 = vadd.f32 %v4815, 1.0
        %v5799 = vlog2.pop %v5798
        %v5800 = vmul.f32 %v5799, 0.6931472
        %v5801 = vmul.f32 -0.5, %v4815
        %v5802 = vadd.f32 %v5801, 1.0
        %v5803 = vmul.f32 %v5802, %v4815
        %v5804 = vand.u32 2147483647, %v4815
        %vm5805 = vcmp.lt.f32.partialorder %v5804, 0.0004427343
        %v5806 = vsel %vm5805, %v5803, %v5800
        %v5807 = vadd.f32 %v4817, 1.0
        %v5808 = vlog2.pop %v5807
        %v5809 = vmul.f32 %v5808, 0.6931472
        %v5810 = vmul.f32 -0.5, %v4817
        %v5811 = vadd.f32 %v5810, 1.0
        %v5812 = vmul.f32 %v5811, %v4817
        %v5813 = vand.u32 2147483647, %v4817
        %vm5814 = vcmp.lt.f32.partialorder %v5813, 0.0004427343
        %v5815 = vsel %vm5814, %v5812, %v5809
        %v5816 = vadd.f32 %v4819, 1.0
        %v5817 = vlog2.pop %v5816
        %v5818 = vmul.f32 %v5817, 0.6931472
        %v5819 = vmul.f32 -0.5, %v4819
        %v5820 = vadd.f32 %v5819, 1.0
        %v5821 = vmul.f32 %v5820, %v4819
        %v5822 = vand.u32 2147483647, %v4819
        %vm5823 = vcmp.lt.f32.partialorder %v5822, 0.0004427343
        %v5824 = vsel %vm5823, %v5821, %v5818
        %v5825 = vadd.f32 %v4821, 1.0
        %v5826 = vlog2.pop %v5825
        %v5827 = vmul.f32 %v5826, 0.6931472
        %v5828 = vmul.f32 -0.5, %v4821
        %v5829 = vadd.f32 %v5828, 1.0
        %v5830 = vmul.f32 %v5829, %v4821
        %v5831 = vand.u32 2147483647, %v4821
        %vm5832 = vcmp.lt.f32.partialorder %v5831, 0.0004427343
        %v5833 = vsel %vm5832, %v5830, %v5827
        %v5834 = vadd.f32 %v4823, 1.0
        %v5835 = vlog2.pop %v5834
        %v5836 = vmul.f32 %v5835, 0.6931472
        %v5837 = vmul.f32 -0.5, %v4823
        %v5838 = vadd.f32 %v5837, 1.0
        %v5839 = vmul.f32 %v5838, %v4823
        %v5840 = vand.u32 2147483647, %v4823
        %vm5841 = vcmp.lt.f32.partialorder %v5840, 0.0004427343
        %v5842 = vsel %vm5841, %v5839, %v5836
        %v5843 = vadd.f32 %v4825, 1.0
        %v5844 = vlog2.pop %v5843
        %v5845 = vmul.f32 %v5844, 0.6931472
        %v5846 = vmul.f32 -0.5, %v4825
        %v5847 = vadd.f32 %v5846, 1.0
        %v5848 = vmul.f32 %v5847, %v4825
        %v5849 = vand.u32 2147483647, %v4825
        %vm5850 = vcmp.lt.f32.partialorder %v5849, 0.0004427343
        %v5851 = vsel %vm5850, %v5848, %v5845
        %v5852 = vadd.f32 %v4827, 1.0
        %v5853 = vlog2.pop %v5852
        %v5854 = vmul.f32 %v5853, 0.6931472
        %v5855 = vmul.f32 -0.5, %v4827
        %v5856 = vadd.f32 %v5855, 1.0
        %v5857 = vmul.f32 %v5856, %v4827
        %v5858 = vand.u32 2147483647, %v4827
        %vm5859 = vcmp.lt.f32.partialorder %v5858, 0.0004427343
        %v5860 = vsel %vm5859, %v5857, %v5854
        %v5861 = vadd.f32 %v4829, 1.0
        %v5862 = vlog2.pop %v5861
        %v5863 = vmul.f32 %v5862, 0.6931472
        %v5864 = vmul.f32 -0.5, %v4829
        %v5865 = vadd.f32 %v5864, 1.0
        %v5866 = vmul.f32 %v5865, %v4829
        %v5867 = vand.u32 2147483647, %v4829
        %vm5868 = vcmp.lt.f32.partialorder %v5867, 0.0004427343
        %v5869 = vsel %vm5868, %v5866, %v5863
        %v5870 = vadd.f32 %v4831, 1.0
        %v5871 = vlog2.pop %v5870
        %v5872 = vmul.f32 %v5871, 0.6931472
        %v5873 = vmul.f32 -0.5, %v4831
        %v5874 = vadd.f32 %v5873, 1.0
        %v5875 = vmul.f32 %v5874, %v4831
        %v5876 = vand.u32 2147483647, %v4831
        %vm5877 = vcmp.lt.f32.partialorder %v5876, 0.0004427343
        %v5878 = vsel %vm5877, %v5875, %v5872
        %v5879 = vadd.f32 %v4833, 1.0
        %v5880 = vlog2.pop %v5879
        %v5881 = vmul.f32 %v5880, 0.6931472
        %v5882 = vmul.f32 -0.5, %v4833
        %v5883 = vadd.f32 %v5882, 1.0
        %v5884 = vmul.f32 %v5883, %v4833
        %v5885 = vand.u32 2147483647, %v4833
        %vm5886 = vcmp.lt.f32.partialorder %v5885, 0.0004427343
        %v5887 = vsel %vm5886, %v5884, %v5881
        %v5888 = vadd.f32 %v4835, 1.0
        %v5889 = vlog2.pop %v5888
        %v5890 = vmul.f32 %v5889, 0.6931472
        %v5891 = vmul.f32 -0.5, %v4835
        %v5892 = vadd.f32 %v5891, 1.0
        %v5893 = vmul.f32 %v5892, %v4835
        %v5894 = vand.u32 2147483647, %v4835
        %vm5895 = vcmp.lt.f32.partialorder %v5894, 0.0004427343
        %v5896 = vsel %vm5895, %v5893, %v5890
        %v5897 = vadd.f32 %v4837, 1.0
        %v5898 = vlog2.pop %v5897
        %v5899 = vmul.f32 %v5898, 0.6931472
        %v5900 = vmul.f32 -0.5, %v4837
        %v5901 = vadd.f32 %v5900, 1.0
        %v5902 = vmul.f32 %v5901, %v4837
        %v5903 = vand.u32 2147483647, %v4837
        %vm5904 = vcmp.lt.f32.partialorder %v5903, 0.0004427343
        %v5905 = vsel %vm5904, %v5902, %v5899
        %v5906 = vadd.f32 %v4839, 1.0
        %v5907 = vlog2.pop %v5906
        %v5908 = vmul.f32 %v5907, 0.6931472
        %v5909 = vmul.f32 -0.5, %v4839
        %v5910 = vadd.f32 %v5909, 1.0
        %v5911 = vmul.f32 %v5910, %v4839
        %v5912 = vand.u32 2147483647, %v4839
        %vm5913 = vcmp.lt.f32.partialorder %v5912, 0.0004427343
        %v5914 = vsel %vm5913, %v5911, %v5908
        %v5915 = vadd.f32 %v4841, 1.0
        %v5916 = vlog2.pop %v5915
        %v5917 = vmul.f32 %v5916, 0.6931472
        %v5918 = vmul.f32 -0.5, %v4841
        %v5919 = vadd.f32 %v5918, 1.0
        %v5920 = vmul.f32 %v5919, %v4841
        %v5921 = vand.u32 2147483647, %v4841
        %vm5922 = vcmp.lt.f32.partialorder %v5921, 0.0004427343
        %v5923 = vsel %vm5922, %v5920, %v5917
        %v5924 = vadd.f32 %v4843, 1.0
        %v5925 = vlog2.pop %v5924
        %v5926 = vmul.f32 %v5925, 0.6931472
        %v5927 = vmul.f32 -0.5, %v4843
        %v5928 = vadd.f32 %v5927, 1.0
        %v5929 = vmul.f32 %v5928, %v4843
        %v5930 = vand.u32 2147483647, %v4843
        %vm5931 = vcmp.lt.f32.partialorder %v5930, 0.0004427343
        %v5932 = vsel %vm5931, %v5929, %v5926
        %v5933 = vadd.f32 %v4845, 1.0
        %v5934 = vlog2.pop %v5933
        %v5935 = vmul.f32 %v5934, 0.6931472
        %v5936 = vmul.f32 -0.5, %v4845
        %v5937 = vadd.f32 %v5936, 1.0
        %v5938 = vmul.f32 %v5937, %v4845
        %v5939 = vand.u32 2147483647, %v4845
        %vm5940 = vcmp.lt.f32.partialorder %v5939, 0.0004427343
        %v5941 = vsel %vm5940, %v5938, %v5935
        %v5942 = vadd.f32 %v4847, 1.0
        %v5943 = vlog2.pop %v5942
        %v5944 = vmul.f32 %v5943, 0.6931472
        %v5945 = vmul.f32 -0.5, %v4847
        %v5946 = vadd.f32 %v5945, 1.0
        %v5947 = vmul.f32 %v5946, %v4847
        %v5948 = vand.u32 2147483647, %v4847
        %vm5949 = vcmp.lt.f32.partialorder %v5948, 0.0004427343
        %v5950 = vsel %vm5949, %v5947, %v5944
        %v5951 = vadd.f32 %v4849, 1.0
        %v5952 = vlog2.pop %v5951
        %v5953 = vmul.f32 %v5952, 0.6931472
        %v5954 = vmul.f32 -0.5, %v4849
        %v5955 = vadd.f32 %v5954, 1.0
        %v5956 = vmul.f32 %v5955, %v4849
        %v5957 = vand.u32 2147483647, %v4849
        %vm5958 = vcmp.lt.f32.partialorder %v5957, 0.0004427343
        %v5959 = vsel %vm5958, %v5956, %v5953
        %v5960 = vadd.f32 %v4851, 1.0
        %v5961 = vlog2.pop %v5960
        %v5962 = vmul.f32 %v5961, 0.6931472
        %v5963 = vmul.f32 -0.5, %v4851
        %v5964 = vadd.f32 %v5963, 1.0
        %v5965 = vmul.f32 %v5964, %v4851
        %v5966 = vand.u32 2147483647, %v4851
        %vm5967 = vcmp.lt.f32.partialorder %v5966, 0.0004427343
        %v5968 = vsel %vm5967, %v5965, %v5962
        %v5969 = vadd.f32 %v4853, 1.0
        %v5970 = vlog2.pop %v5969
        %v5971 = vmul.f32 %v5970, 0.6931472
        %v5972 = vmul.f32 -0.5, %v4853
        %v5973 = vadd.f32 %v5972, 1.0
        %v5974 = vmul.f32 %v5973, %v4853
        %v5975 = vand.u32 2147483647, %v4853
        %vm5976 = vcmp.lt.f32.partialorder %v5975, 0.0004427343
        %v5977 = vsel %vm5976, %v5974, %v5971
        %v5978 = vadd.f32 %v4855, 1.0
        %v5979 = vlog2.pop %v5978
        %v5980 = vmul.f32 %v5979, 0.6931472
        %v5981 = vmul.f32 -0.5, %v4855
        %v5982 = vadd.f32 %v5981, 1.0
        %v5983 = vmul.f32 %v5982, %v4855
        %v5984 = vand.u32 2147483647, %v4855
        %vm5985 = vcmp.lt.f32.partialorder %v5984, 0.0004427343
        %v5986 = vsel %vm5985, %v5983, %v5980
        %v5987 = vadd.f32 %v4857, 1.0
        %v5988 = vlog2.pop %v5987
        %v5989 = vmul.f32 %v5988, 0.6931472
        %v5990 = vmul.f32 -0.5, %v4857
        %v5991 = vadd.f32 %v5990, 1.0
        %v5992 = vmul.f32 %v5991, %v4857
        %v5993 = vand.u32 2147483647, %v4857
        %vm5994 = vcmp.lt.f32.partialorder %v5993, 0.0004427343
        %v5995 = vsel %vm5994, %v5992, %v5989
        %v5996 = vadd.f32 %v4859, 1.0
        %v5997 = vlog2.pop %v5996
        %v5998 = vmul.f32 %v5997, 0.6931472
        %v5999 = vmul.f32 -0.5, %v4859
        %v6000 = vadd.f32 %v5999, 1.0
        %v6001 = vmul.f32 %v6000, %v4859
        %v6002 = vand.u32 2147483647, %v4859
        %vm6003 = vcmp.lt.f32.partialorder %v6002, 0.0004427343
        %v6004 = vsel %vm6003, %v6001, %v5998
        %v6005 = vadd.f32 %v4861, 1.0
        %v6006 = vlog2.pop %v6005
        %v6007 = vmul.f32 %v6006, 0.6931472
        %v6008 = vmul.f32 -0.5, %v4861
        %v6009 = vadd.f32 %v6008, 1.0
        %v6010 = vmul.f32 %v6009, %v4861
        %v6011 = vand.u32 2147483647, %v4861
        %vm6012 = vcmp.lt.f32.partialorder %v6011, 0.0004427343
        %v6013 = vsel %vm6012, %v6010, %v6007
        %v6014 = vadd.f32 %v4222, %v4870
        %v6015 = vadd.f32 %v4223, %v4879
        %v6016 = vadd.f32 %v4224, %v4888
        %v6017 = vadd.f32 %v4225, %v4897
        %v6018 = vadd.f32 %v4226, %v4906
        %v6019 = vadd.f32 %v4227, %v4915
        %v6020 = vadd.f32 %v4228, %v4924
        %v6021 = vadd.f32 %v4229, %v4933
        %v6022 = vadd.f32 %v4230, %v4942
        %v6023 = vadd.f32 %v4231, %v4951
        %v6024 = vadd.f32 %v4232, %v4960
        %v6025 = vadd.f32 %v4233, %v4969
        %v6026 = vadd.f32 %v4234, %v4978
        %v6027 = vadd.f32 %v4235, %v4987
        %v6028 = vadd.f32 %v4236, %v4996
        %v6029 = vadd.f32 %v4237, %v5005
        %v6030 = vadd.f32 %v4238, %v5014
        %v6031 = vadd.f32 %v4239, %v5023
        %v6032 = vadd.f32 %v4240, %v5032
        %v6033 = vadd.f32 %v4241, %v5041
        %v6034 = vadd.f32 %v4242, %v5050
        %v6035 = vadd.f32 %v4243, %v5059
        %v6036 = vadd.f32 %v4244, %v5068
        %v6037 = vadd.f32 %v4245, %v5077
        %v6038 = vadd.f32 %v4246, %v5086
        %v6039 = vadd.f32 %v4247, %v5095
        %v6040 = vadd.f32 %v4248, %v5104
        %v6041 = vadd.f32 %v4249, %v5113
        %v6042 = vadd.f32 %v4250, %v5122
        %v6043 = vadd.f32 %v4251, %v5131
        %v6044 = vadd.f32 %v4252, %v5140
        %v6045 = vadd.f32 %v4253, %v5149
        %v6046 = vadd.f32 %v4254, %v5158
        %v6047 = vadd.f32 %v4255, %v5167
        %v6048 = vadd.f32 %v4256, %v5176
        %v6049 = vadd.f32 %v4257, %v5185
        %v6050 = vadd.f32 %v4258, %v5194
        %v6051 = vadd.f32 %v4259, %v5203
        %v6052 = vadd.f32 %v4260, %v5212
        %v6053 = vadd.f32 %v4261, %v5221
        %v6054 = vadd.f32 %v4262, %v5230
        %v6055 = vadd.f32 %v4263, %v5239
        %v6056 = vadd.f32 %v4264, %v5248
        %v6057 = vadd.f32 %v4265, %v5257
        %v6058 = vadd.f32 %v4266, %v5266
        %v6059 = vadd.f32 %v4267, %v5275
        %v6060 = vadd.f32 %v4268, %v5284
        %v6061 = vadd.f32 %v4269, %v5293
        %v6062 = vadd.f32 %v4270, %v5302
        %v6063 = vadd.f32 %v4271, %v5311
        %v6064 = vadd.f32 %v4272, %v5320
        %v6065 = vadd.f32 %v4273, %v5329
        %v6066 = vadd.f32 %v4274, %v5338
        %v6067 = vadd.f32 %v4275, %v5347
        %v6068 = vadd.f32 %v4276, %v5356
        %v6069 = vadd.f32 %v4277, %v5365
        %v6070 = vadd.f32 %v4278, %v5374
        %v6071 = vadd.f32 %v4279, %v5383
        %v6072 = vadd.f32 %v4280, %v5392
        %v6073 = vadd.f32 %v4281, %v5401
        %v6074 = vadd.f32 %v4282, %v5410
        %v6075 = vadd.f32 %v4283, %v5419
        %v6076 = vadd.f32 %v4284, %v5428
        %v6077 = vadd.f32 %v4285, %v5437
        %v6078 = vadd.f32 %v4286, %v5446
        %v6079 = vadd.f32 %v4287, %v5455
        %v6080 = vadd.f32 %v4288, %v5464
        %v6081 = vadd.f32 %v4289, %v5473
        %v6082 = vadd.f32 %v4290, %v5482
        %v6083 = vadd.f32 %v4291, %v5491
        %v6084 = vadd.f32 %v4292, %v5500
        %v6085 = vadd.f32 %v4293, %v5509
        %v6086 = vadd.f32 %v4294, %v5518
        %v6087 = vadd.f32 %v4295, %v5527
        %v6088 = vadd.f32 %v4296, %v5536
        %v6089 = vadd.f32 %v4297, %v5545
        %v6090 = vadd.f32 %v4298, %v5554
        %v6091 = vadd.f32 %v4299, %v5563
        %v6092 = vadd.f32 %v4300, %v5572
        %v6093 = vadd.f32 %v4301, %v5581
        %v6094 = vadd.f32 %v4302, %v5590
        %v6095 = vadd.f32 %v4303, %v5599
        %v6096 = vadd.f32 %v4304, %v5608
        %v6097 = vadd.f32 %v4305, %v5617
        %v6098 = vadd.f32 %v4306, %v5626
        %v6099 = vadd.f32 %v4307, %v5635
        %v6100 = vadd.f32 %v4308, %v5644
        %v6101 = vadd.f32 %v4309, %v5653
        %v6102 = vadd.f32 %v4310, %v5662
        %v6103 = vadd.f32 %v4311, %v5671
        %v6104 = vadd.f32 %v4312, %v5680
        %v6105 = vadd.f32 %v4313, %v5689
        %v6106 = vadd.f32 %v4314, %v5698
        %v6107 = vadd.f32 %v4315, %v5707
        %v6108 = vadd.f32 %v4316, %v5716
        %v6109 = vadd.f32 %v4317, %v5725
        %v6110 = vadd.f32 %v4318, %v5734
        %v6111 = vadd.f32 %v4319, %v5743
        %v6112 = vadd.f32 %v4320, %v5752
        %v6113 = vadd.f32 %v4321, %v5761
        %v6114 = vadd.f32 %v4322, %v5770
        %v6115 = vadd.f32 %v4323, %v5779
        %v6116 = vadd.f32 %v4324, %v5788
        %v6117 = vadd.f32 %v4325, %v5797
        %v6118 = vadd.f32 %v4326, %v5806
        %v6119 = vadd.f32 %v4327, %v5815
        %v6120 = vadd.f32 %v4328, %v5824
        %v6121 = vadd.f32 %v4329, %v5833
        %v6122 = vadd.f32 %v4330, %v5842
        %v6123 = vadd.f32 %v4331, %v5851
        %v6124 = vadd.f32 %v4332, %v5860
        %v6125 = vadd.f32 %v4333, %v5869
        %v6126 = vadd.f32 %v4334, %v5878
        %v6127 = vadd.f32 %v4335, %v5887
        %v6128 = vadd.f32 %v4336, %v5896
        %v6129 = vadd.f32 %v4337, %v5905
        %v6130 = vadd.f32 %v4338, %v5914
        %v6131 = vadd.f32 %v4339, %v5923
        %v6132 = vadd.f32 %v4340, %v5932
        %v6133 = vadd.f32 %v4341, %v5941
        %v6134 = vadd.f32 %v4342, %v5950
        %v6135 = vadd.f32 %v4343, %v5959
        %v6136 = vadd.f32 %v4344, %v5968
        %v6137 = vadd.f32 %v4345, %v5977
        %v6138 = vadd.f32 %v4346, %v5986
        %v6139 = vadd.f32 %v4347, %v5995
        %v6140 = vadd.f32 %v4348, %v6004
        %v6141 = vadd.f32 %v4349, %v6013
        %v6142 = vsub.f32 0.0, %v6014
        %v6143 = vsub.f32 0.0, %v6015
        %v6144 = vsub.f32 0.0, %v6016
        %v6145 = vsub.f32 0.0, %v6017
        %v6146 = vsub.f32 0.0, %v6018
        %v6147 = vsub.f32 0.0, %v6019
        %v6148 = vsub.f32 0.0, %v6020
        %v6149 = vsub.f32 0.0, %v6021
        %v6150 = vsub.f32 0.0, %v6022
        %v6151 = vsub.f32 0.0, %v6023
        %v6152 = vsub.f32 0.0, %v6024
        %v6153 = vsub.f32 0.0, %v6025
        %v6154 = vsub.f32 0.0, %v6026
        %v6155 = vsub.f32 0.0, %v6027
        %v6156 = vsub.f32 0.0, %v6028
        %v6157 = vsub.f32 0.0, %v6029
        %v6158 = vsub.f32 0.0, %v6030
        %v6159 = vsub.f32 0.0, %v6031
        %v6160 = vsub.f32 0.0, %v6032
        %v6161 = vsub.f32 0.0, %v6033
        %v6162 = vsub.f32 0.0, %v6034
        %v6163 = vsub.f32 0.0, %v6035
        %v6164 = vsub.f32 0.0, %v6036
        %v6165 = vsub.f32 0.0, %v6037
        %v6166 = vsub.f32 0.0, %v6038
        %v6167 = vsub.f32 0.0, %v6039
        %v6168 = vsub.f32 0.0, %v6040
        %v6169 = vsub.f32 0.0, %v6041
        %v6170 = vsub.f32 0.0, %v6042
        %v6171 = vsub.f32 0.0, %v6043
        %v6172 = vsub.f32 0.0, %v6044
        %v6173 = vsub.f32 0.0, %v6045
        %v6174 = vsub.f32 0.0, %v6046
        %v6175 = vsub.f32 0.0, %v6047
        %v6176 = vsub.f32 0.0, %v6048
        %v6177 = vsub.f32 0.0, %v6049
        %v6178 = vsub.f32 0.0, %v6050
        %v6179 = vsub.f32 0.0, %v6051
        %v6180 = vsub.f32 0.0, %v6052
        %v6181 = vsub.f32 0.0, %v6053
        %v6182 = vsub.f32 0.0, %v6054
        %v6183 = vsub.f32 0.0, %v6055
        %v6184 = vsub.f32 0.0, %v6056
        %v6185 = vsub.f32 0.0, %v6057
        %v6186 = vsub.f32 0.0, %v6058
        %v6187 = vsub.f32 0.0, %v6059
        %v6188 = vsub.f32 0.0, %v6060
        %v6189 = vsub.f32 0.0, %v6061
        %v6190 = vsub.f32 0.0, %v6062
        %v6191 = vsub.f32 0.0, %v6063
        %v6192 = vsub.f32 0.0, %v6064
        %v6193 = vsub.f32 0.0, %v6065
        %v6194 = vsub.f32 0.0, %v6066
        %v6195 = vsub.f32 0.0, %v6067
        %v6196 = vsub.f32 0.0, %v6068
        %v6197 = vsub.f32 0.0, %v6069
        %v6198 = vsub.f32 0.0, %v6070
        %v6199 = vsub.f32 0.0, %v6071
        %v6200 = vsub.f32 0.0, %v6072
        %v6201 = vsub.f32 0.0, %v6073
        %v6202 = vsub.f32 0.0, %v6074
        %v6203 = vsub.f32 0.0, %v6075
        %v6204 = vsub.f32 0.0, %v6076
        %v6205 = vsub.f32 0.0, %v6077
        %v6206 = vsub.f32 0.0, %v6078
        %v6207 = vsub.f32 0.0, %v6079
        %v6208 = vsub.f32 0.0, %v6080
        %v6209 = vsub.f32 0.0, %v6081
        %v6210 = vsub.f32 0.0, %v6082
        %v6211 = vsub.f32 0.0, %v6083
        %v6212 = vsub.f32 0.0, %v6084
        %v6213 = vsub.f32 0.0, %v6085
        %v6214 = vsub.f32 0.0, %v6086
        %v6215 = vsub.f32 0.0, %v6087
        %v6216 = vsub.f32 0.0, %v6088
        %v6217 = vsub.f32 0.0, %v6089
        %v6218 = vsub.f32 0.0, %v6090
        %v6219 = vsub.f32 0.0, %v6091
        %v6220 = vsub.f32 0.0, %v6092
        %v6221 = vsub.f32 0.0, %v6093
        %v6222 = vsub.f32 0.0, %v6094
        %v6223 = vsub.f32 0.0, %v6095
        %v6224 = vsub.f32 0.0, %v6096
        %v6225 = vsub.f32 0.0, %v6097
        %v6226 = vsub.f32 0.0, %v6098
        %v6227 = vsub.f32 0.0, %v6099
        %v6228 = vsub.f32 0.0, %v6100
        %v6229 = vsub.f32 0.0, %v6101
        %v6230 = vsub.f32 0.0, %v6102
        %v6231 = vsub.f32 0.0, %v6103
        %v6232 = vsub.f32 0.0, %v6104
        %v6233 = vsub.f32 0.0, %v6105
        %v6234 = vsub.f32 0.0, %v6106
        %v6235 = vsub.f32 0.0, %v6107
        %v6236 = vsub.f32 0.0, %v6108
        %v6237 = vsub.f32 0.0, %v6109
        %v6238 = vsub.f32 0.0, %v6110
        %v6239 = vsub.f32 0.0, %v6111
        %v6240 = vsub.f32 0.0, %v6112
        %v6241 = vsub.f32 0.0, %v6113
        %v6242 = vsub.f32 0.0, %v6114
        %v6243 = vsub.f32 0.0, %v6115
        %v6244 = vsub.f32 0.0, %v6116
        %v6245 = vsub.f32 0.0, %v6117
        %v6246 = vsub.f32 0.0, %v6118
        %v6247 = vsub.f32 0.0, %v6119
        %v6248 = vsub.f32 0.0, %v6120
        %v6249 = vsub.f32 0.0, %v6121
        %v6250 = vsub.f32 0.0, %v6122
        %v6251 = vsub.f32 0.0, %v6123
        %v6252 = vsub.f32 0.0, %v6124
        %v6253 = vsub.f32 0.0, %v6125
        %v6254 = vsub.f32 0.0, %v6126
        %v6255 = vsub.f32 0.0, %v6127
        %v6256 = vsub.f32 0.0, %v6128
        %v6257 = vsub.f32 0.0, %v6129
        %v6258 = vsub.f32 0.0, %v6130
        %v6259 = vsub.f32 0.0, %v6131
        %v6260 = vsub.f32 0.0, %v6132
        %v6261 = vsub.f32 0.0, %v6133
        %v6262 = vsub.f32 0.0, %v6134
        %v6263 = vsub.f32 0.0, %v6135
        %v6264 = vsub.f32 0.0, %v6136
        %v6265 = vsub.f32 0.0, %v6137
        %v6266 = vsub.f32 0.0, %v6138
        %v6267 = vsub.f32 0.0, %v6139
        %v6268 = vsub.f32 0.0, %v6140
        %v6269 = vsub.f32 0.0, %v6141
        %v6270 = vadd.f32 %v3838, %v6142
        %v6271 = vadd.f32 %v3839, %v6143
        %v6272 = vadd.f32 %v3840, %v6144
        %v6273 = vadd.f32 %v3841, %v6145
        %v6274 = vadd.f32 %v3842, %v6146
        %v6275 = vadd.f32 %v3843, %v6147
        %v6276 = vadd.f32 %v3844, %v6148
        %v6277 = vadd.f32 %v3845, %v6149
        %v6278 = vadd.f32 %v3846, %v6150
        %v6279 = vadd.f32 %v3847, %v6151
        %v6280 = vadd.f32 %v3848, %v6152
        %v6281 = vadd.f32 %v3849, %v6153
        %v6282 = vadd.f32 %v3850, %v6154
        %v6283 = vadd.f32 %v3851, %v6155
        %v6284 = vadd.f32 %v3852, %v6156
        %v6285 = vadd.f32 %v3853, %v6157
        %v6286 = vadd.f32 %v3854, %v6158
        %v6287 = vadd.f32 %v3855, %v6159
        %v6288 = vadd.f32 %v3856, %v6160
        %v6289 = vadd.f32 %v3857, %v6161
        %v6290 = vadd.f32 %v3858, %v6162
        %v6291 = vadd.f32 %v3859, %v6163
        %v6292 = vadd.f32 %v3860, %v6164
        %v6293 = vadd.f32 %v3861, %v6165
        %v6294 = vadd.f32 %v3862, %v6166
        %v6295 = vadd.f32 %v3863, %v6167
        %v6296 = vadd.f32 %v3864, %v6168
        %v6297 = vadd.f32 %v3865, %v6169
        %v6298 = vadd.f32 %v3866, %v6170
        %v6299 = vadd.f32 %v3867, %v6171
        %v6300 = vadd.f32 %v3868, %v6172
        %v6301 = vadd.f32 %v3869, %v6173
        %v6302 = vadd.f32 %v3870, %v6174
        %v6303 = vadd.f32 %v3871, %v6175
        %v6304 = vadd.f32 %v3872, %v6176
        %v6305 = vadd.f32 %v3873, %v6177
        %v6306 = vadd.f32 %v3874, %v6178
        %v6307 = vadd.f32 %v3875, %v6179
        %v6308 = vadd.f32 %v3876, %v6180
        %v6309 = vadd.f32 %v3877, %v6181
        %v6310 = vadd.f32 %v3878, %v6182
        %v6311 = vadd.f32 %v3879, %v6183
        %v6312 = vadd.f32 %v3880, %v6184
        %v6313 = vadd.f32 %v3881, %v6185
        %v6314 = vadd.f32 %v3882, %v6186
        %v6315 = vadd.f32 %v3883, %v6187
        %v6316 = vadd.f32 %v3884, %v6188
        %v6317 = vadd.f32 %v3885, %v6189
        %v6318 = vadd.f32 %v3886, %v6190
        %v6319 = vadd.f32 %v3887, %v6191
        %v6320 = vadd.f32 %v3888, %v6192
        %v6321 = vadd.f32 %v3889, %v6193
        %v6322 = vadd.f32 %v3890, %v6194
        %v6323 = vadd.f32 %v3891, %v6195
        %v6324 = vadd.f32 %v3892, %v6196
        %v6325 = vadd.f32 %v3893, %v6197
        %v6326 = vadd.f32 %v3894, %v6198
        %v6327 = vadd.f32 %v3895, %v6199
        %v6328 = vadd.f32 %v3896, %v6200
        %v6329 = vadd.f32 %v3897, %v6201
        %v6330 = vadd.f32 %v3898, %v6202
        %v6331 = vadd.f32 %v3899, %v6203
        %v6332 = vadd.f32 %v3900, %v6204
        %v6333 = vadd.f32 %v3901, %v6205
        %v6334 = vadd.f32 %v3902, %v6206
        %v6335 = vadd.f32 %v3903, %v6207
        %v6336 = vadd.f32 %v3904, %v6208
        %v6337 = vadd.f32 %v3905, %v6209
        %v6338 = vadd.f32 %v3906, %v6210
        %v6339 = vadd.f32 %v3907, %v6211
        %v6340 = vadd.f32 %v3908, %v6212
        %v6341 = vadd.f32 %v3909, %v6213
        %v6342 = vadd.f32 %v3910, %v6214
        %v6343 = vadd.f32 %v3911, %v6215
        %v6344 = vadd.f32 %v3912, %v6216
        %v6345 = vadd.f32 %v3913, %v6217
        %v6346 = vadd.f32 %v3914, %v6218
        %v6347 = vadd.f32 %v3915, %v6219
        %v6348 = vadd.f32 %v3916, %v6220
        %v6349 = vadd.f32 %v3917, %v6221
        %v6350 = vadd.f32 %v3918, %v6222
        %v6351 = vadd.f32 %v3919, %v6223
        %v6352 = vadd.f32 %v3920, %v6224
        %v6353 = vadd.f32 %v3921, %v6225
        %v6354 = vadd.f32 %v3922, %v6226
        %v6355 = vadd.f32 %v3923, %v6227
        %v6356 = vadd.f32 %v3924, %v6228
        %v6357 = vadd.f32 %v3925, %v6229
        %v6358 = vadd.f32 %v3926, %v6230
        %v6359 = vadd.f32 %v3927, %v6231
        %v6360 = vadd.f32 %v3928, %v6232
        %v6361 = vadd.f32 %v3929, %v6233
        %v6362 = vadd.f32 %v3930, %v6234
        %v6363 = vadd.f32 %v3931, %v6235
        %v6364 = vadd.f32 %v3932, %v6236
        %v6365 = vadd.f32 %v3933, %v6237
        %v6366 = vadd.f32 %v3934, %v6238
        %v6367 = vadd.f32 %v3935, %v6239
        %v6368 = vadd.f32 %v3936, %v6240
        %v6369 = vadd.f32 %v3937, %v6241
        %v6370 = vadd.f32 %v3938, %v6242
        %v6371 = vadd.f32 %v3939, %v6243
        %v6372 = vadd.f32 %v3940, %v6244
        %v6373 = vadd.f32 %v3941, %v6245
        %v6374 = vadd.f32 %v3942, %v6246
        %v6375 = vadd.f32 %v3943, %v6247
        %v6376 = vadd.f32 %v3944, %v6248
        %v6377 = vadd.f32 %v3945, %v6249
        %v6378 = vadd.f32 %v3946, %v6250
        %v6379 = vadd.f32 %v3947, %v6251
        %v6380 = vadd.f32 %v3948, %v6252
        %v6381 = vadd.f32 %v3949, %v6253
        %v6382 = vadd.f32 %v3950, %v6254
        %v6383 = vadd.f32 %v3951, %v6255
        %v6384 = vadd.f32 %v3952, %v6256
        %v6385 = vadd.f32 %v3953, %v6257
        %v6386 = vadd.f32 %v3954, %v6258
        %v6387 = vadd.f32 %v3955, %v6259
        %v6388 = vadd.f32 %v3956, %v6260
        %v6389 = vadd.f32 %v3957, %v6261
        %v6390 = vadd.f32 %v3958, %v6262
        %v6391 = vadd.f32 %v3959, %v6263
        %v6392 = vadd.f32 %v3960, %v6264
        %v6393 = vadd.f32 %v3961, %v6265
        %v6394 = vadd.f32 %v3962, %v6266
        %v6395 = vadd.f32 %v3963, %v6267
        %v6396 = vadd.f32 %v3964, %v6268
        %v6397 = vadd.f32 %v3965, %v6269
        %s6398 = sadd.s32 %s21, %s22
        %s6399 = smul.u32 %s6398, 1024
        %v6400 = vlaneseq
        %v6401 = vshrl.u32 %v6400, 7
        %v6402 = vadd.s32 %v6401, 8
        %v6403 = vadd.s32 %v6401, 16
        %v6404 = vadd.s32 %v6401, 24
        %v6405 = vadd.s32 %v6401, 32
        %v6406 = vadd.s32 %v6401, 40
        %v6407 = vadd.s32 %v6401, 48
        %v6408 = vadd.s32 %v6401, 56
        %v6409 = vadd.s32 %v6401, 64
        %v6410 = vadd.s32 %v6401, 72
        %v6411 = vadd.s32 %v6401, 80
        %v6412 = vadd.s32 %v6401, 88
        %v6413 = vadd.s32 %v6401, 96
        %v6414 = vadd.s32 %v6401, 104
        %v6415 = vadd.s32 %v6401, 112
        %v6416 = vadd.s32 %v6401, 120
        %v6417 = vadd.s32 %v6401, 128
        %v6418 = vadd.s32 %v6401, 136
        %v6419 = vadd.s32 %v6401, 144
        %v6420 = vadd.s32 %v6401, 152
        %v6421 = vadd.s32 %v6401, 160
        %v6422 = vadd.s32 %v6401, 168
        %v6423 = vadd.s32 %v6401, 176
        %v6424 = vadd.s32 %v6401, 184
        %v6425 = vadd.s32 %v6401, 192
        %v6426 = vadd.s32 %v6401, 200
        %v6427 = vadd.s32 %v6401, 208
        %v6428 = vadd.s32 %v6401, 216
        %v6429 = vadd.s32 %v6401, 224
        %v6430 = vadd.s32 %v6401, 232
        %v6431 = vadd.s32 %v6401, 240
        %v6432 = vadd.s32 %v6401, 248
        %v6433 = vadd.s32 %v6401, 256
        %v6434 = vadd.s32 %v6401, 264
        %v6435 = vadd.s32 %v6401, 272
        %v6436 = vadd.s32 %v6401, 280
        %v6437 = vadd.s32 %v6401, 288
        %v6438 = vadd.s32 %v6401, 296
        %v6439 = vadd.s32 %v6401, 304
        %v6440 = vadd.s32 %v6401, 312
        %v6441 = vadd.s32 %v6401, 320
        %v6442 = vadd.s32 %v6401, 328
        %v6443 = vadd.s32 %v6401, 336
        %v6444 = vadd.s32 %v6401, 344
        %v6445 = vadd.s32 %v6401, 352
        %v6446 = vadd.s32 %v6401, 360
        %v6447 = vadd.s32 %v6401, 368
        %v6448 = vadd.s32 %v6401, 376
        %v6449 = vadd.s32 %v6401, 384
        %v6450 = vadd.s32 %v6401, 392
        %v6451 = vadd.s32 %v6401, 400
        %v6452 = vadd.s32 %v6401, 408
        %v6453 = vadd.s32 %v6401, 416
        %v6454 = vadd.s32 %v6401, 424
        %v6455 = vadd.s32 %v6401, 432
        %v6456 = vadd.s32 %v6401, 440
        %v6457 = vadd.s32 %v6401, 448
        %v6458 = vadd.s32 %v6401, 456
        %v6459 = vadd.s32 %v6401, 464
        %v6460 = vadd.s32 %v6401, 472
        %v6461 = vadd.s32 %v6401, 480
        %v6462 = vadd.s32 %v6401, 488
        %v6463 = vadd.s32 %v6401, 496
        %v6464 = vadd.s32 %v6401, 504
        %v6465 = vadd.s32 %v6401, 512
        %v6466 = vadd.s32 %v6401, 520
        %v6467 = vadd.s32 %v6401, 528
        %v6468 = vadd.s32 %v6401, 536
        %v6469 = vadd.s32 %v6401, 544
        %v6470 = vadd.s32 %v6401, 552
        %v6471 = vadd.s32 %v6401, 560
        %v6472 = vadd.s32 %v6401, 568
        %v6473 = vadd.s32 %v6401, 576
        %v6474 = vadd.s32 %v6401, 584
        %v6475 = vadd.s32 %v6401, 592
        %v6476 = vadd.s32 %v6401, 600
        %v6477 = vadd.s32 %v6401, 608
        %v6478 = vadd.s32 %v6401, 616
        %v6479 = vadd.s32 %v6401, 624
        %v6480 = vadd.s32 %v6401, 632
        %v6481 = vadd.s32 %v6401, 640
        %v6482 = vadd.s32 %v6401, 648
        %v6483 = vadd.s32 %v6401, 656
        %v6484 = vadd.s32 %v6401, 664
        %v6485 = vadd.s32 %v6401, 672
        %v6486 = vadd.s32 %v6401, 680
        %v6487 = vadd.s32 %v6401, 688
        %v6488 = vadd.s32 %v6401, 696
        %v6489 = vadd.s32 %v6401, 704
        %v6490 = vadd.s32 %v6401, 712
        %v6491 = vadd.s32 %v6401, 720
        %v6492 = vadd.s32 %v6401, 728
        %v6493 = vadd.s32 %v6401, 736
        %v6494 = vadd.s32 %v6401, 744
        %v6495 = vadd.s32 %v6401, 752
        %v6496 = vadd.s32 %v6401, 760
        %v6497 = vadd.s32 %v6401, 768
        %v6498 = vadd.s32 %v6401, 776
        %v6499 = vadd.s32 %v6401, 784
        %v6500 = vadd.s32 %v6401, 792
        %v6501 = vadd.s32 %v6401, 800
        %v6502 = vadd.s32 %v6401, 808
        %v6503 = vadd.s32 %v6401, 816
        %v6504 = vadd.s32 %v6401, 824
        %v6505 = vadd.s32 %v6401, 832
        %v6506 = vadd.s32 %v6401, 840
        %v6507 = vadd.s32 %v6401, 848
        %v6508 = vadd.s32 %v6401, 856
        %v6509 = vadd.s32 %v6401, 864
        %v6510 = vadd.s32 %v6401, 872
        %v6511 = vadd.s32 %v6401, 880
        %v6512 = vadd.s32 %v6401, 888
        %v6513 = vadd.s32 %v6401, 896
        %v6514 = vadd.s32 %v6401, 904
        %v6515 = vadd.s32 %v6401, 912
        %v6516 = vadd.s32 %v6401, 920
        %v6517 = vadd.s32 %v6401, 928
        %v6518 = vadd.s32 %v6401, 936
        %v6519 = vadd.s32 %v6401, 944
        %v6520 = vadd.s32 %v6401, 952
        %v6521 = vadd.s32 %v6401, 960
        %v6522 = vadd.s32 %v6401, 968
        %v6523 = vadd.s32 %v6401, 976
        %v6524 = vadd.s32 %v6401, 984
        %v6525 = vadd.s32 %v6401, 992
        %v6526 = vadd.s32 %v6401, 1000
        %v6527 = vadd.s32 %v6401, 1008
        %v6528 = vadd.s32 %v6401, 1016
        %v6529 = vstv %s6399
        %v6530 = vadd.s32 %v6529, %v6401
        %v6531 = vadd.s32 %v6529, %v6402
        %v6532 = vadd.s32 %v6529, %v6403
        %v6533 = vadd.s32 %v6529, %v6404
        %v6534 = vadd.s32 %v6529, %v6405
        %v6535 = vadd.s32 %v6529, %v6406
        %v6536 = vadd.s32 %v6529, %v6407
        %v6537 = vadd.s32 %v6529, %v6408
        %v6538 = vadd.s32 %v6529, %v6409
        %v6539 = vadd.s32 %v6529, %v6410
        %v6540 = vadd.s32 %v6529, %v6411
        %v6541 = vadd.s32 %v6529, %v6412
        %v6542 = vadd.s32 %v6529, %v6413
        %v6543 = vadd.s32 %v6529, %v6414
        %v6544 = vadd.s32 %v6529, %v6415
        %v6545 = vadd.s32 %v6529, %v6416
        %v6546 = vadd.s32 %v6529, %v6417
        %v6547 = vadd.s32 %v6529, %v6418
        %v6548 = vadd.s32 %v6529, %v6419
        %v6549 = vadd.s32 %v6529, %v6420
        %v6550 = vadd.s32 %v6529, %v6421
        %v6551 = vadd.s32 %v6529, %v6422
        %v6552 = vadd.s32 %v6529, %v6423
        %v6553 = vadd.s32 %v6529, %v6424
        %v6554 = vadd.s32 %v6529, %v6425
        %v6555 = vadd.s32 %v6529, %v6426
        %v6556 = vadd.s32 %v6529, %v6427
        %v6557 = vadd.s32 %v6529, %v6428
        %v6558 = vadd.s32 %v6529, %v6429
        %v6559 = vadd.s32 %v6529, %v6430
        %v6560 = vadd.s32 %v6529, %v6431
        %v6561 = vadd.s32 %v6529, %v6432
        %v6562 = vadd.s32 %v6529, %v6433
        %v6563 = vadd.s32 %v6529, %v6434
        %v6564 = vadd.s32 %v6529, %v6435
        %v6565 = vadd.s32 %v6529, %v6436
        %v6566 = vadd.s32 %v6529, %v6437
        %v6567 = vadd.s32 %v6529, %v6438
        %v6568 = vadd.s32 %v6529, %v6439
        %v6569 = vadd.s32 %v6529, %v6440
        %v6570 = vadd.s32 %v6529, %v6441
        %v6571 = vadd.s32 %v6529, %v6442
        %v6572 = vadd.s32 %v6529, %v6443
        %v6573 = vadd.s32 %v6529, %v6444
        %v6574 = vadd.s32 %v6529, %v6445
        %v6575 = vadd.s32 %v6529, %v6446
        %v6576 = vadd.s32 %v6529, %v6447
        %v6577 = vadd.s32 %v6529, %v6448
        %v6578 = vadd.s32 %v6529, %v6449
        %v6579 = vadd.s32 %v6529, %v6450
        %v6580 = vadd.s32 %v6529, %v6451
        %v6581 = vadd.s32 %v6529, %v6452
        %v6582 = vadd.s32 %v6529, %v6453
        %v6583 = vadd.s32 %v6529, %v6454
        %v6584 = vadd.s32 %v6529, %v6455
        %v6585 = vadd.s32 %v6529, %v6456
        %v6586 = vadd.s32 %v6529, %v6457
        %v6587 = vadd.s32 %v6529, %v6458
        %v6588 = vadd.s32 %v6529, %v6459
        %v6589 = vadd.s32 %v6529, %v6460
        %v6590 = vadd.s32 %v6529, %v6461
        %v6591 = vadd.s32 %v6529, %v6462
        %v6592 = vadd.s32 %v6529, %v6463
        %v6593 = vadd.s32 %v6529, %v6464
        %v6594 = vadd.s32 %v6529, %v6465
        %v6595 = vadd.s32 %v6529, %v6466
        %v6596 = vadd.s32 %v6529, %v6467
        %v6597 = vadd.s32 %v6529, %v6468
        %v6598 = vadd.s32 %v6529, %v6469
        %v6599 = vadd.s32 %v6529, %v6470
        %v6600 = vadd.s32 %v6529, %v6471
        %v6601 = vadd.s32 %v6529, %v6472
        %v6602 = vadd.s32 %v6529, %v6473
        %v6603 = vadd.s32 %v6529, %v6474
        %v6604 = vadd.s32 %v6529, %v6475
        %v6605 = vadd.s32 %v6529, %v6476
        %v6606 = vadd.s32 %v6529, %v6477
        %v6607 = vadd.s32 %v6529, %v6478
        %v6608 = vadd.s32 %v6529, %v6479
        %v6609 = vadd.s32 %v6529, %v6480
        %v6610 = vadd.s32 %v6529, %v6481
        %v6611 = vadd.s32 %v6529, %v6482
        %v6612 = vadd.s32 %v6529, %v6483
        %v6613 = vadd.s32 %v6529, %v6484
        %v6614 = vadd.s32 %v6529, %v6485
        %v6615 = vadd.s32 %v6529, %v6486
        %v6616 = vadd.s32 %v6529, %v6487
        %v6617 = vadd.s32 %v6529, %v6488
        %v6618 = vadd.s32 %v6529, %v6489
        %v6619 = vadd.s32 %v6529, %v6490
        %v6620 = vadd.s32 %v6529, %v6491
        %v6621 = vadd.s32 %v6529, %v6492
        %v6622 = vadd.s32 %v6529, %v6493
        %v6623 = vadd.s32 %v6529, %v6494
        %v6624 = vadd.s32 %v6529, %v6495
        %v6625 = vadd.s32 %v6529, %v6496
        %v6626 = vadd.s32 %v6529, %v6497
        %v6627 = vadd.s32 %v6529, %v6498
        %v6628 = vadd.s32 %v6529, %v6499
        %v6629 = vadd.s32 %v6529, %v6500
        %v6630 = vadd.s32 %v6529, %v6501
        %v6631 = vadd.s32 %v6529, %v6502
        %v6632 = vadd.s32 %v6529, %v6503
        %v6633 = vadd.s32 %v6529, %v6504
        %v6634 = vadd.s32 %v6529, %v6505
        %v6635 = vadd.s32 %v6529, %v6506
        %v6636 = vadd.s32 %v6529, %v6507
        %v6637 = vadd.s32 %v6529, %v6508
        %v6638 = vadd.s32 %v6529, %v6509
        %v6639 = vadd.s32 %v6529, %v6510
        %v6640 = vadd.s32 %v6529, %v6511
        %v6641 = vadd.s32 %v6529, %v6512
        %v6642 = vadd.s32 %v6529, %v6513
        %v6643 = vadd.s32 %v6529, %v6514
        %v6644 = vadd.s32 %v6529, %v6515
        %v6645 = vadd.s32 %v6529, %v6516
        %v6646 = vadd.s32 %v6529, %v6517
        %v6647 = vadd.s32 %v6529, %v6518
        %v6648 = vadd.s32 %v6529, %v6519
        %v6649 = vadd.s32 %v6529, %v6520
        %v6650 = vadd.s32 %v6529, %v6521
        %v6651 = vadd.s32 %v6529, %v6522
        %v6652 = vadd.s32 %v6529, %v6523
        %v6653 = vadd.s32 %v6529, %v6524
        %v6654 = vadd.s32 %v6529, %v6525
        %v6655 = vadd.s32 %v6529, %v6526
        %v6656 = vadd.s32 %v6529, %v6527
        %v6657 = vadd.s32 %v6529, %v6528
        %vm6658 = vcmp.lt.s32.totalorder %v6530, 8
        %vm6659 = vcmp.lt.s32.totalorder %v6531, 8
        %vm6660 = vcmp.lt.s32.totalorder %v6532, 8
        %vm6661 = vcmp.lt.s32.totalorder %v6533, 8
        %vm6662 = vcmp.lt.s32.totalorder %v6534, 8
        %vm6663 = vcmp.lt.s32.totalorder %v6535, 8
        %vm6664 = vcmp.lt.s32.totalorder %v6536, 8
        %vm6665 = vcmp.lt.s32.totalorder %v6537, 8
        %vm6666 = vcmp.lt.s32.totalorder %v6538, 8
        %vm6667 = vcmp.lt.s32.totalorder %v6539, 8
        %vm6668 = vcmp.lt.s32.totalorder %v6540, 8
        %vm6669 = vcmp.lt.s32.totalorder %v6541, 8
        %vm6670 = vcmp.lt.s32.totalorder %v6542, 8
        %vm6671 = vcmp.lt.s32.totalorder %v6543, 8
        %vm6672 = vcmp.lt.s32.totalorder %v6544, 8
        %vm6673 = vcmp.lt.s32.totalorder %v6545, 8
        %vm6674 = vcmp.lt.s32.totalorder %v6546, 8
        %vm6675 = vcmp.lt.s32.totalorder %v6547, 8
        %vm6676 = vcmp.lt.s32.totalorder %v6548, 8
        %vm6677 = vcmp.lt.s32.totalorder %v6549, 8
        %vm6678 = vcmp.lt.s32.totalorder %v6550, 8
        %vm6679 = vcmp.lt.s32.totalorder %v6551, 8
        %vm6680 = vcmp.lt.s32.totalorder %v6552, 8
        %vm6681 = vcmp.lt.s32.totalorder %v6553, 8
        %vm6682 = vcmp.lt.s32.totalorder %v6554, 8
        %vm6683 = vcmp.lt.s32.totalorder %v6555, 8
        %vm6684 = vcmp.lt.s32.totalorder %v6556, 8
        %vm6685 = vcmp.lt.s32.totalorder %v6557, 8
        %vm6686 = vcmp.lt.s32.totalorder %v6558, 8
        %vm6687 = vcmp.lt.s32.totalorder %v6559, 8
        %vm6688 = vcmp.lt.s32.totalorder %v6560, 8
        %vm6689 = vcmp.lt.s32.totalorder %v6561, 8
        %vm6690 = vcmp.lt.s32.totalorder %v6562, 8
        %vm6691 = vcmp.lt.s32.totalorder %v6563, 8
        %vm6692 = vcmp.lt.s32.totalorder %v6564, 8
        %vm6693 = vcmp.lt.s32.totalorder %v6565, 8
        %vm6694 = vcmp.lt.s32.totalorder %v6566, 8
        %vm6695 = vcmp.lt.s32.totalorder %v6567, 8
        %vm6696 = vcmp.lt.s32.totalorder %v6568, 8
        %vm6697 = vcmp.lt.s32.totalorder %v6569, 8
        %vm6698 = vcmp.lt.s32.totalorder %v6570, 8
        %vm6699 = vcmp.lt.s32.totalorder %v6571, 8
        %vm6700 = vcmp.lt.s32.totalorder %v6572, 8
        %vm6701 = vcmp.lt.s32.totalorder %v6573, 8
        %vm6702 = vcmp.lt.s32.totalorder %v6574, 8
        %vm6703 = vcmp.lt.s32.totalorder %v6575, 8
        %vm6704 = vcmp.lt.s32.totalorder %v6576, 8
        %vm6705 = vcmp.lt.s32.totalorder %v6577, 8
        %vm6706 = vcmp.lt.s32.totalorder %v6578, 8
        %vm6707 = vcmp.lt.s32.totalorder %v6579, 8
        %vm6708 = vcmp.lt.s32.totalorder %v6580, 8
        %vm6709 = vcmp.lt.s32.totalorder %v6581, 8
        %vm6710 = vcmp.lt.s32.totalorder %v6582, 8
        %vm6711 = vcmp.lt.s32.totalorder %v6583, 8
        %vm6712 = vcmp.lt.s32.totalorder %v6584, 8
        %vm6713 = vcmp.lt.s32.totalorder %v6585, 8
        %vm6714 = vcmp.lt.s32.totalorder %v6586, 8
        %vm6715 = vcmp.lt.s32.totalorder %v6587, 8
        %vm6716 = vcmp.lt.s32.totalorder %v6588, 8
        %vm6717 = vcmp.lt.s32.totalorder %v6589, 8
        %vm6718 = vcmp.lt.s32.totalorder %v6590, 8
        %vm6719 = vcmp.lt.s32.totalorder %v6591, 8
        %vm6720 = vcmp.lt.s32.totalorder %v6592, 8
        %vm6721 = vcmp.lt.s32.totalorder %v6593, 8
        %vm6722 = vcmp.lt.s32.totalorder %v6594, 8
        %vm6723 = vcmp.lt.s32.totalorder %v6595, 8
        %vm6724 = vcmp.lt.s32.totalorder %v6596, 8
        %vm6725 = vcmp.lt.s32.totalorder %v6597, 8
        %vm6726 = vcmp.lt.s32.totalorder %v6598, 8
        %vm6727 = vcmp.lt.s32.totalorder %v6599, 8
        %vm6728 = vcmp.lt.s32.totalorder %v6600, 8
        %vm6729 = vcmp.lt.s32.totalorder %v6601, 8
        %vm6730 = vcmp.lt.s32.totalorder %v6602, 8
        %vm6731 = vcmp.lt.s32.totalorder %v6603, 8
        %vm6732 = vcmp.lt.s32.totalorder %v6604, 8
        %vm6733 = vcmp.lt.s32.totalorder %v6605, 8
        %vm6734 = vcmp.lt.s32.totalorder %v6606, 8
        %vm6735 = vcmp.lt.s32.totalorder %v6607, 8
        %vm6736 = vcmp.lt.s32.totalorder %v6608, 8
        %vm6737 = vcmp.lt.s32.totalorder %v6609, 8
        %vm6738 = vcmp.lt.s32.totalorder %v6610, 8
        %vm6739 = vcmp.lt.s32.totalorder %v6611, 8
        %vm6740 = vcmp.lt.s32.totalorder %v6612, 8
        %vm6741 = vcmp.lt.s32.totalorder %v6613, 8
        %vm6742 = vcmp.lt.s32.totalorder %v6614, 8
        %vm6743 = vcmp.lt.s32.totalorder %v6615, 8
        %vm6744 = vcmp.lt.s32.totalorder %v6616, 8
        %vm6745 = vcmp.lt.s32.totalorder %v6617, 8
        %vm6746 = vcmp.lt.s32.totalorder %v6618, 8
        %vm6747 = vcmp.lt.s32.totalorder %v6619, 8
        %vm6748 = vcmp.lt.s32.totalorder %v6620, 8
        %vm6749 = vcmp.lt.s32.totalorder %v6621, 8
        %vm6750 = vcmp.lt.s32.totalorder %v6622, 8
        %vm6751 = vcmp.lt.s32.totalorder %v6623, 8
        %vm6752 = vcmp.lt.s32.totalorder %v6624, 8
        %vm6753 = vcmp.lt.s32.totalorder %v6625, 8
        %vm6754 = vcmp.lt.s32.totalorder %v6626, 8
        %vm6755 = vcmp.lt.s32.totalorder %v6627, 8
        %vm6756 = vcmp.lt.s32.totalorder %v6628, 8
        %vm6757 = vcmp.lt.s32.totalorder %v6629, 8
        %vm6758 = vcmp.lt.s32.totalorder %v6630, 8
        %vm6759 = vcmp.lt.s32.totalorder %v6631, 8
        %vm6760 = vcmp.lt.s32.totalorder %v6632, 8
        %vm6761 = vcmp.lt.s32.totalorder %v6633, 8
        %vm6762 = vcmp.lt.s32.totalorder %v6634, 8
        %vm6763 = vcmp.lt.s32.totalorder %v6635, 8
        %vm6764 = vcmp.lt.s32.totalorder %v6636, 8
        %vm6765 = vcmp.lt.s32.totalorder %v6637, 8
        %vm6766 = vcmp.lt.s32.totalorder %v6638, 8
        %vm6767 = vcmp.lt.s32.totalorder %v6639, 8
        %vm6768 = vcmp.lt.s32.totalorder %v6640, 8
        %vm6769 = vcmp.lt.s32.totalorder %v6641, 8
        %vm6770 = vcmp.lt.s32.totalorder %v6642, 8
        %vm6771 = vcmp.lt.s32.totalorder %v6643, 8
        %vm6772 = vcmp.lt.s32.totalorder %v6644, 8
        %vm6773 = vcmp.lt.s32.totalorder %v6645, 8
        %vm6774 = vcmp.lt.s32.totalorder %v6646, 8
        %vm6775 = vcmp.lt.s32.totalorder %v6647, 8
        %vm6776 = vcmp.lt.s32.totalorder %v6648, 8
        %vm6777 = vcmp.lt.s32.totalorder %v6649, 8
        %vm6778 = vcmp.lt.s32.totalorder %v6650, 8
        %vm6779 = vcmp.lt.s32.totalorder %v6651, 8
        %vm6780 = vcmp.lt.s32.totalorder %v6652, 8
        %vm6781 = vcmp.lt.s32.totalorder %v6653, 8
        %vm6782 = vcmp.lt.s32.totalorder %v6654, 8
        %vm6783 = vcmp.lt.s32.totalorder %v6655, 8
        %vm6784 = vcmp.lt.s32.totalorder %v6656, 8
        %vm6785 = vcmp.lt.s32.totalorder %v6657, 8
        %v6786 = vsel %vm6658, %v6270, 0.0
        %v6787 = vsel %vm6659, %v6271, 0.0
        %v6788 = vsel %vm6660, %v6272, 0.0
        %v6789 = vsel %vm6661, %v6273, 0.0
        %v6790 = vsel %vm6662, %v6274, 0.0
        %v6791 = vsel %vm6663, %v6275, 0.0
        %v6792 = vsel %vm6664, %v6276, 0.0
        %v6793 = vsel %vm6665, %v6277, 0.0
        %v6794 = vsel %vm6666, %v6278, 0.0
        %v6795 = vsel %vm6667, %v6279, 0.0
        %v6796 = vsel %vm6668, %v6280, 0.0
        %v6797 = vsel %vm6669, %v6281, 0.0
        %v6798 = vsel %vm6670, %v6282, 0.0
        %v6799 = vsel %vm6671, %v6283, 0.0
        %v6800 = vsel %vm6672, %v6284, 0.0
        %v6801 = vsel %vm6673, %v6285, 0.0
        %v6802 = vsel %vm6674, %v6286, 0.0
        %v6803 = vsel %vm6675, %v6287, 0.0
        %v6804 = vsel %vm6676, %v6288, 0.0
        %v6805 = vsel %vm6677, %v6289, 0.0
        %v6806 = vsel %vm6678, %v6290, 0.0
        %v6807 = vsel %vm6679, %v6291, 0.0
        %v6808 = vsel %vm6680, %v6292, 0.0
        %v6809 = vsel %vm6681, %v6293, 0.0
        %v6810 = vsel %vm6682, %v6294, 0.0
        %v6811 = vsel %vm6683, %v6295, 0.0
        %v6812 = vsel %vm6684, %v6296, 0.0
        %v6813 = vsel %vm6685, %v6297, 0.0
        %v6814 = vsel %vm6686, %v6298, 0.0
        %v6815 = vsel %vm6687, %v6299, 0.0
        %v6816 = vsel %vm6688, %v6300, 0.0
        %v6817 = vsel %vm6689, %v6301, 0.0
        %v6818 = vsel %vm6690, %v6302, 0.0
        %v6819 = vsel %vm6691, %v6303, 0.0
        %v6820 = vsel %vm6692, %v6304, 0.0
        %v6821 = vsel %vm6693, %v6305, 0.0
        %v6822 = vsel %vm6694, %v6306, 0.0
        %v6823 = vsel %vm6695, %v6307, 0.0
        %v6824 = vsel %vm6696, %v6308, 0.0
        %v6825 = vsel %vm6697, %v6309, 0.0
        %v6826 = vsel %vm6698, %v6310, 0.0
        %v6827 = vsel %vm6699, %v6311, 0.0
        %v6828 = vsel %vm6700, %v6312, 0.0
        %v6829 = vsel %vm6701, %v6313, 0.0
        %v6830 = vsel %vm6702, %v6314, 0.0
        %v6831 = vsel %vm6703, %v6315, 0.0
        %v6832 = vsel %vm6704, %v6316, 0.0
        %v6833 = vsel %vm6705, %v6317, 0.0
        %v6834 = vsel %vm6706, %v6318, 0.0
        %v6835 = vsel %vm6707, %v6319, 0.0
        %v6836 = vsel %vm6708, %v6320, 0.0
        %v6837 = vsel %vm6709, %v6321, 0.0
        %v6838 = vsel %vm6710, %v6322, 0.0
        %v6839 = vsel %vm6711, %v6323, 0.0
        %v6840 = vsel %vm6712, %v6324, 0.0
        %v6841 = vsel %vm6713, %v6325, 0.0
        %v6842 = vsel %vm6714, %v6326, 0.0
        %v6843 = vsel %vm6715, %v6327, 0.0
        %v6844 = vsel %vm6716, %v6328, 0.0
        %v6845 = vsel %vm6717, %v6329, 0.0
        %v6846 = vsel %vm6718, %v6330, 0.0
        %v6847 = vsel %vm6719, %v6331, 0.0
        %v6848 = vsel %vm6720, %v6332, 0.0
        %v6849 = vsel %vm6721, %v6333, 0.0
        %v6850 = vsel %vm6722, %v6334, 0.0
        %v6851 = vsel %vm6723, %v6335, 0.0
        %v6852 = vsel %vm6724, %v6336, 0.0
        %v6853 = vsel %vm6725, %v6337, 0.0
        %v6854 = vsel %vm6726, %v6338, 0.0
        %v6855 = vsel %vm6727, %v6339, 0.0
        %v6856 = vsel %vm6728, %v6340, 0.0
        %v6857 = vsel %vm6729, %v6341, 0.0
        %v6858 = vsel %vm6730, %v6342, 0.0
        %v6859 = vsel %vm6731, %v6343, 0.0
        %v6860 = vsel %vm6732, %v6344, 0.0
        %v6861 = vsel %vm6733, %v6345, 0.0
        %v6862 = vsel %vm6734, %v6346, 0.0
        %v6863 = vsel %vm6735, %v6347, 0.0
        %v6864 = vsel %vm6736, %v6348, 0.0
        %v6865 = vsel %vm6737, %v6349, 0.0
        %v6866 = vsel %vm6738, %v6350, 0.0
        %v6867 = vsel %vm6739, %v6351, 0.0
        %v6868 = vsel %vm6740, %v6352, 0.0
        %v6869 = vsel %vm6741, %v6353, 0.0
        %v6870 = vsel %vm6742, %v6354, 0.0
        %v6871 = vsel %vm6743, %v6355, 0.0
        %v6872 = vsel %vm6744, %v6356, 0.0
        %v6873 = vsel %vm6745, %v6357, 0.0
        %v6874 = vsel %vm6746, %v6358, 0.0
        %v6875 = vsel %vm6747, %v6359, 0.0
        %v6876 = vsel %vm6748, %v6360, 0.0
        %v6877 = vsel %vm6749, %v6361, 0.0
        %v6878 = vsel %vm6750, %v6362, 0.0
        %v6879 = vsel %vm6751, %v6363, 0.0
        %v6880 = vsel %vm6752, %v6364, 0.0
        %v6881 = vsel %vm6753, %v6365, 0.0
        %v6882 = vsel %vm6754, %v6366, 0.0
        %v6883 = vsel %vm6755, %v6367, 0.0
        %v6884 = vsel %vm6756, %v6368, 0.0
        %v6885 = vsel %vm6757, %v6369, 0.0
        %v6886 = vsel %vm6758, %v6370, 0.0
        %v6887 = vsel %vm6759, %v6371, 0.0
        %v6888 = vsel %vm6760, %v6372, 0.0
        %v6889 = vsel %vm6761, %v6373, 0.0
        %v6890 = vsel %vm6762, %v6374, 0.0
        %v6891 = vsel %vm6763, %v6375, 0.0
        %v6892 = vsel %vm6764, %v6376, 0.0
        %v6893 = vsel %vm6765, %v6377, 0.0
        %v6894 = vsel %vm6766, %v6378, 0.0
        %v6895 = vsel %vm6767, %v6379, 0.0
        %v6896 = vsel %vm6768, %v6380, 0.0
        %v6897 = vsel %vm6769, %v6381, 0.0
        %v6898 = vsel %vm6770, %v6382, 0.0
        %v6899 = vsel %vm6771, %v6383, 0.0
        %v6900 = vsel %vm6772, %v6384, 0.0
        %v6901 = vsel %vm6773, %v6385, 0.0
        %v6902 = vsel %vm6774, %v6386, 0.0
        %v6903 = vsel %vm6775, %v6387, 0.0
        %v6904 = vsel %vm6776, %v6388, 0.0
        %v6905 = vsel %vm6777, %v6389, 0.0
        %v6906 = vsel %vm6778, %v6390, 0.0
        %v6907 = vsel %vm6779, %v6391, 0.0
        %v6908 = vsel %vm6780, %v6392, 0.0
        %v6909 = vsel %vm6781, %v6393, 0.0
        %v6910 = vsel %vm6782, %v6394, 0.0
        %v6911 = vsel %vm6783, %v6395, 0.0
        %v6912 = vsel %vm6784, %v6396, 0.0
        %v6913 = vsel %vm6785, %v6397, 0.0
        %v6914 = vld [vmem:[#allocation2] sm:$0xff]
        %v6915 = vld [vmem:[#allocation2 + $0x8] sm:$0xff]
        %v6916 = vld [vmem:[#allocation2 + $0x10] sm:$0xff]
        %v6917 = vld [vmem:[#allocation2 + $0x18] sm:$0xff]
        %v6918 = vld [vmem:[#allocation2 + $0x20] sm:$0xff]
        %v6919 = vld [vmem:[#allocation2 + $0x28] sm:$0xff]
        %v6920 = vld [vmem:[#allocation2 + $0x30] sm:$0xff]
        %v6921 = vld [vmem:[#allocation2 + $0x38] sm:$0xff]
        %v6922 = vld [vmem:[#allocation2 + $0x40] sm:$0xff]
        %v6923 = vld [vmem:[#allocation2 + $0x48] sm:$0xff]
        %v6924 = vld [vmem:[#allocation2 + $0x50] sm:$0xff]
        %v6925 = vld [vmem:[#allocation2 + $0x58] sm:$0xff]
        %v6926 = vld [vmem:[#allocation2 + $0x60] sm:$0xff]
        %v6927 = vld [vmem:[#allocation2 + $0x68] sm:$0xff]
        %v6928 = vld [vmem:[#allocation2 + $0x70] sm:$0xff]
        %v6929 = vld [vmem:[#allocation2 + $0x78] sm:$0xff]
        %v6930 = vld [vmem:[#allocation2 + $0x80] sm:$0xff]
        %v6931 = vld [vmem:[#allocation2 + $0x88] sm:$0xff]
        %v6932 = vld [vmem:[#allocation2 + $0x90] sm:$0xff]
        %v6933 = vld [vmem:[#allocation2 + $0x98] sm:$0xff]
        %v6934 = vld [vmem:[#allocation2 + $0xa0] sm:$0xff]
        %v6935 = vld [vmem:[#allocation2 + $0xa8] sm:$0xff]
        %v6936 = vld [vmem:[#allocation2 + $0xb0] sm:$0xff]
        %v6937 = vld [vmem:[#allocation2 + $0xb8] sm:$0xff]
        %v6938 = vld [vmem:[#allocation2 + $0xc0] sm:$0xff]
        %v6939 = vld [vmem:[#allocation2 + $0xc8] sm:$0xff]
        %v6940 = vld [vmem:[#allocation2 + $0xd0] sm:$0xff]
        %v6941 = vld [vmem:[#allocation2 + $0xd8] sm:$0xff]
        %v6942 = vld [vmem:[#allocation2 + $0xe0] sm:$0xff]
        %v6943 = vld [vmem:[#allocation2 + $0xe8] sm:$0xff]
        %v6944 = vld [vmem:[#allocation2 + $0xf0] sm:$0xff]
        %v6945 = vld [vmem:[#allocation2 + $0xf8] sm:$0xff]
        %v6946 = vld [vmem:[#allocation2 + $0x100] sm:$0xff]
        %v6947 = vld [vmem:[#allocation2 + $0x108] sm:$0xff]
        %v6948 = vld [vmem:[#allocation2 + $0x110] sm:$0xff]
        %v6949 = vld [vmem:[#allocation2 + $0x118] sm:$0xff]
        %v6950 = vld [vmem:[#allocation2 + $0x120] sm:$0xff]
        %v6951 = vld [vmem:[#allocation2 + $0x128] sm:$0xff]
        %v6952 = vld [vmem:[#allocation2 + $0x130] sm:$0xff]
        %v6953 = vld [vmem:[#allocation2 + $0x138] sm:$0xff]
        %v6954 = vld [vmem:[#allocation2 + $0x140] sm:$0xff]
        %v6955 = vld [vmem:[#allocation2 + $0x148] sm:$0xff]
        %v6956 = vld [vmem:[#allocation2 + $0x150] sm:$0xff]
        %v6957 = vld [vmem:[#allocation2 + $0x158] sm:$0xff]
        %v6958 = vld [vmem:[#allocation2 + $0x160] sm:$0xff]
        %v6959 = vld [vmem:[#allocation2 + $0x168] sm:$0xff]
        %v6960 = vld [vmem:[#allocation2 + $0x170] sm:$0xff]
        %v6961 = vld [vmem:[#allocation2 + $0x178] sm:$0xff]
        %v6962 = vld [vmem:[#allocation2 + $0x180] sm:$0xff]
        %v6963 = vld [vmem:[#allocation2 + $0x188] sm:$0xff]
        %v6964 = vld [vmem:[#allocation2 + $0x190] sm:$0xff]
        %v6965 = vld [vmem:[#allocation2 + $0x198] sm:$0xff]
        %v6966 = vld [vmem:[#allocation2 + $0x1a0] sm:$0xff]
        %v6967 = vld [vmem:[#allocation2 + $0x1a8] sm:$0xff]
        %v6968 = vld [vmem:[#allocation2 + $0x1b0] sm:$0xff]
        %v6969 = vld [vmem:[#allocation2 + $0x1b8] sm:$0xff]
        %v6970 = vld [vmem:[#allocation2 + $0x1c0] sm:$0xff]
        %v6971 = vld [vmem:[#allocation2 + $0x1c8] sm:$0xff]
        %v6972 = vld [vmem:[#allocation2 + $0x1d0] sm:$0xff]
        %v6973 = vld [vmem:[#allocation2 + $0x1d8] sm:$0xff]
        %v6974 = vld [vmem:[#allocation2 + $0x1e0] sm:$0xff]
        %v6975 = vld [vmem:[#allocation2 + $0x1e8] sm:$0xff]
        %v6976 = vld [vmem:[#allocation2 + $0x1f0] sm:$0xff]
        %v6977 = vld [vmem:[#allocation2 + $0x1f8] sm:$0xff]
        %v6978 = vld [vmem:[#allocation2 + $0x200] sm:$0xff]
        %v6979 = vld [vmem:[#allocation2 + $0x208] sm:$0xff]
        %v6980 = vld [vmem:[#allocation2 + $0x210] sm:$0xff]
        %v6981 = vld [vmem:[#allocation2 + $0x218] sm:$0xff]
        %v6982 = vld [vmem:[#allocation2 + $0x220] sm:$0xff]
        %v6983 = vld [vmem:[#allocation2 + $0x228] sm:$0xff]
        %v6984 = vld [vmem:[#allocation2 + $0x230] sm:$0xff]
        %v6985 = vld [vmem:[#allocation2 + $0x238] sm:$0xff]
        %v6986 = vld [vmem:[#allocation2 + $0x240] sm:$0xff]
        %v6987 = vld [vmem:[#allocation2 + $0x248] sm:$0xff]
        %v6988 = vld [vmem:[#allocation2 + $0x250] sm:$0xff]
        %v6989 = vld [vmem:[#allocation2 + $0x258] sm:$0xff]
        %v6990 = vld [vmem:[#allocation2 + $0x260] sm:$0xff]
        %v6991 = vld [vmem:[#allocation2 + $0x268] sm:$0xff]
        %v6992 = vld [vmem:[#allocation2 + $0x270] sm:$0xff]
        %v6993 = vld [vmem:[#allocation2 + $0x278] sm:$0xff]
        %v6994 = vld [vmem:[#allocation2 + $0x280] sm:$0xff]
        %v6995 = vld [vmem:[#allocation2 + $0x288] sm:$0xff]
        %v6996 = vld [vmem:[#allocation2 + $0x290] sm:$0xff]
        %v6997 = vld [vmem:[#allocation2 + $0x298] sm:$0xff]
        %v6998 = vld [vmem:[#allocation2 + $0x2a0] sm:$0xff]
        %v6999 = vld [vmem:[#allocation2 + $0x2a8] sm:$0xff]
        %v7000 = vld [vmem:[#allocation2 + $0x2b0] sm:$0xff]
        %v7001 = vld [vmem:[#allocation2 + $0x2b8] sm:$0xff]
        %v7002 = vld [vmem:[#allocation2 + $0x2c0] sm:$0xff]
        %v7003 = vld [vmem:[#allocation2 + $0x2c8] sm:$0xff]
        %v7004 = vld [vmem:[#allocation2 + $0x2d0] sm:$0xff]
        %v7005 = vld [vmem:[#allocation2 + $0x2d8] sm:$0xff]
        %v7006 = vld [vmem:[#allocation2 + $0x2e0] sm:$0xff]
        %v7007 = vld [vmem:[#allocation2 + $0x2e8] sm:$0xff]
        %v7008 = vld [vmem:[#allocation2 + $0x2f0] sm:$0xff]
        %v7009 = vld [vmem:[#allocation2 + $0x2f8] sm:$0xff]
        %v7010 = vld [vmem:[#allocation2 + $0x300] sm:$0xff]
        %v7011 = vld [vmem:[#allocation2 + $0x308] sm:$0xff]
        %v7012 = vld [vmem:[#allocation2 + $0x310] sm:$0xff]
        %v7013 = vld [vmem:[#allocation2 + $0x318] sm:$0xff]
        %v7014 = vld [vmem:[#allocation2 + $0x320] sm:$0xff]
        %v7015 = vld [vmem:[#allocation2 + $0x328] sm:$0xff]
        %v7016 = vld [vmem:[#allocation2 + $0x330] sm:$0xff]
        %v7017 = vld [vmem:[#allocation2 + $0x338] sm:$0xff]
        %v7018 = vld [vmem:[#allocation2 + $0x340] sm:$0xff]
        %v7019 = vld [vmem:[#allocation2 + $0x348] sm:$0xff]
        %v7020 = vld [vmem:[#allocation2 + $0x350] sm:$0xff]
        %v7021 = vld [vmem:[#allocation2 + $0x358] sm:$0xff]
        %v7022 = vld [vmem:[#allocation2 + $0x360] sm:$0xff]
        %v7023 = vld [vmem:[#allocation2 + $0x368] sm:$0xff]
        %v7024 = vld [vmem:[#allocation2 + $0x370] sm:$0xff]
        %v7025 = vld [vmem:[#allocation2 + $0x378] sm:$0xff]
        %v7026 = vld [vmem:[#allocation2 + $0x380] sm:$0xff]
        %v7027 = vld [vmem:[#allocation2 + $0x388] sm:$0xff]
        %v7028 = vld [vmem:[#allocation2 + $0x390] sm:$0xff]
        %v7029 = vld [vmem:[#allocation2 + $0x398] sm:$0xff]
        %v7030 = vld [vmem:[#allocation2 + $0x3a0] sm:$0xff]
        %v7031 = vld [vmem:[#allocation2 + $0x3a8] sm:$0xff]
        %v7032 = vld [vmem:[#allocation2 + $0x3b0] sm:$0xff]
        %v7033 = vld [vmem:[#allocation2 + $0x3b8] sm:$0xff]
        %v7034 = vld [vmem:[#allocation2 + $0x3c0] sm:$0xff]
        %v7035 = vld [vmem:[#allocation2 + $0x3c8] sm:$0xff]
        %v7036 = vld [vmem:[#allocation2 + $0x3d0] sm:$0xff]
        %v7037 = vld [vmem:[#allocation2 + $0x3d8] sm:$0xff]
        %v7038 = vld [vmem:[#allocation2 + $0x3e0] sm:$0xff]
        %v7039 = vld [vmem:[#allocation2 + $0x3e8] sm:$0xff]
        %v7040 = vld [vmem:[#allocation2 + $0x3f0] sm:$0xff]
        %v7041 = vld [vmem:[#allocation2 + $0x3f8] sm:$0xff]
        %v7042 = vadd.f32 %v6914, %v6786
        %v7043 = vadd.f32 %v6915, %v6787
        %v7044 = vadd.f32 %v6916, %v6788
        %v7045 = vadd.f32 %v6917, %v6789
        %v7046 = vadd.f32 %v6918, %v6790
        %v7047 = vadd.f32 %v6919, %v6791
        %v7048 = vadd.f32 %v6920, %v6792
        %v7049 = vadd.f32 %v6921, %v6793
        %v7050 = vadd.f32 %v6922, %v6794
        %v7051 = vadd.f32 %v6923, %v6795
        %v7052 = vadd.f32 %v6924, %v6796
        %v7053 = vadd.f32 %v6925, %v6797
        %v7054 = vadd.f32 %v6926, %v6798
        %v7055 = vadd.f32 %v6927, %v6799
        %v7056 = vadd.f32 %v6928, %v6800
        %v7057 = vadd.f32 %v6929, %v6801
        %v7058 = vadd.f32 %v6930, %v6802
        %v7059 = vadd.f32 %v6931, %v6803
        %v7060 = vadd.f32 %v6932, %v6804
        %v7061 = vadd.f32 %v6933, %v6805
        %v7062 = vadd.f32 %v6934, %v6806
        %v7063 = vadd.f32 %v6935, %v6807
        %v7064 = vadd.f32 %v6936, %v6808
        %v7065 = vadd.f32 %v6937, %v6809
        %v7066 = vadd.f32 %v6938, %v6810
        %v7067 = vadd.f32 %v6939, %v6811
        %v7068 = vadd.f32 %v6940, %v6812
        %v7069 = vadd.f32 %v6941, %v6813
        %v7070 = vadd.f32 %v6942, %v6814
        %v7071 = vadd.f32 %v6943, %v6815
        %v7072 = vadd.f32 %v6944, %v6816
        %v7073 = vadd.f32 %v6945, %v6817
        %v7074 = vadd.f32 %v6946, %v6818
        %v7075 = vadd.f32 %v6947, %v6819
        %v7076 = vadd.f32 %v6948, %v6820
        %v7077 = vadd.f32 %v6949, %v6821
        %v7078 = vadd.f32 %v6950, %v6822
        %v7079 = vadd.f32 %v6951, %v6823
        %v7080 = vadd.f32 %v6952, %v6824
        %v7081 = vadd.f32 %v6953, %v6825
        %v7082 = vadd.f32 %v6954, %v6826
        %v7083 = vadd.f32 %v6955, %v6827
        %v7084 = vadd.f32 %v6956, %v6828
        %v7085 = vadd.f32 %v6957, %v6829
        %v7086 = vadd.f32 %v6958, %v6830
        %v7087 = vadd.f32 %v6959, %v6831
        %v7088 = vadd.f32 %v6960, %v6832
        %v7089 = vadd.f32 %v6961, %v6833
        %v7090 = vadd.f32 %v6962, %v6834
        %v7091 = vadd.f32 %v6963, %v6835
        %v7092 = vadd.f32 %v6964, %v6836
        %v7093 = vadd.f32 %v6965, %v6837
        %v7094 = vadd.f32 %v6966, %v6838
        %v7095 = vadd.f32 %v6967, %v6839
        %v7096 = vadd.f32 %v6968, %v6840
        %v7097 = vadd.f32 %v6969, %v6841
        %v7098 = vadd.f32 %v6970, %v6842
        %v7099 = vadd.f32 %v6971, %v6843
        %v7100 = vadd.f32 %v6972, %v6844
        %v7101 = vadd.f32 %v6973, %v6845
        %v7102 = vadd.f32 %v6974, %v6846
        %v7103 = vadd.f32 %v6975, %v6847
        %v7104 = vadd.f32 %v6976, %v6848
        %v7105 = vadd.f32 %v6977, %v6849
        %v7106 = vadd.f32 %v6978, %v6850
        %v7107 = vadd.f32 %v6979, %v6851
        %v7108 = vadd.f32 %v6980, %v6852
        %v7109 = vadd.f32 %v6981, %v6853
        %v7110 = vadd.f32 %v6982, %v6854
        %v7111 = vadd.f32 %v6983, %v6855
        %v7112 = vadd.f32 %v6984, %v6856
        %v7113 = vadd.f32 %v6985, %v6857
        %v7114 = vadd.f32 %v6986, %v6858
        %v7115 = vadd.f32 %v6987, %v6859
        %v7116 = vadd.f32 %v6988, %v6860
        %v7117 = vadd.f32 %v6989, %v6861
        %v7118 = vadd.f32 %v6990, %v6862
        %v7119 = vadd.f32 %v6991, %v6863
        %v7120 = vadd.f32 %v6992, %v6864
        %v7121 = vadd.f32 %v6993, %v6865
        %v7122 = vadd.f32 %v6994, %v6866
        %v7123 = vadd.f32 %v6995, %v6867
        %v7124 = vadd.f32 %v6996, %v6868
        %v7125 = vadd.f32 %v6997, %v6869
        %v7126 = vadd.f32 %v6998, %v6870
        %v7127 = vadd.f32 %v6999, %v6871
        %v7128 = vadd.f32 %v7000, %v6872
        %v7129 = vadd.f32 %v7001, %v6873
        %v7130 = vadd.f32 %v7002, %v6874
        %v7131 = vadd.f32 %v7003, %v6875
        %v7132 = vadd.f32 %v7004, %v6876
        %v7133 = vadd.f32 %v7005, %v6877
        %v7134 = vadd.f32 %v7006, %v6878
        %v7135 = vadd.f32 %v7007, %v6879
        %v7136 = vadd.f32 %v7008, %v6880
        %v7137 = vadd.f32 %v7009, %v6881
        %v7138 = vadd.f32 %v7010, %v6882
        %v7139 = vadd.f32 %v7011, %v6883
        %v7140 = vadd.f32 %v7012, %v6884
        %v7141 = vadd.f32 %v7013, %v6885
        %v7142 = vadd.f32 %v7014, %v6886
        %v7143 = vadd.f32 %v7015, %v6887
        %v7144 = vadd.f32 %v7016, %v6888
        %v7145 = vadd.f32 %v7017, %v6889
        %v7146 = vadd.f32 %v7018, %v6890
        %v7147 = vadd.f32 %v7019, %v6891
        %v7148 = vadd.f32 %v7020, %v6892
        %v7149 = vadd.f32 %v7021, %v6893
        %v7150 = vadd.f32 %v7022, %v6894
        %v7151 = vadd.f32 %v7023, %v6895
        %v7152 = vadd.f32 %v7024, %v6896
        %v7153 = vadd.f32 %v7025, %v6897
        %v7154 = vadd.f32 %v7026, %v6898
        %v7155 = vadd.f32 %v7027, %v6899
        %v7156 = vadd.f32 %v7028, %v6900
        %v7157 = vadd.f32 %v7029, %v6901
        %v7158 = vadd.f32 %v7030, %v6902
        %v7159 = vadd.f32 %v7031, %v6903
        %v7160 = vadd.f32 %v7032, %v6904
        %v7161 = vadd.f32 %v7033, %v6905
        %v7162 = vadd.f32 %v7034, %v6906
        %v7163 = vadd.f32 %v7035, %v6907
        %v7164 = vadd.f32 %v7036, %v6908
        %v7165 = vadd.f32 %v7037, %v6909
        %v7166 = vadd.f32 %v7038, %v6910
        %v7167 = vadd.f32 %v7039, %v6911
        %v7168 = vadd.f32 %v7040, %v6912
        %v7169 = vadd.f32 %v7041, %v6913
        %vm7170 = vcmask 7168
        %7171 = vst.msk [vmem:[#allocation2] sm:$0xff] %vm7170, %v7042
        %7172 = vst.msk [vmem:[#allocation2 + $0x8] sm:$0xff] %vm7170, %v7043
        %7173 = vst.msk [vmem:[#allocation2 + $0x10] sm:$0xff] %vm7170, %v7044
        %7174 = vst.msk [vmem:[#allocation2 + $0x18] sm:$0xff] %vm7170, %v7045
        %7175 = vst.msk [vmem:[#allocation2 + $0x20] sm:$0xff] %vm7170, %v7046
        %7176 = vst.msk [vmem:[#allocation2 + $0x28] sm:$0xff] %vm7170, %v7047
        %7177 = vst.msk [vmem:[#allocation2 + $0x30] sm:$0xff] %vm7170, %v7048
        %7178 = vst.msk [vmem:[#allocation2 + $0x38] sm:$0xff] %vm7170, %v7049
        %7179 = vst.msk [vmem:[#allocation2 + $0x40] sm:$0xff] %vm7170, %v7050
        %7180 = vst.msk [vmem:[#allocation2 + $0x48] sm:$0xff] %vm7170, %v7051
        %7181 = vst.msk [vmem:[#allocation2 + $0x50] sm:$0xff] %vm7170, %v7052
        %7182 = vst.msk [vmem:[#allocation2 + $0x58] sm:$0xff] %vm7170, %v7053
        %7183 = vst.msk [vmem:[#allocation2 + $0x60] sm:$0xff] %vm7170, %v7054
        %7184 = vst.msk [vmem:[#allocation2 + $0x68] sm:$0xff] %vm7170, %v7055
        %7185 = vst.msk [vmem:[#allocation2 + $0x70] sm:$0xff] %vm7170, %v7056
        %7186 = vst.msk [vmem:[#allocation2 + $0x78] sm:$0xff] %vm7170, %v7057
        %7187 = vst.msk [vmem:[#allocation2 + $0x80] sm:$0xff] %vm7170, %v7058
        %7188 = vst.msk [vmem:[#allocation2 + $0x88] sm:$0xff] %vm7170, %v7059
        %7189 = vst.msk [vmem:[#allocation2 + $0x90] sm:$0xff] %vm7170, %v7060
        %7190 = vst.msk [vmem:[#allocation2 + $0x98] sm:$0xff] %vm7170, %v7061
        %7191 = vst.msk [vmem:[#allocation2 + $0xa0] sm:$0xff] %vm7170, %v7062
        %7192 = vst.msk [vmem:[#allocation2 + $0xa8] sm:$0xff] %vm7170, %v7063
        %7193 = vst.msk [vmem:[#allocation2 + $0xb0] sm:$0xff] %vm7170, %v7064
        %7194 = vst.msk [vmem:[#allocation2 + $0xb8] sm:$0xff] %vm7170, %v7065
        %7195 = vst.msk [vmem:[#allocation2 + $0xc0] sm:$0xff] %vm7170, %v7066
        %7196 = vst.msk [vmem:[#allocation2 + $0xc8] sm:$0xff] %vm7170, %v7067
        %7197 = vst.msk [vmem:[#allocation2 + $0xd0] sm:$0xff] %vm7170, %v7068
        %7198 = vst.msk [vmem:[#allocation2 + $0xd8] sm:$0xff] %vm7170, %v7069
        %7199 = vst.msk [vmem:[#allocation2 + $0xe0] sm:$0xff] %vm7170, %v7070
        %7200 = vst.msk [vmem:[#allocation2 + $0xe8] sm:$0xff] %vm7170, %v7071
        %7201 = vst.msk [vmem:[#allocation2 + $0xf0] sm:$0xff] %vm7170, %v7072
        %7202 = vst.msk [vmem:[#allocation2 + $0xf8] sm:$0xff] %vm7170, %v7073
        %7203 = vst.msk [vmem:[#allocation2 + $0x100] sm:$0xff] %vm7170, %v7074
        %7204 = vst.msk [vmem:[#allocation2 + $0x108] sm:$0xff] %vm7170, %v7075
        %7205 = vst.msk [vmem:[#allocation2 + $0x110] sm:$0xff] %vm7170, %v7076
        %7206 = vst.msk [vmem:[#allocation2 + $0x118] sm:$0xff] %vm7170, %v7077
        %7207 = vst.msk [vmem:[#allocation2 + $0x120] sm:$0xff] %vm7170, %v7078
        %7208 = vst.msk [vmem:[#allocation2 + $0x128] sm:$0xff] %vm7170, %v7079
        %7209 = vst.msk [vmem:[#allocation2 + $0x130] sm:$0xff] %vm7170, %v7080
        %7210 = vst.msk [vmem:[#allocation2 + $0x138] sm:$0xff] %vm7170, %v7081
        %7211 = vst.msk [vmem:[#allocation2 + $0x140] sm:$0xff] %vm7170, %v7082
        %7212 = vst.msk [vmem:[#allocation2 + $0x148] sm:$0xff] %vm7170, %v7083
        %7213 = vst.msk [vmem:[#allocation2 + $0x150] sm:$0xff] %vm7170, %v7084
        %7214 = vst.msk [vmem:[#allocation2 + $0x158] sm:$0xff] %vm7170, %v7085
        %7215 = vst.msk [vmem:[#allocation2 + $0x160] sm:$0xff] %vm7170, %v7086
        %7216 = vst.msk [vmem:[#allocation2 + $0x168] sm:$0xff] %vm7170, %v7087
        %7217 = vst.msk [vmem:[#allocation2 + $0x170] sm:$0xff] %vm7170, %v7088
        %7218 = vst.msk [vmem:[#allocation2 + $0x178] sm:$0xff] %vm7170, %v7089
        %7219 = vst.msk [vmem:[#allocation2 + $0x180] sm:$0xff] %vm7170, %v7090
        %7220 = vst.msk [vmem:[#allocation2 + $0x188] sm:$0xff] %vm7170, %v7091
        %7221 = vst.msk [vmem:[#allocation2 + $0x190] sm:$0xff] %vm7170, %v7092
        %7222 = vst.msk [vmem:[#allocation2 + $0x198] sm:$0xff] %vm7170, %v7093
        %7223 = vst.msk [vmem:[#allocation2 + $0x1a0] sm:$0xff] %vm7170, %v7094
        %7224 = vst.msk [vmem:[#allocation2 + $0x1a8] sm:$0xff] %vm7170, %v7095
        %7225 = vst.msk [vmem:[#allocation2 + $0x1b0] sm:$0xff] %vm7170, %v7096
        %7226 = vst.msk [vmem:[#allocation2 + $0x1b8] sm:$0xff] %vm7170, %v7097
        %7227 = vst.msk [vmem:[#allocation2 + $0x1c0] sm:$0xff] %vm7170, %v7098
        %7228 = vst.msk [vmem:[#allocation2 + $0x1c8] sm:$0xff] %vm7170, %v7099
        %7229 = vst.msk [vmem:[#allocation2 + $0x1d0] sm:$0xff] %vm7170, %v7100
        %7230 = vst.msk [vmem:[#allocation2 + $0x1d8] sm:$0xff] %vm7170, %v7101
        %7231 = vst.msk [vmem:[#allocation2 + $0x1e0] sm:$0xff] %vm7170, %v7102
        %7232 = vst.msk [vmem:[#allocation2 + $0x1e8] sm:$0xff] %vm7170, %v7103
        %7233 = vst.msk [vmem:[#allocation2 + $0x1f0] sm:$0xff] %vm7170, %v7104
        %7234 = vst.msk [vmem:[#allocation2 + $0x1f8] sm:$0xff] %vm7170, %v7105
        %7235 = vst.msk [vmem:[#allocation2 + $0x200] sm:$0xff] %vm7170, %v7106
        %7236 = vst.msk [vmem:[#allocation2 + $0x208] sm:$0xff] %vm7170, %v7107
        %7237 = vst.msk [vmem:[#allocation2 + $0x210] sm:$0xff] %vm7170, %v7108
        %7238 = vst.msk [vmem:[#allocation2 + $0x218] sm:$0xff] %vm7170, %v7109
        %7239 = vst.msk [vmem:[#allocation2 + $0x220] sm:$0xff] %vm7170, %v7110
        %7240 = vst.msk [vmem:[#allocation2 + $0x228] sm:$0xff] %vm7170, %v7111
        %7241 = vst.msk [vmem:[#allocation2 + $0x230] sm:$0xff] %vm7170, %v7112
        %7242 = vst.msk [vmem:[#allocation2 + $0x238] sm:$0xff] %vm7170, %v7113
        %7243 = vst.msk [vmem:[#allocation2 + $0x240] sm:$0xff] %vm7170, %v7114
        %7244 = vst.msk [vmem:[#allocation2 + $0x248] sm:$0xff] %vm7170, %v7115
        %7245 = vst.msk [vmem:[#allocation2 + $0x250] sm:$0xff] %vm7170, %v7116
        %7246 = vst.msk [vmem:[#allocation2 + $0x258] sm:$0xff] %vm7170, %v7117
        %7247 = vst.msk [vmem:[#allocation2 + $0x260] sm:$0xff] %vm7170, %v7118
        %7248 = vst.msk [vmem:[#allocation2 + $0x268] sm:$0xff] %vm7170, %v7119
        %7249 = vst.msk [vmem:[#allocation2 + $0x270] sm:$0xff] %vm7170, %v7120
        %7250 = vst.msk [vmem:[#allocation2 + $0x278] sm:$0xff] %vm7170, %v7121
        %7251 = vst.msk [vmem:[#allocation2 + $0x280] sm:$0xff] %vm7170, %v7122
        %7252 = vst.msk [vmem:[#allocation2 + $0x288] sm:$0xff] %vm7170, %v7123
        %7253 = vst.msk [vmem:[#allocation2 + $0x290] sm:$0xff] %vm7170, %v7124
        %7254 = vst.msk [vmem:[#allocation2 + $0x298] sm:$0xff] %vm7170, %v7125
        %7255 = vst.msk [vmem:[#allocation2 + $0x2a0] sm:$0xff] %vm7170, %v7126
        %7256 = vst.msk [vmem:[#allocation2 + $0x2a8] sm:$0xff] %vm7170, %v7127
        %7257 = vst.msk [vmem:[#allocation2 + $0x2b0] sm:$0xff] %vm7170, %v7128
        %7258 = vst.msk [vmem:[#allocation2 + $0x2b8] sm:$0xff] %vm7170, %v7129
        %7259 = vst.msk [vmem:[#allocation2 + $0x2c0] sm:$0xff] %vm7170, %v7130
        %7260 = vst.msk [vmem:[#allocation2 + $0x2c8] sm:$0xff] %vm7170, %v7131
        %7261 = vst.msk [vmem:[#allocation2 + $0x2d0] sm:$0xff] %vm7170, %v7132
        %7262 = vst.msk [vmem:[#allocation2 + $0x2d8] sm:$0xff] %vm7170, %v7133
        %7263 = vst.msk [vmem:[#allocation2 + $0x2e0] sm:$0xff] %vm7170, %v7134
        %7264 = vst.msk [vmem:[#allocation2 + $0x2e8] sm:$0xff] %vm7170, %v7135
        %7265 = vst.msk [vmem:[#allocation2 + $0x2f0] sm:$0xff] %vm7170, %v7136
        %7266 = vst.msk [vmem:[#allocation2 + $0x2f8] sm:$0xff] %vm7170, %v7137
        %7267 = vst.msk [vmem:[#allocation2 + $0x300] sm:$0xff] %vm7170, %v7138
        %7268 = vst.msk [vmem:[#allocation2 + $0x308] sm:$0xff] %vm7170, %v7139
        %7269 = vst.msk [vmem:[#allocation2 + $0x310] sm:$0xff] %vm7170, %v7140
        %7270 = vst.msk [vmem:[#allocation2 + $0x318] sm:$0xff] %vm7170, %v7141
        %7271 = vst.msk [vmem:[#allocation2 + $0x320] sm:$0xff] %vm7170, %v7142
        %7272 = vst.msk [vmem:[#allocation2 + $0x328] sm:$0xff] %vm7170, %v7143
        %7273 = vst.msk [vmem:[#allocation2 + $0x330] sm:$0xff] %vm7170, %v7144
        %7274 = vst.msk [vmem:[#allocation2 + $0x338] sm:$0xff] %vm7170, %v7145
        %7275 = vst.msk [vmem:[#allocation2 + $0x340] sm:$0xff] %vm7170, %v7146
        %7276 = vst.msk [vmem:[#allocation2 + $0x348] sm:$0xff] %vm7170, %v7147
        %7277 = vst.msk [vmem:[#allocation2 + $0x350] sm:$0xff] %vm7170, %v7148
        %7278 = vst.msk [vmem:[#allocation2 + $0x358] sm:$0xff] %vm7170, %v7149
        %7279 = vst.msk [vmem:[#allocation2 + $0x360] sm:$0xff] %vm7170, %v7150
        %7280 = vst.msk [vmem:[#allocation2 + $0x368] sm:$0xff] %vm7170, %v7151
        %7281 = vst.msk [vmem:[#allocation2 + $0x370] sm:$0xff] %vm7170, %v7152
        %7282 = vst.msk [vmem:[#allocation2 + $0x378] sm:$0xff] %vm7170, %v7153
        %7283 = vst.msk [vmem:[#allocation2 + $0x380] sm:$0xff] %vm7170, %v7154
        %7284 = vst.msk [vmem:[#allocation2 + $0x388] sm:$0xff] %vm7170, %v7155
        %7285 = vst.msk [vmem:[#allocation2 + $0x390] sm:$0xff] %vm7170, %v7156
        %7286 = vst.msk [vmem:[#allocation2 + $0x398] sm:$0xff] %vm7170, %v7157
        %7287 = vst.msk [vmem:[#allocation2 + $0x3a0] sm:$0xff] %vm7170, %v7158
        %7288 = vst.msk [vmem:[#allocation2 + $0x3a8] sm:$0xff] %vm7170, %v7159
        %7289 = vst.msk [vmem:[#allocation2 + $0x3b0] sm:$0xff] %vm7170, %v7160
        %7290 = vst.msk [vmem:[#allocation2 + $0x3b8] sm:$0xff] %vm7170, %v7161
        %7291 = vst.msk [vmem:[#allocation2 + $0x3c0] sm:$0xff] %vm7170, %v7162
        %7292 = vst.msk [vmem:[#allocation2 + $0x3c8] sm:$0xff] %vm7170, %v7163
        %7293 = vst.msk [vmem:[#allocation2 + $0x3d0] sm:$0xff] %vm7170, %v7164
        %7294 = vst.msk [vmem:[#allocation2 + $0x3d8] sm:$0xff] %vm7170, %v7165
        %7295 = vst.msk [vmem:[#allocation2 + $0x3e0] sm:$0xff] %vm7170, %v7166
        %7296 = vst.msk [vmem:[#allocation2 + $0x3e8] sm:$0xff] %vm7170, %v7167
        %7297 = vst.msk [vmem:[#allocation2 + $0x3f0] sm:$0xff] %vm7170, %v7168
        %7298 = vst.msk [vmem:[#allocation2 + $0x3f8] sm:$0xff] %vm7170, %v7169
        // Predicated region
        $region37: #{tpu_custom_call.1} parent=31 // pred_check
          %p7299 = pneg %p248
        $region38: #{tpu_custom_call.1} parent=31 // pred_check_branch
          %7301 = sbr.rel (%p7299) target = $region40
        $region39: #{tpu_custom_call.1} parent=31 // pred_region
          %v7302 = vld [vmem:[#allocation2] sm:$0xff]
          %v7303 = vld [vmem:[#allocation2 + $0x8] sm:$0xff]
          %v7304 = vld [vmem:[#allocation2 + $0x10] sm:$0xff]
          %v7305 = vld [vmem:[#allocation2 + $0x18] sm:$0xff]
          %v7306 = vld [vmem:[#allocation2 + $0x20] sm:$0xff]
          %v7307 = vld [vmem:[#allocation2 + $0x28] sm:$0xff]
          %v7308 = vld [vmem:[#allocation2 + $0x30] sm:$0xff]
          %v7309 = vld [vmem:[#allocation2 + $0x38] sm:$0xff]
          %v7310 = vld [vmem:[#allocation2 + $0x40] sm:$0xff]
          %v7311 = vld [vmem:[#allocation2 + $0x48] sm:$0xff]
          %v7312 = vld [vmem:[#allocation2 + $0x50] sm:$0xff]
          %v7313 = vld [vmem:[#allocation2 + $0x58] sm:$0xff]
          %v7314 = vld [vmem:[#allocation2 + $0x60] sm:$0xff]
          %v7315 = vld [vmem:[#allocation2 + $0x68] sm:$0xff]
          %v7316 = vld [vmem:[#allocation2 + $0x70] sm:$0xff]
          %v7317 = vld [vmem:[#allocation2 + $0x78] sm:$0xff]
          %v7318 = vld [vmem:[#allocation2 + $0x80] sm:$0xff]
          %v7319 = vld [vmem:[#allocation2 + $0x88] sm:$0xff]
          %v7320 = vld [vmem:[#allocation2 + $0x90] sm:$0xff]
          %v7321 = vld [vmem:[#allocation2 + $0x98] sm:$0xff]
          %v7322 = vld [vmem:[#allocation2 + $0xa0] sm:$0xff]
          %v7323 = vld [vmem:[#allocation2 + $0xa8] sm:$0xff]
          %v7324 = vld [vmem:[#allocation2 + $0xb0] sm:$0xff]
          %v7325 = vld [vmem:[#allocation2 + $0xb8] sm:$0xff]
          %v7326 = vld [vmem:[#allocation2 + $0xc0] sm:$0xff]
          %v7327 = vld [vmem:[#allocation2 + $0xc8] sm:$0xff]
          %v7328 = vld [vmem:[#allocation2 + $0xd0] sm:$0xff]
          %v7329 = vld [vmem:[#allocation2 + $0xd8] sm:$0xff]
          %v7330 = vld [vmem:[#allocation2 + $0xe0] sm:$0xff]
          %v7331 = vld [vmem:[#allocation2 + $0xe8] sm:$0xff]
          %v7332 = vld [vmem:[#allocation2 + $0xf0] sm:$0xff]
          %v7333 = vld [vmem:[#allocation2 + $0xf8] sm:$0xff]
          %v7334 = vld [vmem:[#allocation2 + $0x100] sm:$0xff]
          %v7335 = vld [vmem:[#allocation2 + $0x108] sm:$0xff]
          %v7336 = vld [vmem:[#allocation2 + $0x110] sm:$0xff]
          %v7337 = vld [vmem:[#allocation2 + $0x118] sm:$0xff]
          %v7338 = vld [vmem:[#allocation2 + $0x120] sm:$0xff]
          %v7339 = vld [vmem:[#allocation2 + $0x128] sm:$0xff]
          %v7340 = vld [vmem:[#allocation2 + $0x130] sm:$0xff]
          %v7341 = vld [vmem:[#allocation2 + $0x138] sm:$0xff]
          %v7342 = vld [vmem:[#allocation2 + $0x140] sm:$0xff]
          %v7343 = vld [vmem:[#allocation2 + $0x148] sm:$0xff]
          %v7344 = vld [vmem:[#allocation2 + $0x150] sm:$0xff]
          %v7345 = vld [vmem:[#allocation2 + $0x158] sm:$0xff]
          %v7346 = vld [vmem:[#allocation2 + $0x160] sm:$0xff]
          %v7347 = vld [vmem:[#allocation2 + $0x168] sm:$0xff]
          %v7348 = vld [vmem:[#allocation2 + $0x170] sm:$0xff]
          %v7349 = vld [vmem:[#allocation2 + $0x178] sm:$0xff]
          %v7350 = vld [vmem:[#allocation2 + $0x180] sm:$0xff]
          %v7351 = vld [vmem:[#allocation2 + $0x188] sm:$0xff]
          %v7352 = vld [vmem:[#allocation2 + $0x190] sm:$0xff]
          %v7353 = vld [vmem:[#allocation2 + $0x198] sm:$0xff]
          %v7354 = vld [vmem:[#allocation2 + $0x1a0] sm:$0xff]
          %v7355 = vld [vmem:[#allocation2 + $0x1a8] sm:$0xff]
          %v7356 = vld [vmem:[#allocation2 + $0x1b0] sm:$0xff]
          %v7357 = vld [vmem:[#allocation2 + $0x1b8] sm:$0xff]
          %v7358 = vld [vmem:[#allocation2 + $0x1c0] sm:$0xff]
          %v7359 = vld [vmem:[#allocation2 + $0x1c8] sm:$0xff]
          %v7360 = vld [vmem:[#allocation2 + $0x1d0] sm:$0xff]
          %v7361 = vld [vmem:[#allocation2 + $0x1d8] sm:$0xff]
          %v7362 = vld [vmem:[#allocation2 + $0x1e0] sm:$0xff]
          %v7363 = vld [vmem:[#allocation2 + $0x1e8] sm:$0xff]
          %v7364 = vld [vmem:[#allocation2 + $0x1f0] sm:$0xff]
          %v7365 = vld [vmem:[#allocation2 + $0x1f8] sm:$0xff]
          %v7366 = vld [vmem:[#allocation2 + $0x200] sm:$0xff]
          %v7367 = vld [vmem:[#allocation2 + $0x208] sm:$0xff]
          %v7368 = vld [vmem:[#allocation2 + $0x210] sm:$0xff]
          %v7369 = vld [vmem:[#allocation2 + $0x218] sm:$0xff]
          %v7370 = vld [vmem:[#allocation2 + $0x220] sm:$0xff]
          %v7371 = vld [vmem:[#allocation2 + $0x228] sm:$0xff]
          %v7372 = vld [vmem:[#allocation2 + $0x230] sm:$0xff]
          %v7373 = vld [vmem:[#allocation2 + $0x238] sm:$0xff]
          %v7374 = vld [vmem:[#allocation2 + $0x240] sm:$0xff]
          %v7375 = vld [vmem:[#allocation2 + $0x248] sm:$0xff]
          %v7376 = vld [vmem:[#allocation2 + $0x250] sm:$0xff]
          %v7377 = vld [vmem:[#allocation2 + $0x258] sm:$0xff]
          %v7378 = vld [vmem:[#allocation2 + $0x260] sm:$0xff]
          %v7379 = vld [vmem:[#allocation2 + $0x268] sm:$0xff]
          %v7380 = vld [vmem:[#allocation2 + $0x270] sm:$0xff]
          %v7381 = vld [vmem:[#allocation2 + $0x278] sm:$0xff]
          %v7382 = vld [vmem:[#allocation2 + $0x280] sm:$0xff]
          %v7383 = vld [vmem:[#allocation2 + $0x288] sm:$0xff]
          %v7384 = vld [vmem:[#allocation2 + $0x290] sm:$0xff]
          %v7385 = vld [vmem:[#allocation2 + $0x298] sm:$0xff]
          %v7386 = vld [vmem:[#allocation2 + $0x2a0] sm:$0xff]
          %v7387 = vld [vmem:[#allocation2 + $0x2a8] sm:$0xff]
          %v7388 = vld [vmem:[#allocation2 + $0x2b0] sm:$0xff]
          %v7389 = vld [vmem:[#allocation2 + $0x2b8] sm:$0xff]
          %v7390 = vld [vmem:[#allocation2 + $0x2c0] sm:$0xff]
          %v7391 = vld [vmem:[#allocation2 + $0x2c8] sm:$0xff]
          %v7392 = vld [vmem:[#allocation2 + $0x2d0] sm:$0xff]
          %v7393 = vld [vmem:[#allocation2 + $0x2d8] sm:$0xff]
          %v7394 = vld [vmem:[#allocation2 + $0x2e0] sm:$0xff]
          %v7395 = vld [vmem:[#allocation2 + $0x2e8] sm:$0xff]
          %v7396 = vld [vmem:[#allocation2 + $0x2f0] sm:$0xff]
          %v7397 = vld [vmem:[#allocation2 + $0x2f8] sm:$0xff]
          %v7398 = vld [vmem:[#allocation2 + $0x300] sm:$0xff]
          %v7399 = vld [vmem:[#allocation2 + $0x308] sm:$0xff]
          %v7400 = vld [vmem:[#allocation2 + $0x310] sm:$0xff]
          %v7401 = vld [vmem:[#allocation2 + $0x318] sm:$0xff]
          %v7402 = vld [vmem:[#allocation2 + $0x320] sm:$0xff]
          %v7403 = vld [vmem:[#allocation2 + $0x328] sm:$0xff]
          %v7404 = vld [vmem:[#allocation2 + $0x330] sm:$0xff]
          %v7405 = vld [vmem:[#allocation2 + $0x338] sm:$0xff]
          %v7406 = vld [vmem:[#allocation2 + $0x340] sm:$0xff]
          %v7407 = vld [vmem:[#allocation2 + $0x348] sm:$0xff]
          %v7408 = vld [vmem:[#allocation2 + $0x350] sm:$0xff]
          %v7409 = vld [vmem:[#allocation2 + $0x358] sm:$0xff]
          %v7410 = vld [vmem:[#allocation2 + $0x360] sm:$0xff]
          %v7411 = vld [vmem:[#allocation2 + $0x368] sm:$0xff]
          %v7412 = vld [vmem:[#allocation2 + $0x370] sm:$0xff]
          %v7413 = vld [vmem:[#allocation2 + $0x378] sm:$0xff]
          %v7414 = vld [vmem:[#allocation2 + $0x380] sm:$0xff]
          %v7415 = vld [vmem:[#allocation2 + $0x388] sm:$0xff]
          %v7416 = vld [vmem:[#allocation2 + $0x390] sm:$0xff]
          %v7417 = vld [vmem:[#allocation2 + $0x398] sm:$0xff]
          %v7418 = vld [vmem:[#allocation2 + $0x3a0] sm:$0xff]
          %v7419 = vld [vmem:[#allocation2 + $0x3a8] sm:$0xff]
          %v7420 = vld [vmem:[#allocation2 + $0x3b0] sm:$0xff]
          %v7421 = vld [vmem:[#allocation2 + $0x3b8] sm:$0xff]
          %v7422 = vld [vmem:[#allocation2 + $0x3c0] sm:$0xff]
          %v7423 = vld [vmem:[#allocation2 + $0x3c8] sm:$0xff]
          %v7424 = vld [vmem:[#allocation2 + $0x3d0] sm:$0xff]
          %v7425 = vld [vmem:[#allocation2 + $0x3d8] sm:$0xff]
          %v7426 = vld [vmem:[#allocation2 + $0x3e0] sm:$0xff]
          %v7427 = vld [vmem:[#allocation2 + $0x3e8] sm:$0xff]
          %v7428 = vld [vmem:[#allocation2 + $0x3f0] sm:$0xff]
          %v7429 = vld [vmem:[#allocation2 + $0x3f8] sm:$0xff]
          %v7430 = vsel %vm7170, %v7302, 0.0
          %v7431 = vsel %vm7170, %v7303, 0.0
          %v7432 = vadd.f32 %v7430, %v7431
          %v7433 = vsel %vm7170, %v7304, 0.0
          %v7434 = vadd.f32 %v7432, %v7433
          %v7435 = vsel %vm7170, %v7305, 0.0
          %v7436 = vadd.f32 %v7434, %v7435
          %v7437 = vsel %vm7170, %v7306, 0.0
          %v7438 = vadd.f32 %v7436, %v7437
          %v7439 = vsel %vm7170, %v7307, 0.0
          %v7440 = vadd.f32 %v7438, %v7439
          %v7441 = vsel %vm7170, %v7308, 0.0
          %v7442 = vadd.f32 %v7440, %v7441
          %v7443 = vsel %vm7170, %v7309, 0.0
          %v7444 = vadd.f32 %v7442, %v7443
          %v7445 = vsel %vm7170, %v7310, 0.0
          %v7446 = vadd.f32 %v7444, %v7445
          %v7447 = vsel %vm7170, %v7311, 0.0
          %v7448 = vadd.f32 %v7446, %v7447
          %v7449 = vsel %vm7170, %v7312, 0.0
          %v7450 = vadd.f32 %v7448, %v7449
          %v7451 = vsel %vm7170, %v7313, 0.0
          %v7452 = vadd.f32 %v7450, %v7451
          %v7453 = vsel %vm7170, %v7314, 0.0
          %v7454 = vadd.f32 %v7452, %v7453
          %v7455 = vsel %vm7170, %v7315, 0.0
          %v7456 = vadd.f32 %v7454, %v7455
          %v7457 = vsel %vm7170, %v7316, 0.0
          %v7458 = vadd.f32 %v7456, %v7457
          %v7459 = vsel %vm7170, %v7317, 0.0
          %v7460 = vadd.f32 %v7458, %v7459
          %v7461 = vsel %vm7170, %v7318, 0.0
          %v7462 = vadd.f32 %v7460, %v7461
          %v7463 = vsel %vm7170, %v7319, 0.0
          %v7464 = vadd.f32 %v7462, %v7463
          %v7465 = vsel %vm7170, %v7320, 0.0
          %v7466 = vadd.f32 %v7464, %v7465
          %v7467 = vsel %vm7170, %v7321, 0.0
          %v7468 = vadd.f32 %v7466, %v7467
          %v7469 = vsel %vm7170, %v7322, 0.0
          %v7470 = vadd.f32 %v7468, %v7469
          %v7471 = vsel %vm7170, %v7323, 0.0
          %v7472 = vadd.f32 %v7470, %v7471
          %v7473 = vsel %vm7170, %v7324, 0.0
          %v7474 = vadd.f32 %v7472, %v7473
          %v7475 = vsel %vm7170, %v7325, 0.0
          %v7476 = vadd.f32 %v7474, %v7475
          %v7477 = vsel %vm7170, %v7326, 0.0
          %v7478 = vadd.f32 %v7476, %v7477
          %v7479 = vsel %vm7170, %v7327, 0.0
          %v7480 = vadd.f32 %v7478, %v7479
          %v7481 = vsel %vm7170, %v7328, 0.0
          %v7482 = vadd.f32 %v7480, %v7481
          %v7483 = vsel %vm7170, %v7329, 0.0
          %v7484 = vadd.f32 %v7482, %v7483
          %v7485 = vsel %vm7170, %v7330, 0.0
          %v7486 = vadd.f32 %v7484, %v7485
          %v7487 = vsel %vm7170, %v7331, 0.0
          %v7488 = vadd.f32 %v7486, %v7487
          %v7489 = vsel %vm7170, %v7332, 0.0
          %v7490 = vadd.f32 %v7488, %v7489
          %v7491 = vsel %vm7170, %v7333, 0.0
          %v7492 = vadd.f32 %v7490, %v7491
          %v7493 = vsel %vm7170, %v7334, 0.0
          %v7494 = vadd.f32 %v7492, %v7493
          %v7495 = vsel %vm7170, %v7335, 0.0
          %v7496 = vadd.f32 %v7494, %v7495
          %v7497 = vsel %vm7170, %v7336, 0.0
          %v7498 = vadd.f32 %v7496, %v7497
          %v7499 = vsel %vm7170, %v7337, 0.0
          %v7500 = vadd.f32 %v7498, %v7499
          %v7501 = vsel %vm7170, %v7338, 0.0
          %v7502 = vadd.f32 %v7500, %v7501
          %v7503 = vsel %vm7170, %v7339, 0.0
          %v7504 = vadd.f32 %v7502, %v7503
          %v7505 = vsel %vm7170, %v7340, 0.0
          %v7506 = vadd.f32 %v7504, %v7505
          %v7507 = vsel %vm7170, %v7341, 0.0
          %v7508 = vadd.f32 %v7506, %v7507
          %v7509 = vsel %vm7170, %v7342, 0.0
          %v7510 = vadd.f32 %v7508, %v7509
          %v7511 = vsel %vm7170, %v7343, 0.0
          %v7512 = vadd.f32 %v7510, %v7511
          %v7513 = vsel %vm7170, %v7344, 0.0
          %v7514 = vadd.f32 %v7512, %v7513
          %v7515 = vsel %vm7170, %v7345, 0.0
          %v7516 = vadd.f32 %v7514, %v7515
          %v7517 = vsel %vm7170, %v7346, 0.0
          %v7518 = vadd.f32 %v7516, %v7517
          %v7519 = vsel %vm7170, %v7347, 0.0
          %v7520 = vadd.f32 %v7518, %v7519
          %v7521 = vsel %vm7170, %v7348, 0.0
          %v7522 = vadd.f32 %v7520, %v7521
          %v7523 = vsel %vm7170, %v7349, 0.0
          %v7524 = vadd.f32 %v7522, %v7523
          %v7525 = vsel %vm7170, %v7350, 0.0
          %v7526 = vadd.f32 %v7524, %v7525
          %v7527 = vsel %vm7170, %v7351, 0.0
          %v7528 = vadd.f32 %v7526, %v7527
          %v7529 = vsel %vm7170, %v7352, 0.0
          %v7530 = vadd.f32 %v7528, %v7529
          %v7531 = vsel %vm7170, %v7353, 0.0
          %v7532 = vadd.f32 %v7530, %v7531
          %v7533 = vsel %vm7170, %v7354, 0.0
          %v7534 = vadd.f32 %v7532, %v7533
          %v7535 = vsel %vm7170, %v7355, 0.0
          %v7536 = vadd.f32 %v7534, %v7535
          %v7537 = vsel %vm7170, %v7356, 0.0
          %v7538 = vadd.f32 %v7536, %v7537
          %v7539 = vsel %vm7170, %v7357, 0.0
          %v7540 = vadd.f32 %v7538, %v7539
          %v7541 = vsel %vm7170, %v7358, 0.0
          %v7542 = vadd.f32 %v7540, %v7541
          %v7543 = vsel %vm7170, %v7359, 0.0
          %v7544 = vadd.f32 %v7542, %v7543
          %v7545 = vsel %vm7170, %v7360, 0.0
          %v7546 = vadd.f32 %v7544, %v7545
          %v7547 = vsel %vm7170, %v7361, 0.0
          %v7548 = vadd.f32 %v7546, %v7547
          %v7549 = vsel %vm7170, %v7362, 0.0
          %v7550 = vadd.f32 %v7548, %v7549
          %v7551 = vsel %vm7170, %v7363, 0.0
          %v7552 = vadd.f32 %v7550, %v7551
          %v7553 = vsel %vm7170, %v7364, 0.0
          %v7554 = vadd.f32 %v7552, %v7553
          %v7555 = vsel %vm7170, %v7365, 0.0
          %v7556 = vadd.f32 %v7554, %v7555
          %v7557 = vsel %vm7170, %v7366, 0.0
          %v7558 = vadd.f32 %v7556, %v7557
          %v7559 = vsel %vm7170, %v7367, 0.0
          %v7560 = vadd.f32 %v7558, %v7559
          %v7561 = vsel %vm7170, %v7368, 0.0
          %v7562 = vadd.f32 %v7560, %v7561
          %v7563 = vsel %vm7170, %v7369, 0.0
          %v7564 = vadd.f32 %v7562, %v7563
          %v7565 = vsel %vm7170, %v7370, 0.0
          %v7566 = vadd.f32 %v7564, %v7565
          %v7567 = vsel %vm7170, %v7371, 0.0
          %v7568 = vadd.f32 %v7566, %v7567
          %v7569 = vsel %vm7170, %v7372, 0.0
          %v7570 = vadd.f32 %v7568, %v7569
          %v7571 = vsel %vm7170, %v7373, 0.0
          %v7572 = vadd.f32 %v7570, %v7571
          %v7573 = vsel %vm7170, %v7374, 0.0
          %v7574 = vadd.f32 %v7572, %v7573
          %v7575 = vsel %vm7170, %v7375, 0.0
          %v7576 = vadd.f32 %v7574, %v7575
          %v7577 = vsel %vm7170, %v7376, 0.0
          %v7578 = vadd.f32 %v7576, %v7577
          %v7579 = vsel %vm7170, %v7377, 0.0
          %v7580 = vadd.f32 %v7578, %v7579
          %v7581 = vsel %vm7170, %v7378, 0.0
          %v7582 = vadd.f32 %v7580, %v7581
          %v7583 = vsel %vm7170, %v7379, 0.0
          %v7584 = vadd.f32 %v7582, %v7583
          %v7585 = vsel %vm7170, %v7380, 0.0
          %v7586 = vadd.f32 %v7584, %v7585
          %v7587 = vsel %vm7170, %v7381, 0.0
          %v7588 = vadd.f32 %v7586, %v7587
          %v7589 = vsel %vm7170, %v7382, 0.0
          %v7590 = vadd.f32 %v7588, %v7589
          %v7591 = vsel %vm7170, %v7383, 0.0
          %v7592 = vadd.f32 %v7590, %v7591
          %v7593 = vsel %vm7170, %v7384, 0.0
          %v7594 = vadd.f32 %v7592, %v7593
          %v7595 = vsel %vm7170, %v7385, 0.0
          %v7596 = vadd.f32 %v7594, %v7595
          %v7597 = vsel %vm7170, %v7386, 0.0
          %v7598 = vadd.f32 %v7596, %v7597
          %v7599 = vsel %vm7170, %v7387, 0.0
          %v7600 = vadd.f32 %v7598, %v7599
          %v7601 = vsel %vm7170, %v7388, 0.0
          %v7602 = vadd.f32 %v7600, %v7601
          %v7603 = vsel %vm7170, %v7389, 0.0
          %v7604 = vadd.f32 %v7602, %v7603
          %v7605 = vsel %vm7170, %v7390, 0.0
          %v7606 = vadd.f32 %v7604, %v7605
          %v7607 = vsel %vm7170, %v7391, 0.0
          %v7608 = vadd.f32 %v7606, %v7607
          %v7609 = vsel %vm7170, %v7392, 0.0
          %v7610 = vadd.f32 %v7608, %v7609
          %v7611 = vsel %vm7170, %v7393, 0.0
          %v7612 = vadd.f32 %v7610, %v7611
          %v7613 = vsel %vm7170, %v7394, 0.0
          %v7614 = vadd.f32 %v7612, %v7613
          %v7615 = vsel %vm7170, %v7395, 0.0
          %v7616 = vadd.f32 %v7614, %v7615
          %v7617 = vsel %vm7170, %v7396, 0.0
          %v7618 = vadd.f32 %v7616, %v7617
          %v7619 = vsel %vm7170, %v7397, 0.0
          %v7620 = vadd.f32 %v7618, %v7619
          %v7621 = vsel %vm7170, %v7398, 0.0
          %v7622 = vadd.f32 %v7620, %v7621
          %v7623 = vsel %vm7170, %v7399, 0.0
          %v7624 = vadd.f32 %v7622, %v7623
          %v7625 = vsel %vm7170, %v7400, 0.0
          %v7626 = vadd.f32 %v7624, %v7625
          %v7627 = vsel %vm7170, %v7401, 0.0
          %v7628 = vadd.f32 %v7626, %v7627
          %v7629 = vsel %vm7170, %v7402, 0.0
          %v7630 = vadd.f32 %v7628, %v7629
          %v7631 = vsel %vm7170, %v7403, 0.0
          %v7632 = vadd.f32 %v7630, %v7631
          %v7633 = vsel %vm7170, %v7404, 0.0
          %v7634 = vadd.f32 %v7632, %v7633
          %v7635 = vsel %vm7170, %v7405, 0.0
          %v7636 = vadd.f32 %v7634, %v7635
          %v7637 = vsel %vm7170, %v7406, 0.0
          %v7638 = vadd.f32 %v7636, %v7637
          %v7639 = vsel %vm7170, %v7407, 0.0
          %v7640 = vadd.f32 %v7638, %v7639
          %v7641 = vsel %vm7170, %v7408, 0.0
          %v7642 = vadd.f32 %v7640, %v7641
          %v7643 = vsel %vm7170, %v7409, 0.0
          %v7644 = vadd.f32 %v7642, %v7643
          %v7645 = vsel %vm7170, %v7410, 0.0
          %v7646 = vadd.f32 %v7644, %v7645
          %v7647 = vsel %vm7170, %v7411, 0.0
          %v7648 = vadd.f32 %v7646, %v7647
          %v7649 = vsel %vm7170, %v7412, 0.0
          %v7650 = vadd.f32 %v7648, %v7649
          %v7651 = vsel %vm7170, %v7413, 0.0
          %v7652 = vadd.f32 %v7650, %v7651
          %v7653 = vsel %vm7170, %v7414, 0.0
          %v7654 = vadd.f32 %v7652, %v7653
          %v7655 = vsel %vm7170, %v7415, 0.0
          %v7656 = vadd.f32 %v7654, %v7655
          %v7657 = vsel %vm7170, %v7416, 0.0
          %v7658 = vadd.f32 %v7656, %v7657
          %v7659 = vsel %vm7170, %v7417, 0.0
          %v7660 = vadd.f32 %v7658, %v7659
          %v7661 = vsel %vm7170, %v7418, 0.0
          %v7662 = vadd.f32 %v7660, %v7661
          %v7663 = vsel %vm7170, %v7419, 0.0
          %v7664 = vadd.f32 %v7662, %v7663
          %v7665 = vsel %vm7170, %v7420, 0.0
          %v7666 = vadd.f32 %v7664, %v7665
          %v7667 = vsel %vm7170, %v7421, 0.0
          %v7668 = vadd.f32 %v7666, %v7667
          %v7669 = vsel %vm7170, %v7422, 0.0
          %v7670 = vadd.f32 %v7668, %v7669
          %v7671 = vsel %vm7170, %v7423, 0.0
          %v7672 = vadd.f32 %v7670, %v7671
          %v7673 = vsel %vm7170, %v7424, 0.0
          %v7674 = vadd.f32 %v7672, %v7673
          %v7675 = vsel %vm7170, %v7425, 0.0
          %v7676 = vadd.f32 %v7674, %v7675
          %v7677 = vsel %vm7170, %v7426, 0.0
          %v7678 = vadd.f32 %v7676, %v7677
          %v7679 = vsel %vm7170, %v7427, 0.0
          %v7680 = vadd.f32 %v7678, %v7679
          %v7681 = vsel %vm7170, %v7428, 0.0
          %v7682 = vadd.f32 %v7680, %v7681
          %v7683 = vsel %vm7170, %v7429, 0.0
          %v7684 = vadd.f32 %v7682, %v7683
          %7685 = vadd.xlane.f32.xlu0 %v7684
          %v7686 = vpop.xlane.xlu0 %7685
          %v7687 = vrot.slane %v7686, 4
          %v7688 = vadd.f32 %v7686, %v7687
          %v7689 = vrot.slane %v7688, 2
          %v7690 = vadd.f32 %v7688, %v7689
          %v7691 = vrot.slane %v7690, 1
          %v7692 = vadd.f32 %v7690, %v7691
          %s7693 = vtos %v7692
          %v7694 = vstv %s7693
          %7695 = vst [vmem:[%s223] sm:$0xff] %v7694
        $region40: #{tpu_custom_call.1} parent=31 // pred_fallthru
          _
        %s7696 = sand.u32 %s121, 1
        %s7697 = scalar_lea.sflag [#allocation4], %s7696
        %s7698 = sand.u32 %s121, 1
        %s7699 = smul.addr %s7698, 8
        %s7700 = scalar_lea.vmem [#allocation3], %s7699
        // Predicated region
        $region41: #{tpu_custom_call.1} parent=31 // pred_check
          %p7701 = pneg %p131
        $region42: #{tpu_custom_call.1} parent=31 // pred_check_branch
          %7703 = sbr.rel (%p7701) target = $region44
        $region43: #{tpu_custom_call.1} parent=31 // pred_region
          %7705 = vsyncadd %s7697, 0
          %s7706 = smul.addr %s21, 8
          %s7707 = scalar_lea.hbm %s3, %s7706
          %s7709 = sshll.u32 %s7700, 4
          %s7710 = int_to_ptr.vmem [resolvable:$true] %s7709
          %s7711 = sshll.u32 %s7707, 4
          %s7712 = int_to_ptr.hbm [resolvable:$true] %s7711
          %7714 = dma.vmem_to_hbm [thread:$0]  %s7710, 128, %s7712, %s7697
        $region44: #{tpu_custom_call.1} parent=31 // pred_fallthru
          _
      $region32: #{tpu_custom_call.1} parent=5 // pred_fallthru
        _
      %p7715 = scmp.le.s32.totalorder 2, %s12
      // Predicated region
      $region45: #{tpu_custom_call.1} parent=5 // pred_check
        %p7716 = pneg %p7715
      $region46: #{tpu_custom_call.1} parent=5 // pred_check_branch
        %7718 = sbr.rel (%p7716) target = $region48
      $region47: #{tpu_custom_call.1} parent=5 // pred_region
        %s7719 = ssub.s32 %s12, 2
        // Predicated region
        $region49: #{tpu_custom_call.1} parent=47 // pred_check
          %p7720 = pneg %p137
        $region50: #{tpu_custom_call.1} parent=47 // pred_check_branch
          %7722 = sbr.rel (%p7720) target = $region52
        $region51: #{tpu_custom_call.1} parent=47 // pred_region
          %s7723 = sand.u32 %s122, 1
          %s7724 = scalar_lea.sflag [#allocation4], %s7723
          %s7725 = sand.u32 %s122, 1
          %s7726 = smul.addr %s7725, 8
          %s7727 = scalar_lea.vmem [#allocation3], %s7726
          %7729 = dma.done %s7724, 128
        $region52: #{tpu_custom_call.1} parent=47 // pred_fallthru
          _
      $region48: #{tpu_custom_call.1} parent=5 // pred_fallthru
        _
    $region6: #{tpu_custom_call.1} parent=1 // loop_footer
      %s16 = sadd.s32 1, %s12
    $region7: #{tpu_custom_call.1} parent=1 // loop_footer_branch
      %11 = sbr.rel target = $region3
    $region8: #{tpu_custom_call.1} parent=1 // loop_exit
      _
    %7730 = vsyncpa [#allocation4], 1
    %s7731 = scalar_lea.sflag [#allocation4], 1
    %7732 = vsyncpa %s7731, 1

</llo_original>
